<compile_context>
chip_gen: v5e
topology: v5e:2x2
jax: 0.10.0
libtpu: 0.0.40
codegen_flags: <defaults>
</compile_context>

<pallas_src>
import math

import jax
import jax.numpy as jnp
from jax.experimental import pallas as pl
from jax.experimental.pallas import tpu as pltpu


def _reconstruction_kernel(xp_ref, w1_ref, b1_ref, w2_ref, b2_ref,
                           w3_ref, b3_ref, at_ref, o_ref,
                           y1p_ref, y2p_ref):
    # xp_ref: (1, H+2, W+2, Cin) zero-padded NHWC input for this batch element.
    _, Hp, Wp, Cin = xp_ref.shape
    H, W = Hp - 2, Wp - 2
    HW = H * W
    C1 = w1_ref.shape[2]
    C2 = w2_ref.shape[2]
    C3 = w3_ref.shape[2]

    x0 = xp_ref[0]                                    # (Hp, Wp, Cin)

    # ---- conv1 (3x3, pad 1) + ReLU: 9 shifted matmuls on the MXU ----------
    acc1 = jnp.zeros((HW, C1), jnp.float32)
    t = 0
    for ky in range(3):
        for kx in range(3):
            tap = x0[ky:ky + H, kx:kx + W, :].reshape(HW, Cin)
            acc1 = acc1 + jnp.dot(tap, w1_ref[t],
                                  preferred_element_type=jnp.float32)
            t += 1
    y1 = jnp.maximum(acc1 + b1_ref[...], 0.0)         # (HW, C1)

    # Zero-pad y1 into VMEM scratch for the next conv.
    y1p_ref[...] = jnp.zeros_like(y1p_ref)
    y1p_ref[1:H + 1, 1:W + 1, :] = y1.reshape(H, W, C1)

    # ---- conv2 (3x3, pad 1) + ReLU ----------------------------------------
    acc2 = jnp.zeros((HW, C2), jnp.float32)
    t = 0
    for ky in range(3):
        for kx in range(3):
            tap = y1p_ref[ky:ky + H, kx:kx + W, :].reshape(HW, C1)
            acc2 = acc2 + jnp.dot(tap, w2_ref[t],
                                  preferred_element_type=jnp.float32)
            t += 1
    y2 = jnp.maximum(acc2 + b2_ref[...], 0.0)         # (HW, C2)

    y2p_ref[...] = jnp.zeros_like(y2p_ref)
    y2p_ref[1:H + 1, 1:W + 1, :] = y2.reshape(H, W, C2)

    # ---- conv3 (3x3, pad 1) + sigmoid --------------------------------------
    acc3 = jnp.zeros((HW, C3), jnp.float32)
    t = 0
    for ky in range(3):
        for kx in range(3):
            tap = y2p_ref[ky:ky + H, kx:kx + W, :].reshape(HW, C2)
            acc3 = acc3 + jnp.dot(tap, w3_ref[t],
                                  preferred_element_type=jnp.float32)
            t += 1
    y3 = jax.nn.sigmoid(acc3 + b3_ref[...])           # (HW, C3)

    # ---- bilinear resize (align_corners=False) as a single matmul ---------
    # out[c, q] = sum_p y3[p, c] * A[q, p]; at_ref holds A^T with shape
    # (HW, Ho*Wo), so contract dim 0 of both -> lane-dense (C3, Ho*Wo).
    out_t = jax.lax.dot_general(
        y3, at_ref[...],
        dimension_numbers=(((0,), (0,)), ((), ())),
        preferred_element_type=jnp.float32)
    o_ref[0] = out_t.astype(o_ref.dtype)


def _bilinear_matrix(in_size, out_size, dtype=jnp.float32):
    """(out_size, in_size) row-stochastic matrix matching PyTorch
    F.interpolate(mode='bilinear', align_corners=False)."""
    scale = in_size / out_size
    dst = jnp.arange(out_size, dtype=jnp.float32)
    src = jnp.maximum((dst + 0.5) * scale - 0.5, 0.0)
    i0 = jnp.clip(jnp.floor(src).astype(jnp.int32), 0, in_size - 1)
    i1 = jnp.minimum(i0 + 1, in_size - 1)
    frac = src - i0.astype(jnp.float32)
    rows = (jax.nn.one_hot(i0, in_size, dtype=dtype) * (1.0 - frac)[:, None]
            + jax.nn.one_hot(i1, in_size, dtype=dtype) * frac[:, None])
    return rows


def reconstruction_forward(x, params, out_height, out_width):
    """x: (B, Cin, H, W) f32; params = (w1, b1, w2, b2, w3, b3) in PyTorch
    Conv2d layout (O, I, 3, 3) / (O,)."""
    w1, b1, w2, b2, w3, b3 = params
    B, Cin, H, W = x.shape
    C1, C2, C3 = w1.shape[0], w2.shape[0], w3.shape[0]
    Hp, Wp = H + 2, W + 2
    HW, HoWo = H * W, out_height * out_width

    # NHWC + spatial zero padding, done once outside the kernel.
    xp = jnp.pad(jnp.transpose(x, (0, 2, 3, 1)),
                 ((0, 0), (1, 1), (1, 1), (0, 0)))

    def prep_w(w):  # (O, I, 3, 3) -> (9, I, O), tap index t = ky*3 + kx
        return jnp.transpose(w, (2, 3, 1, 0)).reshape(9, w.shape[1], w.shape[0])

    w1t, w2t, w3t = prep_w(w1), prep_w(w2), prep_w(w3)
    b1r, b2r, b3r = b1.reshape(1, C1), b2.reshape(1, C2), b3.reshape(1, C3)

    # Fused (row-then-column) bilinear interpolation matrix, pre-transposed.
    a_full = jnp.kron(_bilinear_matrix(H, out_height),
                      _bilinear_matrix(W, out_width))          # (HoWo, HW)
    a_t = jnp.transpose(a_full)                                # (HW, HoWo)

    flops = (2 * B * HW * 9 * (Cin * C1 + C1 * C2 + C2 * C3)
             + 2 * B * C3 * HW * HoWo)
    bytes_accessed = 4 * (B * Hp * Wp * Cin + B * C3 * HoWo + HW * HoWo
                          + 9 * (Cin * C1 + C1 * C2 + C2 * C3) + C1 + C2 + C3)

    out_flat = pl.pallas_call(
        _reconstruction_kernel,
        out_shape=jax.ShapeDtypeStruct((B, C3, HoWo), x.dtype),
        grid_spec=pltpu.PrefetchScalarGridSpec(
            num_scalar_prefetch=0,
            grid=(B,),
            in_specs=[
                pl.BlockSpec((1, Hp, Wp, Cin), lambda b: (b, 0, 0, 0)),
                pl.BlockSpec((9, Cin, C1), lambda b: (0, 0, 0)),
                pl.BlockSpec((1, C1), lambda b: (0, 0)),
                pl.BlockSpec((9, C1, C2), lambda b: (0, 0, 0)),
                pl.BlockSpec((1, C2), lambda b: (0, 0)),
                pl.BlockSpec((9, C2, C3), lambda b: (0, 0, 0)),
                pl.BlockSpec((1, C3), lambda b: (0, 0)),
                pl.BlockSpec((HW, HoWo), lambda b: (0, 0)),
            ],
            out_specs=pl.BlockSpec((1, C3, HoWo), lambda b: (b, 0, 0)),
            scratch_shapes=[
                pltpu.VMEM((Hp, Wp, C1), jnp.float32),
                pltpu.VMEM((Hp, Wp, C2), jnp.float32),
            ]),
        compiler_params=pltpu.CompilerParams(
            dimension_semantics=("parallel",),
            vmem_limit_bytes=32 * 1024 * 1024),
        cost_estimate=pl.CostEstimate(
            flops=flops,
            transcendentals=B * HW * C3,
            bytes_accessed=bytes_accessed),
    )(xp, w1t, b1r, w2t, b2r, w3t, b3r, a_t)

    return out_flat.reshape(B, C3, out_height, out_width)


def reconstruction_ref(x, params, out_height, out_width):
    """Pure-JAX reference mirroring the PyTorch forward."""
    w1, b1, w2, b2, w3, b3 = params
    dn = ('NCHW', 'OIHW', 'NCHW')

    def conv(v, w, b):
        y = jax.lax.conv_general_dilated(v, w, (1, 1), 'SAME',
                                         dimension_numbers=dn)
        return y + b[None, :, None, None]

    y = jnp.maximum(conv(x, w1, b1), 0.0)
    y = jnp.maximum(conv(y, w2, b2), 0.0)
    y = jax.nn.sigmoid(conv(y, w3, b3))

    # Independent (gather-based) bilinear resize, align_corners=False.
    B, C, H, W = y.shape

    def src(out_size, in_size):
        s = jnp.maximum((jnp.arange(out_size, dtype=jnp.float32) + 0.5)
                        * (in_size / out_size) - 0.5, 0.0)
        i0 = jnp.clip(jnp.floor(s).astype(jnp.int32), 0, in_size - 1)
        i1 = jnp.minimum(i0 + 1, in_size - 1)
        return i0, i1, s - i0.astype(jnp.float32)

    h0, h1, fh = src(out_height, H)
    j0, j1, fw = src(out_width, W)
    top = y[:, :, h0, :][:, :, :, j0] * (1 - fw) + y[:, :, h0, :][:, :, :, j1] * fw
    bot = y[:, :, h1, :][:, :, :, j0] * (1 - fw) + y[:, :, h1, :][:, :, :, j1] * fw
    return top * (1 - fh)[None, None, :, None] + bot * fh[None, None, :, None]


if __name__ == "__main__":
    # Small shapes consistent with the module: Reconstruction(in_channels=4,
    # out_height=32, out_width=32) applied to a (2, 4, 16, 16) input.
    B, Cin, H, W = 2, 4, 16, 16
    out_h, out_w = 32, 32
    C1, C2, C3 = 64, 32, 3

    key = jax.random.PRNGKey(0)
    ks = jax.random.split(key, 7)
    x = jax.random.normal(ks[0], (B, Cin, H, W), dtype=jnp.float32)
    w1 = jax.random.normal(ks[1], (C1, Cin, 3, 3), jnp.float32) / math.sqrt(Cin * 9)
    b1 = 0.1 * jax.random.normal(ks[2], (C1,), jnp.float32)
    w2 = jax.random.normal(ks[3], (C2, C1, 3, 3), jnp.float32) / math.sqrt(C1 * 9)
    b2 = 0.1 * jax.random.normal(ks[4], (C2,), jnp.float32)
    w3 = jax.random.normal(ks[5], (C3, C2, 3, 3), jnp.float32) / math.sqrt(C2 * 9)
    b3 = 0.1 * jax.random.normal(ks[6], (C3,), jnp.float32)
    params = (w1, b1, w2, b2, w3, b3)

    out = jax.block_until_ready(reconstruction_forward(x, params, out_h, out_w))
    ref = jax.block_until_ready(reconstruction_ref(x, params, out_h, out_w))

    assert out.shape == (B, C3, out_h, out_w) and out.dtype == x.dtype
    err = float(jnp.max(jnp.abs(out - ref)))
    assert jnp.allclose(out, ref, atol=2e-5, rtol=1e-5), f"mismatch: {err}"
    print("KERNEL_OK")
</pallas_src>

<mosaic_0001>
module attributes {stable_mosaic.version = 11 : i64} {
  func.func @_reconstruction_kernel(%arg0: i32, %arg1: memref<1x18x18x4xf32, #tpu.memory_space<vmem>>, %arg2: memref<9x4x64xf32, #tpu.memory_space<vmem>>, %arg3: memref<1x64xf32, #tpu.memory_space<vmem>>, %arg4: memref<9x64x32xf32, #tpu.memory_space<vmem>>, %arg5: memref<1x32xf32, #tpu.memory_space<vmem>>, %arg6: memref<9x32x3xf32, #tpu.memory_space<vmem>>, %arg7: memref<1x3xf32, #tpu.memory_space<vmem>>, %arg8: memref<256x1024xf32, #tpu.memory_space<vmem>>, %arg9: memref<1x3x1024xf32, #tpu.memory_space<vmem>>, %arg10: memref<18x18x64xf32, #tpu.memory_space<vmem>>, %arg11: memref<18x18x32xf32, #tpu.memory_space<vmem>>) attributes {dimension_semantics = [#tpu.dimension_semantics<parallel>], iteration_bounds = array<i64: 2>, scalar_prefetch = 0 : i64, scratch_operands = 2 : i64, tpu.core_type = #tpu.core_type<tc>, window_params = [{transform_indices = @transform_0, window_bounds = array<i64: 1, 18, 18, 4>}, {pipeline_mode = #tpu.pipeline_mode<synchronous>, transform_indices = @transform_1, window_bounds = array<i64: 9, 4, 64>}, {pipeline_mode = #tpu.pipeline_mode<synchronous>, transform_indices = @transform_2, window_bounds = array<i64: 1, 64>}, {pipeline_mode = #tpu.pipeline_mode<synchronous>, transform_indices = @transform_3, window_bounds = array<i64: 9, 64, 32>}, {pipeline_mode = #tpu.pipeline_mode<synchronous>, transform_indices = @transform_4, window_bounds = array<i64: 1, 32>}, {pipeline_mode = #tpu.pipeline_mode<synchronous>, transform_indices = @transform_5, window_bounds = array<i64: 9, 32, 3>}, {pipeline_mode = #tpu.pipeline_mode<synchronous>, transform_indices = @transform_6, window_bounds = array<i64: 1, 3>}, {pipeline_mode = #tpu.pipeline_mode<synchronous>, transform_indices = @transform_7, window_bounds = array<i64: 256, 1024>}, {transform_indices = @transform_8, window_bounds = array<i64: 1, 3, 1024>}]} {
    %c0 = arith.constant 0 : index
    %c0_0 = arith.constant 0 : index
    %c0_1 = arith.constant 0 : index
    %c0_2 = arith.constant 0 : index
    %0 = vector.load %arg1[%c0, %c0_0, %c0_1, %c0_2] : memref<1x18x18x4xf32, #tpu.memory_space<vmem>>, vector<1x18x18x4xf32>
    %1 = vector.shape_cast %0 : vector<1x18x18x4xf32> to vector<18x18x4xf32>
    %cst = arith.constant 0.000000e+00 : f32
    %2 = vector.broadcast %cst : f32 to vector<256x64xf32>
    %3 = vector.extract_strided_slice %1 {offsets = [0, 0, 0], sizes = [16, 16, 4], strides = [1, 1, 1]} : vector<18x18x4xf32> to vector<16x16x4xf32>
    %4 = vector.shape_cast %3 : vector<16x16x4xf32> to vector<256x4xf32>
    %c0_3 = arith.constant 0 : index
    %c0_4 = arith.constant 0 : index
    %c0_5 = arith.constant 0 : index
    %5 = vector.load %arg2[%c0_3, %c0_4, %c0_5] : memref<9x4x64xf32, #tpu.memory_space<vmem>>, vector<1x4x64xf32>
    %6 = vector.shape_cast %5 : vector<1x4x64xf32> to vector<4x64xf32>
    %cst_6 = arith.constant dense<0.000000e+00> : vector<256x64xf32>
    %7 = tpu.matmul %4, %6, %cst_6 {dimension_numbers = #tpu.dot_dimension_numbers<[1], [0], [0], [1], [0, 0, 1, 1], [], []>} : vector<256x4xf32>, vector<4x64xf32>, vector<256x64xf32> -> vector<256x64xf32>
    %8 = arith.addf %2, %7 : vector<256x64xf32>
    %9 = vector.extract_strided_slice %1 {offsets = [0, 1, 0], sizes = [16, 16, 4], strides = [1, 1, 1]} : vector<18x18x4xf32> to vector<16x16x4xf32>
    %10 = vector.shape_cast %9 : vector<16x16x4xf32> to vector<256x4xf32>
    %c1 = arith.constant 1 : index
    %c0_7 = arith.constant 0 : index
    %c0_8 = arith.constant 0 : index
    %11 = vector.load %arg2[%c1, %c0_7, %c0_8] : memref<9x4x64xf32, #tpu.memory_space<vmem>>, vector<1x4x64xf32>
    %12 = vector.shape_cast %11 : vector<1x4x64xf32> to vector<4x64xf32>
    %cst_9 = arith.constant dense<0.000000e+00> : vector<256x64xf32>
    %13 = tpu.matmul %10, %12, %cst_9 {dimension_numbers = #tpu.dot_dimension_numbers<[1], [0], [0], [1], [0, 0, 1, 1], [], []>} : vector<256x4xf32>, vector<4x64xf32>, vector<256x64xf32> -> vector<256x64xf32>
    %14 = arith.addf %8, %13 : vector<256x64xf32>
    %15 = vector.extract_strided_slice %1 {offsets = [0, 2, 0], sizes = [16, 16, 4], strides = [1, 1, 1]} : vector<18x18x4xf32> to vector<16x16x4xf32>
    %16 = vector.shape_cast %15 : vector<16x16x4xf32> to vector<256x4xf32>
    %c2 = arith.constant 2 : index
    %c0_10 = arith.constant 0 : index
    %c0_11 = arith.constant 0 : index
    %17 = vector.load %arg2[%c2, %c0_10, %c0_11] : memref<9x4x64xf32, #tpu.memory_space<vmem>>, vector<1x4x64xf32>
    %18 = vector.shape_cast %17 : vector<1x4x64xf32> to vector<4x64xf32>
    %cst_12 = arith.constant dense<0.000000e+00> : vector<256x64xf32>
    %19 = tpu.matmul %16, %18, %cst_12 {dimension_numbers = #tpu.dot_dimension_numbers<[1], [0], [0], [1], [0, 0, 1, 1], [], []>} : vector<256x4xf32>, vector<4x64xf32>, vector<256x64xf32> -> vector<256x64xf32>
    %20 = arith.addf %14, %19 : vector<256x64xf32>
    %21 = vector.extract_strided_slice %1 {offsets = [1, 0, 0], sizes = [16, 16, 4], strides = [1, 1, 1]} : vector<18x18x4xf32> to vector<16x16x4xf32>
    %22 = vector.shape_cast %21 : vector<16x16x4xf32> to vector<256x4xf32>
    %c3 = arith.constant 3 : index
    %c0_13 = arith.constant 0 : index
    %c0_14 = arith.constant 0 : index
    %23 = vector.load %arg2[%c3, %c0_13, %c0_14] : memref<9x4x64xf32, #tpu.memory_space<vmem>>, vector<1x4x64xf32>
    %24 = vector.shape_cast %23 : vector<1x4x64xf32> to vector<4x64xf32>
    %cst_15 = arith.constant dense<0.000000e+00> : vector<256x64xf32>
    %25 = tpu.matmul %22, %24, %cst_15 {dimension_numbers = #tpu.dot_dimension_numbers<[1], [0], [0], [1], [0, 0, 1, 1], [], []>} : vector<256x4xf32>, vector<4x64xf32>, vector<256x64xf32> -> vector<256x64xf32>
    %26 = arith.addf %20, %25 : vector<256x64xf32>
    %27 = vector.extract_strided_slice %1 {offsets = [1, 1, 0], sizes = [16, 16, 4], strides = [1, 1, 1]} : vector<18x18x4xf32> to vector<16x16x4xf32>
    %28 = vector.shape_cast %27 : vector<16x16x4xf32> to vector<256x4xf32>
    %c4 = arith.constant 4 : index
    %c0_16 = arith.constant 0 : index
    %c0_17 = arith.constant 0 : index
    %29 = vector.load %arg2[%c4, %c0_16, %c0_17] : memref<9x4x64xf32, #tpu.memory_space<vmem>>, vector<1x4x64xf32>
    %30 = vector.shape_cast %29 : vector<1x4x64xf32> to vector<4x64xf32>
    %cst_18 = arith.constant dense<0.000000e+00> : vector<256x64xf32>
    %31 = tpu.matmul %28, %30, %cst_18 {dimension_numbers = #tpu.dot_dimension_numbers<[1], [0], [0], [1], [0, 0, 1, 1], [], []>} : vector<256x4xf32>, vector<4x64xf32>, vector<256x64xf32> -> vector<256x64xf32>
    %32 = arith.addf %26, %31 : vector<256x64xf32>
    %33 = vector.extract_strided_slice %1 {offsets = [1, 2, 0], sizes = [16, 16, 4], strides = [1, 1, 1]} : vector<18x18x4xf32> to vector<16x16x4xf32>
    %34 = vector.shape_cast %33 : vector<16x16x4xf32> to vector<256x4xf32>
    %c5 = arith.constant 5 : index
    %c0_19 = arith.constant 0 : index
    %c0_20 = arith.constant 0 : index
    %35 = vector.load %arg2[%c5, %c0_19, %c0_20] : memref<9x4x64xf32, #tpu.memory_space<vmem>>, vector<1x4x64xf32>
    %36 = vector.shape_cast %35 : vector<1x4x64xf32> to vector<4x64xf32>
    %cst_21 = arith.constant dense<0.000000e+00> : vector<256x64xf32>
    %37 = tpu.matmul %34, %36, %cst_21 {dimension_numbers = #tpu.dot_dimension_numbers<[1], [0], [0], [1], [0, 0, 1, 1], [], []>} : vector<256x4xf32>, vector<4x64xf32>, vector<256x64xf32> -> vector<256x64xf32>
    %38 = arith.addf %32, %37 : vector<256x64xf32>
    %39 = vector.extract_strided_slice %1 {offsets = [2, 0, 0], sizes = [16, 16, 4], strides = [1, 1, 1]} : vector<18x18x4xf32> to vector<16x16x4xf32>
    %40 = vector.shape_cast %39 : vector<16x16x4xf32> to vector<256x4xf32>
    %c6 = arith.constant 6 : index
    %c0_22 = arith.constant 0 : index
    %c0_23 = arith.constant 0 : index
    %41 = vector.load %arg2[%c6, %c0_22, %c0_23] : memref<9x4x64xf32, #tpu.memory_space<vmem>>, vector<1x4x64xf32>
    %42 = vector.shape_cast %41 : vector<1x4x64xf32> to vector<4x64xf32>
    %cst_24 = arith.constant dense<0.000000e+00> : vector<256x64xf32>
    %43 = tpu.matmul %40, %42, %cst_24 {dimension_numbers = #tpu.dot_dimension_numbers<[1], [0], [0], [1], [0, 0, 1, 1], [], []>} : vector<256x4xf32>, vector<4x64xf32>, vector<256x64xf32> -> vector<256x64xf32>
    %44 = arith.addf %38, %43 : vector<256x64xf32>
    %45 = vector.extract_strided_slice %1 {offsets = [2, 1, 0], sizes = [16, 16, 4], strides = [1, 1, 1]} : vector<18x18x4xf32> to vector<16x16x4xf32>
    %46 = vector.shape_cast %45 : vector<16x16x4xf32> to vector<256x4xf32>
    %c7 = arith.constant 7 : index
    %c0_25 = arith.constant 0 : index
    %c0_26 = arith.constant 0 : index
    %47 = vector.load %arg2[%c7, %c0_25, %c0_26] : memref<9x4x64xf32, #tpu.memory_space<vmem>>, vector<1x4x64xf32>
    %48 = vector.shape_cast %47 : vector<1x4x64xf32> to vector<4x64xf32>
    %cst_27 = arith.constant dense<0.000000e+00> : vector<256x64xf32>
    %49 = tpu.matmul %46, %48, %cst_27 {dimension_numbers = #tpu.dot_dimension_numbers<[1], [0], [0], [1], [0, 0, 1, 1], [], []>} : vector<256x4xf32>, vector<4x64xf32>, vector<256x64xf32> -> vector<256x64xf32>
    %50 = arith.addf %44, %49 : vector<256x64xf32>
    %51 = vector.extract_strided_slice %1 {offsets = [2, 2, 0], sizes = [16, 16, 4], strides = [1, 1, 1]} : vector<18x18x4xf32> to vector<16x16x4xf32>
    %52 = vector.shape_cast %51 : vector<16x16x4xf32> to vector<256x4xf32>
    %c8 = arith.constant 8 : index
    %c0_28 = arith.constant 0 : index
    %c0_29 = arith.constant 0 : index
    %53 = vector.load %arg2[%c8, %c0_28, %c0_29] : memref<9x4x64xf32, #tpu.memory_space<vmem>>, vector<1x4x64xf32>
    %54 = vector.shape_cast %53 : vector<1x4x64xf32> to vector<4x64xf32>
    %cst_30 = arith.constant dense<0.000000e+00> : vector<256x64xf32>
    %55 = tpu.matmul %52, %54, %cst_30 {dimension_numbers = #tpu.dot_dimension_numbers<[1], [0], [0], [1], [0, 0, 1, 1], [], []>} : vector<256x4xf32>, vector<4x64xf32>, vector<256x64xf32> -> vector<256x64xf32>
    %56 = arith.addf %50, %55 : vector<256x64xf32>
    %c0_31 = arith.constant 0 : index
    %c0_32 = arith.constant 0 : index
    %57 = vector.load %arg3[%c0_31, %c0_32] : memref<1x64xf32, #tpu.memory_space<vmem>>, vector<1x64xf32>
    %58 = vector.broadcast %57 : vector<1x64xf32> to vector<256x64xf32>
    %59 = arith.addf %56, %58 : vector<256x64xf32>
    %cst_33 = arith.constant 0.000000e+00 : f32
    %60 = vector.broadcast %cst_33 : f32 to vector<256x64xf32>
    %61 = arith.maximumf %59, %60 : vector<256x64xf32>
    %cst_34 = arith.constant 0.000000e+00 : f32
    %62 = vector.broadcast %cst_34 : f32 to vector<18x18x64xf32>
    %c0_35 = arith.constant 0 : index
    %c0_36 = arith.constant 0 : index
    %c0_37 = arith.constant 0 : index
    %63 = vector.load %arg10[%c0_35, %c0_36, %c0_37] : memref<18x18x64xf32, #tpu.memory_space<vmem>>, vector<18x18x64xf32>
    tpu.vector_store %arg10[%c0_35, %c0_36, %c0_37], %62 {strides = array<i32>} : memref<18x18x64xf32, #tpu.memory_space<vmem>>, vector<18x18x64xf32>,
    %64 = vector.shape_cast %61 : vector<256x64xf32> to vector<16x16x64xf32>
    %c1_38 = arith.constant 1 : index
    %c1_39 = arith.constant 1 : index
    %c0_40 = arith.constant 0 : index
    %65 = vector.load %arg10[%c1_38, %c1_39, %c0_40] : memref<18x18x64xf32, #tpu.memory_space<vmem>>, vector<16x16x64xf32>
    tpu.vector_store %arg10[%c1_38, %c1_39, %c0_40], %64 {strides = array<i32>} : memref<18x18x64xf32, #tpu.memory_space<vmem>>, vector<16x16x64xf32>,
    %cst_41 = arith.constant 0.000000e+00 : f32
    %66 = vector.broadcast %cst_41 : f32 to vector<256x32xf32>
    %c0_42 = arith.constant 0 : index
    %c0_43 = arith.constant 0 : index
    %c0_44 = arith.constant 0 : index
    %67 = vector.load %arg10[%c0_42, %c0_43, %c0_44] : memref<18x18x64xf32, #tpu.memory_space<vmem>>, vector<16x16x64xf32>
    %68 = vector.shape_cast %67 : vector<16x16x64xf32> to vector<256x64xf32>
    %c0_45 = arith.constant 0 : index
    %c0_46 = arith.constant 0 : index
    %c0_47 = arith.constant 0 : index
    %69 = vector.load %arg4[%c0_45, %c0_46, %c0_47] : memref<9x64x32xf32, #tpu.memory_space<vmem>>, vector<1x64x32xf32>
    %70 = vector.shape_cast %69 : vector<1x64x32xf32> to vector<64x32xf32>
    %cst_48 = arith.constant dense<0.000000e+00> : vector<256x32xf32>
    %71 = tpu.matmul %68, %70, %cst_48 {dimension_numbers = #tpu.dot_dimension_numbers<[1], [0], [0], [1], [0, 0, 1, 1], [], []>} : vector<256x64xf32>, vector<64x32xf32>, vector<256x32xf32> -> vector<256x32xf32>
    %72 = arith.addf %66, %71 : vector<256x32xf32>
    %c0_49 = arith.constant 0 : index
    %c1_50 = arith.constant 1 : index
    %c0_51 = arith.constant 0 : index
    %73 = vector.load %arg10[%c0_49, %c1_50, %c0_51] : memref<18x18x64xf32, #tpu.memory_space<vmem>>, vector<16x16x64xf32>
    %74 = vector.shape_cast %73 : vector<16x16x64xf32> to vector<256x64xf32>
    %c1_52 = arith.constant 1 : index
    %c0_53 = arith.constant 0 : index
    %c0_54 = arith.constant 0 : index
    %75 = vector.load %arg4[%c1_52, %c0_53, %c0_54] : memref<9x64x32xf32, #tpu.memory_space<vmem>>, vector<1x64x32xf32>
    %76 = vector.shape_cast %75 : vector<1x64x32xf32> to vector<64x32xf32>
    %cst_55 = arith.constant dense<0.000000e+00> : vector<256x32xf32>
    %77 = tpu.matmul %74, %76, %cst_55 {dimension_numbers = #tpu.dot_dimension_numbers<[1], [0], [0], [1], [0, 0, 1, 1], [], []>} : vector<256x64xf32>, vector<64x32xf32>, vector<256x32xf32> -> vector<256x32xf32>
    %78 = arith.addf %72, %77 : vector<256x32xf32>
    %c0_56 = arith.constant 0 : index
    %c2_57 = arith.constant 2 : index
    %c0_58 = arith.constant 0 : index
    %79 = vector.load %arg10[%c0_56, %c2_57, %c0_58] : memref<18x18x64xf32, #tpu.memory_space<vmem>>, vector<16x16x64xf32>
    %80 = vector.shape_cast %79 : vector<16x16x64xf32> to vector<256x64xf32>
    %c2_59 = arith.constant 2 : index
    %c0_60 = arith.constant 0 : index
    %c0_61 = arith.constant 0 : index
    %81 = vector.load %arg4[%c2_59, %c0_60, %c0_61] : memref<9x64x32xf32, #tpu.memory_space<vmem>>, vector<1x64x32xf32>
    %82 = vector.shape_cast %81 : vector<1x64x32xf32> to vector<64x32xf32>
    %cst_62 = arith.constant dense<0.000000e+00> : vector<256x32xf32>
    %83 = tpu.matmul %80, %82, %cst_62 {dimension_numbers = #tpu.dot_dimension_numbers<[1], [0], [0], [1], [0, 0, 1, 1], [], []>} : vector<256x64xf32>, vector<64x32xf32>, vector<256x32xf32> -> vector<256x32xf32>
    %84 = arith.addf %78, %83 : vector<256x32xf32>
    %c1_63 = arith.constant 1 : index
    %c0_64 = arith.constant 0 : index
    %c0_65 = arith.constant 0 : index
    %85 = vector.load %arg10[%c1_63, %c0_64, %c0_65] : memref<18x18x64xf32, #tpu.memory_space<vmem>>, vector<16x16x64xf32>
    %86 = vector.shape_cast %85 : vector<16x16x64xf32> to vector<256x64xf32>
    %c3_66 = arith.constant 3 : index
    %c0_67 = arith.constant 0 : index
    %c0_68 = arith.constant 0 : index
    %87 = vector.load %arg4[%c3_66, %c0_67, %c0_68] : memref<9x64x32xf32, #tpu.memory_space<vmem>>, vector<1x64x32xf32>
    %88 = vector.shape_cast %87 : vector<1x64x32xf32> to vector<64x32xf32>
    %cst_69 = arith.constant dense<0.000000e+00> : vector<256x32xf32>
    %89 = tpu.matmul %86, %88, %cst_69 {dimension_numbers = #tpu.dot_dimension_numbers<[1], [0], [0], [1], [0, 0, 1, 1], [], []>} : vector<256x64xf32>, vector<64x32xf32>, vector<256x32xf32> -> vector<256x32xf32>
    %90 = arith.addf %84, %89 : vector<256x32xf32>
    %c1_70 = arith.constant 1 : index
    %c1_71 = arith.constant 1 : index
    %c0_72 = arith.constant 0 : index
    %91 = vector.load %arg10[%c1_70, %c1_71, %c0_72] : memref<18x18x64xf32, #tpu.memory_space<vmem>>, vector<16x16x64xf32>
    %92 = vector.shape_cast %91 : vector<16x16x64xf32> to vector<256x64xf32>
    %c4_73 = arith.constant 4 : index
    %c0_74 = arith.constant 0 : index
    %c0_75 = arith.constant 0 : index
    %93 = vector.load %arg4[%c4_73, %c0_74, %c0_75] : memref<9x64x32xf32, #tpu.memory_space<vmem>>, vector<1x64x32xf32>
    %94 = vector.shape_cast %93 : vector<1x64x32xf32> to vector<64x32xf32>
    %cst_76 = arith.constant dense<0.000000e+00> : vector<256x32xf32>
    %95 = tpu.matmul %92, %94, %cst_76 {dimension_numbers = #tpu.dot_dimension_numbers<[1], [0], [0], [1], [0, 0, 1, 1], [], []>} : vector<256x64xf32>, vector<64x32xf32>, vector<256x32xf32> -> vector<256x32xf32>
    %96 = arith.addf %90, %95 : vector<256x32xf32>
    %c1_77 = arith.constant 1 : index
    %c2_78 = arith.constant 2 : index
    %c0_79 = arith.constant 0 : index
    %97 = vector.load %arg10[%c1_77, %c2_78, %c0_79] : memref<18x18x64xf32, #tpu.memory_space<vmem>>, vector<16x16x64xf32>
    %98 = vector.shape_cast %97 : vector<16x16x64xf32> to vector<256x64xf32>
    %c5_80 = arith.constant 5 : index
    %c0_81 = arith.constant 0 : index
    %c0_82 = arith.constant 0 : index
    %99 = vector.load %arg4[%c5_80, %c0_81, %c0_82] : memref<9x64x32xf32, #tpu.memory_space<vmem>>, vector<1x64x32xf32>
    %100 = vector.shape_cast %99 : vector<1x64x32xf32> to vector<64x32xf32>
    %cst_83 = arith.constant dense<0.000000e+00> : vector<256x32xf32>
    %101 = tpu.matmul %98, %100, %cst_83 {dimension_numbers = #tpu.dot_dimension_numbers<[1], [0], [0], [1], [0, 0, 1, 1], [], []>} : vector<256x64xf32>, vector<64x32xf32>, vector<256x32xf32> -> vector<256x32xf32>
    %102 = arith.addf %96, %101 : vector<256x32xf32>
    %c2_84 = arith.constant 2 : index
    %c0_85 = arith.constant 0 : index
    %c0_86 = arith.constant 0 : index
    %103 = vector.load %arg10[%c2_84, %c0_85, %c0_86] : memref<18x18x64xf32, #tpu.memory_space<vmem>>, vector<16x16x64xf32>
    %104 = vector.shape_cast %103 : vector<16x16x64xf32> to vector<256x64xf32>
    %c6_87 = arith.constant 6 : index
    %c0_88 = arith.constant 0 : index
    %c0_89 = arith.constant 0 : index
    %105 = vector.load %arg4[%c6_87, %c0_88, %c0_89] : memref<9x64x32xf32, #tpu.memory_space<vmem>>, vector<1x64x32xf32>
    %106 = vector.shape_cast %105 : vector<1x64x32xf32> to vector<64x32xf32>
    %cst_90 = arith.constant dense<0.000000e+00> : vector<256x32xf32>
    %107 = tpu.matmul %104, %106, %cst_90 {dimension_numbers = #tpu.dot_dimension_numbers<[1], [0], [0], [1], [0, 0, 1, 1], [], []>} : vector<256x64xf32>, vector<64x32xf32>, vector<256x32xf32> -> vector<256x32xf32>
    %108 = arith.addf %102, %107 : vector<256x32xf32>
    %c2_91 = arith.constant 2 : index
    %c1_92 = arith.constant 1 : index
    %c0_93 = arith.constant 0 : index
    %109 = vector.load %arg10[%c2_91, %c1_92, %c0_93] : memref<18x18x64xf32, #tpu.memory_space<vmem>>, vector<16x16x64xf32>
    %110 = vector.shape_cast %109 : vector<16x16x64xf32> to vector<256x64xf32>
    %c7_94 = arith.constant 7 : index
    %c0_95 = arith.constant 0 : index
    %c0_96 = arith.constant 0 : index
    %111 = vector.load %arg4[%c7_94, %c0_95, %c0_96] : memref<9x64x32xf32, #tpu.memory_space<vmem>>, vector<1x64x32xf32>
    %112 = vector.shape_cast %111 : vector<1x64x32xf32> to vector<64x32xf32>
    %cst_97 = arith.constant dense<0.000000e+00> : vector<256x32xf32>
    %113 = tpu.matmul %110, %112, %cst_97 {dimension_numbers = #tpu.dot_dimension_numbers<[1], [0], [0], [1], [0, 0, 1, 1], [], []>} : vector<256x64xf32>, vector<64x32xf32>, vector<256x32xf32> -> vector<256x32xf32>
    %114 = arith.addf %108, %113 : vector<256x32xf32>
    %c2_98 = arith.constant 2 : index
    %c2_99 = arith.constant 2 : index
    %c0_100 = arith.constant 0 : index
    %115 = vector.load %arg10[%c2_98, %c2_99, %c0_100] : memref<18x18x64xf32, #tpu.memory_space<vmem>>, vector<16x16x64xf32>
    %116 = vector.shape_cast %115 : vector<16x16x64xf32> to vector<256x64xf32>
    %c8_101 = arith.constant 8 : index
    %c0_102 = arith.constant 0 : index
    %c0_103 = arith.constant 0 : index
    %117 = vector.load %arg4[%c8_101, %c0_102, %c0_103] : memref<9x64x32xf32, #tpu.memory_space<vmem>>, vector<1x64x32xf32>
    %118 = vector.shape_cast %117 : vector<1x64x32xf32> to vector<64x32xf32>
    %cst_104 = arith.constant dense<0.000000e+00> : vector<256x32xf32>
    %119 = tpu.matmul %116, %118, %cst_104 {dimension_numbers = #tpu.dot_dimension_numbers<[1], [0], [0], [1], [0, 0, 1, 1], [], []>} : vector<256x64xf32>, vector<64x32xf32>, vector<256x32xf32> -> vector<256x32xf32>
    %120 = arith.addf %114, %119 : vector<256x32xf32>
    %c0_105 = arith.constant 0 : index
    %c0_106 = arith.constant 0 : index
    %121 = vector.load %arg5[%c0_105, %c0_106] : memref<1x32xf32, #tpu.memory_space<vmem>>, vector<1x32xf32>
    %122 = vector.broadcast %121 : vector<1x32xf32> to vector<256x32xf32>
    %123 = arith.addf %120, %122 : vector<256x32xf32>
    %cst_107 = arith.constant 0.000000e+00 : f32
    %124 = vector.broadcast %cst_107 : f32 to vector<256x32xf32>
    %125 = arith.maximumf %123, %124 : vector<256x32xf32>
    %cst_108 = arith.constant 0.000000e+00 : f32
    %126 = vector.broadcast %cst_108 : f32 to vector<18x18x32xf32>
    %c0_109 = arith.constant 0 : index
    %c0_110 = arith.constant 0 : index
    %c0_111 = arith.constant 0 : index
    %127 = vector.load %arg11[%c0_109, %c0_110, %c0_111] : memref<18x18x32xf32, #tpu.memory_space<vmem>>, vector<18x18x32xf32>
    tpu.vector_store %arg11[%c0_109, %c0_110, %c0_111], %126 {strides = array<i32>} : memref<18x18x32xf32, #tpu.memory_space<vmem>>, vector<18x18x32xf32>,
    %128 = vector.shape_cast %125 : vector<256x32xf32> to vector<16x16x32xf32>
    %c1_112 = arith.constant 1 : index
    %c1_113 = arith.constant 1 : index
    %c0_114 = arith.constant 0 : index
    %129 = vector.load %arg11[%c1_112, %c1_113, %c0_114] : memref<18x18x32xf32, #tpu.memory_space<vmem>>, vector<16x16x32xf32>
    tpu.vector_store %arg11[%c1_112, %c1_113, %c0_114], %128 {strides = array<i32>} : memref<18x18x32xf32, #tpu.memory_space<vmem>>, vector<16x16x32xf32>,
    %cst_115 = arith.constant 0.000000e+00 : f32
    %130 = vector.broadcast %cst_115 : f32 to vector<256x3xf32>
    %c0_116 = arith.constant 0 : index
    %c0_117 = arith.constant 0 : index
    %c0_118 = arith.constant 0 : index
    %131 = vector.load %arg11[%c0_116, %c0_117, %c0_118] : memref<18x18x32xf32, #tpu.memory_space<vmem>>, vector<16x16x32xf32>
    %132 = vector.shape_cast %131 : vector<16x16x32xf32> to vector<256x32xf32>
    %c0_119 = arith.constant 0 : index
    %c0_120 = arith.constant 0 : index
    %c0_121 = arith.constant 0 : index
    %133 = vector.load %arg6[%c0_119, %c0_120, %c0_121] : memref<9x32x3xf32, #tpu.memory_space<vmem>>, vector<1x32x3xf32>
    %134 = vector.shape_cast %133 : vector<1x32x3xf32> to vector<32x3xf32>
    %cst_122 = arith.constant dense<0.000000e+00> : vector<256x3xf32>
    %135 = tpu.matmul %132, %134, %cst_122 {dimension_numbers = #tpu.dot_dimension_numbers<[1], [0], [0], [1], [0, 0, 1, 1], [], []>} : vector<256x32xf32>, vector<32x3xf32>, vector<256x3xf32> -> vector<256x3xf32>
    %136 = arith.addf %130, %135 : vector<256x3xf32>
    %c0_123 = arith.constant 0 : index
    %c1_124 = arith.constant 1 : index
    %c0_125 = arith.constant 0 : index
    %137 = vector.load %arg11[%c0_123, %c1_124, %c0_125] : memref<18x18x32xf32, #tpu.memory_space<vmem>>, vector<16x16x32xf32>
    %138 = vector.shape_cast %137 : vector<16x16x32xf32> to vector<256x32xf32>
    %c1_126 = arith.constant 1 : index
    %c0_127 = arith.constant 0 : index
    %c0_128 = arith.constant 0 : index
    %139 = vector.load %arg6[%c1_126, %c0_127, %c0_128] : memref<9x32x3xf32, #tpu.memory_space<vmem>>, vector<1x32x3xf32>
    %140 = vector.shape_cast %139 : vector<1x32x3xf32> to vector<32x3xf32>
    %cst_129 = arith.constant dense<0.000000e+00> : vector<256x3xf32>
    %141 = tpu.matmul %138, %140, %cst_129 {dimension_numbers = #tpu.dot_dimension_numbers<[1], [0], [0], [1], [0, 0, 1, 1], [], []>} : vector<256x32xf32>, vector<32x3xf32>, vector<256x3xf32> -> vector<256x3xf32>
    %142 = arith.addf %136, %141 : vector<256x3xf32>
    %c0_130 = arith.constant 0 : index
    %c2_131 = arith.constant 2 : index
    %c0_132 = arith.constant 0 : index
    %143 = vector.load %arg11[%c0_130, %c2_131, %c0_132] : memref<18x18x32xf32, #tpu.memory_space<vmem>>, vector<16x16x32xf32>
    %144 = vector.shape_cast %143 : vector<16x16x32xf32> to vector<256x32xf32>
    %c2_133 = arith.constant 2 : index
    %c0_134 = arith.constant 0 : index
    %c0_135 = arith.constant 0 : index
    %145 = vector.load %arg6[%c2_133, %c0_134, %c0_135] : memref<9x32x3xf32, #tpu.memory_space<vmem>>, vector<1x32x3xf32>
    %146 = vector.shape_cast %145 : vector<1x32x3xf32> to vector<32x3xf32>
    %cst_136 = arith.constant dense<0.000000e+00> : vector<256x3xf32>
    %147 = tpu.matmul %144, %146, %cst_136 {dimension_numbers = #tpu.dot_dimension_numbers<[1], [0], [0], [1], [0, 0, 1, 1], [], []>} : vector<256x32xf32>, vector<32x3xf32>, vector<256x3xf32> -> vector<256x3xf32>
    %148 = arith.addf %142, %147 : vector<256x3xf32>
    %c1_137 = arith.constant 1 : index
    %c0_138 = arith.constant 0 : index
    %c0_139 = arith.constant 0 : index
    %149 = vector.load %arg11[%c1_137, %c0_138, %c0_139] : memref<18x18x32xf32, #tpu.memory_space<vmem>>, vector<16x16x32xf32>
    %150 = vector.shape_cast %149 : vector<16x16x32xf32> to vector<256x32xf32>
    %c3_140 = arith.constant 3 : index
    %c0_141 = arith.constant 0 : index
    %c0_142 = arith.constant 0 : index
    %151 = vector.load %arg6[%c3_140, %c0_141, %c0_142] : memref<9x32x3xf32, #tpu.memory_space<vmem>>, vector<1x32x3xf32>
    %152 = vector.shape_cast %151 : vector<1x32x3xf32> to vector<32x3xf32>
    %cst_143 = arith.constant dense<0.000000e+00> : vector<256x3xf32>
    %153 = tpu.matmul %150, %152, %cst_143 {dimension_numbers = #tpu.dot_dimension_numbers<[1], [0], [0], [1], [0, 0, 1, 1], [], []>} : vector<256x32xf32>, vector<32x3xf32>, vector<256x3xf32> -> vector<256x3xf32>
    %154 = arith.addf %148, %153 : vector<256x3xf32>
    %c1_144 = arith.constant 1 : index
    %c1_145 = arith.constant 1 : index
    %c0_146 = arith.constant 0 : index
    %155 = vector.load %arg11[%c1_144, %c1_145, %c0_146] : memref<18x18x32xf32, #tpu.memory_space<vmem>>, vector<16x16x32xf32>
    %156 = vector.shape_cast %155 : vector<16x16x32xf32> to vector<256x32xf32>
    %c4_147 = arith.constant 4 : index
    %c0_148 = arith.constant 0 : index
    %c0_149 = arith.constant 0 : index
    %157 = vector.load %arg6[%c4_147, %c0_148, %c0_149] : memref<9x32x3xf32, #tpu.memory_space<vmem>>, vector<1x32x3xf32>
    %158 = vector.shape_cast %157 : vector<1x32x3xf32> to vector<32x3xf32>
    %cst_150 = arith.constant dense<0.000000e+00> : vector<256x3xf32>
    %159 = tpu.matmul %156, %158, %cst_150 {dimension_numbers = #tpu.dot_dimension_numbers<[1], [0], [0], [1], [0, 0, 1, 1], [], []>} : vector<256x32xf32>, vector<32x3xf32>, vector<256x3xf32> -> vector<256x3xf32>
    %160 = arith.addf %154, %159 : vector<256x3xf32>
    %c1_151 = arith.constant 1 : index
    %c2_152 = arith.constant 2 : index
    %c0_153 = arith.constant 0 : index
    %161 = vector.load %arg11[%c1_151, %c2_152, %c0_153] : memref<18x18x32xf32, #tpu.memory_space<vmem>>, vector<16x16x32xf32>
    %162 = vector.shape_cast %161 : vector<16x16x32xf32> to vector<256x32xf32>
    %c5_154 = arith.constant 5 : index
    %c0_155 = arith.constant 0 : index
    %c0_156 = arith.constant 0 : index
    %163 = vector.load %arg6[%c5_154, %c0_155, %c0_156] : memref<9x32x3xf32, #tpu.memory_space<vmem>>, vector<1x32x3xf32>
    %164 = vector.shape_cast %163 : vector<1x32x3xf32> to vector<32x3xf32>
    %cst_157 = arith.constant dense<0.000000e+00> : vector<256x3xf32>
    %165 = tpu.matmul %162, %164, %cst_157 {dimension_numbers = #tpu.dot_dimension_numbers<[1], [0], [0], [1], [0, 0, 1, 1], [], []>} : vector<256x32xf32>, vector<32x3xf32>, vector<256x3xf32> -> vector<256x3xf32>
    %166 = arith.addf %160, %165 : vector<256x3xf32>
    %c2_158 = arith.constant 2 : index
    %c0_159 = arith.constant 0 : index
    %c0_160 = arith.constant 0 : index
    %167 = vector.load %arg11[%c2_158, %c0_159, %c0_160] : memref<18x18x32xf32, #tpu.memory_space<vmem>>, vector<16x16x32xf32>
    %168 = vector.shape_cast %167 : vector<16x16x32xf32> to vector<256x32xf32>
    %c6_161 = arith.constant 6 : index
    %c0_162 = arith.constant 0 : index
    %c0_163 = arith.constant 0 : index
    %169 = vector.load %arg6[%c6_161, %c0_162, %c0_163] : memref<9x32x3xf32, #tpu.memory_space<vmem>>, vector<1x32x3xf32>
    %170 = vector.shape_cast %169 : vector<1x32x3xf32> to vector<32x3xf32>
    %cst_164 = arith.constant dense<0.000000e+00> : vector<256x3xf32>
    %171 = tpu.matmul %168, %170, %cst_164 {dimension_numbers = #tpu.dot_dimension_numbers<[1], [0], [0], [1], [0, 0, 1, 1], [], []>} : vector<256x32xf32>, vector<32x3xf32>, vector<256x3xf32> -> vector<256x3xf32>
    %172 = arith.addf %166, %171 : vector<256x3xf32>
    %c2_165 = arith.constant 2 : index
    %c1_166 = arith.constant 1 : index
    %c0_167 = arith.constant 0 : index
    %173 = vector.load %arg11[%c2_165, %c1_166, %c0_167] : memref<18x18x32xf32, #tpu.memory_space<vmem>>, vector<16x16x32xf32>
    %174 = vector.shape_cast %173 : vector<16x16x32xf32> to vector<256x32xf32>
    %c7_168 = arith.constant 7 : index
    %c0_169 = arith.constant 0 : index
    %c0_170 = arith.constant 0 : index
    %175 = vector.load %arg6[%c7_168, %c0_169, %c0_170] : memref<9x32x3xf32, #tpu.memory_space<vmem>>, vector<1x32x3xf32>
    %176 = vector.shape_cast %175 : vector<1x32x3xf32> to vector<32x3xf32>
    %cst_171 = arith.constant dense<0.000000e+00> : vector<256x3xf32>
    %177 = tpu.matmul %174, %176, %cst_171 {dimension_numbers = #tpu.dot_dimension_numbers<[1], [0], [0], [1], [0, 0, 1, 1], [], []>} : vector<256x32xf32>, vector<32x3xf32>, vector<256x3xf32> -> vector<256x3xf32>
    %178 = arith.addf %172, %177 : vector<256x3xf32>
    %c2_172 = arith.constant 2 : index
    %c2_173 = arith.constant 2 : index
    %c0_174 = arith.constant 0 : index
    %179 = vector.load %arg11[%c2_172, %c2_173, %c0_174] : memref<18x18x32xf32, #tpu.memory_space<vmem>>, vector<16x16x32xf32>
    %180 = vector.shape_cast %179 : vector<16x16x32xf32> to vector<256x32xf32>
    %c8_175 = arith.constant 8 : index
    %c0_176 = arith.constant 0 : index
    %c0_177 = arith.constant 0 : index
    %181 = vector.load %arg6[%c8_175, %c0_176, %c0_177] : memref<9x32x3xf32, #tpu.memory_space<vmem>>, vector<1x32x3xf32>
    %182 = vector.shape_cast %181 : vector<1x32x3xf32> to vector<32x3xf32>
    %cst_178 = arith.constant dense<0.000000e+00> : vector<256x3xf32>
    %183 = tpu.matmul %180, %182, %cst_178 {dimension_numbers = #tpu.dot_dimension_numbers<[1], [0], [0], [1], [0, 0, 1, 1], [], []>} : vector<256x32xf32>, vector<32x3xf32>, vector<256x3xf32> -> vector<256x3xf32>
    %184 = arith.addf %178, %183 : vector<256x3xf32>
    %c0_179 = arith.constant 0 : index
    %c0_180 = arith.constant 0 : index
    %185 = vector.load %arg7[%c0_179, %c0_180] : memref<1x3xf32, #tpu.memory_space<vmem>>, vector<1x3xf32>
    %186 = vector.broadcast %185 : vector<1x3xf32> to vector<256x3xf32>
    %187 = arith.addf %184, %186 : vector<256x3xf32>
    %188 = arith.negf %187 : vector<256x3xf32>
    %189 = math.exp %188 : vector<256x3xf32>
    %cst_181 = arith.constant 1.000000e+00 : f32
    %190 = vector.broadcast %cst_181 : f32 to vector<256x3xf32>
    %191 = arith.addf %190, %189 : vector<256x3xf32>
    %192 = arith.divf %190, %191 : vector<256x3xf32>
    %c0_182 = arith.constant 0 : index
    %c0_183 = arith.constant 0 : index
    %193 = vector.load %arg8[%c0_182, %c0_183] : memref<256x1024xf32, #tpu.memory_space<vmem>>, vector<256x1024xf32>
    %cst_184 = arith.constant dense<0.000000e+00> : vector<3x1024xf32>
    %194 = tpu.matmul %192, %193, %cst_184 {dimension_numbers = #tpu.dot_dimension_numbers<[0], [0], [1], [1], [0, 1, 1, 1], [], []>} : vector<256x3xf32>, vector<256x1024xf32>, vector<3x1024xf32> -> vector<3x1024xf32>
    %c0_185 = arith.constant 0 : index
    %c0_186 = arith.constant 0 : index
    %c0_187 = arith.constant 0 : index
    %195 = vector.load %arg9[%c0_185, %c0_186, %c0_187] : memref<1x3x1024xf32, #tpu.memory_space<vmem>>, vector<1x3x1024xf32>
    %196 = vector.shape_cast %195 : vector<1x3x1024xf32> to vector<3x1024xf32>
    %197 = vector.shape_cast %194 : vector<3x1024xf32> to vector<1x3x1024xf32>
    tpu.vector_store %arg9[%c0_185, %c0_186, %c0_187], %197 {strides = array<i32>} : memref<1x3x1024xf32, #tpu.memory_space<vmem>>, vector<1x3x1024xf32>,
    return
  }
  func.func @transform_0(%arg0: i32) -> (i32, i32, i32, i32) {
    %c0_i32 = arith.constant 0 : i32
    %c0_i32_0 = arith.constant 0 : i32
    %c0_i32_1 = arith.constant 0 : i32
    %c0_i32_2 = arith.constant 0 : i32
    return %arg0, %c0_i32, %c0_i32_0, %c0_i32_1 : i32, i32, i32, i32
  }
  func.func @transform_1(%arg0: i32) -> (i32, i32, i32) {
    %c0_i32 = arith.constant 0 : i32
    %c0_i32_0 = arith.constant 0 : i32
    %c0_i32_1 = arith.constant 0 : i32
    %c0_i32_2 = arith.constant 0 : i32
    return %c0_i32, %c0_i32_0, %c0_i32_1 : i32, i32, i32
  }
  func.func @transform_2(%arg0: i32) -> (i32, i32) {
    %c0_i32 = arith.constant 0 : i32
    %c0_i32_0 = arith.constant 0 : i32
    %c0_i32_1 = arith.constant 0 : i32
    return %c0_i32, %c0_i32_0 : i32, i32
  }
  func.func @transform_3(%arg0: i32) -> (i32, i32, i32) {
    %c0_i32 = arith.constant 0 : i32
    %c0_i32_0 = arith.constant 0 : i32
    %c0_i32_1 = arith.constant 0 : i32
    %c0_i32_2 = arith.constant 0 : i32
    return %c0_i32, %c0_i32_0, %c0_i32_1 : i32, i32, i32
  }
  func.func @transform_4(%arg0: i32) -> (i32, i32) {
    %c0_i32 = arith.constant 0 : i32
    %c0_i32_0 = arith.constant 0 : i32
    %c0_i32_1 = arith.constant 0 : i32
    return %c0_i32, %c0_i32_0 : i32, i32
  }
  func.func @transform_5(%arg0: i32) -> (i32, i32, i32) {
    %c0_i32 = arith.constant 0 : i32
    %c0_i32_0 = arith.constant 0 : i32
    %c0_i32_1 = arith.constant 0 : i32
    %c0_i32_2 = arith.constant 0 : i32
    return %c0_i32, %c0_i32_0, %c0_i32_1 : i32, i32, i32
  }
  func.func @transform_6(%arg0: i32) -> (i32, i32) {
    %c0_i32 = arith.constant 0 : i32
    %c0_i32_0 = arith.constant 0 : i32
    %c0_i32_1 = arith.constant 0 : i32
    return %c0_i32, %c0_i32_0 : i32, i32
  }
  func.func @transform_7(%arg0: i32) -> (i32, i32) {
    %c0_i32 = arith.constant 0 : i32
    %c0_i32_0 = arith.constant 0 : i32
    %c0_i32_1 = arith.constant 0 : i32
    return %c0_i32, %c0_i32_0 : i32, i32
  }
  func.func @transform_8(%arg0: i32) -> (i32, i32, i32) {
    %c0_i32 = arith.constant 0 : i32
    %c0_i32_0 = arith.constant 0 : i32
    %c0_i32_1 = arith.constant 0 : i32
    return %arg0, %c0_i32, %c0_i32_0 : i32, i32, i32
  }
}

</mosaic_0001>

<llo_original>
// kernel: tpu_custom_call.1
$region0: #{tpu_custom_call.1}
  #allocation0 [shape = 'u32[]', space=smem, size = 0x4, offset = 0x4, fixed_abs, tag = 'smem constant byte address 0x4 - core index']
  #allocation1 [shape = 'u32[72,128]{1,0:T(1,128)}', space=vmem, size = 0x9000, scoped, tag = 'internal scratch']
  #allocation2 [shape = 'f32[18,18,64]{2,1,0:T(8,128)}', space=vmem, size = 0x36000, scoped, tag = 'scratch operand']
  #allocation3 [shape = 'f32[18,18,32]{2,1,0:T(8,128)}', space=vmem, size = 0x36000, scoped, tag = 'scratch operand']
  %s0 = inlined_call_operand.vmem [shape: f32[2,18,18,4], index: 0, kind: input, shape index: {}]
  %s1 = inlined_call_operand.vmem [shape: f32[9,4,64], index: 1, kind: input, shape index: {}]
  %s2 = inlined_call_operand.vmem [shape: f32[1,64], index: 2, kind: input, shape index: {}]
  %s3 = inlined_call_operand.vmem [shape: f32[9,64,32], index: 3, kind: input, shape index: {}]
  %s4 = inlined_call_operand.vmem [shape: f32[1,32], index: 4, kind: input, shape index: {}]
  %s5 = inlined_call_operand.vmem [shape: f32[9,32,3], index: 5, kind: input, shape index: {}]
  %s6 = inlined_call_operand.vmem [shape: f32[1,3], index: 6, kind: input, shape index: {}]
  %s7 = inlined_call_operand.vmem [shape: f32[256,1024], index: 7, kind: input, shape index: {}]
  %s8 = inlined_call_operand.vmem [shape: f32[2,3,1024], index: 8, kind: output, shape index: {}]
  %s9 = sld [smem:[#allocation0]]
  $region65: #{tpu_custom_call.1} parent=0
    _
  %s11 = ssub.s32 1, %s9
  %s12 = scalar_select 0, %s11, %s9
  loop: start=0, step=1, limit=4
  $region2: #{tpu_custom_call.1} parent=0 // loop_pre_header
    _
  $region3: #{tpu_custom_call.1} parent=0 // loop_header
    %s14 = sphi 0, %s18
    %p15 = scmp.ge.s32.totalorder %s14, 4
    %s24 = sphi 0, %s26
    %s27 = sphi 0, %s24
    %s28 = sphi 0, %s27
    %s44 = sphi 0, %s28
    %s48 = sphi 0, %s48
    %s50 = sphi 0, %s48
    %s51 = sphi 0, %s50
    %s65 = sphi 0, %s51
    %s69 = sphi 0, %s69
    %s71 = sphi 0, %s69
    %s72 = sphi 0, %s71
    %s86 = sphi 0, %s72
    %s90 = sphi 0, %s90
    %s92 = sphi 0, %s90
    %s93 = sphi 0, %s92
    %s107 = sphi 0, %s93
    %s111 = sphi 0, %s111
    %s113 = sphi 0, %s111
    %s114 = sphi 0, %s113
    %s128 = sphi 0, %s114
    %s132 = sphi 0, %s132
    %s134 = sphi 0, %s132
    %s135 = sphi 0, %s134
    %s149 = sphi 0, %s135
    %s153 = sphi 0, %s153
    %s155 = sphi 0, %s153
    %s156 = sphi 0, %s155
    %s170 = sphi 0, %s156
    %s174 = sphi 0, %s174
    %s176 = sphi 0, %s174
    %s177 = sphi 0, %s176
    %s191 = sphi 0, %s177
    %s197 = sphi 0, %s199
    %s200 = sphi 0, %s197
    %s201 = sphi 0, %s200
    %s217 = sphi 0, %s201
  $region4: #{tpu_custom_call.1} parent=0 // loop_header_branch
    %17 = sbr.rel (%p15) target = $region8
  $region5: #{tpu_custom_call.1} parent=0 // loop_body
    %s19 = ssub.s32 %s14, 1
    %s20 = ssub.s32 %s14, 2
    %s21 = sadd.s32 %s14, 1
    %s22 = ssub.s32 %s14, %s21
    %p23 = scmp.eq.s32.totalorder %s22, 0
    %s25 = sadd.s32 %s24, 1
    %s26 = scalar_select %p23, %s24, %s25
    %p29 = pneg %p23
    %p30 = scmp.eq.s32.totalorder %s14, 1
    %p31 = por %p29, %p30
    %p32 = scmp.ne.s32.totalorder %s24, %s27
    %p33 = scmp.eq.s32.totalorder %s14, 0
    %p34 = por %p32, %p33
    %p35 = scmp.ne.s32.totalorder %s24, %s27
    %p36 = scmp.eq.s32.totalorder %s19, 1
    %p37 = por %p35, %p36
    %p38 = scmp.ne.s32.totalorder %s27, %s28
    %p39 = scmp.eq.s32.totalorder %s19, 0
    %p40 = por %p38, %p39
    %p41 = scmp.ne.s32.totalorder %s27, %s28
    %p42 = scmp.eq.s32.totalorder %s20, 1
    %p43 = por %p41, %p42
    %p45 = scmp.ne.s32.totalorder %s28, %s44
    %p46 = scmp.eq.s32.totalorder %s20, 0
    %p47 = por %p45, %p46
    %s49 = sadd.s32 %s48, 1
    %p52 = scmp.eq.s32.totalorder %s14, 1
    %p53 = scmp.ne.s32.totalorder %s48, %s50
    %p54 = scmp.eq.s32.totalorder %s14, 0
    %p55 = por %p53, %p54
    %p56 = scmp.ne.s32.totalorder %s48, %s50
    %p57 = scmp.eq.s32.totalorder %s19, 1
    %p58 = por %p56, %p57
    %p59 = scmp.ne.s32.totalorder %s50, %s51
    %p60 = scmp.eq.s32.totalorder %s19, 0
    %p61 = por %p59, %p60
    %p62 = scmp.ne.s32.totalorder %s50, %s51
    %p63 = scmp.eq.s32.totalorder %s20, 1
    %p64 = por %p62, %p63
    %p66 = scmp.ne.s32.totalorder %s51, %s65
    %p67 = scmp.eq.s32.totalorder %s20, 0
    %p68 = por %p66, %p67
    %s70 = sadd.s32 %s69, 1
    %p73 = scmp.eq.s32.totalorder %s14, 1
    %p74 = scmp.ne.s32.totalorder %s69, %s71
    %p75 = scmp.eq.s32.totalorder %s14, 0
    %p76 = por %p74, %p75
    %p77 = scmp.ne.s32.totalorder %s69, %s71
    %p78 = scmp.eq.s32.totalorder %s19, 1
    %p79 = por %p77, %p78
    %p80 = scmp.ne.s32.totalorder %s71, %s72
    %p81 = scmp.eq.s32.totalorder %s19, 0
    %p82 = por %p80, %p81
    %p83 = scmp.ne.s32.totalorder %s71, %s72
    %p84 = scmp.eq.s32.totalorder %s20, 1
    %p85 = por %p83, %p84
    %p87 = scmp.ne.s32.totalorder %s72, %s86
    %p88 = scmp.eq.s32.totalorder %s20, 0
    %p89 = por %p87, %p88
    %s91 = sadd.s32 %s90, 1
    %p94 = scmp.eq.s32.totalorder %s14, 1
    %p95 = scmp.ne.s32.totalorder %s90, %s92
    %p96 = scmp.eq.s32.totalorder %s14, 0
    %p97 = por %p95, %p96
    %p98 = scmp.ne.s32.totalorder %s90, %s92
    %p99 = scmp.eq.s32.totalorder %s19, 1
    %p100 = por %p98, %p99
    %p101 = scmp.ne.s32.totalorder %s92, %s93
    %p102 = scmp.eq.s32.totalorder %s19, 0
    %p103 = por %p101, %p102
    %p104 = scmp.ne.s32.totalorder %s92, %s93
    %p105 = scmp.eq.s32.totalorder %s20, 1
    %p106 = por %p104, %p105
    %p108 = scmp.ne.s32.totalorder %s93, %s107
    %p109 = scmp.eq.s32.totalorder %s20, 0
    %p110 = por %p108, %p109
    %s112 = sadd.s32 %s111, 1
    %p115 = scmp.eq.s32.totalorder %s14, 1
    %p116 = scmp.ne.s32.totalorder %s111, %s113
    %p117 = scmp.eq.s32.totalorder %s14, 0
    %p118 = por %p116, %p117
    %p119 = scmp.ne.s32.totalorder %s111, %s113
    %p120 = scmp.eq.s32.totalorder %s19, 1
    %p121 = por %p119, %p120
    %p122 = scmp.ne.s32.totalorder %s113, %s114
    %p123 = scmp.eq.s32.totalorder %s19, 0
    %p124 = por %p122, %p123
    %p125 = scmp.ne.s32.totalorder %s113, %s114
    %p126 = scmp.eq.s32.totalorder %s20, 1
    %p127 = por %p125, %p126
    %p129 = scmp.ne.s32.totalorder %s114, %s128
    %p130 = scmp.eq.s32.totalorder %s20, 0
    %p131 = por %p129, %p130
    %s133 = sadd.s32 %s132, 1
    %p136 = scmp.eq.s32.totalorder %s14, 1
    %p137 = scmp.ne.s32.totalorder %s132, %s134
    %p138 = scmp.eq.s32.totalorder %s14, 0
    %p139 = por %p137, %p138
    %p140 = scmp.ne.s32.totalorder %s132, %s134
    %p141 = scmp.eq.s32.totalorder %s19, 1
    %p142 = por %p140, %p141
    %p143 = scmp.ne.s32.totalorder %s134, %s135
    %p144 = scmp.eq.s32.totalorder %s19, 0
    %p145 = por %p143, %p144
    %p146 = scmp.ne.s32.totalorder %s134, %s135
    %p147 = scmp.eq.s32.totalorder %s20, 1
    %p148 = por %p146, %p147
    %p150 = scmp.ne.s32.totalorder %s135, %s149
    %p151 = scmp.eq.s32.totalorder %s20, 0
    %p152 = por %p150, %p151
    %s154 = sadd.s32 %s153, 1
    %p157 = scmp.eq.s32.totalorder %s14, 1
    %p158 = scmp.ne.s32.totalorder %s153, %s155
    %p159 = scmp.eq.s32.totalorder %s14, 0
    %p160 = por %p158, %p159
    %p161 = scmp.ne.s32.totalorder %s153, %s155
    %p162 = scmp.eq.s32.totalorder %s19, 1
    %p163 = por %p161, %p162
    %p164 = scmp.ne.s32.totalorder %s155, %s156
    %p165 = scmp.eq.s32.totalorder %s19, 0
    %p166 = por %p164, %p165
    %p167 = scmp.ne.s32.totalorder %s155, %s156
    %p168 = scmp.eq.s32.totalorder %s20, 1
    %p169 = por %p167, %p168
    %p171 = scmp.ne.s32.totalorder %s156, %s170
    %p172 = scmp.eq.s32.totalorder %s20, 0
    %p173 = por %p171, %p172
    %s175 = sadd.s32 %s174, 1
    %p178 = scmp.eq.s32.totalorder %s14, 1
    %p179 = scmp.ne.s32.totalorder %s174, %s176
    %p180 = scmp.eq.s32.totalorder %s14, 0
    %p181 = por %p179, %p180
    %p182 = scmp.ne.s32.totalorder %s174, %s176
    %p183 = scmp.eq.s32.totalorder %s19, 1
    %p184 = por %p182, %p183
    %p185 = scmp.ne.s32.totalorder %s176, %s177
    %p186 = scmp.eq.s32.totalorder %s19, 0
    %p187 = por %p185, %p186
    %p188 = scmp.ne.s32.totalorder %s176, %s177
    %p189 = scmp.eq.s32.totalorder %s20, 1
    %p190 = por %p188, %p189
    %p192 = scmp.ne.s32.totalorder %s177, %s191
    %p193 = scmp.eq.s32.totalorder %s20, 0
    %p194 = por %p192, %p193
    %s195 = ssub.s32 %s14, %s21
    %p196 = scmp.eq.s32.totalorder %s195, 0
    %s198 = sadd.s32 %s197, 1
    %s199 = scalar_select %p196, %s197, %s198
    %p202 = pneg %p196
    %p203 = scmp.eq.s32.totalorder %s14, 1
    %p204 = por %p202, %p203
    %p205 = scmp.ne.s32.totalorder %s197, %s200
    %p206 = scmp.eq.s32.totalorder %s14, 0
    %p207 = por %p205, %p206
    %p208 = scmp.ne.s32.totalorder %s197, %s200
    %p209 = scmp.eq.s32.totalorder %s19, 1
    %p210 = por %p208, %p209
    %p211 = scmp.ne.s32.totalorder %s200, %s201
    %p212 = scmp.eq.s32.totalorder %s19, 0
    %p213 = por %p211, %p212
    %p214 = scmp.ne.s32.totalorder %s200, %s201
    %p215 = scmp.eq.s32.totalorder %s20, 1
    %p216 = por %p214, %p215
    %p218 = scmp.ne.s32.totalorder %s201, %s217
    %p219 = scmp.eq.s32.totalorder %s20, 0
    %p220 = por %p218, %p219
    %p221 = scmp.le.s32.totalorder 1, %s14
    %p222 = scmp.lt.s32.totalorder %s14, 3
    %p223 = pnand %p221, %p222
    %p224 = pneg %p223
    // Predicated region
    $region9: #{tpu_custom_call.1} parent=5 // pred_check
      _
    $region10: #{tpu_custom_call.1} parent=5 // pred_check_branch
      %226 = sbr.rel (%p223) target = $region12
    $region11: #{tpu_custom_call.1} parent=5 // pred_region
      %s227 = ssub.s32 %s14, 1
      // Predicated region
      $region13: #{tpu_custom_call.1} parent=11 // pred_check
        %p228 = pneg %p61
      $region14: #{tpu_custom_call.1} parent=11 // pred_check_branch
        %230 = sbr.rel (%p228) target = $region16
      $region15: #{tpu_custom_call.1} parent=11 // pred_region
        _
      $region16: #{tpu_custom_call.1} parent=11 // pred_fallthru
        _
      // Predicated region
      $region17: #{tpu_custom_call.1} parent=11 // pred_check
        %p231 = pneg %p82
      $region18: #{tpu_custom_call.1} parent=11 // pred_check_branch
        %233 = sbr.rel (%p231) target = $region20
      $region19: #{tpu_custom_call.1} parent=11 // pred_region
        _
      $region20: #{tpu_custom_call.1} parent=11 // pred_fallthru
        _
      // Predicated region
      $region21: #{tpu_custom_call.1} parent=11 // pred_check
        %p234 = pneg %p103
      $region22: #{tpu_custom_call.1} parent=11 // pred_check_branch
        %236 = sbr.rel (%p234) target = $region24
      $region23: #{tpu_custom_call.1} parent=11 // pred_region
        _
      $region24: #{tpu_custom_call.1} parent=11 // pred_fallthru
        _
      // Predicated region
      $region25: #{tpu_custom_call.1} parent=11 // pred_check
        %p237 = pneg %p124
      $region26: #{tpu_custom_call.1} parent=11 // pred_check_branch
        %239 = sbr.rel (%p237) target = $region28
      $region27: #{tpu_custom_call.1} parent=11 // pred_region
        _
      $region28: #{tpu_custom_call.1} parent=11 // pred_fallthru
        _
      // Predicated region
      $region29: #{tpu_custom_call.1} parent=11 // pred_check
        %p240 = pneg %p145
      $region30: #{tpu_custom_call.1} parent=11 // pred_check_branch
        %242 = sbr.rel (%p240) target = $region32
      $region31: #{tpu_custom_call.1} parent=11 // pred_region
        _
      $region32: #{tpu_custom_call.1} parent=11 // pred_fallthru
        _
      // Predicated region
      $region33: #{tpu_custom_call.1} parent=11 // pred_check
        %p243 = pneg %p166
      $region34: #{tpu_custom_call.1} parent=11 // pred_check_branch
        %245 = sbr.rel (%p243) target = $region36
      $region35: #{tpu_custom_call.1} parent=11 // pred_region
        _
      $region36: #{tpu_custom_call.1} parent=11 // pred_fallthru
        _
      // Predicated region
      $region37: #{tpu_custom_call.1} parent=11 // pred_check
        %p246 = pneg %p187
      $region38: #{tpu_custom_call.1} parent=11 // pred_check_branch
        %248 = sbr.rel (%p246) target = $region40
      $region39: #{tpu_custom_call.1} parent=11 // pred_region
        _
      $region40: #{tpu_custom_call.1} parent=11 // pred_fallthru
        _
    $region12: #{tpu_custom_call.1} parent=5 // pred_fallthru
      _
    %p249 = scmp.lt.s32.totalorder %s14, 2
    // Predicated region
    $region41: #{tpu_custom_call.1} parent=5 // pred_check
      %p250 = pneg %p249
    $region42: #{tpu_custom_call.1} parent=5 // pred_check_branch
      %252 = sbr.rel (%p250) target = $region44
    $region43: #{tpu_custom_call.1} parent=5 // pred_region
      // Predicated region
      $region45: #{tpu_custom_call.1} parent=43 // pred_check
        %p253 = pneg %p34
      $region46: #{tpu_custom_call.1} parent=43 // pred_check_branch
        %255 = sbr.rel (%p253) target = $region48
      $region47: #{tpu_custom_call.1} parent=43 // pred_region
        %p256 = scmp.lt.s32.totalorder %s14, 1
        %s257 = scalar_select %p256, %s14, 1
        %s258 = smul.addr %s257, 54
        %s259 = smul.addr %s258, 8
        %s260 = scalar_lea.vmem %s0, %s259
      $region48: #{tpu_custom_call.1} parent=43 // pred_fallthru
        _
    $region44: #{tpu_custom_call.1} parent=5 // pred_fallthru
      _
    %p261 = scmp.le.s32.totalorder 1, %s14
    %p262 = scmp.lt.s32.totalorder %s14, 3
    %p263 = pnand %p261, %p262
    %p264 = pneg %p263
    // Predicated region
    $region49: #{tpu_custom_call.1} parent=5 // pred_check
      _
    $region50: #{tpu_custom_call.1} parent=5 // pred_check_branch
      %266 = sbr.rel (%p263) target = $region52
    $region51: #{tpu_custom_call.1} parent=5 // pred_region
      %s267 = ssub.s32 %s14, 1
      %p268 = scmp.lt.s32.totalorder %s19, 1
      %s269 = scalar_select %p268, %s19, 1
      %s270 = smul.addr %s269, 54
      %s271 = smul.addr %s270, 8
      %s272 = scalar_lea.vmem %s0, %s271
      %p273 = pneg %p40
      %p274 = pneg %p37
      %p275 = pneg %p61
      %p276 = pneg %p58
      %p277 = pneg %p82
      %p278 = pneg %p79
      %p279 = pneg %p103
      %p280 = pneg %p100
      %p281 = pneg %p124
      %p282 = pneg %p121
      %p283 = pneg %p145
      %p284 = pneg %p142
      %p285 = pneg %p166
      %p286 = pneg %p163
      %p287 = pneg %p187
      %p288 = pneg %p184
      %p289 = pneg %p213
      %p290 = pneg %p210
      %p291 = scmp.lt.s32.totalorder %s19, 1
      %s292 = scalar_select %p291, %s19, 1
      %s293 = smul.addr %s292, 8
      %s294 = smul.addr %s293, 4
      %s295 = scalar_lea.vmem %s8, %s294
      %p296 = scmp.lt.s32.totalorder %s19, 1
      %s297 = scalar_select %p296, %s19, 1
      %s298 = smul.addr %s297, 54
      %s299 = smul.addr %s298, 8
      %s300 = scalar_lea.vmem %s0, %s299
      %p301 = scmp.lt.s32.totalorder %s19, 1
      %s302 = scalar_select %p301, %s19, 1
      %s303 = smul.addr %s302, 8
      %s304 = smul.addr %s303, 4
      %s305 = scalar_lea.vmem %s8, %s304
      %v306 = vld [vmem:[%s300] sm:$0xff]
      %v307 = vld [vmem:[%s300 + $0x8] sm:$0xff]
      %v308 = vld [vmem:[%s300 + $0x10] sm:$0x3]
      %v309 = vld [vmem:[%s300 + $0x18] sm:$0xff]
      %v310 = vld [vmem:[%s300 + $0x20] sm:$0xff]
      %v311 = vld [vmem:[%s300 + $0x28] sm:$0x3]
      %v312 = vld [vmem:[%s300 + $0x30] sm:$0xff]
      %v313 = vld [vmem:[%s300 + $0x38] sm:$0xff]
      %v314 = vld [vmem:[%s300 + $0x40] sm:$0x3]
      %v315 = vld [vmem:[%s300 + $0x48] sm:$0xff]
      %v316 = vld [vmem:[%s300 + $0x50] sm:$0xff]
      %v317 = vld [vmem:[%s300 + $0x58] sm:$0x3]
      %v318 = vld [vmem:[%s300 + $0x60] sm:$0xff]
      %v319 = vld [vmem:[%s300 + $0x68] sm:$0xff]
      %v320 = vld [vmem:[%s300 + $0x70] sm:$0x3]
      %v321 = vld [vmem:[%s300 + $0x78] sm:$0xff]
      %v322 = vld [vmem:[%s300 + $0x80] sm:$0xff]
      %v323 = vld [vmem:[%s300 + $0x88] sm:$0x3]
      %v324 = vld [vmem:[%s300 + $0x90] sm:$0xff]
      %v325 = vld [vmem:[%s300 + $0x98] sm:$0xff]
      %v326 = vld [vmem:[%s300 + $0xa0] sm:$0x3]
      %v327 = vld [vmem:[%s300 + $0xa8] sm:$0xff]
      %v328 = vld [vmem:[%s300 + $0xb0] sm:$0xff]
      %v329 = vld [vmem:[%s300 + $0xb8] sm:$0x3]
      %v330 = vld [vmem:[%s300 + $0xc0] sm:$0xff]
      %v331 = vld [vmem:[%s300 + $0xc8] sm:$0xff]
      %v332 = vld [vmem:[%s300 + $0xd0] sm:$0x3]
      %v333 = vld [vmem:[%s300 + $0xd8] sm:$0xff]
      %v334 = vld [vmem:[%s300 + $0xe0] sm:$0xff]
      %v335 = vld [vmem:[%s300 + $0xe8] sm:$0x3]
      %v336 = vld [vmem:[%s300 + $0xf0] sm:$0xff]
      %v337 = vld [vmem:[%s300 + $0xf8] sm:$0xff]
      %v338 = vld [vmem:[%s300 + $0x100] sm:$0x3]
      %v339 = vld [vmem:[%s300 + $0x108] sm:$0xff]
      %v340 = vld [vmem:[%s300 + $0x110] sm:$0xff]
      %v341 = vld [vmem:[%s300 + $0x118] sm:$0x3]
      %v342 = vld [vmem:[%s300 + $0x120] sm:$0xff]
      %v343 = vld [vmem:[%s300 + $0x128] sm:$0xff]
      %v344 = vld [vmem:[%s300 + $0x130] sm:$0x3]
      %v345 = vld [vmem:[%s300 + $0x138] sm:$0xff]
      %v346 = vld [vmem:[%s300 + $0x140] sm:$0xff]
      %v347 = vld [vmem:[%s300 + $0x148] sm:$0x3]
      %v348 = vld [vmem:[%s300 + $0x150] sm:$0xff]
      %v349 = vld [vmem:[%s300 + $0x158] sm:$0xff]
      %v350 = vld [vmem:[%s300 + $0x160] sm:$0x3]
      %v351 = vld [vmem:[%s300 + $0x168] sm:$0xff]
      %v352 = vld [vmem:[%s300 + $0x170] sm:$0xff]
      %v353 = vld [vmem:[%s300 + $0x178] sm:$0x3]
      %v354 = vld [vmem:[%s300 + $0x180] sm:$0xff]
      %v355 = vld [vmem:[%s300 + $0x188] sm:$0xff]
      %v356 = vld [vmem:[%s300 + $0x190] sm:$0x3]
      %v357 = vld [vmem:[%s300 + $0x198] sm:$0xff]
      %v358 = vld [vmem:[%s300 + $0x1a0] sm:$0xff]
      %v359 = vld [vmem:[%s300 + $0x1a8] sm:$0x3]
      %v360 = vld [vmem:[%s1] sm:$0xf]
      %vm409 = vcmask 1046528
      %v410 = vrot.slane %v306, 1
      %v411 = vrot.slane %v307, 1
      %v412 = vsel %vm409, %v410, %v411
      %v413 = vrot.slane %v308, 1
      %v414 = vsel %vm409, %v411, %v413
      %v415 = vrot.slane %v309, 1
      %v416 = vrot.slane %v310, 1
      %v417 = vsel %vm409, %v415, %v416
      %v418 = vrot.slane %v311, 1
      %v419 = vsel %vm409, %v416, %v418
      %v420 = vrot.slane %v312, 1
      %v421 = vrot.slane %v313, 1
      %v422 = vsel %vm409, %v420, %v421
      %v423 = vrot.slane %v314, 1
      %v424 = vsel %vm409, %v421, %v423
      %v425 = vrot.slane %v315, 1
      %v426 = vrot.slane %v316, 1
      %v427 = vsel %vm409, %v425, %v426
      %v428 = vrot.slane %v317, 1
      %v429 = vsel %vm409, %v426, %v428
      %v430 = vrot.slane %v318, 1
      %v431 = vrot.slane %v319, 1
      %v432 = vsel %vm409, %v430, %v431
      %v433 = vrot.slane %v320, 1
      %v434 = vsel %vm409, %v431, %v433
      %v435 = vrot.slane %v321, 1
      %v436 = vrot.slane %v322, 1
      %v437 = vsel %vm409, %v435, %v436
      %v438 = vrot.slane %v323, 1
      %v439 = vsel %vm409, %v436, %v438
      %v440 = vrot.slane %v324, 1
      %v441 = vrot.slane %v325, 1
      %v442 = vsel %vm409, %v440, %v441
      %v443 = vrot.slane %v326, 1
      %v444 = vsel %vm409, %v441, %v443
      %v445 = vrot.slane %v327, 1
      %v446 = vrot.slane %v328, 1
      %v447 = vsel %vm409, %v445, %v446
      %v448 = vrot.slane %v329, 1
      %v449 = vsel %vm409, %v446, %v448
      %v450 = vrot.slane %v330, 1
      %v451 = vrot.slane %v331, 1
      %v452 = vsel %vm409, %v450, %v451
      %v453 = vrot.slane %v332, 1
      %v454 = vsel %vm409, %v451, %v453
      %v455 = vrot.slane %v333, 1
      %v456 = vrot.slane %v334, 1
      %v457 = vsel %vm409, %v455, %v456
      %v458 = vrot.slane %v335, 1
      %v459 = vsel %vm409, %v456, %v458
      %v460 = vrot.slane %v336, 1
      %v461 = vrot.slane %v337, 1
      %v462 = vsel %vm409, %v460, %v461
      %v463 = vrot.slane %v338, 1
      %v464 = vsel %vm409, %v461, %v463
      %v465 = vrot.slane %v339, 1
      %v466 = vrot.slane %v340, 1
      %v467 = vsel %vm409, %v465, %v466
      %v468 = vrot.slane %v341, 1
      %v469 = vsel %vm409, %v466, %v468
      %v470 = vrot.slane %v342, 1
      %v471 = vrot.slane %v343, 1
      %v472 = vsel %vm409, %v470, %v471
      %v473 = vrot.slane %v344, 1
      %v474 = vsel %vm409, %v471, %v473
      %v475 = vrot.slane %v345, 1
      %v476 = vrot.slane %v346, 1
      %v477 = vsel %vm409, %v475, %v476
      %v478 = vrot.slane %v347, 1
      %v479 = vsel %vm409, %v476, %v478
      %v480 = vrot.slane %v348, 1
      %v481 = vrot.slane %v349, 1
      %v482 = vsel %vm409, %v480, %v481
      %v483 = vrot.slane %v350, 1
      %v484 = vsel %vm409, %v481, %v483
      %v485 = vrot.slane %v351, 1
      %v486 = vrot.slane %v352, 1
      %v487 = vsel %vm409, %v485, %v486
      %v488 = vrot.slane %v353, 1
      %v489 = vsel %vm409, %v486, %v488
      %s490 = scalar_lea.vmem %s1, 4
      %v491 = vld [vmem:[%s490] sm:$0xf]
      %vm492 = vcmask 31744
      %v493 = vsel %vm492, %v412, 0
      %v495 = vsel %vm492, %v414, 0
      %v497 = vsel %vm492, %v417, 0
      %v499 = vsel %vm492, %v419, 0
      %v501 = vsel %vm492, %v422, 0
      %v503 = vsel %vm492, %v424, 0
      %v505 = vsel %vm492, %v427, 0
      %v507 = vsel %vm492, %v429, 0
      %v509 = vsel %vm492, %v432, 0
      %v511 = vsel %vm492, %v434, 0
      %v513 = vsel %vm492, %v437, 0
      %v515 = vsel %vm492, %v439, 0
      %v517 = vsel %vm492, %v442, 0
      %v519 = vsel %vm492, %v444, 0
      %v521 = vsel %vm492, %v447, 0
      %v523 = vsel %vm492, %v449, 0
      %v525 = vsel %vm492, %v452, 0
      %v527 = vsel %vm492, %v454, 0
      %v529 = vsel %vm492, %v457, 0
      %v531 = vsel %vm492, %v459, 0
      %v533 = vsel %vm492, %v462, 0
      %v535 = vsel %vm492, %v464, 0
      %v537 = vsel %vm492, %v467, 0
      %v539 = vsel %vm492, %v469, 0
      %v541 = vsel %vm492, %v472, 0
      %v543 = vsel %vm492, %v474, 0
      %v545 = vsel %vm492, %v477, 0
      %v547 = vsel %vm492, %v479, 0
      %v549 = vsel %vm492, %v482, 0
      %v551 = vsel %vm492, %v484, 0
      %v553 = vsel %vm492, %v487, 0
      %v555 = vsel %vm492, %v489, 0
      %vm557 = vcmask 1043456
      %v559 = vsel %vm557, %v491, 0
      %561 = vmatpush.msra.mxu0 0.0
      %562 = vmatpush.msra.mxu0 0.0
      %563 = vmatpush.msra.mxu0 0.0
      %564 = vmatpush.msra.mxu0 0.0
      %565 = vmatpush.msra.mxu0 0.0
      %566 = vmatpush.msra.mxu0 0.0
      %567 = vmatpush.msra.mxu0 0.0
      %568 = vmatpush.msra.mxu0 0.0
      %569 = vmatpush.msra.mxu0 0.0
      %570 = vmatpush.msra.mxu0 0.0
      %571 = vmatpush.msra.mxu0 0.0
      %572 = vmatpush.msra.mxu0 0.0
      %573 = vmatpush.msra.mxu0 0.0
      %574 = vmatpush.msra.mxu0 0.0
      %575 = vmatpush.msra.mxu0 0.0
      %576 = vmatpush.msra.mxu0 %v559
      %577 = vmatmul.f32.gmra.mxu0 %v493
      %v578 = vpop.f32.mrf.mxu0
      %v579 = vadd.f32 0.0, %v578
      %580 = vmatmul.f32.gmra.mxu0 %v495
      %v581 = vpop.f32.mrf.mxu0
      %v582 = vadd.f32 0.0, %v581
      %583 = vmatmul.f32.gmra.mxu0 %v497
      %v584 = vpop.f32.mrf.mxu0
      %v585 = vadd.f32 0.0, %v584
      %586 = vmatmul.f32.gmra.mxu0 %v499
      %v587 = vpop.f32.mrf.mxu0
      %v588 = vadd.f32 0.0, %v587
      %589 = vmatmul.f32.gmra.mxu0 %v501
      %v590 = vpop.f32.mrf.mxu0
      %v591 = vadd.f32 0.0, %v590
      %592 = vmatmul.f32.gmra.mxu0 %v503
      %v593 = vpop.f32.mrf.mxu0
      %v594 = vadd.f32 0.0, %v593
      %595 = vmatmul.f32.gmra.mxu0 %v505
      %v596 = vpop.f32.mrf.mxu0
      %v597 = vadd.f32 0.0, %v596
      %598 = vmatmul.f32.gmra.mxu0 %v507
      %v599 = vpop.f32.mrf.mxu0
      %v600 = vadd.f32 0.0, %v599
      %601 = vmatmul.f32.gmra.mxu0 %v509
      %v602 = vpop.f32.mrf.mxu0
      %v603 = vadd.f32 0.0, %v602
      %604 = vmatmul.f32.gmra.mxu0 %v511
      %v605 = vpop.f32.mrf.mxu0
      %v606 = vadd.f32 0.0, %v605
      %607 = vmatmul.f32.gmra.mxu0 %v513
      %v608 = vpop.f32.mrf.mxu0
      %v609 = vadd.f32 0.0, %v608
      %610 = vmatmul.f32.gmra.mxu0 %v515
      %v611 = vpop.f32.mrf.mxu0
      %v612 = vadd.f32 0.0, %v611
      %613 = vmatmul.f32.gmra.mxu0 %v517
      %v614 = vpop.f32.mrf.mxu0
      %v615 = vadd.f32 0.0, %v614
      %616 = vmatmul.f32.gmra.mxu0 %v519
      %v617 = vpop.f32.mrf.mxu0
      %v618 = vadd.f32 0.0, %v617
      %619 = vmatmul.f32.gmra.mxu0 %v521
      %v620 = vpop.f32.mrf.mxu0
      %v621 = vadd.f32 0.0, %v620
      %622 = vmatmul.f32.gmra.mxu0 %v523
      %v623 = vpop.f32.mrf.mxu0
      %v624 = vadd.f32 0.0, %v623
      %625 = vmatmul.f32.gmra.mxu0 %v525
      %v626 = vpop.f32.mrf.mxu0
      %v627 = vadd.f32 0.0, %v626
      %628 = vmatmul.f32.gmra.mxu0 %v527
      %v629 = vpop.f32.mrf.mxu0
      %v630 = vadd.f32 0.0, %v629
      %631 = vmatmul.f32.gmra.mxu0 %v529
      %v632 = vpop.f32.mrf.mxu0
      %v633 = vadd.f32 0.0, %v632
      %634 = vmatmul.f32.gmra.mxu0 %v531
      %v635 = vpop.f32.mrf.mxu0
      %v636 = vadd.f32 0.0, %v635
      %637 = vmatmul.f32.gmra.mxu0 %v533
      %v638 = vpop.f32.mrf.mxu0
      %v639 = vadd.f32 0.0, %v638
      %640 = vmatmul.f32.gmra.mxu0 %v535
      %v641 = vpop.f32.mrf.mxu0
      %v642 = vadd.f32 0.0, %v641
      %643 = vmatmul.f32.gmra.mxu0 %v537
      %v644 = vpop.f32.mrf.mxu0
      %v645 = vadd.f32 0.0, %v644
      %646 = vmatmul.f32.gmra.mxu0 %v539
      %v647 = vpop.f32.mrf.mxu0
      %v648 = vadd.f32 0.0, %v647
      %649 = vmatmul.f32.gmra.mxu0 %v541
      %v650 = vpop.f32.mrf.mxu0
      %v651 = vadd.f32 0.0, %v650
      %652 = vmatmul.f32.gmra.mxu0 %v543
      %v653 = vpop.f32.mrf.mxu0
      %v654 = vadd.f32 0.0, %v653
      %655 = vmatmul.f32.gmra.mxu0 %v545
      %v656 = vpop.f32.mrf.mxu0
      %v657 = vadd.f32 0.0, %v656
      %658 = vmatmul.f32.gmra.mxu0 %v547
      %v659 = vpop.f32.mrf.mxu0
      %v660 = vadd.f32 0.0, %v659
      %661 = vmatmul.f32.gmra.mxu0 %v549
      %v662 = vpop.f32.mrf.mxu0
      %v663 = vadd.f32 0.0, %v662
      %664 = vmatmul.f32.gmra.mxu0 %v551
      %v665 = vpop.f32.mrf.mxu0
      %v666 = vadd.f32 0.0, %v665
      %667 = vmatmul.f32.gmra.mxu0 %v553
      %v668 = vpop.f32.mrf.mxu0
      %v669 = vadd.f32 0.0, %v668
      %670 = vmatmul.f32.gmra.mxu0 %v555
      %v671 = vpop.f32.mrf.mxu0
      %v672 = vadd.f32 0.0, %v671
      %673 = vdwg.mxu0
      %v674 = vsel %vm492, %v306, 0
      %v676 = vsel %vm492, %v307, 0
      %v678 = vsel %vm492, %v309, 0
      %v680 = vsel %vm492, %v310, 0
      %v682 = vsel %vm492, %v312, 0
      %v684 = vsel %vm492, %v313, 0
      %v686 = vsel %vm492, %v315, 0
      %v688 = vsel %vm492, %v316, 0
      %v690 = vsel %vm492, %v318, 0
      %v692 = vsel %vm492, %v319, 0
      %v694 = vsel %vm492, %v321, 0
      %v696 = vsel %vm492, %v322, 0
      %v698 = vsel %vm492, %v324, 0
      %v700 = vsel %vm492, %v325, 0
      %v702 = vsel %vm492, %v327, 0
      %v704 = vsel %vm492, %v328, 0
      %v706 = vsel %vm492, %v330, 0
      %v708 = vsel %vm492, %v331, 0
      %v710 = vsel %vm492, %v333, 0
      %v712 = vsel %vm492, %v334, 0
      %v714 = vsel %vm492, %v336, 0
      %v716 = vsel %vm492, %v337, 0
      %v718 = vsel %vm492, %v339, 0
      %v720 = vsel %vm492, %v340, 0
      %v722 = vsel %vm492, %v342, 0
      %v724 = vsel %vm492, %v343, 0
      %v726 = vsel %vm492, %v345, 0
      %v728 = vsel %vm492, %v346, 0
      %v730 = vsel %vm492, %v348, 0
      %v732 = vsel %vm492, %v349, 0
      %v734 = vsel %vm492, %v351, 0
      %v736 = vsel %vm492, %v352, 0
      %v739 = vsel %vm557, %v360, 0
      %741 = vmatpush.msra.mxu0 0.0
      %742 = vmatpush.msra.mxu0 0.0
      %743 = vmatpush.msra.mxu0 0.0
      %744 = vmatpush.msra.mxu0 0.0
      %745 = vmatpush.msra.mxu0 0.0
      %746 = vmatpush.msra.mxu0 0.0
      %747 = vmatpush.msra.mxu0 0.0
      %748 = vmatpush.msra.mxu0 0.0
      %749 = vmatpush.msra.mxu0 0.0
      %750 = vmatpush.msra.mxu0 0.0
      %751 = vmatpush.msra.mxu0 0.0
      %752 = vmatpush.msra.mxu0 0.0
      %753 = vmatpush.msra.mxu0 0.0
      %754 = vmatpush.msra.mxu0 0.0
      %755 = vmatpush.msra.mxu0 0.0
      %756 = vmatpush.msra.mxu0 %v739
      %757 = vmatmul.f32.gmra.mxu0 %v674
      %v758 = vpop.f32.mrf.mxu0
      %v759 = vadd.f32 %v579, %v758
      %760 = vmatmul.f32.gmra.mxu0 %v676
      %v761 = vpop.f32.mrf.mxu0
      %v762 = vadd.f32 %v582, %v761
      %763 = vmatmul.f32.gmra.mxu0 %v678
      %v764 = vpop.f32.mrf.mxu0
      %v765 = vadd.f32 %v585, %v764
      %766 = vmatmul.f32.gmra.mxu0 %v680
      %v767 = vpop.f32.mrf.mxu0
      %v768 = vadd.f32 %v588, %v767
      %769 = vmatmul.f32.gmra.mxu0 %v682
      %v770 = vpop.f32.mrf.mxu0
      %v771 = vadd.f32 %v591, %v770
      %772 = vmatmul.f32.gmra.mxu0 %v684
      %v773 = vpop.f32.mrf.mxu0
      %v774 = vadd.f32 %v594, %v773
      %775 = vmatmul.f32.gmra.mxu0 %v686
      %v776 = vpop.f32.mrf.mxu0
      %v777 = vadd.f32 %v597, %v776
      %778 = vmatmul.f32.gmra.mxu0 %v688
      %v779 = vpop.f32.mrf.mxu0
      %v780 = vadd.f32 %v600, %v779
      %781 = vmatmul.f32.gmra.mxu0 %v690
      %v782 = vpop.f32.mrf.mxu0
      %v783 = vadd.f32 %v603, %v782
      %784 = vmatmul.f32.gmra.mxu0 %v692
      %v785 = vpop.f32.mrf.mxu0
      %v786 = vadd.f32 %v606, %v785
      %787 = vmatmul.f32.gmra.mxu0 %v694
      %v788 = vpop.f32.mrf.mxu0
      %v789 = vadd.f32 %v609, %v788
      %790 = vmatmul.f32.gmra.mxu0 %v696
      %v791 = vpop.f32.mrf.mxu0
      %v792 = vadd.f32 %v612, %v791
      %793 = vmatmul.f32.gmra.mxu0 %v698
      %v794 = vpop.f32.mrf.mxu0
      %v795 = vadd.f32 %v615, %v794
      %796 = vmatmul.f32.gmra.mxu0 %v700
      %v797 = vpop.f32.mrf.mxu0
      %v798 = vadd.f32 %v618, %v797
      %799 = vmatmul.f32.gmra.mxu0 %v702
      %v800 = vpop.f32.mrf.mxu0
      %v801 = vadd.f32 %v621, %v800
      %802 = vmatmul.f32.gmra.mxu0 %v704
      %v803 = vpop.f32.mrf.mxu0
      %v804 = vadd.f32 %v624, %v803
      %805 = vmatmul.f32.gmra.mxu0 %v706
      %v806 = vpop.f32.mrf.mxu0
      %v807 = vadd.f32 %v627, %v806
      %808 = vmatmul.f32.gmra.mxu0 %v708
      %v809 = vpop.f32.mrf.mxu0
      %v810 = vadd.f32 %v630, %v809
      %811 = vmatmul.f32.gmra.mxu0 %v710
      %v812 = vpop.f32.mrf.mxu0
      %v813 = vadd.f32 %v633, %v812
      %814 = vmatmul.f32.gmra.mxu0 %v712
      %v815 = vpop.f32.mrf.mxu0
      %v816 = vadd.f32 %v636, %v815
      %817 = vmatmul.f32.gmra.mxu0 %v714
      %v818 = vpop.f32.mrf.mxu0
      %v819 = vadd.f32 %v639, %v818
      %820 = vmatmul.f32.gmra.mxu0 %v716
      %v821 = vpop.f32.mrf.mxu0
      %v822 = vadd.f32 %v642, %v821
      %823 = vmatmul.f32.gmra.mxu0 %v718
      %v824 = vpop.f32.mrf.mxu0
      %v825 = vadd.f32 %v645, %v824
      %826 = vmatmul.f32.gmra.mxu0 %v720
      %v827 = vpop.f32.mrf.mxu0
      %v828 = vadd.f32 %v648, %v827
      %829 = vmatmul.f32.gmra.mxu0 %v722
      %v830 = vpop.f32.mrf.mxu0
      %v831 = vadd.f32 %v651, %v830
      %832 = vmatmul.f32.gmra.mxu0 %v724
      %v833 = vpop.f32.mrf.mxu0
      %v834 = vadd.f32 %v654, %v833
      %835 = vmatmul.f32.gmra.mxu0 %v726
      %v836 = vpop.f32.mrf.mxu0
      %v837 = vadd.f32 %v657, %v836
      %838 = vmatmul.f32.gmra.mxu0 %v728
      %v839 = vpop.f32.mrf.mxu0
      %v840 = vadd.f32 %v660, %v839
      %841 = vmatmul.f32.gmra.mxu0 %v730
      %v842 = vpop.f32.mrf.mxu0
      %v843 = vadd.f32 %v663, %v842
      %844 = vmatmul.f32.gmra.mxu0 %v732
      %v845 = vpop.f32.mrf.mxu0
      %v846 = vadd.f32 %v666, %v845
      %847 = vmatmul.f32.gmra.mxu0 %v734
      %v848 = vpop.f32.mrf.mxu0
      %v849 = vadd.f32 %v669, %v848
      %850 = vmatmul.f32.gmra.mxu0 %v736
      %v851 = vpop.f32.mrf.mxu0
      %v852 = vadd.f32 %v672, %v851
      %853 = vdwg.mxu0
      %vm854 = vcmask 1045504
      %v855 = vrot.slane %v306, 2
      %v856 = vrot.slane %v307, 2
      %v857 = vsel %vm854, %v855, %v856
      %v858 = vrot.slane %v308, 2
      %v859 = vsel %vm854, %v856, %v858
      %v860 = vrot.slane %v309, 2
      %v861 = vrot.slane %v310, 2
      %v862 = vsel %vm854, %v860, %v861
      %v863 = vrot.slane %v311, 2
      %v864 = vsel %vm854, %v861, %v863
      %v865 = vrot.slane %v312, 2
      %v866 = vrot.slane %v313, 2
      %v867 = vsel %vm854, %v865, %v866
      %v868 = vrot.slane %v314, 2
      %v869 = vsel %vm854, %v866, %v868
      %v870 = vrot.slane %v315, 2
      %v871 = vrot.slane %v316, 2
      %v872 = vsel %vm854, %v870, %v871
      %v873 = vrot.slane %v317, 2
      %v874 = vsel %vm854, %v871, %v873
      %v875 = vrot.slane %v318, 2
      %v876 = vrot.slane %v319, 2
      %v877 = vsel %vm854, %v875, %v876
      %v878 = vrot.slane %v320, 2
      %v879 = vsel %vm854, %v876, %v878
      %v880 = vrot.slane %v321, 2
      %v881 = vrot.slane %v322, 2
      %v882 = vsel %vm854, %v880, %v881
      %v883 = vrot.slane %v323, 2
      %v884 = vsel %vm854, %v881, %v883
      %v885 = vrot.slane %v324, 2
      %v886 = vrot.slane %v325, 2
      %v887 = vsel %vm854, %v885, %v886
      %v888 = vrot.slane %v326, 2
      %v889 = vsel %vm854, %v886, %v888
      %v890 = vrot.slane %v327, 2
      %v891 = vrot.slane %v328, 2
      %v892 = vsel %vm854, %v890, %v891
      %v893 = vrot.slane %v329, 2
      %v894 = vsel %vm854, %v891, %v893
      %v895 = vrot.slane %v330, 2
      %v896 = vrot.slane %v331, 2
      %v897 = vsel %vm854, %v895, %v896
      %v898 = vrot.slane %v332, 2
      %v899 = vsel %vm854, %v896, %v898
      %v900 = vrot.slane %v333, 2
      %v901 = vrot.slane %v334, 2
      %v902 = vsel %vm854, %v900, %v901
      %v903 = vrot.slane %v335, 2
      %v904 = vsel %vm854, %v901, %v903
      %v905 = vrot.slane %v336, 2
      %v906 = vrot.slane %v337, 2
      %v907 = vsel %vm854, %v905, %v906
      %v908 = vrot.slane %v338, 2
      %v909 = vsel %vm854, %v906, %v908
      %v910 = vrot.slane %v339, 2
      %v911 = vrot.slane %v340, 2
      %v912 = vsel %vm854, %v910, %v911
      %v913 = vrot.slane %v341, 2
      %v914 = vsel %vm854, %v911, %v913
      %v915 = vrot.slane %v342, 2
      %v916 = vrot.slane %v343, 2
      %v917 = vsel %vm854, %v915, %v916
      %v918 = vrot.slane %v344, 2
      %v919 = vsel %vm854, %v916, %v918
      %v920 = vrot.slane %v345, 2
      %v921 = vrot.slane %v346, 2
      %v922 = vsel %vm854, %v920, %v921
      %v923 = vrot.slane %v347, 2
      %v924 = vsel %vm854, %v921, %v923
      %v925 = vrot.slane %v348, 2
      %v926 = vrot.slane %v349, 2
      %v927 = vsel %vm854, %v925, %v926
      %v928 = vrot.slane %v350, 2
      %v929 = vsel %vm854, %v926, %v928
      %v930 = vrot.slane %v351, 2
      %v931 = vrot.slane %v352, 2
      %v932 = vsel %vm854, %v930, %v931
      %v933 = vrot.slane %v353, 2
      %v934 = vsel %vm854, %v931, %v933
      %s935 = scalar_lea.vmem %s1, 8
      %v936 = vld [vmem:[%s935] sm:$0xf]
      %v937 = vsel %vm492, %v857, 0
      %v939 = vsel %vm492, %v859, 0
      %v941 = vsel %vm492, %v862, 0
      %v943 = vsel %vm492, %v864, 0
      %v945 = vsel %vm492, %v867, 0
      %v947 = vsel %vm492, %v869, 0
      %v949 = vsel %vm492, %v872, 0
      %v951 = vsel %vm492, %v874, 0
      %v953 = vsel %vm492, %v877, 0
      %v955 = vsel %vm492, %v879, 0
      %v957 = vsel %vm492, %v882, 0
      %v959 = vsel %vm492, %v884, 0
      %v961 = vsel %vm492, %v887, 0
      %v963 = vsel %vm492, %v889, 0
      %v965 = vsel %vm492, %v892, 0
      %v967 = vsel %vm492, %v894, 0
      %v969 = vsel %vm492, %v897, 0
      %v971 = vsel %vm492, %v899, 0
      %v973 = vsel %vm492, %v902, 0
      %v975 = vsel %vm492, %v904, 0
      %v977 = vsel %vm492, %v907, 0
      %v979 = vsel %vm492, %v909, 0
      %v981 = vsel %vm492, %v912, 0
      %v983 = vsel %vm492, %v914, 0
      %v985 = vsel %vm492, %v917, 0
      %v987 = vsel %vm492, %v919, 0
      %v989 = vsel %vm492, %v922, 0
      %v991 = vsel %vm492, %v924, 0
      %v993 = vsel %vm492, %v927, 0
      %v995 = vsel %vm492, %v929, 0
      %v997 = vsel %vm492, %v932, 0
      %v999 = vsel %vm492, %v934, 0
      %v1002 = vsel %vm557, %v936, 0
      %1004 = vmatpush.msra.mxu0 0.0
      %1005 = vmatpush.msra.mxu0 0.0
      %1006 = vmatpush.msra.mxu0 0.0
      %1007 = vmatpush.msra.mxu0 0.0
      %1008 = vmatpush.msra.mxu0 0.0
      %1009 = vmatpush.msra.mxu0 0.0
      %1010 = vmatpush.msra.mxu0 0.0
      %1011 = vmatpush.msra.mxu0 0.0
      %1012 = vmatpush.msra.mxu0 0.0
      %1013 = vmatpush.msra.mxu0 0.0
      %1014 = vmatpush.msra.mxu0 0.0
      %1015 = vmatpush.msra.mxu0 0.0
      %1016 = vmatpush.msra.mxu0 0.0
      %1017 = vmatpush.msra.mxu0 0.0
      %1018 = vmatpush.msra.mxu0 0.0
      %1019 = vmatpush.msra.mxu0 %v1002
      %1020 = vmatmul.f32.gmra.mxu0 %v937
      %v1021 = vpop.f32.mrf.mxu0
      %v1022 = vadd.f32 0.0, %v1021
      %1023 = vmatmul.f32.gmra.mxu0 %v939
      %v1024 = vpop.f32.mrf.mxu0
      %v1025 = vadd.f32 0.0, %v1024
      %1026 = vmatmul.f32.gmra.mxu0 %v941
      %v1027 = vpop.f32.mrf.mxu0
      %v1028 = vadd.f32 0.0, %v1027
      %1029 = vmatmul.f32.gmra.mxu0 %v943
      %v1030 = vpop.f32.mrf.mxu0
      %v1031 = vadd.f32 0.0, %v1030
      %1032 = vmatmul.f32.gmra.mxu0 %v945
      %v1033 = vpop.f32.mrf.mxu0
      %v1034 = vadd.f32 0.0, %v1033
      %1035 = vmatmul.f32.gmra.mxu0 %v947
      %v1036 = vpop.f32.mrf.mxu0
      %v1037 = vadd.f32 0.0, %v1036
      %1038 = vmatmul.f32.gmra.mxu0 %v949
      %v1039 = vpop.f32.mrf.mxu0
      %v1040 = vadd.f32 0.0, %v1039
      %1041 = vmatmul.f32.gmra.mxu0 %v951
      %v1042 = vpop.f32.mrf.mxu0
      %v1043 = vadd.f32 0.0, %v1042
      %1044 = vmatmul.f32.gmra.mxu0 %v953
      %v1045 = vpop.f32.mrf.mxu0
      %v1046 = vadd.f32 0.0, %v1045
      %1047 = vmatmul.f32.gmra.mxu0 %v955
      %v1048 = vpop.f32.mrf.mxu0
      %v1049 = vadd.f32 0.0, %v1048
      %1050 = vmatmul.f32.gmra.mxu0 %v957
      %v1051 = vpop.f32.mrf.mxu0
      %v1052 = vadd.f32 0.0, %v1051
      %1053 = vmatmul.f32.gmra.mxu0 %v959
      %v1054 = vpop.f32.mrf.mxu0
      %v1055 = vadd.f32 0.0, %v1054
      %1056 = vmatmul.f32.gmra.mxu0 %v961
      %v1057 = vpop.f32.mrf.mxu0
      %v1058 = vadd.f32 0.0, %v1057
      %1059 = vmatmul.f32.gmra.mxu0 %v963
      %v1060 = vpop.f32.mrf.mxu0
      %v1061 = vadd.f32 0.0, %v1060
      %1062 = vmatmul.f32.gmra.mxu0 %v965
      %v1063 = vpop.f32.mrf.mxu0
      %v1064 = vadd.f32 0.0, %v1063
      %1065 = vmatmul.f32.gmra.mxu0 %v967
      %v1066 = vpop.f32.mrf.mxu0
      %v1067 = vadd.f32 0.0, %v1066
      %1068 = vmatmul.f32.gmra.mxu0 %v969
      %v1069 = vpop.f32.mrf.mxu0
      %v1070 = vadd.f32 0.0, %v1069
      %1071 = vmatmul.f32.gmra.mxu0 %v971
      %v1072 = vpop.f32.mrf.mxu0
      %v1073 = vadd.f32 0.0, %v1072
      %1074 = vmatmul.f32.gmra.mxu0 %v973
      %v1075 = vpop.f32.mrf.mxu0
      %v1076 = vadd.f32 0.0, %v1075
      %1077 = vmatmul.f32.gmra.mxu0 %v975
      %v1078 = vpop.f32.mrf.mxu0
      %v1079 = vadd.f32 0.0, %v1078
      %1080 = vmatmul.f32.gmra.mxu0 %v977
      %v1081 = vpop.f32.mrf.mxu0
      %v1082 = vadd.f32 0.0, %v1081
      %1083 = vmatmul.f32.gmra.mxu0 %v979
      %v1084 = vpop.f32.mrf.mxu0
      %v1085 = vadd.f32 0.0, %v1084
      %1086 = vmatmul.f32.gmra.mxu0 %v981
      %v1087 = vpop.f32.mrf.mxu0
      %v1088 = vadd.f32 0.0, %v1087
      %1089 = vmatmul.f32.gmra.mxu0 %v983
      %v1090 = vpop.f32.mrf.mxu0
      %v1091 = vadd.f32 0.0, %v1090
      %1092 = vmatmul.f32.gmra.mxu0 %v985
      %v1093 = vpop.f32.mrf.mxu0
      %v1094 = vadd.f32 0.0, %v1093
      %1095 = vmatmul.f32.gmra.mxu0 %v987
      %v1096 = vpop.f32.mrf.mxu0
      %v1097 = vadd.f32 0.0, %v1096
      %1098 = vmatmul.f32.gmra.mxu0 %v989
      %v1099 = vpop.f32.mrf.mxu0
      %v1100 = vadd.f32 0.0, %v1099
      %1101 = vmatmul.f32.gmra.mxu0 %v991
      %v1102 = vpop.f32.mrf.mxu0
      %v1103 = vadd.f32 0.0, %v1102
      %1104 = vmatmul.f32.gmra.mxu0 %v993
      %v1105 = vpop.f32.mrf.mxu0
      %v1106 = vadd.f32 0.0, %v1105
      %1107 = vmatmul.f32.gmra.mxu0 %v995
      %v1108 = vpop.f32.mrf.mxu0
      %v1109 = vadd.f32 0.0, %v1108
      %1110 = vmatmul.f32.gmra.mxu0 %v997
      %v1111 = vpop.f32.mrf.mxu0
      %v1112 = vadd.f32 0.0, %v1111
      %1113 = vmatmul.f32.gmra.mxu0 %v999
      %v1114 = vpop.f32.mrf.mxu0
      %v1115 = vadd.f32 0.0, %v1114
      %1116 = vdwg.mxu0
      %v1117 = vadd.f32 %v759, %v1022
      %v1118 = vadd.f32 %v762, %v1025
      %v1119 = vadd.f32 %v765, %v1028
      %v1120 = vadd.f32 %v768, %v1031
      %v1121 = vadd.f32 %v771, %v1034
      %v1122 = vadd.f32 %v774, %v1037
      %v1123 = vadd.f32 %v777, %v1040
      %v1124 = vadd.f32 %v780, %v1043
      %v1125 = vadd.f32 %v783, %v1046
      %v1126 = vadd.f32 %v786, %v1049
      %v1127 = vadd.f32 %v789, %v1052
      %v1128 = vadd.f32 %v792, %v1055
      %v1129 = vadd.f32 %v795, %v1058
      %v1130 = vadd.f32 %v798, %v1061
      %v1131 = vadd.f32 %v801, %v1064
      %v1132 = vadd.f32 %v804, %v1067
      %v1133 = vadd.f32 %v807, %v1070
      %v1134 = vadd.f32 %v810, %v1073
      %v1135 = vadd.f32 %v813, %v1076
      %v1136 = vadd.f32 %v816, %v1079
      %v1137 = vadd.f32 %v819, %v1082
      %v1138 = vadd.f32 %v822, %v1085
      %v1139 = vadd.f32 %v825, %v1088
      %v1140 = vadd.f32 %v828, %v1091
      %v1141 = vadd.f32 %v831, %v1094
      %v1142 = vadd.f32 %v834, %v1097
      %v1143 = vadd.f32 %v837, %v1100
      %v1144 = vadd.f32 %v840, %v1103
      %v1145 = vadd.f32 %v843, %v1106
      %v1146 = vadd.f32 %v846, %v1109
      %v1147 = vadd.f32 %v849, %v1112
      %v1148 = vadd.f32 %v852, %v1115
      %s1149 = scalar_lea.vmem %s1, 12
      %v1150 = vld [vmem:[%s1149] sm:$0xf]
      %v1152 = vsel %vm492, %v354, 0
      %v1155 = vsel %vm492, %v355, 0
      %v1158 = vsel %vm557, %v1150, 0
      %1160 = vmatpush.msra.mxu0 0.0
      %1161 = vmatpush.msra.mxu0 0.0
      %1162 = vmatpush.msra.mxu0 0.0
      %1163 = vmatpush.msra.mxu0 0.0
      %1164 = vmatpush.msra.mxu0 0.0
      %1165 = vmatpush.msra.mxu0 0.0
      %1166 = vmatpush.msra.mxu0 0.0
      %1167 = vmatpush.msra.mxu0 0.0
      %1168 = vmatpush.msra.mxu0 0.0
      %1169 = vmatpush.msra.mxu0 0.0
      %1170 = vmatpush.msra.mxu0 0.0
      %1171 = vmatpush.msra.mxu0 0.0
      %1172 = vmatpush.msra.mxu0 0.0
      %1173 = vmatpush.msra.mxu0 0.0
      %1174 = vmatpush.msra.mxu0 0.0
      %1175 = vmatpush.msra.mxu0 %v1158
      %1176 = vmatmul.f32.gmra.mxu0 %v678
      %v1177 = vpop.f32.mrf.mxu0
      %v1178 = vadd.f32 0.0, %v1177
      %1179 = vmatmul.f32.gmra.mxu0 %v680
      %v1180 = vpop.f32.mrf.mxu0
      %v1181 = vadd.f32 0.0, %v1180
      %1182 = vmatmul.f32.gmra.mxu0 %v682
      %v1183 = vpop.f32.mrf.mxu0
      %v1184 = vadd.f32 0.0, %v1183
      %1185 = vmatmul.f32.gmra.mxu0 %v684
      %v1186 = vpop.f32.mrf.mxu0
      %v1187 = vadd.f32 0.0, %v1186
      %1188 = vmatmul.f32.gmra.mxu0 %v686
      %v1189 = vpop.f32.mrf.mxu0
      %v1190 = vadd.f32 0.0, %v1189
      %1191 = vmatmul.f32.gmra.mxu0 %v688
      %v1192 = vpop.f32.mrf.mxu0
      %v1193 = vadd.f32 0.0, %v1192
      %1194 = vmatmul.f32.gmra.mxu0 %v690
      %v1195 = vpop.f32.mrf.mxu0
      %v1196 = vadd.f32 0.0, %v1195
      %1197 = vmatmul.f32.gmra.mxu0 %v692
      %v1198 = vpop.f32.mrf.mxu0
      %v1199 = vadd.f32 0.0, %v1198
      %1200 = vmatmul.f32.gmra.mxu0 %v694
      %v1201 = vpop.f32.mrf.mxu0
      %v1202 = vadd.f32 0.0, %v1201
      %1203 = vmatmul.f32.gmra.mxu0 %v696
      %v1204 = vpop.f32.mrf.mxu0
      %v1205 = vadd.f32 0.0, %v1204
      %1206 = vmatmul.f32.gmra.mxu0 %v698
      %v1207 = vpop.f32.mrf.mxu0
      %v1208 = vadd.f32 0.0, %v1207
      %1209 = vmatmul.f32.gmra.mxu0 %v700
      %v1210 = vpop.f32.mrf.mxu0
      %v1211 = vadd.f32 0.0, %v1210
      %1212 = vmatmul.f32.gmra.mxu0 %v702
      %v1213 = vpop.f32.mrf.mxu0
      %v1214 = vadd.f32 0.0, %v1213
      %1215 = vmatmul.f32.gmra.mxu0 %v704
      %v1216 = vpop.f32.mrf.mxu0
      %v1217 = vadd.f32 0.0, %v1216
      %1218 = vmatmul.f32.gmra.mxu0 %v706
      %v1219 = vpop.f32.mrf.mxu0
      %v1220 = vadd.f32 0.0, %v1219
      %1221 = vmatmul.f32.gmra.mxu0 %v708
      %v1222 = vpop.f32.mrf.mxu0
      %v1223 = vadd.f32 0.0, %v1222
      %1224 = vmatmul.f32.gmra.mxu0 %v710
      %v1225 = vpop.f32.mrf.mxu0
      %v1226 = vadd.f32 0.0, %v1225
      %1227 = vmatmul.f32.gmra.mxu0 %v712
      %v1228 = vpop.f32.mrf.mxu0
      %v1229 = vadd.f32 0.0, %v1228
      %1230 = vmatmul.f32.gmra.mxu0 %v714
      %v1231 = vpop.f32.mrf.mxu0
      %v1232 = vadd.f32 0.0, %v1231
      %1233 = vmatmul.f32.gmra.mxu0 %v716
      %v1234 = vpop.f32.mrf.mxu0
      %v1235 = vadd.f32 0.0, %v1234
      %1236 = vmatmul.f32.gmra.mxu0 %v718
      %v1237 = vpop.f32.mrf.mxu0
      %v1238 = vadd.f32 0.0, %v1237
      %1239 = vmatmul.f32.gmra.mxu0 %v720
      %v1240 = vpop.f32.mrf.mxu0
      %v1241 = vadd.f32 0.0, %v1240
      %1242 = vmatmul.f32.gmra.mxu0 %v722
      %v1243 = vpop.f32.mrf.mxu0
      %v1244 = vadd.f32 0.0, %v1243
      %1245 = vmatmul.f32.gmra.mxu0 %v724
      %v1246 = vpop.f32.mrf.mxu0
      %v1247 = vadd.f32 0.0, %v1246
      %1248 = vmatmul.f32.gmra.mxu0 %v726
      %v1249 = vpop.f32.mrf.mxu0
      %v1250 = vadd.f32 0.0, %v1249
      %1251 = vmatmul.f32.gmra.mxu0 %v728
      %v1252 = vpop.f32.mrf.mxu0
      %v1253 = vadd.f32 0.0, %v1252
      %1254 = vmatmul.f32.gmra.mxu0 %v730
      %v1255 = vpop.f32.mrf.mxu0
      %v1256 = vadd.f32 0.0, %v1255
      %1257 = vmatmul.f32.gmra.mxu0 %v732
      %v1258 = vpop.f32.mrf.mxu0
      %v1259 = vadd.f32 0.0, %v1258
      %1260 = vmatmul.f32.gmra.mxu0 %v734
      %v1261 = vpop.f32.mrf.mxu0
      %v1262 = vadd.f32 0.0, %v1261
      %1263 = vmatmul.f32.gmra.mxu0 %v736
      %v1264 = vpop.f32.mrf.mxu0
      %v1265 = vadd.f32 0.0, %v1264
      %1266 = vmatmul.f32.gmra.mxu0 %v1152
      %v1267 = vpop.f32.mrf.mxu0
      %v1268 = vadd.f32 0.0, %v1267
      %1269 = vmatmul.f32.gmra.mxu0 %v1155
      %v1270 = vpop.f32.mrf.mxu0
      %v1271 = vadd.f32 0.0, %v1270
      %1272 = vdwg.mxu0
      %v1273 = vadd.f32 %v1117, %v1178
      %v1274 = vadd.f32 %v1118, %v1181
      %v1275 = vadd.f32 %v1119, %v1184
      %v1276 = vadd.f32 %v1120, %v1187
      %v1277 = vadd.f32 %v1121, %v1190
      %v1278 = vadd.f32 %v1122, %v1193
      %v1279 = vadd.f32 %v1123, %v1196
      %v1280 = vadd.f32 %v1124, %v1199
      %v1281 = vadd.f32 %v1125, %v1202
      %v1282 = vadd.f32 %v1126, %v1205
      %v1283 = vadd.f32 %v1127, %v1208
      %v1284 = vadd.f32 %v1128, %v1211
      %v1285 = vadd.f32 %v1129, %v1214
      %v1286 = vadd.f32 %v1130, %v1217
      %v1287 = vadd.f32 %v1131, %v1220
      %v1288 = vadd.f32 %v1132, %v1223
      %v1289 = vadd.f32 %v1133, %v1226
      %v1290 = vadd.f32 %v1134, %v1229
      %v1291 = vadd.f32 %v1135, %v1232
      %v1292 = vadd.f32 %v1136, %v1235
      %v1293 = vadd.f32 %v1137, %v1238
      %v1294 = vadd.f32 %v1138, %v1241
      %v1295 = vadd.f32 %v1139, %v1244
      %v1296 = vadd.f32 %v1140, %v1247
      %v1297 = vadd.f32 %v1141, %v1250
      %v1298 = vadd.f32 %v1142, %v1253
      %v1299 = vadd.f32 %v1143, %v1256
      %v1300 = vadd.f32 %v1144, %v1259
      %v1301 = vadd.f32 %v1145, %v1262
      %v1302 = vadd.f32 %v1146, %v1265
      %v1303 = vadd.f32 %v1147, %v1268
      %v1304 = vadd.f32 %v1148, %v1271
      %v1306 = vrot.slane %v354, 1
      %v1307 = vrot.slane %v355, 1
      %v1308 = vsel %vm409, %v1306, %v1307
      %v1309 = vrot.slane %v356, 1
      %v1310 = vsel %vm409, %v1307, %v1309
      %s1311 = scalar_lea.vmem %s1, 16
      %v1312 = vld [vmem:[%s1311] sm:$0xf]
      %v1313 = vsel %vm492, %v1308, 0
      %v1315 = vsel %vm492, %v1310, 0
      %v1318 = vsel %vm557, %v1312, 0
      %1320 = vmatpush.msra.mxu0 0.0
      %1321 = vmatpush.msra.mxu0 0.0
      %1322 = vmatpush.msra.mxu0 0.0
      %1323 = vmatpush.msra.mxu0 0.0
      %1324 = vmatpush.msra.mxu0 0.0
      %1325 = vmatpush.msra.mxu0 0.0
      %1326 = vmatpush.msra.mxu0 0.0
      %1327 = vmatpush.msra.mxu0 0.0
      %1328 = vmatpush.msra.mxu0 0.0
      %1329 = vmatpush.msra.mxu0 0.0
      %1330 = vmatpush.msra.mxu0 0.0
      %1331 = vmatpush.msra.mxu0 0.0
      %1332 = vmatpush.msra.mxu0 0.0
      %1333 = vmatpush.msra.mxu0 0.0
      %1334 = vmatpush.msra.mxu0 0.0
      %1335 = vmatpush.msra.mxu0 %v1318
      %1336 = vmatmul.f32.gmra.mxu0 %v497
      %v1337 = vpop.f32.mrf.mxu0
      %v1338 = vadd.f32 0.0, %v1337
      %1339 = vmatmul.f32.gmra.mxu0 %v499
      %v1340 = vpop.f32.mrf.mxu0
      %v1341 = vadd.f32 0.0, %v1340
      %1342 = vmatmul.f32.gmra.mxu0 %v501
      %v1343 = vpop.f32.mrf.mxu0
      %v1344 = vadd.f32 0.0, %v1343
      %1345 = vmatmul.f32.gmra.mxu0 %v503
      %v1346 = vpop.f32.mrf.mxu0
      %v1347 = vadd.f32 0.0, %v1346
      %1348 = vmatmul.f32.gmra.mxu0 %v505
      %v1349 = vpop.f32.mrf.mxu0
      %v1350 = vadd.f32 0.0, %v1349
      %1351 = vmatmul.f32.gmra.mxu0 %v507
      %v1352 = vpop.f32.mrf.mxu0
      %v1353 = vadd.f32 0.0, %v1352
      %1354 = vmatmul.f32.gmra.mxu0 %v509
      %v1355 = vpop.f32.mrf.mxu0
      %v1356 = vadd.f32 0.0, %v1355
      %1357 = vmatmul.f32.gmra.mxu0 %v511
      %v1358 = vpop.f32.mrf.mxu0
      %v1359 = vadd.f32 0.0, %v1358
      %1360 = vmatmul.f32.gmra.mxu0 %v513
      %v1361 = vpop.f32.mrf.mxu0
      %v1362 = vadd.f32 0.0, %v1361
      %1363 = vmatmul.f32.gmra.mxu0 %v515
      %v1364 = vpop.f32.mrf.mxu0
      %v1365 = vadd.f32 0.0, %v1364
      %1366 = vmatmul.f32.gmra.mxu0 %v517
      %v1367 = vpop.f32.mrf.mxu0
      %v1368 = vadd.f32 0.0, %v1367
      %1369 = vmatmul.f32.gmra.mxu0 %v519
      %v1370 = vpop.f32.mrf.mxu0
      %v1371 = vadd.f32 0.0, %v1370
      %1372 = vmatmul.f32.gmra.mxu0 %v521
      %v1373 = vpop.f32.mrf.mxu0
      %v1374 = vadd.f32 0.0, %v1373
      %1375 = vmatmul.f32.gmra.mxu0 %v523
      %v1376 = vpop.f32.mrf.mxu0
      %v1377 = vadd.f32 0.0, %v1376
      %1378 = vmatmul.f32.gmra.mxu0 %v525
      %v1379 = vpop.f32.mrf.mxu0
      %v1380 = vadd.f32 0.0, %v1379
      %1381 = vmatmul.f32.gmra.mxu0 %v527
      %v1382 = vpop.f32.mrf.mxu0
      %v1383 = vadd.f32 0.0, %v1382
      %1384 = vmatmul.f32.gmra.mxu0 %v529
      %v1385 = vpop.f32.mrf.mxu0
      %v1386 = vadd.f32 0.0, %v1385
      %1387 = vmatmul.f32.gmra.mxu0 %v531
      %v1388 = vpop.f32.mrf.mxu0
      %v1389 = vadd.f32 0.0, %v1388
      %1390 = vmatmul.f32.gmra.mxu0 %v533
      %v1391 = vpop.f32.mrf.mxu0
      %v1392 = vadd.f32 0.0, %v1391
      %1393 = vmatmul.f32.gmra.mxu0 %v535
      %v1394 = vpop.f32.mrf.mxu0
      %v1395 = vadd.f32 0.0, %v1394
      %1396 = vmatmul.f32.gmra.mxu0 %v537
      %v1397 = vpop.f32.mrf.mxu0
      %v1398 = vadd.f32 0.0, %v1397
      %1399 = vmatmul.f32.gmra.mxu0 %v539
      %v1400 = vpop.f32.mrf.mxu0
      %v1401 = vadd.f32 0.0, %v1400
      %1402 = vmatmul.f32.gmra.mxu0 %v541
      %v1403 = vpop.f32.mrf.mxu0
      %v1404 = vadd.f32 0.0, %v1403
      %1405 = vmatmul.f32.gmra.mxu0 %v543
      %v1406 = vpop.f32.mrf.mxu0
      %v1407 = vadd.f32 0.0, %v1406
      %1408 = vmatmul.f32.gmra.mxu0 %v545
      %v1409 = vpop.f32.mrf.mxu0
      %v1410 = vadd.f32 0.0, %v1409
      %1411 = vmatmul.f32.gmra.mxu0 %v547
      %v1412 = vpop.f32.mrf.mxu0
      %v1413 = vadd.f32 0.0, %v1412
      %1414 = vmatmul.f32.gmra.mxu0 %v549
      %v1415 = vpop.f32.mrf.mxu0
      %v1416 = vadd.f32 0.0, %v1415
      %1417 = vmatmul.f32.gmra.mxu0 %v551
      %v1418 = vpop.f32.mrf.mxu0
      %v1419 = vadd.f32 0.0, %v1418
      %1420 = vmatmul.f32.gmra.mxu0 %v553
      %v1421 = vpop.f32.mrf.mxu0
      %v1422 = vadd.f32 0.0, %v1421
      %1423 = vmatmul.f32.gmra.mxu0 %v555
      %v1424 = vpop.f32.mrf.mxu0
      %v1425 = vadd.f32 0.0, %v1424
      %1426 = vmatmul.f32.gmra.mxu0 %v1313
      %v1427 = vpop.f32.mrf.mxu0
      %v1428 = vadd.f32 0.0, %v1427
      %1429 = vmatmul.f32.gmra.mxu0 %v1315
      %v1430 = vpop.f32.mrf.mxu0
      %v1431 = vadd.f32 0.0, %v1430
      %1432 = vdwg.mxu0
      %v1433 = vadd.f32 %v1273, %v1338
      %v1434 = vadd.f32 %v1274, %v1341
      %v1435 = vadd.f32 %v1275, %v1344
      %v1436 = vadd.f32 %v1276, %v1347
      %v1437 = vadd.f32 %v1277, %v1350
      %v1438 = vadd.f32 %v1278, %v1353
      %v1439 = vadd.f32 %v1279, %v1356
      %v1440 = vadd.f32 %v1280, %v1359
      %v1441 = vadd.f32 %v1281, %v1362
      %v1442 = vadd.f32 %v1282, %v1365
      %v1443 = vadd.f32 %v1283, %v1368
      %v1444 = vadd.f32 %v1284, %v1371
      %v1445 = vadd.f32 %v1285, %v1374
      %v1446 = vadd.f32 %v1286, %v1377
      %v1447 = vadd.f32 %v1287, %v1380
      %v1448 = vadd.f32 %v1288, %v1383
      %v1449 = vadd.f32 %v1289, %v1386
      %v1450 = vadd.f32 %v1290, %v1389
      %v1451 = vadd.f32 %v1291, %v1392
      %v1452 = vadd.f32 %v1292, %v1395
      %v1453 = vadd.f32 %v1293, %v1398
      %v1454 = vadd.f32 %v1294, %v1401
      %v1455 = vadd.f32 %v1295, %v1404
      %v1456 = vadd.f32 %v1296, %v1407
      %v1457 = vadd.f32 %v1297, %v1410
      %v1458 = vadd.f32 %v1298, %v1413
      %v1459 = vadd.f32 %v1299, %v1416
      %v1460 = vadd.f32 %v1300, %v1419
      %v1461 = vadd.f32 %v1301, %v1422
      %v1462 = vadd.f32 %v1302, %v1425
      %v1463 = vadd.f32 %v1303, %v1428
      %v1464 = vadd.f32 %v1304, %v1431
      %v1465 = vrot.slane %v354, 2
      %v1466 = vrot.slane %v355, 2
      %v1467 = vsel %vm854, %v1465, %v1466
      %v1468 = vrot.slane %v356, 2
      %v1469 = vsel %vm854, %v1466, %v1468
      %s1470 = scalar_lea.vmem %s1, 20
      %v1471 = vld [vmem:[%s1470] sm:$0xf]
      %v1472 = vsel %vm492, %v1467, 0
      %v1474 = vsel %vm492, %v1469, 0
      %v1477 = vsel %vm557, %v1471, 0
      %1479 = vmatpush.msra.mxu0 0.0
      %1480 = vmatpush.msra.mxu0 0.0
      %1481 = vmatpush.msra.mxu0 0.0
      %1482 = vmatpush.msra.mxu0 0.0
      %1483 = vmatpush.msra.mxu0 0.0
      %1484 = vmatpush.msra.mxu0 0.0
      %1485 = vmatpush.msra.mxu0 0.0
      %1486 = vmatpush.msra.mxu0 0.0
      %1487 = vmatpush.msra.mxu0 0.0
      %1488 = vmatpush.msra.mxu0 0.0
      %1489 = vmatpush.msra.mxu0 0.0
      %1490 = vmatpush.msra.mxu0 0.0
      %1491 = vmatpush.msra.mxu0 0.0
      %1492 = vmatpush.msra.mxu0 0.0
      %1493 = vmatpush.msra.mxu0 0.0
      %1494 = vmatpush.msra.mxu0 %v1477
      %1495 = vmatmul.f32.gmra.mxu0 %v941
      %v1496 = vpop.f32.mrf.mxu0
      %v1497 = vadd.f32 0.0, %v1496
      %1498 = vmatmul.f32.gmra.mxu0 %v943
      %v1499 = vpop.f32.mrf.mxu0
      %v1500 = vadd.f32 0.0, %v1499
      %1501 = vmatmul.f32.gmra.mxu0 %v945
      %v1502 = vpop.f32.mrf.mxu0
      %v1503 = vadd.f32 0.0, %v1502
      %1504 = vmatmul.f32.gmra.mxu0 %v947
      %v1505 = vpop.f32.mrf.mxu0
      %v1506 = vadd.f32 0.0, %v1505
      %1507 = vmatmul.f32.gmra.mxu0 %v949
      %v1508 = vpop.f32.mrf.mxu0
      %v1509 = vadd.f32 0.0, %v1508
      %1510 = vmatmul.f32.gmra.mxu0 %v951
      %v1511 = vpop.f32.mrf.mxu0
      %v1512 = vadd.f32 0.0, %v1511
      %1513 = vmatmul.f32.gmra.mxu0 %v953
      %v1514 = vpop.f32.mrf.mxu0
      %v1515 = vadd.f32 0.0, %v1514
      %1516 = vmatmul.f32.gmra.mxu0 %v955
      %v1517 = vpop.f32.mrf.mxu0
      %v1518 = vadd.f32 0.0, %v1517
      %1519 = vmatmul.f32.gmra.mxu0 %v957
      %v1520 = vpop.f32.mrf.mxu0
      %v1521 = vadd.f32 0.0, %v1520
      %1522 = vmatmul.f32.gmra.mxu0 %v959
      %v1523 = vpop.f32.mrf.mxu0
      %v1524 = vadd.f32 0.0, %v1523
      %1525 = vmatmul.f32.gmra.mxu0 %v961
      %v1526 = vpop.f32.mrf.mxu0
      %v1527 = vadd.f32 0.0, %v1526
      %1528 = vmatmul.f32.gmra.mxu0 %v963
      %v1529 = vpop.f32.mrf.mxu0
      %v1530 = vadd.f32 0.0, %v1529
      %1531 = vmatmul.f32.gmra.mxu0 %v965
      %v1532 = vpop.f32.mrf.mxu0
      %v1533 = vadd.f32 0.0, %v1532
      %1534 = vmatmul.f32.gmra.mxu0 %v967
      %v1535 = vpop.f32.mrf.mxu0
      %v1536 = vadd.f32 0.0, %v1535
      %1537 = vmatmul.f32.gmra.mxu0 %v969
      %v1538 = vpop.f32.mrf.mxu0
      %v1539 = vadd.f32 0.0, %v1538
      %1540 = vmatmul.f32.gmra.mxu0 %v971
      %v1541 = vpop.f32.mrf.mxu0
      %v1542 = vadd.f32 0.0, %v1541
      %1543 = vmatmul.f32.gmra.mxu0 %v973
      %v1544 = vpop.f32.mrf.mxu0
      %v1545 = vadd.f32 0.0, %v1544
      %1546 = vmatmul.f32.gmra.mxu0 %v975
      %v1547 = vpop.f32.mrf.mxu0
      %v1548 = vadd.f32 0.0, %v1547
      %1549 = vmatmul.f32.gmra.mxu0 %v977
      %v1550 = vpop.f32.mrf.mxu0
      %v1551 = vadd.f32 0.0, %v1550
      %1552 = vmatmul.f32.gmra.mxu0 %v979
      %v1553 = vpop.f32.mrf.mxu0
      %v1554 = vadd.f32 0.0, %v1553
      %1555 = vmatmul.f32.gmra.mxu0 %v981
      %v1556 = vpop.f32.mrf.mxu0
      %v1557 = vadd.f32 0.0, %v1556
      %1558 = vmatmul.f32.gmra.mxu0 %v983
      %v1559 = vpop.f32.mrf.mxu0
      %v1560 = vadd.f32 0.0, %v1559
      %1561 = vmatmul.f32.gmra.mxu0 %v985
      %v1562 = vpop.f32.mrf.mxu0
      %v1563 = vadd.f32 0.0, %v1562
      %1564 = vmatmul.f32.gmra.mxu0 %v987
      %v1565 = vpop.f32.mrf.mxu0
      %v1566 = vadd.f32 0.0, %v1565
      %1567 = vmatmul.f32.gmra.mxu0 %v989
      %v1568 = vpop.f32.mrf.mxu0
      %v1569 = vadd.f32 0.0, %v1568
      %1570 = vmatmul.f32.gmra.mxu0 %v991
      %v1571 = vpop.f32.mrf.mxu0
      %v1572 = vadd.f32 0.0, %v1571
      %1573 = vmatmul.f32.gmra.mxu0 %v993
      %v1574 = vpop.f32.mrf.mxu0
      %v1575 = vadd.f32 0.0, %v1574
      %1576 = vmatmul.f32.gmra.mxu0 %v995
      %v1577 = vpop.f32.mrf.mxu0
      %v1578 = vadd.f32 0.0, %v1577
      %1579 = vmatmul.f32.gmra.mxu0 %v997
      %v1580 = vpop.f32.mrf.mxu0
      %v1581 = vadd.f32 0.0, %v1580
      %1582 = vmatmul.f32.gmra.mxu0 %v999
      %v1583 = vpop.f32.mrf.mxu0
      %v1584 = vadd.f32 0.0, %v1583
      %1585 = vmatmul.f32.gmra.mxu0 %v1472
      %v1586 = vpop.f32.mrf.mxu0
      %v1587 = vadd.f32 0.0, %v1586
      %1588 = vmatmul.f32.gmra.mxu0 %v1474
      %v1589 = vpop.f32.mrf.mxu0
      %v1590 = vadd.f32 0.0, %v1589
      %1591 = vdwg.mxu0
      %v1592 = vadd.f32 %v1433, %v1497
      %v1593 = vadd.f32 %v1434, %v1500
      %v1594 = vadd.f32 %v1435, %v1503
      %v1595 = vadd.f32 %v1436, %v1506
      %v1596 = vadd.f32 %v1437, %v1509
      %v1597 = vadd.f32 %v1438, %v1512
      %v1598 = vadd.f32 %v1439, %v1515
      %v1599 = vadd.f32 %v1440, %v1518
      %v1600 = vadd.f32 %v1441, %v1521
      %v1601 = vadd.f32 %v1442, %v1524
      %v1602 = vadd.f32 %v1443, %v1527
      %v1603 = vadd.f32 %v1444, %v1530
      %v1604 = vadd.f32 %v1445, %v1533
      %v1605 = vadd.f32 %v1446, %v1536
      %v1606 = vadd.f32 %v1447, %v1539
      %v1607 = vadd.f32 %v1448, %v1542
      %v1608 = vadd.f32 %v1449, %v1545
      %v1609 = vadd.f32 %v1450, %v1548
      %v1610 = vadd.f32 %v1451, %v1551
      %v1611 = vadd.f32 %v1452, %v1554
      %v1612 = vadd.f32 %v1453, %v1557
      %v1613 = vadd.f32 %v1454, %v1560
      %v1614 = vadd.f32 %v1455, %v1563
      %v1615 = vadd.f32 %v1456, %v1566
      %v1616 = vadd.f32 %v1457, %v1569
      %v1617 = vadd.f32 %v1458, %v1572
      %v1618 = vadd.f32 %v1459, %v1575
      %v1619 = vadd.f32 %v1460, %v1578
      %v1620 = vadd.f32 %v1461, %v1581
      %v1621 = vadd.f32 %v1462, %v1584
      %v1622 = vadd.f32 %v1463, %v1587
      %v1623 = vadd.f32 %v1464, %v1590
      %s1624 = scalar_lea.vmem %s1, 24
      %v1625 = vld [vmem:[%s1624] sm:$0xf]
      %v1627 = vsel %vm492, %v357, 0
      %v1630 = vsel %vm492, %v358, 0
      %v1633 = vsel %vm557, %v1625, 0
      %1635 = vmatpush.msra.mxu0 0.0
      %1636 = vmatpush.msra.mxu0 0.0
      %1637 = vmatpush.msra.mxu0 0.0
      %1638 = vmatpush.msra.mxu0 0.0
      %1639 = vmatpush.msra.mxu0 0.0
      %1640 = vmatpush.msra.mxu0 0.0
      %1641 = vmatpush.msra.mxu0 0.0
      %1642 = vmatpush.msra.mxu0 0.0
      %1643 = vmatpush.msra.mxu0 0.0
      %1644 = vmatpush.msra.mxu0 0.0
      %1645 = vmatpush.msra.mxu0 0.0
      %1646 = vmatpush.msra.mxu0 0.0
      %1647 = vmatpush.msra.mxu0 0.0
      %1648 = vmatpush.msra.mxu0 0.0
      %1649 = vmatpush.msra.mxu0 0.0
      %1650 = vmatpush.msra.mxu0 %v1633
      %1651 = vmatmul.f32.gmra.mxu0 %v682
      %v1652 = vpop.f32.mrf.mxu0
      %v1653 = vadd.f32 0.0, %v1652
      %1654 = vmatmul.f32.gmra.mxu0 %v684
      %v1655 = vpop.f32.mrf.mxu0
      %v1656 = vadd.f32 0.0, %v1655
      %1657 = vmatmul.f32.gmra.mxu0 %v686
      %v1658 = vpop.f32.mrf.mxu0
      %v1659 = vadd.f32 0.0, %v1658
      %1660 = vmatmul.f32.gmra.mxu0 %v688
      %v1661 = vpop.f32.mrf.mxu0
      %v1662 = vadd.f32 0.0, %v1661
      %1663 = vmatmul.f32.gmra.mxu0 %v690
      %v1664 = vpop.f32.mrf.mxu0
      %v1665 = vadd.f32 0.0, %v1664
      %1666 = vmatmul.f32.gmra.mxu0 %v692
      %v1667 = vpop.f32.mrf.mxu0
      %v1668 = vadd.f32 0.0, %v1667
      %1669 = vmatmul.f32.gmra.mxu0 %v694
      %v1670 = vpop.f32.mrf.mxu0
      %v1671 = vadd.f32 0.0, %v1670
      %1672 = vmatmul.f32.gmra.mxu0 %v696
      %v1673 = vpop.f32.mrf.mxu0
      %v1674 = vadd.f32 0.0, %v1673
      %1675 = vmatmul.f32.gmra.mxu0 %v698
      %v1676 = vpop.f32.mrf.mxu0
      %v1677 = vadd.f32 0.0, %v1676
      %1678 = vmatmul.f32.gmra.mxu0 %v700
      %v1679 = vpop.f32.mrf.mxu0
      %v1680 = vadd.f32 0.0, %v1679
      %1681 = vmatmul.f32.gmra.mxu0 %v702
      %v1682 = vpop.f32.mrf.mxu0
      %v1683 = vadd.f32 0.0, %v1682
      %1684 = vmatmul.f32.gmra.mxu0 %v704
      %v1685 = vpop.f32.mrf.mxu0
      %v1686 = vadd.f32 0.0, %v1685
      %1687 = vmatmul.f32.gmra.mxu0 %v706
      %v1688 = vpop.f32.mrf.mxu0
      %v1689 = vadd.f32 0.0, %v1688
      %1690 = vmatmul.f32.gmra.mxu0 %v708
      %v1691 = vpop.f32.mrf.mxu0
      %v1692 = vadd.f32 0.0, %v1691
      %1693 = vmatmul.f32.gmra.mxu0 %v710
      %v1694 = vpop.f32.mrf.mxu0
      %v1695 = vadd.f32 0.0, %v1694
      %1696 = vmatmul.f32.gmra.mxu0 %v712
      %v1697 = vpop.f32.mrf.mxu0
      %v1698 = vadd.f32 0.0, %v1697
      %1699 = vmatmul.f32.gmra.mxu0 %v714
      %v1700 = vpop.f32.mrf.mxu0
      %v1701 = vadd.f32 0.0, %v1700
      %1702 = vmatmul.f32.gmra.mxu0 %v716
      %v1703 = vpop.f32.mrf.mxu0
      %v1704 = vadd.f32 0.0, %v1703
      %1705 = vmatmul.f32.gmra.mxu0 %v718
      %v1706 = vpop.f32.mrf.mxu0
      %v1707 = vadd.f32 0.0, %v1706
      %1708 = vmatmul.f32.gmra.mxu0 %v720
      %v1709 = vpop.f32.mrf.mxu0
      %v1710 = vadd.f32 0.0, %v1709
      %1711 = vmatmul.f32.gmra.mxu0 %v722
      %v1712 = vpop.f32.mrf.mxu0
      %v1713 = vadd.f32 0.0, %v1712
      %1714 = vmatmul.f32.gmra.mxu0 %v724
      %v1715 = vpop.f32.mrf.mxu0
      %v1716 = vadd.f32 0.0, %v1715
      %1717 = vmatmul.f32.gmra.mxu0 %v726
      %v1718 = vpop.f32.mrf.mxu0
      %v1719 = vadd.f32 0.0, %v1718
      %1720 = vmatmul.f32.gmra.mxu0 %v728
      %v1721 = vpop.f32.mrf.mxu0
      %v1722 = vadd.f32 0.0, %v1721
      %1723 = vmatmul.f32.gmra.mxu0 %v730
      %v1724 = vpop.f32.mrf.mxu0
      %v1725 = vadd.f32 0.0, %v1724
      %1726 = vmatmul.f32.gmra.mxu0 %v732
      %v1727 = vpop.f32.mrf.mxu0
      %v1728 = vadd.f32 0.0, %v1727
      %1729 = vmatmul.f32.gmra.mxu0 %v734
      %v1730 = vpop.f32.mrf.mxu0
      %v1731 = vadd.f32 0.0, %v1730
      %1732 = vmatmul.f32.gmra.mxu0 %v736
      %v1733 = vpop.f32.mrf.mxu0
      %v1734 = vadd.f32 0.0, %v1733
      %1735 = vmatmul.f32.gmra.mxu0 %v1152
      %v1736 = vpop.f32.mrf.mxu0
      %v1737 = vadd.f32 0.0, %v1736
      %1738 = vmatmul.f32.gmra.mxu0 %v1155
      %v1739 = vpop.f32.mrf.mxu0
      %v1740 = vadd.f32 0.0, %v1739
      %1741 = vmatmul.f32.gmra.mxu0 %v1627
      %v1742 = vpop.f32.mrf.mxu0
      %v1743 = vadd.f32 0.0, %v1742
      %1744 = vmatmul.f32.gmra.mxu0 %v1630
      %v1745 = vpop.f32.mrf.mxu0
      %v1746 = vadd.f32 0.0, %v1745
      %1747 = vdwg.mxu0
      %v1748 = vadd.f32 %v1592, %v1653
      %v1749 = vadd.f32 %v1593, %v1656
      %v1750 = vadd.f32 %v1594, %v1659
      %v1751 = vadd.f32 %v1595, %v1662
      %v1752 = vadd.f32 %v1596, %v1665
      %v1753 = vadd.f32 %v1597, %v1668
      %v1754 = vadd.f32 %v1598, %v1671
      %v1755 = vadd.f32 %v1599, %v1674
      %v1756 = vadd.f32 %v1600, %v1677
      %v1757 = vadd.f32 %v1601, %v1680
      %v1758 = vadd.f32 %v1602, %v1683
      %v1759 = vadd.f32 %v1603, %v1686
      %v1760 = vadd.f32 %v1604, %v1689
      %v1761 = vadd.f32 %v1605, %v1692
      %v1762 = vadd.f32 %v1606, %v1695
      %v1763 = vadd.f32 %v1607, %v1698
      %v1764 = vadd.f32 %v1608, %v1701
      %v1765 = vadd.f32 %v1609, %v1704
      %v1766 = vadd.f32 %v1610, %v1707
      %v1767 = vadd.f32 %v1611, %v1710
      %v1768 = vadd.f32 %v1612, %v1713
      %v1769 = vadd.f32 %v1613, %v1716
      %v1770 = vadd.f32 %v1614, %v1719
      %v1771 = vadd.f32 %v1615, %v1722
      %v1772 = vadd.f32 %v1616, %v1725
      %v1773 = vadd.f32 %v1617, %v1728
      %v1774 = vadd.f32 %v1618, %v1731
      %v1775 = vadd.f32 %v1619, %v1734
      %v1776 = vadd.f32 %v1620, %v1737
      %v1777 = vadd.f32 %v1621, %v1740
      %v1778 = vadd.f32 %v1622, %v1743
      %v1779 = vadd.f32 %v1623, %v1746
      %v1781 = vrot.slane %v357, 1
      %v1782 = vrot.slane %v358, 1
      %v1783 = vsel %vm409, %v1781, %v1782
      %v1784 = vrot.slane %v359, 1
      %v1785 = vsel %vm409, %v1782, %v1784
      %s1786 = scalar_lea.vmem %s1, 28
      %v1787 = vld [vmem:[%s1786] sm:$0xf]
      %v1788 = vsel %vm492, %v1783, 0
      %v1790 = vsel %vm492, %v1785, 0
      %v1793 = vsel %vm557, %v1787, 0
      %1795 = vmatpush.msra.mxu0 0.0
      %1796 = vmatpush.msra.mxu0 0.0
      %1797 = vmatpush.msra.mxu0 0.0
      %1798 = vmatpush.msra.mxu0 0.0
      %1799 = vmatpush.msra.mxu0 0.0
      %1800 = vmatpush.msra.mxu0 0.0
      %1801 = vmatpush.msra.mxu0 0.0
      %1802 = vmatpush.msra.mxu0 0.0
      %1803 = vmatpush.msra.mxu0 0.0
      %1804 = vmatpush.msra.mxu0 0.0
      %1805 = vmatpush.msra.mxu0 0.0
      %1806 = vmatpush.msra.mxu0 0.0
      %1807 = vmatpush.msra.mxu0 0.0
      %1808 = vmatpush.msra.mxu0 0.0
      %1809 = vmatpush.msra.mxu0 0.0
      %1810 = vmatpush.msra.mxu0 %v1793
      %1811 = vmatmul.f32.gmra.mxu0 %v501
      %v1812 = vpop.f32.mrf.mxu0
      %v1813 = vadd.f32 0.0, %v1812
      %1814 = vmatmul.f32.gmra.mxu0 %v503
      %v1815 = vpop.f32.mrf.mxu0
      %v1816 = vadd.f32 0.0, %v1815
      %1817 = vmatmul.f32.gmra.mxu0 %v505
      %v1818 = vpop.f32.mrf.mxu0
      %v1819 = vadd.f32 0.0, %v1818
      %1820 = vmatmul.f32.gmra.mxu0 %v507
      %v1821 = vpop.f32.mrf.mxu0
      %v1822 = vadd.f32 0.0, %v1821
      %1823 = vmatmul.f32.gmra.mxu0 %v509
      %v1824 = vpop.f32.mrf.mxu0
      %v1825 = vadd.f32 0.0, %v1824
      %1826 = vmatmul.f32.gmra.mxu0 %v511
      %v1827 = vpop.f32.mrf.mxu0
      %v1828 = vadd.f32 0.0, %v1827
      %1829 = vmatmul.f32.gmra.mxu0 %v513
      %v1830 = vpop.f32.mrf.mxu0
      %v1831 = vadd.f32 0.0, %v1830
      %1832 = vmatmul.f32.gmra.mxu0 %v515
      %v1833 = vpop.f32.mrf.mxu0
      %v1834 = vadd.f32 0.0, %v1833
      %1835 = vmatmul.f32.gmra.mxu0 %v517
      %v1836 = vpop.f32.mrf.mxu0
      %v1837 = vadd.f32 0.0, %v1836
      %1838 = vmatmul.f32.gmra.mxu0 %v519
      %v1839 = vpop.f32.mrf.mxu0
      %v1840 = vadd.f32 0.0, %v1839
      %1841 = vmatmul.f32.gmra.mxu0 %v521
      %v1842 = vpop.f32.mrf.mxu0
      %v1843 = vadd.f32 0.0, %v1842
      %1844 = vmatmul.f32.gmra.mxu0 %v523
      %v1845 = vpop.f32.mrf.mxu0
      %v1846 = vadd.f32 0.0, %v1845
      %1847 = vmatmul.f32.gmra.mxu0 %v525
      %v1848 = vpop.f32.mrf.mxu0
      %v1849 = vadd.f32 0.0, %v1848
      %1850 = vmatmul.f32.gmra.mxu0 %v527
      %v1851 = vpop.f32.mrf.mxu0
      %v1852 = vadd.f32 0.0, %v1851
      %1853 = vmatmul.f32.gmra.mxu0 %v529
      %v1854 = vpop.f32.mrf.mxu0
      %v1855 = vadd.f32 0.0, %v1854
      %1856 = vmatmul.f32.gmra.mxu0 %v531
      %v1857 = vpop.f32.mrf.mxu0
      %v1858 = vadd.f32 0.0, %v1857
      %1859 = vmatmul.f32.gmra.mxu0 %v533
      %v1860 = vpop.f32.mrf.mxu0
      %v1861 = vadd.f32 0.0, %v1860
      %1862 = vmatmul.f32.gmra.mxu0 %v535
      %v1863 = vpop.f32.mrf.mxu0
      %v1864 = vadd.f32 0.0, %v1863
      %1865 = vmatmul.f32.gmra.mxu0 %v537
      %v1866 = vpop.f32.mrf.mxu0
      %v1867 = vadd.f32 0.0, %v1866
      %1868 = vmatmul.f32.gmra.mxu0 %v539
      %v1869 = vpop.f32.mrf.mxu0
      %v1870 = vadd.f32 0.0, %v1869
      %1871 = vmatmul.f32.gmra.mxu0 %v541
      %v1872 = vpop.f32.mrf.mxu0
      %v1873 = vadd.f32 0.0, %v1872
      %1874 = vmatmul.f32.gmra.mxu0 %v543
      %v1875 = vpop.f32.mrf.mxu0
      %v1876 = vadd.f32 0.0, %v1875
      %1877 = vmatmul.f32.gmra.mxu0 %v545
      %v1878 = vpop.f32.mrf.mxu0
      %v1879 = vadd.f32 0.0, %v1878
      %1880 = vmatmul.f32.gmra.mxu0 %v547
      %v1881 = vpop.f32.mrf.mxu0
      %v1882 = vadd.f32 0.0, %v1881
      %1883 = vmatmul.f32.gmra.mxu0 %v549
      %v1884 = vpop.f32.mrf.mxu0
      %v1885 = vadd.f32 0.0, %v1884
      %1886 = vmatmul.f32.gmra.mxu0 %v551
      %v1887 = vpop.f32.mrf.mxu0
      %v1888 = vadd.f32 0.0, %v1887
      %1889 = vmatmul.f32.gmra.mxu0 %v553
      %v1890 = vpop.f32.mrf.mxu0
      %v1891 = vadd.f32 0.0, %v1890
      %1892 = vmatmul.f32.gmra.mxu0 %v555
      %v1893 = vpop.f32.mrf.mxu0
      %v1894 = vadd.f32 0.0, %v1893
      %1895 = vmatmul.f32.gmra.mxu0 %v1313
      %v1896 = vpop.f32.mrf.mxu0
      %v1897 = vadd.f32 0.0, %v1896
      %1898 = vmatmul.f32.gmra.mxu0 %v1315
      %v1899 = vpop.f32.mrf.mxu0
      %v1900 = vadd.f32 0.0, %v1899
      %1901 = vmatmul.f32.gmra.mxu0 %v1788
      %v1902 = vpop.f32.mrf.mxu0
      %v1903 = vadd.f32 0.0, %v1902
      %1904 = vmatmul.f32.gmra.mxu0 %v1790
      %v1905 = vpop.f32.mrf.mxu0
      %v1906 = vadd.f32 0.0, %v1905
      %1907 = vdwg.mxu0
      %v1908 = vadd.f32 %v1748, %v1813
      %v1909 = vadd.f32 %v1749, %v1816
      %v1910 = vadd.f32 %v1750, %v1819
      %v1911 = vadd.f32 %v1751, %v1822
      %v1912 = vadd.f32 %v1752, %v1825
      %v1913 = vadd.f32 %v1753, %v1828
      %v1914 = vadd.f32 %v1754, %v1831
      %v1915 = vadd.f32 %v1755, %v1834
      %v1916 = vadd.f32 %v1756, %v1837
      %v1917 = vadd.f32 %v1757, %v1840
      %v1918 = vadd.f32 %v1758, %v1843
      %v1919 = vadd.f32 %v1759, %v1846
      %v1920 = vadd.f32 %v1760, %v1849
      %v1921 = vadd.f32 %v1761, %v1852
      %v1922 = vadd.f32 %v1762, %v1855
      %v1923 = vadd.f32 %v1763, %v1858
      %v1924 = vadd.f32 %v1764, %v1861
      %v1925 = vadd.f32 %v1765, %v1864
      %v1926 = vadd.f32 %v1766, %v1867
      %v1927 = vadd.f32 %v1767, %v1870
      %v1928 = vadd.f32 %v1768, %v1873
      %v1929 = vadd.f32 %v1769, %v1876
      %v1930 = vadd.f32 %v1770, %v1879
      %v1931 = vadd.f32 %v1771, %v1882
      %v1932 = vadd.f32 %v1772, %v1885
      %v1933 = vadd.f32 %v1773, %v1888
      %v1934 = vadd.f32 %v1774, %v1891
      %v1935 = vadd.f32 %v1775, %v1894
      %v1936 = vadd.f32 %v1776, %v1897
      %v1937 = vadd.f32 %v1777, %v1900
      %v1938 = vadd.f32 %v1778, %v1903
      %v1939 = vadd.f32 %v1779, %v1906
      %v1940 = vrot.slane %v357, 2
      %v1941 = vrot.slane %v358, 2
      %v1942 = vsel %vm854, %v1940, %v1941
      %v1943 = vrot.slane %v359, 2
      %v1944 = vsel %vm854, %v1941, %v1943
      %s1945 = scalar_lea.vmem %s1, 32
      %v1946 = vld [vmem:[%s1945] sm:$0xf]
      %v1947 = vsel %vm492, %v1942, 0
      %v1949 = vsel %vm492, %v1944, 0
      %v1952 = vsel %vm557, %v1946, 0
      %1954 = vmatpush.msra.mxu0 0.0
      %1955 = vmatpush.msra.mxu0 0.0
      %1956 = vmatpush.msra.mxu0 0.0
      %1957 = vmatpush.msra.mxu0 0.0
      %1958 = vmatpush.msra.mxu0 0.0
      %1959 = vmatpush.msra.mxu0 0.0
      %1960 = vmatpush.msra.mxu0 0.0
      %1961 = vmatpush.msra.mxu0 0.0
      %1962 = vmatpush.msra.mxu0 0.0
      %1963 = vmatpush.msra.mxu0 0.0
      %1964 = vmatpush.msra.mxu0 0.0
      %1965 = vmatpush.msra.mxu0 0.0
      %1966 = vmatpush.msra.mxu0 0.0
      %1967 = vmatpush.msra.mxu0 0.0
      %1968 = vmatpush.msra.mxu0 0.0
      %1969 = vmatpush.msra.mxu0 %v1952
      %1970 = vmatmul.f32.gmra.mxu0 %v945
      %v1971 = vpop.f32.mrf.mxu0
      %v1972 = vadd.f32 0.0, %v1971
      %1973 = vmatmul.f32.gmra.mxu0 %v947
      %v1974 = vpop.f32.mrf.mxu0
      %v1975 = vadd.f32 0.0, %v1974
      %1976 = vmatmul.f32.gmra.mxu0 %v949
      %v1977 = vpop.f32.mrf.mxu0
      %v1978 = vadd.f32 0.0, %v1977
      %1979 = vmatmul.f32.gmra.mxu0 %v951
      %v1980 = vpop.f32.mrf.mxu0
      %v1981 = vadd.f32 0.0, %v1980
      %1982 = vmatmul.f32.gmra.mxu0 %v953
      %v1983 = vpop.f32.mrf.mxu0
      %v1984 = vadd.f32 0.0, %v1983
      %1985 = vmatmul.f32.gmra.mxu0 %v955
      %v1986 = vpop.f32.mrf.mxu0
      %v1987 = vadd.f32 0.0, %v1986
      %1988 = vmatmul.f32.gmra.mxu0 %v957
      %v1989 = vpop.f32.mrf.mxu0
      %v1990 = vadd.f32 0.0, %v1989
      %1991 = vmatmul.f32.gmra.mxu0 %v959
      %v1992 = vpop.f32.mrf.mxu0
      %v1993 = vadd.f32 0.0, %v1992
      %1994 = vmatmul.f32.gmra.mxu0 %v961
      %v1995 = vpop.f32.mrf.mxu0
      %v1996 = vadd.f32 0.0, %v1995
      %1997 = vmatmul.f32.gmra.mxu0 %v963
      %v1998 = vpop.f32.mrf.mxu0
      %v1999 = vadd.f32 0.0, %v1998
      %2000 = vmatmul.f32.gmra.mxu0 %v965
      %v2001 = vpop.f32.mrf.mxu0
      %v2002 = vadd.f32 0.0, %v2001
      %2003 = vmatmul.f32.gmra.mxu0 %v967
      %v2004 = vpop.f32.mrf.mxu0
      %v2005 = vadd.f32 0.0, %v2004
      %2006 = vmatmul.f32.gmra.mxu0 %v969
      %v2007 = vpop.f32.mrf.mxu0
      %v2008 = vadd.f32 0.0, %v2007
      %2009 = vmatmul.f32.gmra.mxu0 %v971
      %v2010 = vpop.f32.mrf.mxu0
      %v2011 = vadd.f32 0.0, %v2010
      %2012 = vmatmul.f32.gmra.mxu0 %v973
      %v2013 = vpop.f32.mrf.mxu0
      %v2014 = vadd.f32 0.0, %v2013
      %2015 = vmatmul.f32.gmra.mxu0 %v975
      %v2016 = vpop.f32.mrf.mxu0
      %v2017 = vadd.f32 0.0, %v2016
      %2018 = vmatmul.f32.gmra.mxu0 %v977
      %v2019 = vpop.f32.mrf.mxu0
      %v2020 = vadd.f32 0.0, %v2019
      %2021 = vmatmul.f32.gmra.mxu0 %v979
      %v2022 = vpop.f32.mrf.mxu0
      %v2023 = vadd.f32 0.0, %v2022
      %2024 = vmatmul.f32.gmra.mxu0 %v981
      %v2025 = vpop.f32.mrf.mxu0
      %v2026 = vadd.f32 0.0, %v2025
      %2027 = vmatmul.f32.gmra.mxu0 %v983
      %v2028 = vpop.f32.mrf.mxu0
      %v2029 = vadd.f32 0.0, %v2028
      %2030 = vmatmul.f32.gmra.mxu0 %v985
      %v2031 = vpop.f32.mrf.mxu0
      %v2032 = vadd.f32 0.0, %v2031
      %2033 = vmatmul.f32.gmra.mxu0 %v987
      %v2034 = vpop.f32.mrf.mxu0
      %v2035 = vadd.f32 0.0, %v2034
      %2036 = vmatmul.f32.gmra.mxu0 %v989
      %v2037 = vpop.f32.mrf.mxu0
      %v2038 = vadd.f32 0.0, %v2037
      %2039 = vmatmul.f32.gmra.mxu0 %v991
      %v2040 = vpop.f32.mrf.mxu0
      %v2041 = vadd.f32 0.0, %v2040
      %2042 = vmatmul.f32.gmra.mxu0 %v993
      %v2043 = vpop.f32.mrf.mxu0
      %v2044 = vadd.f32 0.0, %v2043
      %2045 = vmatmul.f32.gmra.mxu0 %v995
      %v2046 = vpop.f32.mrf.mxu0
      %v2047 = vadd.f32 0.0, %v2046
      %2048 = vmatmul.f32.gmra.mxu0 %v997
      %v2049 = vpop.f32.mrf.mxu0
      %v2050 = vadd.f32 0.0, %v2049
      %2051 = vmatmul.f32.gmra.mxu0 %v999
      %v2052 = vpop.f32.mrf.mxu0
      %v2053 = vadd.f32 0.0, %v2052
      %2054 = vmatmul.f32.gmra.mxu0 %v1472
      %v2055 = vpop.f32.mrf.mxu0
      %v2056 = vadd.f32 0.0, %v2055
      %2057 = vmatmul.f32.gmra.mxu0 %v1474
      %v2058 = vpop.f32.mrf.mxu0
      %v2059 = vadd.f32 0.0, %v2058
      %2060 = vmatmul.f32.gmra.mxu0 %v1947
      %v2061 = vpop.f32.mrf.mxu0
      %v2062 = vadd.f32 0.0, %v2061
      %2063 = vmatmul.f32.gmra.mxu0 %v1949
      %v2064 = vpop.f32.mrf.mxu0
      %v2065 = vadd.f32 0.0, %v2064
      %2066 = vdwg.mxu0
      %v2067 = vadd.f32 %v1908, %v1972
      %v2068 = vadd.f32 %v1909, %v1975
      %v2069 = vadd.f32 %v1910, %v1978
      %v2070 = vadd.f32 %v1911, %v1981
      %v2071 = vadd.f32 %v1912, %v1984
      %v2072 = vadd.f32 %v1913, %v1987
      %v2073 = vadd.f32 %v1914, %v1990
      %v2074 = vadd.f32 %v1915, %v1993
      %v2075 = vadd.f32 %v1916, %v1996
      %v2076 = vadd.f32 %v1917, %v1999
      %v2077 = vadd.f32 %v1918, %v2002
      %v2078 = vadd.f32 %v1919, %v2005
      %v2079 = vadd.f32 %v1920, %v2008
      %v2080 = vadd.f32 %v1921, %v2011
      %v2081 = vadd.f32 %v1922, %v2014
      %v2082 = vadd.f32 %v1923, %v2017
      %v2083 = vadd.f32 %v1924, %v2020
      %v2084 = vadd.f32 %v1925, %v2023
      %v2085 = vadd.f32 %v1926, %v2026
      %v2086 = vadd.f32 %v1927, %v2029
      %v2087 = vadd.f32 %v1928, %v2032
      %v2088 = vadd.f32 %v1929, %v2035
      %v2089 = vadd.f32 %v1930, %v2038
      %v2090 = vadd.f32 %v1931, %v2041
      %v2091 = vadd.f32 %v1932, %v2044
      %v2092 = vadd.f32 %v1933, %v2047
      %v2093 = vadd.f32 %v1934, %v2050
      %v2094 = vadd.f32 %v1935, %v2053
      %v2095 = vadd.f32 %v1936, %v2056
      %v2096 = vadd.f32 %v1937, %v2059
      %v2097 = vadd.f32 %v1938, %v2062
      %v2098 = vadd.f32 %v1939, %v2065
      %v2099 = vld [vmem:[%s2] sm:$0x1]
      %v2101 = vperm.slane %v2099, 0
      %v2103 = vadd.f32 %v2067, %v2101
      %v2104 = vadd.f32 %v2068, %v2101
      %v2105 = vadd.f32 %v2069, %v2101
      %v2106 = vadd.f32 %v2070, %v2101
      %v2107 = vadd.f32 %v2071, %v2101
      %v2108 = vadd.f32 %v2072, %v2101
      %v2109 = vadd.f32 %v2073, %v2101
      %v2110 = vadd.f32 %v2074, %v2101
      %v2111 = vadd.f32 %v2075, %v2101
      %v2112 = vadd.f32 %v2076, %v2101
      %v2113 = vadd.f32 %v2077, %v2101
      %v2114 = vadd.f32 %v2078, %v2101
      %v2115 = vadd.f32 %v2079, %v2101
      %v2116 = vadd.f32 %v2080, %v2101
      %v2117 = vadd.f32 %v2081, %v2101
      %v2118 = vadd.f32 %v2082, %v2101
      %v2119 = vadd.f32 %v2083, %v2101
      %v2120 = vadd.f32 %v2084, %v2101
      %v2121 = vadd.f32 %v2085, %v2101
      %v2122 = vadd.f32 %v2086, %v2101
      %v2123 = vadd.f32 %v2087, %v2101
      %v2124 = vadd.f32 %v2088, %v2101
      %v2125 = vadd.f32 %v2089, %v2101
      %v2126 = vadd.f32 %v2090, %v2101
      %v2127 = vadd.f32 %v2091, %v2101
      %v2128 = vadd.f32 %v2092, %v2101
      %v2129 = vadd.f32 %v2093, %v2101
      %v2130 = vadd.f32 %v2094, %v2101
      %v2131 = vadd.f32 %v2095, %v2101
      %v2132 = vadd.f32 %v2096, %v2101
      %v2133 = vadd.f32 %v2097, %v2101
      %v2134 = vadd.f32 %v2098, %v2101
      %v2135 = vmax.f32 %v2103, 0.0
      %v2136 = vmax.f32 %v2104, 0.0
      %v2137 = vmax.f32 %v2105, 0.0
      %v2138 = vmax.f32 %v2106, 0.0
      %v2139 = vmax.f32 %v2107, 0.0
      %v2140 = vmax.f32 %v2108, 0.0
      %v2141 = vmax.f32 %v2109, 0.0
      %v2142 = vmax.f32 %v2110, 0.0
      %v2143 = vmax.f32 %v2111, 0.0
      %v2144 = vmax.f32 %v2112, 0.0
      %v2145 = vmax.f32 %v2113, 0.0
      %v2146 = vmax.f32 %v2114, 0.0
      %v2147 = vmax.f32 %v2115, 0.0
      %v2148 = vmax.f32 %v2116, 0.0
      %v2149 = vmax.f32 %v2117, 0.0
      %v2150 = vmax.f32 %v2118, 0.0
      %v2151 = vmax.f32 %v2119, 0.0
      %v2152 = vmax.f32 %v2120, 0.0
      %v2153 = vmax.f32 %v2121, 0.0
      %v2154 = vmax.f32 %v2122, 0.0
      %v2155 = vmax.f32 %v2123, 0.0
      %v2156 = vmax.f32 %v2124, 0.0
      %v2157 = vmax.f32 %v2125, 0.0
      %v2158 = vmax.f32 %v2126, 0.0
      %v2159 = vmax.f32 %v2127, 0.0
      %v2160 = vmax.f32 %v2128, 0.0
      %v2161 = vmax.f32 %v2129, 0.0
      %v2162 = vmax.f32 %v2130, 0.0
      %v2163 = vmax.f32 %v2131, 0.0
      %v2164 = vmax.f32 %v2132, 0.0
      %v2165 = vmax.f32 %v2133, 0.0
      %v2166 = vmax.f32 %v2134, 0.0
      %vm2167 = vcmask 523264
      %2168 = vst.msk [vmem:[#allocation2] sm:$0xff] %vm2167, 0.0
      %2169 = vst.msk [vmem:[#allocation2 + $0x8] sm:$0xff] %vm2167, 0.0
      %vm2170 = vcmask 517120
      %2171 = vst.msk [vmem:[#allocation2 + $0x10] sm:$0x3] %vm2170, 0.0
      %2172 = vst.msk [vmem:[#allocation2 + $0x18] sm:$0xff] %vm2167, 0.0
      %2173 = vst.msk [vmem:[#allocation2 + $0x20] sm:$0xff] %vm2167, 0.0
      %2174 = vst.msk [vmem:[#allocation2 + $0x28] sm:$0x3] %vm2170, 0.0
      %2175 = vst.msk [vmem:[#allocation2 + $0x30] sm:$0xff] %vm2167, 0.0
      %2176 = vst.msk [vmem:[#allocation2 + $0x38] sm:$0xff] %vm2167, 0.0
      %2177 = vst.msk [vmem:[#allocation2 + $0x40] sm:$0x3] %vm2170, 0.0
      %2178 = vst.msk [vmem:[#allocation2 + $0x48] sm:$0xff] %vm2167, 0.0
      %2179 = vst.msk [vmem:[#allocation2 + $0x50] sm:$0xff] %vm2167, 0.0
      %2180 = vst.msk [vmem:[#allocation2 + $0x58] sm:$0x3] %vm2170, 0.0
      %2181 = vst.msk [vmem:[#allocation2 + $0x60] sm:$0xff] %vm2167, 0.0
      %2182 = vst.msk [vmem:[#allocation2 + $0x68] sm:$0xff] %vm2167, 0.0
      %2183 = vst.msk [vmem:[#allocation2 + $0x70] sm:$0x3] %vm2170, 0.0
      %2184 = vst.msk [vmem:[#allocation2 + $0x78] sm:$0xff] %vm2167, 0.0
      %2185 = vst.msk [vmem:[#allocation2 + $0x80] sm:$0xff] %vm2167, 0.0
      %2186 = vst.msk [vmem:[#allocation2 + $0x88] sm:$0x3] %vm2170, 0.0
      %2187 = vst.msk [vmem:[#allocation2 + $0x90] sm:$0xff] %vm2167, 0.0
      %2188 = vst.msk [vmem:[#allocation2 + $0x98] sm:$0xff] %vm2167, 0.0
      %2189 = vst.msk [vmem:[#allocation2 + $0xa0] sm:$0x3] %vm2170, 0.0
      %2190 = vst.msk [vmem:[#allocation2 + $0xa8] sm:$0xff] %vm2167, 0.0
      %2191 = vst.msk [vmem:[#allocation2 + $0xb0] sm:$0xff] %vm2167, 0.0
      %2192 = vst.msk [vmem:[#allocation2 + $0xb8] sm:$0x3] %vm2170, 0.0
      %2193 = vst.msk [vmem:[#allocation2 + $0xc0] sm:$0xff] %vm2167, 0.0
      %2194 = vst.msk [vmem:[#allocation2 + $0xc8] sm:$0xff] %vm2167, 0.0
      %2195 = vst.msk [vmem:[#allocation2 + $0xd0] sm:$0x3] %vm2170, 0.0
      %2196 = vst.msk [vmem:[#allocation2 + $0xd8] sm:$0xff] %vm2167, 0.0
      %2197 = vst.msk [vmem:[#allocation2 + $0xe0] sm:$0xff] %vm2167, 0.0
      %2198 = vst.msk [vmem:[#allocation2 + $0xe8] sm:$0x3] %vm2170, 0.0
      %2199 = vst.msk [vmem:[#allocation2 + $0xf0] sm:$0xff] %vm2167, 0.0
      %2200 = vst.msk [vmem:[#allocation2 + $0xf8] sm:$0xff] %vm2167, 0.0
      %2201 = vst.msk [vmem:[#allocation2 + $0x100] sm:$0x3] %vm2170, 0.0
      %2202 = vst.msk [vmem:[#allocation2 + $0x108] sm:$0xff] %vm2167, 0.0
      %2203 = vst.msk [vmem:[#allocation2 + $0x110] sm:$0xff] %vm2167, 0.0
      %2204 = vst.msk [vmem:[#allocation2 + $0x118] sm:$0x3] %vm2170, 0.0
      %2205 = vst.msk [vmem:[#allocation2 + $0x120] sm:$0xff] %vm2167, 0.0
      %2206 = vst.msk [vmem:[#allocation2 + $0x128] sm:$0xff] %vm2167, 0.0
      %2207 = vst.msk [vmem:[#allocation2 + $0x130] sm:$0x3] %vm2170, 0.0
      %2208 = vst.msk [vmem:[#allocation2 + $0x138] sm:$0xff] %vm2167, 0.0
      %2209 = vst.msk [vmem:[#allocation2 + $0x140] sm:$0xff] %vm2167, 0.0
      %2210 = vst.msk [vmem:[#allocation2 + $0x148] sm:$0x3] %vm2170, 0.0
      %2211 = vst.msk [vmem:[#allocation2 + $0x150] sm:$0xff] %vm2167, 0.0
      %2212 = vst.msk [vmem:[#allocation2 + $0x158] sm:$0xff] %vm2167, 0.0
      %2213 = vst.msk [vmem:[#allocation2 + $0x160] sm:$0x3] %vm2170, 0.0
      %2214 = vst.msk [vmem:[#allocation2 + $0x168] sm:$0xff] %vm2167, 0.0
      %2215 = vst.msk [vmem:[#allocation2 + $0x170] sm:$0xff] %vm2167, 0.0
      %2216 = vst.msk [vmem:[#allocation2 + $0x178] sm:$0x3] %vm2170, 0.0
      %2217 = vst.msk [vmem:[#allocation2 + $0x180] sm:$0xff] %vm2167, 0.0
      %2218 = vst.msk [vmem:[#allocation2 + $0x188] sm:$0xff] %vm2167, 0.0
      %2219 = vst.msk [vmem:[#allocation2 + $0x190] sm:$0x3] %vm2170, 0.0
      %2220 = vst.msk [vmem:[#allocation2 + $0x198] sm:$0xff] %vm2167, 0.0
      %2221 = vst.msk [vmem:[#allocation2 + $0x1a0] sm:$0xff] %vm2167, 0.0
      %2222 = vst.msk [vmem:[#allocation2 + $0x1a8] sm:$0x3] %vm2170, 0.0
      %s2223 = scalar_lea.vmem [#allocation2], 24
      %2224 = vst.msk [vmem:[%s2223 + $0x1] sm:$0xff] %vm2167, %v2135
      %2225 = vst.msk [vmem:[%s2223 + $0x9] sm:$0xff] %vm2167, %v2136
      %2226 = vst.msk [vmem:[%s2223 + $0x19] sm:$0xff] %vm2167, %v2137
      %2227 = vst.msk [vmem:[%s2223 + $0x21] sm:$0xff] %vm2167, %v2138
      %2228 = vst.msk [vmem:[%s2223 + $0x31] sm:$0xff] %vm2167, %v2139
      %2229 = vst.msk [vmem:[%s2223 + $0x39] sm:$0xff] %vm2167, %v2140
      %2230 = vst.msk [vmem:[%s2223 + $0x49] sm:$0xff] %vm2167, %v2141
      %2231 = vst.msk [vmem:[%s2223 + $0x51] sm:$0xff] %vm2167, %v2142
      %2232 = vst.msk [vmem:[%s2223 + $0x61] sm:$0xff] %vm2167, %v2143
      %2233 = vst.msk [vmem:[%s2223 + $0x69] sm:$0xff] %vm2167, %v2144
      %2234 = vst.msk [vmem:[%s2223 + $0x79] sm:$0xff] %vm2167, %v2145
      %2235 = vst.msk [vmem:[%s2223 + $0x81] sm:$0xff] %vm2167, %v2146
      %2236 = vst.msk [vmem:[%s2223 + $0x91] sm:$0xff] %vm2167, %v2147
      %2237 = vst.msk [vmem:[%s2223 + $0x99] sm:$0xff] %vm2167, %v2148
      %2238 = vst.msk [vmem:[%s2223 + $0xa9] sm:$0xff] %vm2167, %v2149
      %2239 = vst.msk [vmem:[%s2223 + $0xb1] sm:$0xff] %vm2167, %v2150
      %2240 = vst.msk [vmem:[%s2223 + $0xc1] sm:$0xff] %vm2167, %v2151
      %2241 = vst.msk [vmem:[%s2223 + $0xc9] sm:$0xff] %vm2167, %v2152
      %2242 = vst.msk [vmem:[%s2223 + $0xd9] sm:$0xff] %vm2167, %v2153
      %2243 = vst.msk [vmem:[%s2223 + $0xe1] sm:$0xff] %vm2167, %v2154
      %2244 = vst.msk [vmem:[%s2223 + $0xf1] sm:$0xff] %vm2167, %v2155
      %2245 = vst.msk [vmem:[%s2223 + $0xf9] sm:$0xff] %vm2167, %v2156
      %2246 = vst.msk [vmem:[%s2223 + $0x109] sm:$0xff] %vm2167, %v2157
      %2247 = vst.msk [vmem:[%s2223 + $0x111] sm:$0xff] %vm2167, %v2158
      %2248 = vst.msk [vmem:[%s2223 + $0x121] sm:$0xff] %vm2167, %v2159
      %2249 = vst.msk [vmem:[%s2223 + $0x129] sm:$0xff] %vm2167, %v2160
      %2250 = vst.msk [vmem:[%s2223 + $0x139] sm:$0xff] %vm2167, %v2161
      %2251 = vst.msk [vmem:[%s2223 + $0x141] sm:$0xff] %vm2167, %v2162
      %2252 = vst.msk [vmem:[%s2223 + $0x151] sm:$0xff] %vm2167, %v2163
      %2253 = vst.msk [vmem:[%s2223 + $0x159] sm:$0xff] %vm2167, %v2164
      %2254 = vst.msk [vmem:[%s2223 + $0x169] sm:$0xff] %vm2167, %v2165
      %2255 = vst.msk [vmem:[%s2223 + $0x171] sm:$0xff] %vm2167, %v2166
      %v2256 = vld [vmem:[#allocation2] sm:$0xff]
      %v2257 = vld [vmem:[#allocation2 + $0x8] sm:$0xff]
      %v2258 = vld [vmem:[#allocation2 + $0x18] sm:$0xff]
      %v2259 = vld [vmem:[#allocation2 + $0x20] sm:$0xff]
      %v2260 = vld [vmem:[#allocation2 + $0x30] sm:$0xff]
      %v2261 = vld [vmem:[#allocation2 + $0x38] sm:$0xff]
      %v2262 = vld [vmem:[#allocation2 + $0x48] sm:$0xff]
      %v2263 = vld [vmem:[#allocation2 + $0x50] sm:$0xff]
      %v2264 = vld [vmem:[#allocation2 + $0x60] sm:$0xff]
      %v2265 = vld [vmem:[#allocation2 + $0x68] sm:$0xff]
      %v2266 = vld [vmem:[#allocation2 + $0x78] sm:$0xff]
      %v2267 = vld [vmem:[#allocation2 + $0x80] sm:$0xff]
      %v2268 = vld [vmem:[#allocation2 + $0x90] sm:$0xff]
      %v2269 = vld [vmem:[#allocation2 + $0x98] sm:$0xff]
      %v2270 = vld [vmem:[#allocation2 + $0xa8] sm:$0xff]
      %v2271 = vld [vmem:[#allocation2 + $0xb0] sm:$0xff]
      %v2272 = vld [vmem:[#allocation2 + $0xc0] sm:$0xff]
      %v2273 = vld [vmem:[#allocation2 + $0xc8] sm:$0xff]
      %v2274 = vld [vmem:[#allocation2 + $0xd8] sm:$0xff]
      %v2275 = vld [vmem:[#allocation2 + $0xe0] sm:$0xff]
      %v2276 = vld [vmem:[#allocation2 + $0xf0] sm:$0xff]
      %v2277 = vld [vmem:[#allocation2 + $0xf8] sm:$0xff]
      %v2278 = vld [vmem:[#allocation2 + $0x108] sm:$0xff]
      %v2279 = vld [vmem:[#allocation2 + $0x110] sm:$0xff]
      %v2280 = vld [vmem:[#allocation2 + $0x120] sm:$0xff]
      %v2281 = vld [vmem:[#allocation2 + $0x128] sm:$0xff]
      %v2282 = vld [vmem:[#allocation2 + $0x138] sm:$0xff]
      %v2283 = vld [vmem:[#allocation2 + $0x140] sm:$0xff]
      %v2284 = vld [vmem:[#allocation2 + $0x150] sm:$0xff]
      %v2285 = vld [vmem:[#allocation2 + $0x158] sm:$0xff]
      %v2286 = vld [vmem:[#allocation2 + $0x168] sm:$0xff]
      %v2287 = vld [vmem:[#allocation2 + $0x170] sm:$0xff]
      %v2288 = vld [vmem:[%s3] sm:$0xff]
      %v2289 = vld [vmem:[%s3 + $0x8] sm:$0xff]
      %v2290 = vld [vmem:[%s3 + $0x10] sm:$0xff]
      %v2291 = vld [vmem:[%s3 + $0x18] sm:$0xff]
      %v2292 = vld [vmem:[%s3 + $0x20] sm:$0xff]
      %v2293 = vld [vmem:[%s3 + $0x28] sm:$0xff]
      %v2294 = vld [vmem:[%s3 + $0x30] sm:$0xff]
      %v2295 = vld [vmem:[%s3 + $0x38] sm:$0xff]
      %v2296 = vld [vmem:[#allocation2 + $0x1] sm:$0xff]
      %v2297 = vld [vmem:[#allocation2 + $0x9] sm:$0xff]
      %v2298 = vld [vmem:[#allocation2 + $0x19] sm:$0xff]
      %v2299 = vld [vmem:[#allocation2 + $0x21] sm:$0xff]
      %v2300 = vld [vmem:[#allocation2 + $0x31] sm:$0xff]
      %v2301 = vld [vmem:[#allocation2 + $0x39] sm:$0xff]
      %v2302 = vld [vmem:[#allocation2 + $0x49] sm:$0xff]
      %v2303 = vld [vmem:[#allocation2 + $0x51] sm:$0xff]
      %v2304 = vld [vmem:[#allocation2 + $0x61] sm:$0xff]
      %v2305 = vld [vmem:[#allocation2 + $0x69] sm:$0xff]
      %v2306 = vld [vmem:[#allocation2 + $0x79] sm:$0xff]
      %v2307 = vld [vmem:[#allocation2 + $0x81] sm:$0xff]
      %v2308 = vld [vmem:[#allocation2 + $0x91] sm:$0xff]
      %v2309 = vld [vmem:[#allocation2 + $0x99] sm:$0xff]
      %v2310 = vld [vmem:[#allocation2 + $0xa9] sm:$0xff]
      %v2311 = vld [vmem:[#allocation2 + $0xb1] sm:$0xff]
      %v2312 = vld [vmem:[#allocation2 + $0xc1] sm:$0xff]
      %v2313 = vld [vmem:[#allocation2 + $0xc9] sm:$0xff]
      %v2314 = vld [vmem:[#allocation2 + $0xd9] sm:$0xff]
      %v2315 = vld [vmem:[#allocation2 + $0xe1] sm:$0xff]
      %v2316 = vld [vmem:[#allocation2 + $0xf1] sm:$0xff]
      %v2317 = vld [vmem:[#allocation2 + $0xf9] sm:$0xff]
      %v2318 = vld [vmem:[#allocation2 + $0x109] sm:$0xff]
      %v2319 = vld [vmem:[#allocation2 + $0x111] sm:$0xff]
      %v2320 = vld [vmem:[#allocation2 + $0x121] sm:$0xff]
      %v2321 = vld [vmem:[#allocation2 + $0x129] sm:$0xff]
      %v2322 = vld [vmem:[#allocation2 + $0x139] sm:$0xff]
      %v2323 = vld [vmem:[#allocation2 + $0x141] sm:$0xff]
      %v2324 = vld [vmem:[#allocation2 + $0x151] sm:$0xff]
      %v2325 = vld [vmem:[#allocation2 + $0x159] sm:$0xff]
      %v2326 = vld [vmem:[#allocation2 + $0x169] sm:$0xff]
      %v2327 = vld [vmem:[#allocation2 + $0x171] sm:$0xff]
      %s2328 = scalar_lea.vmem %s3, 64
      %v2329 = vld [vmem:[%s2328] sm:$0xff]
      %v2330 = vld [vmem:[%s2328 + $0x8] sm:$0xff]
      %v2331 = vld [vmem:[%s2328 + $0x10] sm:$0xff]
      %v2332 = vld [vmem:[%s2328 + $0x18] sm:$0xff]
      %v2333 = vld [vmem:[%s2328 + $0x20] sm:$0xff]
      %v2334 = vld [vmem:[%s2328 + $0x28] sm:$0xff]
      %v2335 = vld [vmem:[%s2328 + $0x30] sm:$0xff]
      %v2336 = vld [vmem:[%s2328 + $0x38] sm:$0xff]
      %v2338 = vsel %vm2167, %v2296, 0
      %v2341 = vsel %vm2167, %v2297, 0
      %v2344 = vsel %vm2167, %v2298, 0
      %v2347 = vsel %vm2167, %v2299, 0
      %v2350 = vsel %vm2167, %v2300, 0
      %v2353 = vsel %vm2167, %v2301, 0
      %v2356 = vsel %vm2167, %v2302, 0
      %v2359 = vsel %vm2167, %v2303, 0
      %v2362 = vsel %vm2167, %v2304, 0
      %v2365 = vsel %vm2167, %v2305, 0
      %v2368 = vsel %vm2167, %v2306, 0
      %v2371 = vsel %vm2167, %v2307, 0
      %v2374 = vsel %vm2167, %v2308, 0
      %v2377 = vsel %vm2167, %v2309, 0
      %v2380 = vsel %vm2167, %v2310, 0
      %v2383 = vsel %vm2167, %v2311, 0
      %v2386 = vsel %vm2167, %v2312, 0
      %v2389 = vsel %vm2167, %v2313, 0
      %v2392 = vsel %vm2167, %v2314, 0
      %v2395 = vsel %vm2167, %v2315, 0
      %v2398 = vsel %vm2167, %v2316, 0
      %v2401 = vsel %vm2167, %v2317, 0
      %v2404 = vsel %vm2167, %v2318, 0
      %v2407 = vsel %vm2167, %v2319, 0
      %v2410 = vsel %vm2167, %v2320, 0
      %v2413 = vsel %vm2167, %v2321, 0
      %v2416 = vsel %vm2167, %v2322, 0
      %v2419 = vsel %vm2167, %v2323, 0
      %v2422 = vsel %vm2167, %v2324, 0
      %v2425 = vsel %vm2167, %v2325, 0
      %v2428 = vsel %vm2167, %v2326, 0
      %v2431 = vsel %vm2167, %v2327, 0
      %2433 = vmatpush.msra.mxu0 0.0
      %2434 = vmatpush.msra.mxu0 0.0
      %2435 = vmatpush.msra.mxu0 0.0
      %2436 = vmatpush.msra.mxu0 0.0
      %2437 = vmatpush.msra.mxu0 0.0
      %2438 = vmatpush.msra.mxu0 0.0
      %2439 = vmatpush.msra.mxu0 0.0
      %2440 = vmatpush.msra.mxu0 0.0
      %2441 = vmatpush.msra.mxu0 %v2336
      %2442 = vmatpush.msra.mxu0 %v2335
      %2443 = vmatpush.msra.mxu0 %v2334
      %2444 = vmatpush.msra.mxu0 %v2333
      %2445 = vmatpush.msra.mxu0 %v2332
      %2446 = vmatpush.msra.mxu0 %v2331
      %2447 = vmatpush.msra.mxu0 %v2330
      %2448 = vmatpush.msra.mxu0 %v2329
      %2449 = vmatmul.f32.gmra.mxu0 %v2338
      %v2450 = vpop.f32.mrf.mxu0
      %v2451 = vadd.f32 0.0, %v2450
      %2452 = vmatmul.f32.gmra.mxu0 %v2341
      %v2453 = vpop.f32.mrf.mxu0
      %v2454 = vadd.f32 0.0, %v2453
      %2455 = vmatmul.f32.gmra.mxu0 %v2344
      %v2456 = vpop.f32.mrf.mxu0
      %v2457 = vadd.f32 0.0, %v2456
      %2458 = vmatmul.f32.gmra.mxu0 %v2347
      %v2459 = vpop.f32.mrf.mxu0
      %v2460 = vadd.f32 0.0, %v2459
      %2461 = vmatmul.f32.gmra.mxu0 %v2350
      %v2462 = vpop.f32.mrf.mxu0
      %v2463 = vadd.f32 0.0, %v2462
      %2464 = vmatmul.f32.gmra.mxu0 %v2353
      %v2465 = vpop.f32.mrf.mxu0
      %v2466 = vadd.f32 0.0, %v2465
      %2467 = vmatmul.f32.gmra.mxu0 %v2356
      %v2468 = vpop.f32.mrf.mxu0
      %v2469 = vadd.f32 0.0, %v2468
      %2470 = vmatmul.f32.gmra.mxu0 %v2359
      %v2471 = vpop.f32.mrf.mxu0
      %v2472 = vadd.f32 0.0, %v2471
      %2473 = vmatmul.f32.gmra.mxu0 %v2362
      %v2474 = vpop.f32.mrf.mxu0
      %v2475 = vadd.f32 0.0, %v2474
      %2476 = vmatmul.f32.gmra.mxu0 %v2365
      %v2477 = vpop.f32.mrf.mxu0
      %v2478 = vadd.f32 0.0, %v2477
      %2479 = vmatmul.f32.gmra.mxu0 %v2368
      %v2480 = vpop.f32.mrf.mxu0
      %v2481 = vadd.f32 0.0, %v2480
      %2482 = vmatmul.f32.gmra.mxu0 %v2371
      %v2483 = vpop.f32.mrf.mxu0
      %v2484 = vadd.f32 0.0, %v2483
      %2485 = vmatmul.f32.gmra.mxu0 %v2374
      %v2486 = vpop.f32.mrf.mxu0
      %v2487 = vadd.f32 0.0, %v2486
      %2488 = vmatmul.f32.gmra.mxu0 %v2377
      %v2489 = vpop.f32.mrf.mxu0
      %v2490 = vadd.f32 0.0, %v2489
      %2491 = vmatmul.f32.gmra.mxu0 %v2380
      %v2492 = vpop.f32.mrf.mxu0
      %v2493 = vadd.f32 0.0, %v2492
      %2494 = vmatmul.f32.gmra.mxu0 %v2383
      %v2495 = vpop.f32.mrf.mxu0
      %v2496 = vadd.f32 0.0, %v2495
      %2497 = vmatmul.f32.gmra.mxu0 %v2386
      %v2498 = vpop.f32.mrf.mxu0
      %v2499 = vadd.f32 0.0, %v2498
      %2500 = vmatmul.f32.gmra.mxu0 %v2389
      %v2501 = vpop.f32.mrf.mxu0
      %v2502 = vadd.f32 0.0, %v2501
      %2503 = vmatmul.f32.gmra.mxu0 %v2392
      %v2504 = vpop.f32.mrf.mxu0
      %v2505 = vadd.f32 0.0, %v2504
      %2506 = vmatmul.f32.gmra.mxu0 %v2395
      %v2507 = vpop.f32.mrf.mxu0
      %v2508 = vadd.f32 0.0, %v2507
      %2509 = vmatmul.f32.gmra.mxu0 %v2398
      %v2510 = vpop.f32.mrf.mxu0
      %v2511 = vadd.f32 0.0, %v2510
      %2512 = vmatmul.f32.gmra.mxu0 %v2401
      %v2513 = vpop.f32.mrf.mxu0
      %v2514 = vadd.f32 0.0, %v2513
      %2515 = vmatmul.f32.gmra.mxu0 %v2404
      %v2516 = vpop.f32.mrf.mxu0
      %v2517 = vadd.f32 0.0, %v2516
      %2518 = vmatmul.f32.gmra.mxu0 %v2407
      %v2519 = vpop.f32.mrf.mxu0
      %v2520 = vadd.f32 0.0, %v2519
      %2521 = vmatmul.f32.gmra.mxu0 %v2410
      %v2522 = vpop.f32.mrf.mxu0
      %v2523 = vadd.f32 0.0, %v2522
      %2524 = vmatmul.f32.gmra.mxu0 %v2413
      %v2525 = vpop.f32.mrf.mxu0
      %v2526 = vadd.f32 0.0, %v2525
      %2527 = vmatmul.f32.gmra.mxu0 %v2416
      %v2528 = vpop.f32.mrf.mxu0
      %v2529 = vadd.f32 0.0, %v2528
      %2530 = vmatmul.f32.gmra.mxu0 %v2419
      %v2531 = vpop.f32.mrf.mxu0
      %v2532 = vadd.f32 0.0, %v2531
      %2533 = vmatmul.f32.gmra.mxu0 %v2422
      %v2534 = vpop.f32.mrf.mxu0
      %v2535 = vadd.f32 0.0, %v2534
      %2536 = vmatmul.f32.gmra.mxu0 %v2425
      %v2537 = vpop.f32.mrf.mxu0
      %v2538 = vadd.f32 0.0, %v2537
      %2539 = vmatmul.f32.gmra.mxu0 %v2428
      %v2540 = vpop.f32.mrf.mxu0
      %v2541 = vadd.f32 0.0, %v2540
      %2542 = vmatmul.f32.gmra.mxu0 %v2431
      %v2543 = vpop.f32.mrf.mxu0
      %v2544 = vadd.f32 0.0, %v2543
      %2545 = vdwg.mxu0
      %v2547 = vsel %vm2167, %v2256, 0
      %v2550 = vsel %vm2167, %v2257, 0
      %v2553 = vsel %vm2167, %v2258, 0
      %v2556 = vsel %vm2167, %v2259, 0
      %v2559 = vsel %vm2167, %v2260, 0
      %v2562 = vsel %vm2167, %v2261, 0
      %v2565 = vsel %vm2167, %v2262, 0
      %v2568 = vsel %vm2167, %v2263, 0
      %v2571 = vsel %vm2167, %v2264, 0
      %v2574 = vsel %vm2167, %v2265, 0
      %v2577 = vsel %vm2167, %v2266, 0
      %v2580 = vsel %vm2167, %v2267, 0
      %v2583 = vsel %vm2167, %v2268, 0
      %v2586 = vsel %vm2167, %v2269, 0
      %v2589 = vsel %vm2167, %v2270, 0
      %v2592 = vsel %vm2167, %v2271, 0
      %v2595 = vsel %vm2167, %v2272, 0
      %v2598 = vsel %vm2167, %v2273, 0
      %v2601 = vsel %vm2167, %v2274, 0
      %v2604 = vsel %vm2167, %v2275, 0
      %v2607 = vsel %vm2167, %v2276, 0
      %v2610 = vsel %vm2167, %v2277, 0
      %v2613 = vsel %vm2167, %v2278, 0
      %v2616 = vsel %vm2167, %v2279, 0
      %v2619 = vsel %vm2167, %v2280, 0
      %v2622 = vsel %vm2167, %v2281, 0
      %v2625 = vsel %vm2167, %v2282, 0
      %v2628 = vsel %vm2167, %v2283, 0
      %v2631 = vsel %vm2167, %v2284, 0
      %v2634 = vsel %vm2167, %v2285, 0
      %v2637 = vsel %vm2167, %v2286, 0
      %v2640 = vsel %vm2167, %v2287, 0
      %2642 = vmatpush.msra.mxu0 0.0
      %2643 = vmatpush.msra.mxu0 0.0
      %2644 = vmatpush.msra.mxu0 0.0
      %2645 = vmatpush.msra.mxu0 0.0
      %2646 = vmatpush.msra.mxu0 0.0
      %2647 = vmatpush.msra.mxu0 0.0
      %2648 = vmatpush.msra.mxu0 0.0
      %2649 = vmatpush.msra.mxu0 0.0
      %2650 = vmatpush.msra.mxu0 %v2295
      %2651 = vmatpush.msra.mxu0 %v2294
      %2652 = vmatpush.msra.mxu0 %v2293
      %2653 = vmatpush.msra.mxu0 %v2292
      %2654 = vmatpush.msra.mxu0 %v2291
      %2655 = vmatpush.msra.mxu0 %v2290
      %2656 = vmatpush.msra.mxu0 %v2289
      %2657 = vmatpush.msra.mxu0 %v2288
      %2658 = vmatmul.f32.gmra.mxu0 %v2547
      %v2659 = vpop.f32.mrf.mxu0
      %v2660 = vadd.f32 %v2451, %v2659
      %2661 = vmatmul.f32.gmra.mxu0 %v2550
      %v2662 = vpop.f32.mrf.mxu0
      %v2663 = vadd.f32 %v2454, %v2662
      %2664 = vmatmul.f32.gmra.mxu0 %v2553
      %v2665 = vpop.f32.mrf.mxu0
      %v2666 = vadd.f32 %v2457, %v2665
      %2667 = vmatmul.f32.gmra.mxu0 %v2556
      %v2668 = vpop.f32.mrf.mxu0
      %v2669 = vadd.f32 %v2460, %v2668
      %2670 = vmatmul.f32.gmra.mxu0 %v2559
      %v2671 = vpop.f32.mrf.mxu0
      %v2672 = vadd.f32 %v2463, %v2671
      %2673 = vmatmul.f32.gmra.mxu0 %v2562
      %v2674 = vpop.f32.mrf.mxu0
      %v2675 = vadd.f32 %v2466, %v2674
      %2676 = vmatmul.f32.gmra.mxu0 %v2565
      %v2677 = vpop.f32.mrf.mxu0
      %v2678 = vadd.f32 %v2469, %v2677
      %2679 = vmatmul.f32.gmra.mxu0 %v2568
      %v2680 = vpop.f32.mrf.mxu0
      %v2681 = vadd.f32 %v2472, %v2680
      %2682 = vmatmul.f32.gmra.mxu0 %v2571
      %v2683 = vpop.f32.mrf.mxu0
      %v2684 = vadd.f32 %v2475, %v2683
      %2685 = vmatmul.f32.gmra.mxu0 %v2574
      %v2686 = vpop.f32.mrf.mxu0
      %v2687 = vadd.f32 %v2478, %v2686
      %2688 = vmatmul.f32.gmra.mxu0 %v2577
      %v2689 = vpop.f32.mrf.mxu0
      %v2690 = vadd.f32 %v2481, %v2689
      %2691 = vmatmul.f32.gmra.mxu0 %v2580
      %v2692 = vpop.f32.mrf.mxu0
      %v2693 = vadd.f32 %v2484, %v2692
      %2694 = vmatmul.f32.gmra.mxu0 %v2583
      %v2695 = vpop.f32.mrf.mxu0
      %v2696 = vadd.f32 %v2487, %v2695
      %2697 = vmatmul.f32.gmra.mxu0 %v2586
      %v2698 = vpop.f32.mrf.mxu0
      %v2699 = vadd.f32 %v2490, %v2698
      %2700 = vmatmul.f32.gmra.mxu0 %v2589
      %v2701 = vpop.f32.mrf.mxu0
      %v2702 = vadd.f32 %v2493, %v2701
      %2703 = vmatmul.f32.gmra.mxu0 %v2592
      %v2704 = vpop.f32.mrf.mxu0
      %v2705 = vadd.f32 %v2496, %v2704
      %2706 = vmatmul.f32.gmra.mxu0 %v2595
      %v2707 = vpop.f32.mrf.mxu0
      %v2708 = vadd.f32 %v2499, %v2707
      %2709 = vmatmul.f32.gmra.mxu0 %v2598
      %v2710 = vpop.f32.mrf.mxu0
      %v2711 = vadd.f32 %v2502, %v2710
      %2712 = vmatmul.f32.gmra.mxu0 %v2601
      %v2713 = vpop.f32.mrf.mxu0
      %v2714 = vadd.f32 %v2505, %v2713
      %2715 = vmatmul.f32.gmra.mxu0 %v2604
      %v2716 = vpop.f32.mrf.mxu0
      %v2717 = vadd.f32 %v2508, %v2716
      %2718 = vmatmul.f32.gmra.mxu0 %v2607
      %v2719 = vpop.f32.mrf.mxu0
      %v2720 = vadd.f32 %v2511, %v2719
      %2721 = vmatmul.f32.gmra.mxu0 %v2610
      %v2722 = vpop.f32.mrf.mxu0
      %v2723 = vadd.f32 %v2514, %v2722
      %2724 = vmatmul.f32.gmra.mxu0 %v2613
      %v2725 = vpop.f32.mrf.mxu0
      %v2726 = vadd.f32 %v2517, %v2725
      %2727 = vmatmul.f32.gmra.mxu0 %v2616
      %v2728 = vpop.f32.mrf.mxu0
      %v2729 = vadd.f32 %v2520, %v2728
      %2730 = vmatmul.f32.gmra.mxu0 %v2619
      %v2731 = vpop.f32.mrf.mxu0
      %v2732 = vadd.f32 %v2523, %v2731
      %2733 = vmatmul.f32.gmra.mxu0 %v2622
      %v2734 = vpop.f32.mrf.mxu0
      %v2735 = vadd.f32 %v2526, %v2734
      %2736 = vmatmul.f32.gmra.mxu0 %v2625
      %v2737 = vpop.f32.mrf.mxu0
      %v2738 = vadd.f32 %v2529, %v2737
      %2739 = vmatmul.f32.gmra.mxu0 %v2628
      %v2740 = vpop.f32.mrf.mxu0
      %v2741 = vadd.f32 %v2532, %v2740
      %2742 = vmatmul.f32.gmra.mxu0 %v2631
      %v2743 = vpop.f32.mrf.mxu0
      %v2744 = vadd.f32 %v2535, %v2743
      %2745 = vmatmul.f32.gmra.mxu0 %v2634
      %v2746 = vpop.f32.mrf.mxu0
      %v2747 = vadd.f32 %v2538, %v2746
      %2748 = vmatmul.f32.gmra.mxu0 %v2637
      %v2749 = vpop.f32.mrf.mxu0
      %v2750 = vadd.f32 %v2541, %v2749
      %2751 = vmatmul.f32.gmra.mxu0 %v2640
      %v2752 = vpop.f32.mrf.mxu0
      %v2753 = vadd.f32 %v2544, %v2752
      %2754 = vdwg.mxu0
      %v2755 = vld [vmem:[#allocation2 + $0x2] sm:$0xff]
      %v2756 = vld [vmem:[#allocation2 + $0xa] sm:$0xff]
      %v2757 = vld [vmem:[#allocation2 + $0x1a] sm:$0xff]
      %v2758 = vld [vmem:[#allocation2 + $0x22] sm:$0xff]
      %v2759 = vld [vmem:[#allocation2 + $0x32] sm:$0xff]
      %v2760 = vld [vmem:[#allocation2 + $0x3a] sm:$0xff]
      %v2761 = vld [vmem:[#allocation2 + $0x4a] sm:$0xff]
      %v2762 = vld [vmem:[#allocation2 + $0x52] sm:$0xff]
      %v2763 = vld [vmem:[#allocation2 + $0x62] sm:$0xff]
      %v2764 = vld [vmem:[#allocation2 + $0x6a] sm:$0xff]
      %v2765 = vld [vmem:[#allocation2 + $0x7a] sm:$0xff]
      %v2766 = vld [vmem:[#allocation2 + $0x82] sm:$0xff]
      %v2767 = vld [vmem:[#allocation2 + $0x92] sm:$0xff]
      %v2768 = vld [vmem:[#allocation2 + $0x9a] sm:$0xff]
      %v2769 = vld [vmem:[#allocation2 + $0xaa] sm:$0xff]
      %v2770 = vld [vmem:[#allocation2 + $0xb2] sm:$0xff]
      %v2771 = vld [vmem:[#allocation2 + $0xc2] sm:$0xff]
      %v2772 = vld [vmem:[#allocation2 + $0xca] sm:$0xff]
      %v2773 = vld [vmem:[#allocation2 + $0xda] sm:$0xff]
      %v2774 = vld [vmem:[#allocation2 + $0xe2] sm:$0xff]
      %v2775 = vld [vmem:[#allocation2 + $0xf2] sm:$0xff]
      %v2776 = vld [vmem:[#allocation2 + $0xfa] sm:$0xff]
      %v2777 = vld [vmem:[#allocation2 + $0x10a] sm:$0xff]
      %v2778 = vld [vmem:[#allocation2 + $0x112] sm:$0xff]
      %v2779 = vld [vmem:[#allocation2 + $0x122] sm:$0xff]
      %v2780 = vld [vmem:[#allocation2 + $0x12a] sm:$0xff]
      %v2781 = vld [vmem:[#allocation2 + $0x13a] sm:$0xff]
      %v2782 = vld [vmem:[#allocation2 + $0x142] sm:$0xff]
      %v2783 = vld [vmem:[#allocation2 + $0x152] sm:$0xff]
      %v2784 = vld [vmem:[#allocation2 + $0x15a] sm:$0xff]
      %v2785 = vld [vmem:[#allocation2 + $0x16a] sm:$0xff]
      %v2786 = vld [vmem:[#allocation2 + $0x172] sm:$0xff]
      %s2787 = scalar_lea.vmem %s3, 128
      %v2788 = vld [vmem:[%s2787] sm:$0xff]
      %v2789 = vld [vmem:[%s2787 + $0x8] sm:$0xff]
      %v2790 = vld [vmem:[%s2787 + $0x10] sm:$0xff]
      %v2791 = vld [vmem:[%s2787 + $0x18] sm:$0xff]
      %v2792 = vld [vmem:[%s2787 + $0x20] sm:$0xff]
      %v2793 = vld [vmem:[%s2787 + $0x28] sm:$0xff]
      %v2794 = vld [vmem:[%s2787 + $0x30] sm:$0xff]
      %v2795 = vld [vmem:[%s2787 + $0x38] sm:$0xff]
      %v2797 = vsel %vm2167, %v2755, 0
      %v2800 = vsel %vm2167, %v2756, 0
      %v2803 = vsel %vm2167, %v2757, 0
      %v2806 = vsel %vm2167, %v2758, 0
      %v2809 = vsel %vm2167, %v2759, 0
      %v2812 = vsel %vm2167, %v2760, 0
      %v2815 = vsel %vm2167, %v2761, 0
      %v2818 = vsel %vm2167, %v2762, 0
      %v2821 = vsel %vm2167, %v2763, 0
      %v2824 = vsel %vm2167, %v2764, 0
      %v2827 = vsel %vm2167, %v2765, 0
      %v2830 = vsel %vm2167, %v2766, 0
      %v2833 = vsel %vm2167, %v2767, 0
      %v2836 = vsel %vm2167, %v2768, 0
      %v2839 = vsel %vm2167, %v2769, 0
      %v2842 = vsel %vm2167, %v2770, 0
      %v2845 = vsel %vm2167, %v2771, 0
      %v2848 = vsel %vm2167, %v2772, 0
      %v2851 = vsel %vm2167, %v2773, 0
      %v2854 = vsel %vm2167, %v2774, 0
      %v2857 = vsel %vm2167, %v2775, 0
      %v2860 = vsel %vm2167, %v2776, 0
      %v2863 = vsel %vm2167, %v2777, 0
      %v2866 = vsel %vm2167, %v2778, 0
      %v2869 = vsel %vm2167, %v2779, 0
      %v2872 = vsel %vm2167, %v2780, 0
      %v2875 = vsel %vm2167, %v2781, 0
      %v2878 = vsel %vm2167, %v2782, 0
      %v2881 = vsel %vm2167, %v2783, 0
      %v2884 = vsel %vm2167, %v2784, 0
      %v2887 = vsel %vm2167, %v2785, 0
      %v2890 = vsel %vm2167, %v2786, 0
      %2892 = vmatpush.msra.mxu0 0.0
      %2893 = vmatpush.msra.mxu0 0.0
      %2894 = vmatpush.msra.mxu0 0.0
      %2895 = vmatpush.msra.mxu0 0.0
      %2896 = vmatpush.msra.mxu0 0.0
      %2897 = vmatpush.msra.mxu0 0.0
      %2898 = vmatpush.msra.mxu0 0.0
      %2899 = vmatpush.msra.mxu0 0.0
      %2900 = vmatpush.msra.mxu0 %v2795
      %2901 = vmatpush.msra.mxu0 %v2794
      %2902 = vmatpush.msra.mxu0 %v2793
      %2903 = vmatpush.msra.mxu0 %v2792
      %2904 = vmatpush.msra.mxu0 %v2791
      %2905 = vmatpush.msra.mxu0 %v2790
      %2906 = vmatpush.msra.mxu0 %v2789
      %2907 = vmatpush.msra.mxu0 %v2788
      %2908 = vmatmul.f32.gmra.mxu0 %v2797
      %v2909 = vpop.f32.mrf.mxu0
      %v2910 = vadd.f32 0.0, %v2909
      %2911 = vmatmul.f32.gmra.mxu0 %v2800
      %v2912 = vpop.f32.mrf.mxu0
      %v2913 = vadd.f32 0.0, %v2912
      %2914 = vmatmul.f32.gmra.mxu0 %v2803
      %v2915 = vpop.f32.mrf.mxu0
      %v2916 = vadd.f32 0.0, %v2915
      %2917 = vmatmul.f32.gmra.mxu0 %v2806
      %v2918 = vpop.f32.mrf.mxu0
      %v2919 = vadd.f32 0.0, %v2918
      %2920 = vmatmul.f32.gmra.mxu0 %v2809
      %v2921 = vpop.f32.mrf.mxu0
      %v2922 = vadd.f32 0.0, %v2921
      %2923 = vmatmul.f32.gmra.mxu0 %v2812
      %v2924 = vpop.f32.mrf.mxu0
      %v2925 = vadd.f32 0.0, %v2924
      %2926 = vmatmul.f32.gmra.mxu0 %v2815
      %v2927 = vpop.f32.mrf.mxu0
      %v2928 = vadd.f32 0.0, %v2927
      %2929 = vmatmul.f32.gmra.mxu0 %v2818
      %v2930 = vpop.f32.mrf.mxu0
      %v2931 = vadd.f32 0.0, %v2930
      %2932 = vmatmul.f32.gmra.mxu0 %v2821
      %v2933 = vpop.f32.mrf.mxu0
      %v2934 = vadd.f32 0.0, %v2933
      %2935 = vmatmul.f32.gmra.mxu0 %v2824
      %v2936 = vpop.f32.mrf.mxu0
      %v2937 = vadd.f32 0.0, %v2936
      %2938 = vmatmul.f32.gmra.mxu0 %v2827
      %v2939 = vpop.f32.mrf.mxu0
      %v2940 = vadd.f32 0.0, %v2939
      %2941 = vmatmul.f32.gmra.mxu0 %v2830
      %v2942 = vpop.f32.mrf.mxu0
      %v2943 = vadd.f32 0.0, %v2942
      %2944 = vmatmul.f32.gmra.mxu0 %v2833
      %v2945 = vpop.f32.mrf.mxu0
      %v2946 = vadd.f32 0.0, %v2945
      %2947 = vmatmul.f32.gmra.mxu0 %v2836
      %v2948 = vpop.f32.mrf.mxu0
      %v2949 = vadd.f32 0.0, %v2948
      %2950 = vmatmul.f32.gmra.mxu0 %v2839
      %v2951 = vpop.f32.mrf.mxu0
      %v2952 = vadd.f32 0.0, %v2951
      %2953 = vmatmul.f32.gmra.mxu0 %v2842
      %v2954 = vpop.f32.mrf.mxu0
      %v2955 = vadd.f32 0.0, %v2954
      %2956 = vmatmul.f32.gmra.mxu0 %v2845
      %v2957 = vpop.f32.mrf.mxu0
      %v2958 = vadd.f32 0.0, %v2957
      %2959 = vmatmul.f32.gmra.mxu0 %v2848
      %v2960 = vpop.f32.mrf.mxu0
      %v2961 = vadd.f32 0.0, %v2960
      %2962 = vmatmul.f32.gmra.mxu0 %v2851
      %v2963 = vpop.f32.mrf.mxu0
      %v2964 = vadd.f32 0.0, %v2963
      %2965 = vmatmul.f32.gmra.mxu0 %v2854
      %v2966 = vpop.f32.mrf.mxu0
      %v2967 = vadd.f32 0.0, %v2966
      %2968 = vmatmul.f32.gmra.mxu0 %v2857
      %v2969 = vpop.f32.mrf.mxu0
      %v2970 = vadd.f32 0.0, %v2969
      %2971 = vmatmul.f32.gmra.mxu0 %v2860
      %v2972 = vpop.f32.mrf.mxu0
      %v2973 = vadd.f32 0.0, %v2972
      %2974 = vmatmul.f32.gmra.mxu0 %v2863
      %v2975 = vpop.f32.mrf.mxu0
      %v2976 = vadd.f32 0.0, %v2975
      %2977 = vmatmul.f32.gmra.mxu0 %v2866
      %v2978 = vpop.f32.mrf.mxu0
      %v2979 = vadd.f32 0.0, %v2978
      %2980 = vmatmul.f32.gmra.mxu0 %v2869
      %v2981 = vpop.f32.mrf.mxu0
      %v2982 = vadd.f32 0.0, %v2981
      %2983 = vmatmul.f32.gmra.mxu0 %v2872
      %v2984 = vpop.f32.mrf.mxu0
      %v2985 = vadd.f32 0.0, %v2984
      %2986 = vmatmul.f32.gmra.mxu0 %v2875
      %v2987 = vpop.f32.mrf.mxu0
      %v2988 = vadd.f32 0.0, %v2987
      %2989 = vmatmul.f32.gmra.mxu0 %v2878
      %v2990 = vpop.f32.mrf.mxu0
      %v2991 = vadd.f32 0.0, %v2990
      %2992 = vmatmul.f32.gmra.mxu0 %v2881
      %v2993 = vpop.f32.mrf.mxu0
      %v2994 = vadd.f32 0.0, %v2993
      %2995 = vmatmul.f32.gmra.mxu0 %v2884
      %v2996 = vpop.f32.mrf.mxu0
      %v2997 = vadd.f32 0.0, %v2996
      %2998 = vmatmul.f32.gmra.mxu0 %v2887
      %v2999 = vpop.f32.mrf.mxu0
      %v3000 = vadd.f32 0.0, %v2999
      %3001 = vmatmul.f32.gmra.mxu0 %v2890
      %v3002 = vpop.f32.mrf.mxu0
      %v3003 = vadd.f32 0.0, %v3002
      %3004 = vdwg.mxu0
      %v3005 = vadd.f32 %v2660, %v2910
      %v3006 = vadd.f32 %v2663, %v2913
      %v3007 = vadd.f32 %v2666, %v2916
      %v3008 = vadd.f32 %v2669, %v2919
      %v3009 = vadd.f32 %v2672, %v2922
      %v3010 = vadd.f32 %v2675, %v2925
      %v3011 = vadd.f32 %v2678, %v2928
      %v3012 = vadd.f32 %v2681, %v2931
      %v3013 = vadd.f32 %v2684, %v2934
      %v3014 = vadd.f32 %v2687, %v2937
      %v3015 = vadd.f32 %v2690, %v2940
      %v3016 = vadd.f32 %v2693, %v2943
      %v3017 = vadd.f32 %v2696, %v2946
      %v3018 = vadd.f32 %v2699, %v2949
      %v3019 = vadd.f32 %v2702, %v2952
      %v3020 = vadd.f32 %v2705, %v2955
      %v3021 = vadd.f32 %v2708, %v2958
      %v3022 = vadd.f32 %v2711, %v2961
      %v3023 = vadd.f32 %v2714, %v2964
      %v3024 = vadd.f32 %v2717, %v2967
      %v3025 = vadd.f32 %v2720, %v2970
      %v3026 = vadd.f32 %v2723, %v2973
      %v3027 = vadd.f32 %v2726, %v2976
      %v3028 = vadd.f32 %v2729, %v2979
      %v3029 = vadd.f32 %v2732, %v2982
      %v3030 = vadd.f32 %v2735, %v2985
      %v3031 = vadd.f32 %v2738, %v2988
      %v3032 = vadd.f32 %v2741, %v2991
      %v3033 = vadd.f32 %v2744, %v2994
      %v3034 = vadd.f32 %v2747, %v2997
      %v3035 = vadd.f32 %v2750, %v3000
      %v3036 = vadd.f32 %v2753, %v3003
      %v3037 = vld [vmem:[%s2223] sm:$0xff]
      %v3038 = vld [vmem:[%s2223 + $0x8] sm:$0xff]
      %v3039 = vld [vmem:[%s2223 + $0x18] sm:$0xff]
      %v3040 = vld [vmem:[%s2223 + $0x20] sm:$0xff]
      %v3041 = vld [vmem:[%s2223 + $0x30] sm:$0xff]
      %v3042 = vld [vmem:[%s2223 + $0x38] sm:$0xff]
      %v3043 = vld [vmem:[%s2223 + $0x48] sm:$0xff]
      %v3044 = vld [vmem:[%s2223 + $0x50] sm:$0xff]
      %v3045 = vld [vmem:[%s2223 + $0x60] sm:$0xff]
      %v3046 = vld [vmem:[%s2223 + $0x68] sm:$0xff]
      %v3047 = vld [vmem:[%s2223 + $0x78] sm:$0xff]
      %v3048 = vld [vmem:[%s2223 + $0x80] sm:$0xff]
      %v3049 = vld [vmem:[%s2223 + $0x90] sm:$0xff]
      %v3050 = vld [vmem:[%s2223 + $0x98] sm:$0xff]
      %v3051 = vld [vmem:[%s2223 + $0xa8] sm:$0xff]
      %v3052 = vld [vmem:[%s2223 + $0xb0] sm:$0xff]
      %v3053 = vld [vmem:[%s2223 + $0xc0] sm:$0xff]
      %v3054 = vld [vmem:[%s2223 + $0xc8] sm:$0xff]
      %v3055 = vld [vmem:[%s2223 + $0xd8] sm:$0xff]
      %v3056 = vld [vmem:[%s2223 + $0xe0] sm:$0xff]
      %v3057 = vld [vmem:[%s2223 + $0xf0] sm:$0xff]
      %v3058 = vld [vmem:[%s2223 + $0xf8] sm:$0xff]
      %v3059 = vld [vmem:[%s2223 + $0x108] sm:$0xff]
      %v3060 = vld [vmem:[%s2223 + $0x110] sm:$0xff]
      %v3061 = vld [vmem:[%s2223 + $0x120] sm:$0xff]
      %v3062 = vld [vmem:[%s2223 + $0x128] sm:$0xff]
      %v3063 = vld [vmem:[%s2223 + $0x138] sm:$0xff]
      %v3064 = vld [vmem:[%s2223 + $0x140] sm:$0xff]
      %v3065 = vld [vmem:[%s2223 + $0x150] sm:$0xff]
      %v3066 = vld [vmem:[%s2223 + $0x158] sm:$0xff]
      %v3067 = vld [vmem:[%s2223 + $0x168] sm:$0xff]
      %v3068 = vld [vmem:[%s2223 + $0x170] sm:$0xff]
      %s3069 = scalar_lea.vmem %s3, 192
      %v3070 = vld [vmem:[%s3069] sm:$0xff]
      %v3071 = vld [vmem:[%s3069 + $0x8] sm:$0xff]
      %v3072 = vld [vmem:[%s3069 + $0x10] sm:$0xff]
      %v3073 = vld [vmem:[%s3069 + $0x18] sm:$0xff]
      %v3074 = vld [vmem:[%s3069 + $0x20] sm:$0xff]
      %v3075 = vld [vmem:[%s3069 + $0x28] sm:$0xff]
      %v3076 = vld [vmem:[%s3069 + $0x30] sm:$0xff]
      %v3077 = vld [vmem:[%s3069 + $0x38] sm:$0xff]
      %v3079 = vsel %vm2167, %v3037, 0
      %v3082 = vsel %vm2167, %v3038, 0
      %v3085 = vsel %vm2167, %v3039, 0
      %v3088 = vsel %vm2167, %v3040, 0
      %v3091 = vsel %vm2167, %v3041, 0
      %v3094 = vsel %vm2167, %v3042, 0
      %v3097 = vsel %vm2167, %v3043, 0
      %v3100 = vsel %vm2167, %v3044, 0
      %v3103 = vsel %vm2167, %v3045, 0
      %v3106 = vsel %vm2167, %v3046, 0
      %v3109 = vsel %vm2167, %v3047, 0
      %v3112 = vsel %vm2167, %v3048, 0
      %v3115 = vsel %vm2167, %v3049, 0
      %v3118 = vsel %vm2167, %v3050, 0
      %v3121 = vsel %vm2167, %v3051, 0
      %v3124 = vsel %vm2167, %v3052, 0
      %v3127 = vsel %vm2167, %v3053, 0
      %v3130 = vsel %vm2167, %v3054, 0
      %v3133 = vsel %vm2167, %v3055, 0
      %v3136 = vsel %vm2167, %v3056, 0
      %v3139 = vsel %vm2167, %v3057, 0
      %v3142 = vsel %vm2167, %v3058, 0
      %v3145 = vsel %vm2167, %v3059, 0
      %v3148 = vsel %vm2167, %v3060, 0
      %v3151 = vsel %vm2167, %v3061, 0
      %v3154 = vsel %vm2167, %v3062, 0
      %v3157 = vsel %vm2167, %v3063, 0
      %v3160 = vsel %vm2167, %v3064, 0
      %v3163 = vsel %vm2167, %v3065, 0
      %v3166 = vsel %vm2167, %v3066, 0
      %v3169 = vsel %vm2167, %v3067, 0
      %v3172 = vsel %vm2167, %v3068, 0
      %3174 = vmatpush.msra.mxu0 0.0
      %3175 = vmatpush.msra.mxu0 0.0
      %3176 = vmatpush.msra.mxu0 0.0
      %3177 = vmatpush.msra.mxu0 0.0
      %3178 = vmatpush.msra.mxu0 0.0
      %3179 = vmatpush.msra.mxu0 0.0
      %3180 = vmatpush.msra.mxu0 0.0
      %3181 = vmatpush.msra.mxu0 0.0
      %3182 = vmatpush.msra.mxu0 %v3077
      %3183 = vmatpush.msra.mxu0 %v3076
      %3184 = vmatpush.msra.mxu0 %v3075
      %3185 = vmatpush.msra.mxu0 %v3074
      %3186 = vmatpush.msra.mxu0 %v3073
      %3187 = vmatpush.msra.mxu0 %v3072
      %3188 = vmatpush.msra.mxu0 %v3071
      %3189 = vmatpush.msra.mxu0 %v3070
      %3190 = vmatmul.f32.gmra.mxu0 %v3079
      %v3191 = vpop.f32.mrf.mxu0
      %v3192 = vadd.f32 0.0, %v3191
      %3193 = vmatmul.f32.gmra.mxu0 %v3082
      %v3194 = vpop.f32.mrf.mxu0
      %v3195 = vadd.f32 0.0, %v3194
      %3196 = vmatmul.f32.gmra.mxu0 %v3085
      %v3197 = vpop.f32.mrf.mxu0
      %v3198 = vadd.f32 0.0, %v3197
      %3199 = vmatmul.f32.gmra.mxu0 %v3088
      %v3200 = vpop.f32.mrf.mxu0
      %v3201 = vadd.f32 0.0, %v3200
      %3202 = vmatmul.f32.gmra.mxu0 %v3091
      %v3203 = vpop.f32.mrf.mxu0
      %v3204 = vadd.f32 0.0, %v3203
      %3205 = vmatmul.f32.gmra.mxu0 %v3094
      %v3206 = vpop.f32.mrf.mxu0
      %v3207 = vadd.f32 0.0, %v3206
      %3208 = vmatmul.f32.gmra.mxu0 %v3097
      %v3209 = vpop.f32.mrf.mxu0
      %v3210 = vadd.f32 0.0, %v3209
      %3211 = vmatmul.f32.gmra.mxu0 %v3100
      %v3212 = vpop.f32.mrf.mxu0
      %v3213 = vadd.f32 0.0, %v3212
      %3214 = vmatmul.f32.gmra.mxu0 %v3103
      %v3215 = vpop.f32.mrf.mxu0
      %v3216 = vadd.f32 0.0, %v3215
      %3217 = vmatmul.f32.gmra.mxu0 %v3106
      %v3218 = vpop.f32.mrf.mxu0
      %v3219 = vadd.f32 0.0, %v3218
      %3220 = vmatmul.f32.gmra.mxu0 %v3109
      %v3221 = vpop.f32.mrf.mxu0
      %v3222 = vadd.f32 0.0, %v3221
      %3223 = vmatmul.f32.gmra.mxu0 %v3112
      %v3224 = vpop.f32.mrf.mxu0
      %v3225 = vadd.f32 0.0, %v3224
      %3226 = vmatmul.f32.gmra.mxu0 %v3115
      %v3227 = vpop.f32.mrf.mxu0
      %v3228 = vadd.f32 0.0, %v3227
      %3229 = vmatmul.f32.gmra.mxu0 %v3118
      %v3230 = vpop.f32.mrf.mxu0
      %v3231 = vadd.f32 0.0, %v3230
      %3232 = vmatmul.f32.gmra.mxu0 %v3121
      %v3233 = vpop.f32.mrf.mxu0
      %v3234 = vadd.f32 0.0, %v3233
      %3235 = vmatmul.f32.gmra.mxu0 %v3124
      %v3236 = vpop.f32.mrf.mxu0
      %v3237 = vadd.f32 0.0, %v3236
      %3238 = vmatmul.f32.gmra.mxu0 %v3127
      %v3239 = vpop.f32.mrf.mxu0
      %v3240 = vadd.f32 0.0, %v3239
      %3241 = vmatmul.f32.gmra.mxu0 %v3130
      %v3242 = vpop.f32.mrf.mxu0
      %v3243 = vadd.f32 0.0, %v3242
      %3244 = vmatmul.f32.gmra.mxu0 %v3133
      %v3245 = vpop.f32.mrf.mxu0
      %v3246 = vadd.f32 0.0, %v3245
      %3247 = vmatmul.f32.gmra.mxu0 %v3136
      %v3248 = vpop.f32.mrf.mxu0
      %v3249 = vadd.f32 0.0, %v3248
      %3250 = vmatmul.f32.gmra.mxu0 %v3139
      %v3251 = vpop.f32.mrf.mxu0
      %v3252 = vadd.f32 0.0, %v3251
      %3253 = vmatmul.f32.gmra.mxu0 %v3142
      %v3254 = vpop.f32.mrf.mxu0
      %v3255 = vadd.f32 0.0, %v3254
      %3256 = vmatmul.f32.gmra.mxu0 %v3145
      %v3257 = vpop.f32.mrf.mxu0
      %v3258 = vadd.f32 0.0, %v3257
      %3259 = vmatmul.f32.gmra.mxu0 %v3148
      %v3260 = vpop.f32.mrf.mxu0
      %v3261 = vadd.f32 0.0, %v3260
      %3262 = vmatmul.f32.gmra.mxu0 %v3151
      %v3263 = vpop.f32.mrf.mxu0
      %v3264 = vadd.f32 0.0, %v3263
      %3265 = vmatmul.f32.gmra.mxu0 %v3154
      %v3266 = vpop.f32.mrf.mxu0
      %v3267 = vadd.f32 0.0, %v3266
      %3268 = vmatmul.f32.gmra.mxu0 %v3157
      %v3269 = vpop.f32.mrf.mxu0
      %v3270 = vadd.f32 0.0, %v3269
      %3271 = vmatmul.f32.gmra.mxu0 %v3160
      %v3272 = vpop.f32.mrf.mxu0
      %v3273 = vadd.f32 0.0, %v3272
      %3274 = vmatmul.f32.gmra.mxu0 %v3163
      %v3275 = vpop.f32.mrf.mxu0
      %v3276 = vadd.f32 0.0, %v3275
      %3277 = vmatmul.f32.gmra.mxu0 %v3166
      %v3278 = vpop.f32.mrf.mxu0
      %v3279 = vadd.f32 0.0, %v3278
      %3280 = vmatmul.f32.gmra.mxu0 %v3169
      %v3281 = vpop.f32.mrf.mxu0
      %v3282 = vadd.f32 0.0, %v3281
      %3283 = vmatmul.f32.gmra.mxu0 %v3172
      %v3284 = vpop.f32.mrf.mxu0
      %v3285 = vadd.f32 0.0, %v3284
      %3286 = vdwg.mxu0
      %v3287 = vadd.f32 %v3005, %v3192
      %v3288 = vadd.f32 %v3006, %v3195
      %v3289 = vadd.f32 %v3007, %v3198
      %v3290 = vadd.f32 %v3008, %v3201
      %v3291 = vadd.f32 %v3009, %v3204
      %v3292 = vadd.f32 %v3010, %v3207
      %v3293 = vadd.f32 %v3011, %v3210
      %v3294 = vadd.f32 %v3012, %v3213
      %v3295 = vadd.f32 %v3013, %v3216
      %v3296 = vadd.f32 %v3014, %v3219
      %v3297 = vadd.f32 %v3015, %v3222
      %v3298 = vadd.f32 %v3016, %v3225
      %v3299 = vadd.f32 %v3017, %v3228
      %v3300 = vadd.f32 %v3018, %v3231
      %v3301 = vadd.f32 %v3019, %v3234
      %v3302 = vadd.f32 %v3020, %v3237
      %v3303 = vadd.f32 %v3021, %v3240
      %v3304 = vadd.f32 %v3022, %v3243
      %v3305 = vadd.f32 %v3023, %v3246
      %v3306 = vadd.f32 %v3024, %v3249
      %v3307 = vadd.f32 %v3025, %v3252
      %v3308 = vadd.f32 %v3026, %v3255
      %v3309 = vadd.f32 %v3027, %v3258
      %v3310 = vadd.f32 %v3028, %v3261
      %v3311 = vadd.f32 %v3029, %v3264
      %v3312 = vadd.f32 %v3030, %v3267
      %v3313 = vadd.f32 %v3031, %v3270
      %v3314 = vadd.f32 %v3032, %v3273
      %v3315 = vadd.f32 %v3033, %v3276
      %v3316 = vadd.f32 %v3034, %v3279
      %v3317 = vadd.f32 %v3035, %v3282
      %v3318 = vadd.f32 %v3036, %v3285
      %v3319 = vld [vmem:[%s2223 + $0x1] sm:$0xff]
      %v3320 = vld [vmem:[%s2223 + $0x9] sm:$0xff]
      %v3321 = vld [vmem:[%s2223 + $0x19] sm:$0xff]
      %v3322 = vld [vmem:[%s2223 + $0x21] sm:$0xff]
      %v3323 = vld [vmem:[%s2223 + $0x31] sm:$0xff]
      %v3324 = vld [vmem:[%s2223 + $0x39] sm:$0xff]
      %v3325 = vld [vmem:[%s2223 + $0x49] sm:$0xff]
      %v3326 = vld [vmem:[%s2223 + $0x51] sm:$0xff]
      %v3327 = vld [vmem:[%s2223 + $0x61] sm:$0xff]
      %v3328 = vld [vmem:[%s2223 + $0x69] sm:$0xff]
      %v3329 = vld [vmem:[%s2223 + $0x79] sm:$0xff]
      %v3330 = vld [vmem:[%s2223 + $0x81] sm:$0xff]
      %v3331 = vld [vmem:[%s2223 + $0x91] sm:$0xff]
      %v3332 = vld [vmem:[%s2223 + $0x99] sm:$0xff]
      %v3333 = vld [vmem:[%s2223 + $0xa9] sm:$0xff]
      %v3334 = vld [vmem:[%s2223 + $0xb1] sm:$0xff]
      %v3335 = vld [vmem:[%s2223 + $0xc1] sm:$0xff]
      %v3336 = vld [vmem:[%s2223 + $0xc9] sm:$0xff]
      %v3337 = vld [vmem:[%s2223 + $0xd9] sm:$0xff]
      %v3338 = vld [vmem:[%s2223 + $0xe1] sm:$0xff]
      %v3339 = vld [vmem:[%s2223 + $0xf1] sm:$0xff]
      %v3340 = vld [vmem:[%s2223 + $0xf9] sm:$0xff]
      %v3341 = vld [vmem:[%s2223 + $0x109] sm:$0xff]
      %v3342 = vld [vmem:[%s2223 + $0x111] sm:$0xff]
      %v3343 = vld [vmem:[%s2223 + $0x121] sm:$0xff]
      %v3344 = vld [vmem:[%s2223 + $0x129] sm:$0xff]
      %v3345 = vld [vmem:[%s2223 + $0x139] sm:$0xff]
      %v3346 = vld [vmem:[%s2223 + $0x141] sm:$0xff]
      %v3347 = vld [vmem:[%s2223 + $0x151] sm:$0xff]
      %v3348 = vld [vmem:[%s2223 + $0x159] sm:$0xff]
      %v3349 = vld [vmem:[%s2223 + $0x169] sm:$0xff]
      %v3350 = vld [vmem:[%s2223 + $0x171] sm:$0xff]
      %s3351 = scalar_lea.vmem %s3, 256
      %v3352 = vld [vmem:[%s3351] sm:$0xff]
      %v3353 = vld [vmem:[%s3351 + $0x8] sm:$0xff]
      %v3354 = vld [vmem:[%s3351 + $0x10] sm:$0xff]
      %v3355 = vld [vmem:[%s3351 + $0x18] sm:$0xff]
      %v3356 = vld [vmem:[%s3351 + $0x20] sm:$0xff]
      %v3357 = vld [vmem:[%s3351 + $0x28] sm:$0xff]
      %v3358 = vld [vmem:[%s3351 + $0x30] sm:$0xff]
      %v3359 = vld [vmem:[%s3351 + $0x38] sm:$0xff]
      %v3361 = vsel %vm2167, %v3319, 0
      %v3364 = vsel %vm2167, %v3320, 0
      %v3367 = vsel %vm2167, %v3321, 0
      %v3370 = vsel %vm2167, %v3322, 0
      %v3373 = vsel %vm2167, %v3323, 0
      %v3376 = vsel %vm2167, %v3324, 0
      %v3379 = vsel %vm2167, %v3325, 0
      %v3382 = vsel %vm2167, %v3326, 0
      %v3385 = vsel %vm2167, %v3327, 0
      %v3388 = vsel %vm2167, %v3328, 0
      %v3391 = vsel %vm2167, %v3329, 0
      %v3394 = vsel %vm2167, %v3330, 0
      %v3397 = vsel %vm2167, %v3331, 0
      %v3400 = vsel %vm2167, %v3332, 0
      %v3403 = vsel %vm2167, %v3333, 0
      %v3406 = vsel %vm2167, %v3334, 0
      %v3409 = vsel %vm2167, %v3335, 0
      %v3412 = vsel %vm2167, %v3336, 0
      %v3415 = vsel %vm2167, %v3337, 0
      %v3418 = vsel %vm2167, %v3338, 0
      %v3421 = vsel %vm2167, %v3339, 0
      %v3424 = vsel %vm2167, %v3340, 0
      %v3427 = vsel %vm2167, %v3341, 0
      %v3430 = vsel %vm2167, %v3342, 0
      %v3433 = vsel %vm2167, %v3343, 0
      %v3436 = vsel %vm2167, %v3344, 0
      %v3439 = vsel %vm2167, %v3345, 0
      %v3442 = vsel %vm2167, %v3346, 0
      %v3445 = vsel %vm2167, %v3347, 0
      %v3448 = vsel %vm2167, %v3348, 0
      %v3451 = vsel %vm2167, %v3349, 0
      %v3454 = vsel %vm2167, %v3350, 0
      %3456 = vmatpush.msra.mxu0 0.0
      %3457 = vmatpush.msra.mxu0 0.0
      %3458 = vmatpush.msra.mxu0 0.0
      %3459 = vmatpush.msra.mxu0 0.0
      %3460 = vmatpush.msra.mxu0 0.0
      %3461 = vmatpush.msra.mxu0 0.0
      %3462 = vmatpush.msra.mxu0 0.0
      %3463 = vmatpush.msra.mxu0 0.0
      %3464 = vmatpush.msra.mxu0 %v3359
      %3465 = vmatpush.msra.mxu0 %v3358
      %3466 = vmatpush.msra.mxu0 %v3357
      %3467 = vmatpush.msra.mxu0 %v3356
      %3468 = vmatpush.msra.mxu0 %v3355
      %3469 = vmatpush.msra.mxu0 %v3354
      %3470 = vmatpush.msra.mxu0 %v3353
      %3471 = vmatpush.msra.mxu0 %v3352
      %3472 = vmatmul.f32.gmra.mxu0 %v3361
      %v3473 = vpop.f32.mrf.mxu0
      %v3474 = vadd.f32 0.0, %v3473
      %3475 = vmatmul.f32.gmra.mxu0 %v3364
      %v3476 = vpop.f32.mrf.mxu0
      %v3477 = vadd.f32 0.0, %v3476
      %3478 = vmatmul.f32.gmra.mxu0 %v3367
      %v3479 = vpop.f32.mrf.mxu0
      %v3480 = vadd.f32 0.0, %v3479
      %3481 = vmatmul.f32.gmra.mxu0 %v3370
      %v3482 = vpop.f32.mrf.mxu0
      %v3483 = vadd.f32 0.0, %v3482
      %3484 = vmatmul.f32.gmra.mxu0 %v3373
      %v3485 = vpop.f32.mrf.mxu0
      %v3486 = vadd.f32 0.0, %v3485
      %3487 = vmatmul.f32.gmra.mxu0 %v3376
      %v3488 = vpop.f32.mrf.mxu0
      %v3489 = vadd.f32 0.0, %v3488
      %3490 = vmatmul.f32.gmra.mxu0 %v3379
      %v3491 = vpop.f32.mrf.mxu0
      %v3492 = vadd.f32 0.0, %v3491
      %3493 = vmatmul.f32.gmra.mxu0 %v3382
      %v3494 = vpop.f32.mrf.mxu0
      %v3495 = vadd.f32 0.0, %v3494
      %3496 = vmatmul.f32.gmra.mxu0 %v3385
      %v3497 = vpop.f32.mrf.mxu0
      %v3498 = vadd.f32 0.0, %v3497
      %3499 = vmatmul.f32.gmra.mxu0 %v3388
      %v3500 = vpop.f32.mrf.mxu0
      %v3501 = vadd.f32 0.0, %v3500
      %3502 = vmatmul.f32.gmra.mxu0 %v3391
      %v3503 = vpop.f32.mrf.mxu0
      %v3504 = vadd.f32 0.0, %v3503
      %3505 = vmatmul.f32.gmra.mxu0 %v3394
      %v3506 = vpop.f32.mrf.mxu0
      %v3507 = vadd.f32 0.0, %v3506
      %3508 = vmatmul.f32.gmra.mxu0 %v3397
      %v3509 = vpop.f32.mrf.mxu0
      %v3510 = vadd.f32 0.0, %v3509
      %3511 = vmatmul.f32.gmra.mxu0 %v3400
      %v3512 = vpop.f32.mrf.mxu0
      %v3513 = vadd.f32 0.0, %v3512
      %3514 = vmatmul.f32.gmra.mxu0 %v3403
      %v3515 = vpop.f32.mrf.mxu0
      %v3516 = vadd.f32 0.0, %v3515
      %3517 = vmatmul.f32.gmra.mxu0 %v3406
      %v3518 = vpop.f32.mrf.mxu0
      %v3519 = vadd.f32 0.0, %v3518
      %3520 = vmatmul.f32.gmra.mxu0 %v3409
      %v3521 = vpop.f32.mrf.mxu0
      %v3522 = vadd.f32 0.0, %v3521
      %3523 = vmatmul.f32.gmra.mxu0 %v3412
      %v3524 = vpop.f32.mrf.mxu0
      %v3525 = vadd.f32 0.0, %v3524
      %3526 = vmatmul.f32.gmra.mxu0 %v3415
      %v3527 = vpop.f32.mrf.mxu0
      %v3528 = vadd.f32 0.0, %v3527
      %3529 = vmatmul.f32.gmra.mxu0 %v3418
      %v3530 = vpop.f32.mrf.mxu0
      %v3531 = vadd.f32 0.0, %v3530
      %3532 = vmatmul.f32.gmra.mxu0 %v3421
      %v3533 = vpop.f32.mrf.mxu0
      %v3534 = vadd.f32 0.0, %v3533
      %3535 = vmatmul.f32.gmra.mxu0 %v3424
      %v3536 = vpop.f32.mrf.mxu0
      %v3537 = vadd.f32 0.0, %v3536
      %3538 = vmatmul.f32.gmra.mxu0 %v3427
      %v3539 = vpop.f32.mrf.mxu0
      %v3540 = vadd.f32 0.0, %v3539
      %3541 = vmatmul.f32.gmra.mxu0 %v3430
      %v3542 = vpop.f32.mrf.mxu0
      %v3543 = vadd.f32 0.0, %v3542
      %3544 = vmatmul.f32.gmra.mxu0 %v3433
      %v3545 = vpop.f32.mrf.mxu0
      %v3546 = vadd.f32 0.0, %v3545
      %3547 = vmatmul.f32.gmra.mxu0 %v3436
      %v3548 = vpop.f32.mrf.mxu0
      %v3549 = vadd.f32 0.0, %v3548
      %3550 = vmatmul.f32.gmra.mxu0 %v3439
      %v3551 = vpop.f32.mrf.mxu0
      %v3552 = vadd.f32 0.0, %v3551
      %3553 = vmatmul.f32.gmra.mxu0 %v3442
      %v3554 = vpop.f32.mrf.mxu0
      %v3555 = vadd.f32 0.0, %v3554
      %3556 = vmatmul.f32.gmra.mxu0 %v3445
      %v3557 = vpop.f32.mrf.mxu0
      %v3558 = vadd.f32 0.0, %v3557
      %3559 = vmatmul.f32.gmra.mxu0 %v3448
      %v3560 = vpop.f32.mrf.mxu0
      %v3561 = vadd.f32 0.0, %v3560
      %3562 = vmatmul.f32.gmra.mxu0 %v3451
      %v3563 = vpop.f32.mrf.mxu0
      %v3564 = vadd.f32 0.0, %v3563
      %3565 = vmatmul.f32.gmra.mxu0 %v3454
      %v3566 = vpop.f32.mrf.mxu0
      %v3567 = vadd.f32 0.0, %v3566
      %3568 = vdwg.mxu0
      %v3569 = vadd.f32 %v3287, %v3474
      %v3570 = vadd.f32 %v3288, %v3477
      %v3571 = vadd.f32 %v3289, %v3480
      %v3572 = vadd.f32 %v3290, %v3483
      %v3573 = vadd.f32 %v3291, %v3486
      %v3574 = vadd.f32 %v3292, %v3489
      %v3575 = vadd.f32 %v3293, %v3492
      %v3576 = vadd.f32 %v3294, %v3495
      %v3577 = vadd.f32 %v3295, %v3498
      %v3578 = vadd.f32 %v3296, %v3501
      %v3579 = vadd.f32 %v3297, %v3504
      %v3580 = vadd.f32 %v3298, %v3507
      %v3581 = vadd.f32 %v3299, %v3510
      %v3582 = vadd.f32 %v3300, %v3513
      %v3583 = vadd.f32 %v3301, %v3516
      %v3584 = vadd.f32 %v3302, %v3519
      %v3585 = vadd.f32 %v3303, %v3522
      %v3586 = vadd.f32 %v3304, %v3525
      %v3587 = vadd.f32 %v3305, %v3528
      %v3588 = vadd.f32 %v3306, %v3531
      %v3589 = vadd.f32 %v3307, %v3534
      %v3590 = vadd.f32 %v3308, %v3537
      %v3591 = vadd.f32 %v3309, %v3540
      %v3592 = vadd.f32 %v3310, %v3543
      %v3593 = vadd.f32 %v3311, %v3546
      %v3594 = vadd.f32 %v3312, %v3549
      %v3595 = vadd.f32 %v3313, %v3552
      %v3596 = vadd.f32 %v3314, %v3555
      %v3597 = vadd.f32 %v3315, %v3558
      %v3598 = vadd.f32 %v3316, %v3561
      %v3599 = vadd.f32 %v3317, %v3564
      %v3600 = vadd.f32 %v3318, %v3567
      %v3601 = vld [vmem:[%s2223 + $0x2] sm:$0xff]
      %v3602 = vld [vmem:[%s2223 + $0xa] sm:$0xff]
      %v3603 = vld [vmem:[%s2223 + $0x1a] sm:$0xff]
      %v3604 = vld [vmem:[%s2223 + $0x22] sm:$0xff]
      %v3605 = vld [vmem:[%s2223 + $0x32] sm:$0xff]
      %v3606 = vld [vmem:[%s2223 + $0x3a] sm:$0xff]
      %v3607 = vld [vmem:[%s2223 + $0x4a] sm:$0xff]
      %v3608 = vld [vmem:[%s2223 + $0x52] sm:$0xff]
      %v3609 = vld [vmem:[%s2223 + $0x62] sm:$0xff]
      %v3610 = vld [vmem:[%s2223 + $0x6a] sm:$0xff]
      %v3611 = vld [vmem:[%s2223 + $0x7a] sm:$0xff]
      %v3612 = vld [vmem:[%s2223 + $0x82] sm:$0xff]
      %v3613 = vld [vmem:[%s2223 + $0x92] sm:$0xff]
      %v3614 = vld [vmem:[%s2223 + $0x9a] sm:$0xff]
      %v3615 = vld [vmem:[%s2223 + $0xaa] sm:$0xff]
      %v3616 = vld [vmem:[%s2223 + $0xb2] sm:$0xff]
      %v3617 = vld [vmem:[%s2223 + $0xc2] sm:$0xff]
      %v3618 = vld [vmem:[%s2223 + $0xca] sm:$0xff]
      %v3619 = vld [vmem:[%s2223 + $0xda] sm:$0xff]
      %v3620 = vld [vmem:[%s2223 + $0xe2] sm:$0xff]
      %v3621 = vld [vmem:[%s2223 + $0xf2] sm:$0xff]
      %v3622 = vld [vmem:[%s2223 + $0xfa] sm:$0xff]
      %v3623 = vld [vmem:[%s2223 + $0x10a] sm:$0xff]
      %v3624 = vld [vmem:[%s2223 + $0x112] sm:$0xff]
      %v3625 = vld [vmem:[%s2223 + $0x122] sm:$0xff]
      %v3626 = vld [vmem:[%s2223 + $0x12a] sm:$0xff]
      %v3627 = vld [vmem:[%s2223 + $0x13a] sm:$0xff]
      %v3628 = vld [vmem:[%s2223 + $0x142] sm:$0xff]
      %v3629 = vld [vmem:[%s2223 + $0x152] sm:$0xff]
      %v3630 = vld [vmem:[%s2223 + $0x15a] sm:$0xff]
      %v3631 = vld [vmem:[%s2223 + $0x16a] sm:$0xff]
      %v3632 = vld [vmem:[%s2223 + $0x172] sm:$0xff]
      %s3633 = scalar_lea.vmem %s3, 320
      %v3634 = vld [vmem:[%s3633] sm:$0xff]
      %v3635 = vld [vmem:[%s3633 + $0x8] sm:$0xff]
      %v3636 = vld [vmem:[%s3633 + $0x10] sm:$0xff]
      %v3637 = vld [vmem:[%s3633 + $0x18] sm:$0xff]
      %v3638 = vld [vmem:[%s3633 + $0x20] sm:$0xff]
      %v3639 = vld [vmem:[%s3633 + $0x28] sm:$0xff]
      %v3640 = vld [vmem:[%s3633 + $0x30] sm:$0xff]
      %v3641 = vld [vmem:[%s3633 + $0x38] sm:$0xff]
      %v3643 = vsel %vm2167, %v3601, 0
      %v3646 = vsel %vm2167, %v3602, 0
      %v3649 = vsel %vm2167, %v3603, 0
      %v3652 = vsel %vm2167, %v3604, 0
      %v3655 = vsel %vm2167, %v3605, 0
      %v3658 = vsel %vm2167, %v3606, 0
      %v3661 = vsel %vm2167, %v3607, 0
      %v3664 = vsel %vm2167, %v3608, 0
      %v3667 = vsel %vm2167, %v3609, 0
      %v3670 = vsel %vm2167, %v3610, 0
      %v3673 = vsel %vm2167, %v3611, 0
      %v3676 = vsel %vm2167, %v3612, 0
      %v3679 = vsel %vm2167, %v3613, 0
      %v3682 = vsel %vm2167, %v3614, 0
      %v3685 = vsel %vm2167, %v3615, 0
      %v3688 = vsel %vm2167, %v3616, 0
      %v3691 = vsel %vm2167, %v3617, 0
      %v3694 = vsel %vm2167, %v3618, 0
      %v3697 = vsel %vm2167, %v3619, 0
      %v3700 = vsel %vm2167, %v3620, 0
      %v3703 = vsel %vm2167, %v3621, 0
      %v3706 = vsel %vm2167, %v3622, 0
      %v3709 = vsel %vm2167, %v3623, 0
      %v3712 = vsel %vm2167, %v3624, 0
      %v3715 = vsel %vm2167, %v3625, 0
      %v3718 = vsel %vm2167, %v3626, 0
      %v3721 = vsel %vm2167, %v3627, 0
      %v3724 = vsel %vm2167, %v3628, 0
      %v3727 = vsel %vm2167, %v3629, 0
      %v3730 = vsel %vm2167, %v3630, 0
      %v3733 = vsel %vm2167, %v3631, 0
      %v3736 = vsel %vm2167, %v3632, 0
      %3738 = vmatpush.msra.mxu0 0.0
      %3739 = vmatpush.msra.mxu0 0.0
      %3740 = vmatpush.msra.mxu0 0.0
      %3741 = vmatpush.msra.mxu0 0.0
      %3742 = vmatpush.msra.mxu0 0.0
      %3743 = vmatpush.msra.mxu0 0.0
      %3744 = vmatpush.msra.mxu0 0.0
      %3745 = vmatpush.msra.mxu0 0.0
      %3746 = vmatpush.msra.mxu0 %v3641
      %3747 = vmatpush.msra.mxu0 %v3640
      %3748 = vmatpush.msra.mxu0 %v3639
      %3749 = vmatpush.msra.mxu0 %v3638
      %3750 = vmatpush.msra.mxu0 %v3637
      %3751 = vmatpush.msra.mxu0 %v3636
      %3752 = vmatpush.msra.mxu0 %v3635
      %3753 = vmatpush.msra.mxu0 %v3634
      %3754 = vmatmul.f32.gmra.mxu0 %v3643
      %v3755 = vpop.f32.mrf.mxu0
      %v3756 = vadd.f32 0.0, %v3755
      %3757 = vmatmul.f32.gmra.mxu0 %v3646
      %v3758 = vpop.f32.mrf.mxu0
      %v3759 = vadd.f32 0.0, %v3758
      %3760 = vmatmul.f32.gmra.mxu0 %v3649
      %v3761 = vpop.f32.mrf.mxu0
      %v3762 = vadd.f32 0.0, %v3761
      %3763 = vmatmul.f32.gmra.mxu0 %v3652
      %v3764 = vpop.f32.mrf.mxu0
      %v3765 = vadd.f32 0.0, %v3764
      %3766 = vmatmul.f32.gmra.mxu0 %v3655
      %v3767 = vpop.f32.mrf.mxu0
      %v3768 = vadd.f32 0.0, %v3767
      %3769 = vmatmul.f32.gmra.mxu0 %v3658
      %v3770 = vpop.f32.mrf.mxu0
      %v3771 = vadd.f32 0.0, %v3770
      %3772 = vmatmul.f32.gmra.mxu0 %v3661
      %v3773 = vpop.f32.mrf.mxu0
      %v3774 = vadd.f32 0.0, %v3773
      %3775 = vmatmul.f32.gmra.mxu0 %v3664
      %v3776 = vpop.f32.mrf.mxu0
      %v3777 = vadd.f32 0.0, %v3776
      %3778 = vmatmul.f32.gmra.mxu0 %v3667
      %v3779 = vpop.f32.mrf.mxu0
      %v3780 = vadd.f32 0.0, %v3779
      %3781 = vmatmul.f32.gmra.mxu0 %v3670
      %v3782 = vpop.f32.mrf.mxu0
      %v3783 = vadd.f32 0.0, %v3782
      %3784 = vmatmul.f32.gmra.mxu0 %v3673
      %v3785 = vpop.f32.mrf.mxu0
      %v3786 = vadd.f32 0.0, %v3785
      %3787 = vmatmul.f32.gmra.mxu0 %v3676
      %v3788 = vpop.f32.mrf.mxu0
      %v3789 = vadd.f32 0.0, %v3788
      %3790 = vmatmul.f32.gmra.mxu0 %v3679
      %v3791 = vpop.f32.mrf.mxu0
      %v3792 = vadd.f32 0.0, %v3791
      %3793 = vmatmul.f32.gmra.mxu0 %v3682
      %v3794 = vpop.f32.mrf.mxu0
      %v3795 = vadd.f32 0.0, %v3794
      %3796 = vmatmul.f32.gmra.mxu0 %v3685
      %v3797 = vpop.f32.mrf.mxu0
      %v3798 = vadd.f32 0.0, %v3797
      %3799 = vmatmul.f32.gmra.mxu0 %v3688
      %v3800 = vpop.f32.mrf.mxu0
      %v3801 = vadd.f32 0.0, %v3800
      %3802 = vmatmul.f32.gmra.mxu0 %v3691
      %v3803 = vpop.f32.mrf.mxu0
      %v3804 = vadd.f32 0.0, %v3803
      %3805 = vmatmul.f32.gmra.mxu0 %v3694
      %v3806 = vpop.f32.mrf.mxu0
      %v3807 = vadd.f32 0.0, %v3806
      %3808 = vmatmul.f32.gmra.mxu0 %v3697
      %v3809 = vpop.f32.mrf.mxu0
      %v3810 = vadd.f32 0.0, %v3809
      %3811 = vmatmul.f32.gmra.mxu0 %v3700
      %v3812 = vpop.f32.mrf.mxu0
      %v3813 = vadd.f32 0.0, %v3812
      %3814 = vmatmul.f32.gmra.mxu0 %v3703
      %v3815 = vpop.f32.mrf.mxu0
      %v3816 = vadd.f32 0.0, %v3815
      %3817 = vmatmul.f32.gmra.mxu0 %v3706
      %v3818 = vpop.f32.mrf.mxu0
      %v3819 = vadd.f32 0.0, %v3818
      %3820 = vmatmul.f32.gmra.mxu0 %v3709
      %v3821 = vpop.f32.mrf.mxu0
      %v3822 = vadd.f32 0.0, %v3821
      %3823 = vmatmul.f32.gmra.mxu0 %v3712
      %v3824 = vpop.f32.mrf.mxu0
      %v3825 = vadd.f32 0.0, %v3824
      %3826 = vmatmul.f32.gmra.mxu0 %v3715
      %v3827 = vpop.f32.mrf.mxu0
      %v3828 = vadd.f32 0.0, %v3827
      %3829 = vmatmul.f32.gmra.mxu0 %v3718
      %v3830 = vpop.f32.mrf.mxu0
      %v3831 = vadd.f32 0.0, %v3830
      %3832 = vmatmul.f32.gmra.mxu0 %v3721
      %v3833 = vpop.f32.mrf.mxu0
      %v3834 = vadd.f32 0.0, %v3833
      %3835 = vmatmul.f32.gmra.mxu0 %v3724
      %v3836 = vpop.f32.mrf.mxu0
      %v3837 = vadd.f32 0.0, %v3836
      %3838 = vmatmul.f32.gmra.mxu0 %v3727
      %v3839 = vpop.f32.mrf.mxu0
      %v3840 = vadd.f32 0.0, %v3839
      %3841 = vmatmul.f32.gmra.mxu0 %v3730
      %v3842 = vpop.f32.mrf.mxu0
      %v3843 = vadd.f32 0.0, %v3842
      %3844 = vmatmul.f32.gmra.mxu0 %v3733
      %v3845 = vpop.f32.mrf.mxu0
      %v3846 = vadd.f32 0.0, %v3845
      %3847 = vmatmul.f32.gmra.mxu0 %v3736
      %v3848 = vpop.f32.mrf.mxu0
      %v3849 = vadd.f32 0.0, %v3848
      %3850 = vdwg.mxu0
      %v3851 = vadd.f32 %v3569, %v3756
      %v3852 = vadd.f32 %v3570, %v3759
      %v3853 = vadd.f32 %v3571, %v3762
      %v3854 = vadd.f32 %v3572, %v3765
      %v3855 = vadd.f32 %v3573, %v3768
      %v3856 = vadd.f32 %v3574, %v3771
      %v3857 = vadd.f32 %v3575, %v3774
      %v3858 = vadd.f32 %v3576, %v3777
      %v3859 = vadd.f32 %v3577, %v3780
      %v3860 = vadd.f32 %v3578, %v3783
      %v3861 = vadd.f32 %v3579, %v3786
      %v3862 = vadd.f32 %v3580, %v3789
      %v3863 = vadd.f32 %v3581, %v3792
      %v3864 = vadd.f32 %v3582, %v3795
      %v3865 = vadd.f32 %v3583, %v3798
      %v3866 = vadd.f32 %v3584, %v3801
      %v3867 = vadd.f32 %v3585, %v3804
      %v3868 = vadd.f32 %v3586, %v3807
      %v3869 = vadd.f32 %v3587, %v3810
      %v3870 = vadd.f32 %v3588, %v3813
      %v3871 = vadd.f32 %v3589, %v3816
      %v3872 = vadd.f32 %v3590, %v3819
      %v3873 = vadd.f32 %v3591, %v3822
      %v3874 = vadd.f32 %v3592, %v3825
      %v3875 = vadd.f32 %v3593, %v3828
      %v3876 = vadd.f32 %v3594, %v3831
      %v3877 = vadd.f32 %v3595, %v3834
      %v3878 = vadd.f32 %v3596, %v3837
      %v3879 = vadd.f32 %v3597, %v3840
      %v3880 = vadd.f32 %v3598, %v3843
      %v3881 = vadd.f32 %v3599, %v3846
      %v3882 = vadd.f32 %v3600, %v3849
      %s3883 = scalar_lea.vmem [#allocation2], 48
      %v3884 = vld [vmem:[%s3883] sm:$0xff]
      %v3885 = vld [vmem:[%s3883 + $0x8] sm:$0xff]
      %v3886 = vld [vmem:[%s3883 + $0x18] sm:$0xff]
      %v3887 = vld [vmem:[%s3883 + $0x20] sm:$0xff]
      %v3888 = vld [vmem:[%s3883 + $0x30] sm:$0xff]
      %v3889 = vld [vmem:[%s3883 + $0x38] sm:$0xff]
      %v3890 = vld [vmem:[%s3883 + $0x48] sm:$0xff]
      %v3891 = vld [vmem:[%s3883 + $0x50] sm:$0xff]
      %v3892 = vld [vmem:[%s3883 + $0x60] sm:$0xff]
      %v3893 = vld [vmem:[%s3883 + $0x68] sm:$0xff]
      %v3894 = vld [vmem:[%s3883 + $0x78] sm:$0xff]
      %v3895 = vld [vmem:[%s3883 + $0x80] sm:$0xff]
      %v3896 = vld [vmem:[%s3883 + $0x90] sm:$0xff]
      %v3897 = vld [vmem:[%s3883 + $0x98] sm:$0xff]
      %v3898 = vld [vmem:[%s3883 + $0xa8] sm:$0xff]
      %v3899 = vld [vmem:[%s3883 + $0xb0] sm:$0xff]
      %v3900 = vld [vmem:[%s3883 + $0xc0] sm:$0xff]
      %v3901 = vld [vmem:[%s3883 + $0xc8] sm:$0xff]
      %v3902 = vld [vmem:[%s3883 + $0xd8] sm:$0xff]
      %v3903 = vld [vmem:[%s3883 + $0xe0] sm:$0xff]
      %v3904 = vld [vmem:[%s3883 + $0xf0] sm:$0xff]
      %v3905 = vld [vmem:[%s3883 + $0xf8] sm:$0xff]
      %v3906 = vld [vmem:[%s3883 + $0x108] sm:$0xff]
      %v3907 = vld [vmem:[%s3883 + $0x110] sm:$0xff]
      %v3908 = vld [vmem:[%s3883 + $0x120] sm:$0xff]
      %v3909 = vld [vmem:[%s3883 + $0x128] sm:$0xff]
      %v3910 = vld [vmem:[%s3883 + $0x138] sm:$0xff]
      %v3911 = vld [vmem:[%s3883 + $0x140] sm:$0xff]
      %v3912 = vld [vmem:[%s3883 + $0x150] sm:$0xff]
      %v3913 = vld [vmem:[%s3883 + $0x158] sm:$0xff]
      %v3914 = vld [vmem:[%s3883 + $0x168] sm:$0xff]
      %v3915 = vld [vmem:[%s3883 + $0x170] sm:$0xff]
      %s3916 = scalar_lea.vmem %s3, 384
      %v3917 = vld [vmem:[%s3916] sm:$0xff]
      %v3918 = vld [vmem:[%s3916 + $0x8] sm:$0xff]
      %v3919 = vld [vmem:[%s3916 + $0x10] sm:$0xff]
      %v3920 = vld [vmem:[%s3916 + $0x18] sm:$0xff]
      %v3921 = vld [vmem:[%s3916 + $0x20] sm:$0xff]
      %v3922 = vld [vmem:[%s3916 + $0x28] sm:$0xff]
      %v3923 = vld [vmem:[%s3916 + $0x30] sm:$0xff]
      %v3924 = vld [vmem:[%s3916 + $0x38] sm:$0xff]
      %v3926 = vsel %vm2167, %v3884, 0
      %v3929 = vsel %vm2167, %v3885, 0
      %v3932 = vsel %vm2167, %v3886, 0
      %v3935 = vsel %vm2167, %v3887, 0
      %v3938 = vsel %vm2167, %v3888, 0
      %v3941 = vsel %vm2167, %v3889, 0
      %v3944 = vsel %vm2167, %v3890, 0
      %v3947 = vsel %vm2167, %v3891, 0
      %v3950 = vsel %vm2167, %v3892, 0
      %v3953 = vsel %vm2167, %v3893, 0
      %v3956 = vsel %vm2167, %v3894, 0
      %v3959 = vsel %vm2167, %v3895, 0
      %v3962 = vsel %vm2167, %v3896, 0
      %v3965 = vsel %vm2167, %v3897, 0
      %v3968 = vsel %vm2167, %v3898, 0
      %v3971 = vsel %vm2167, %v3899, 0
      %v3974 = vsel %vm2167, %v3900, 0
      %v3977 = vsel %vm2167, %v3901, 0
      %v3980 = vsel %vm2167, %v3902, 0
      %v3983 = vsel %vm2167, %v3903, 0
      %v3986 = vsel %vm2167, %v3904, 0
      %v3989 = vsel %vm2167, %v3905, 0
      %v3992 = vsel %vm2167, %v3906, 0
      %v3995 = vsel %vm2167, %v3907, 0
      %v3998 = vsel %vm2167, %v3908, 0
      %v4001 = vsel %vm2167, %v3909, 0
      %v4004 = vsel %vm2167, %v3910, 0
      %v4007 = vsel %vm2167, %v3911, 0
      %v4010 = vsel %vm2167, %v3912, 0
      %v4013 = vsel %vm2167, %v3913, 0
      %v4016 = vsel %vm2167, %v3914, 0
      %v4019 = vsel %vm2167, %v3915, 0
      %4021 = vmatpush.msra.mxu0 0.0
      %4022 = vmatpush.msra.mxu0 0.0
      %4023 = vmatpush.msra.mxu0 0.0
      %4024 = vmatpush.msra.mxu0 0.0
      %4025 = vmatpush.msra.mxu0 0.0
      %4026 = vmatpush.msra.mxu0 0.0
      %4027 = vmatpush.msra.mxu0 0.0
      %4028 = vmatpush.msra.mxu0 0.0
      %4029 = vmatpush.msra.mxu0 %v3924
      %4030 = vmatpush.msra.mxu0 %v3923
      %4031 = vmatpush.msra.mxu0 %v3922
      %4032 = vmatpush.msra.mxu0 %v3921
      %4033 = vmatpush.msra.mxu0 %v3920
      %4034 = vmatpush.msra.mxu0 %v3919
      %4035 = vmatpush.msra.mxu0 %v3918
      %4036 = vmatpush.msra.mxu0 %v3917
      %4037 = vmatmul.f32.gmra.mxu0 %v3926
      %v4038 = vpop.f32.mrf.mxu0
      %v4039 = vadd.f32 0.0, %v4038
      %4040 = vmatmul.f32.gmra.mxu0 %v3929
      %v4041 = vpop.f32.mrf.mxu0
      %v4042 = vadd.f32 0.0, %v4041
      %4043 = vmatmul.f32.gmra.mxu0 %v3932
      %v4044 = vpop.f32.mrf.mxu0
      %v4045 = vadd.f32 0.0, %v4044
      %4046 = vmatmul.f32.gmra.mxu0 %v3935
      %v4047 = vpop.f32.mrf.mxu0
      %v4048 = vadd.f32 0.0, %v4047
      %4049 = vmatmul.f32.gmra.mxu0 %v3938
      %v4050 = vpop.f32.mrf.mxu0
      %v4051 = vadd.f32 0.0, %v4050
      %4052 = vmatmul.f32.gmra.mxu0 %v3941
      %v4053 = vpop.f32.mrf.mxu0
      %v4054 = vadd.f32 0.0, %v4053
      %4055 = vmatmul.f32.gmra.mxu0 %v3944
      %v4056 = vpop.f32.mrf.mxu0
      %v4057 = vadd.f32 0.0, %v4056
      %4058 = vmatmul.f32.gmra.mxu0 %v3947
      %v4059 = vpop.f32.mrf.mxu0
      %v4060 = vadd.f32 0.0, %v4059
      %4061 = vmatmul.f32.gmra.mxu0 %v3950
      %v4062 = vpop.f32.mrf.mxu0
      %v4063 = vadd.f32 0.0, %v4062
      %4064 = vmatmul.f32.gmra.mxu0 %v3953
      %v4065 = vpop.f32.mrf.mxu0
      %v4066 = vadd.f32 0.0, %v4065
      %4067 = vmatmul.f32.gmra.mxu0 %v3956
      %v4068 = vpop.f32.mrf.mxu0
      %v4069 = vadd.f32 0.0, %v4068
      %4070 = vmatmul.f32.gmra.mxu0 %v3959
      %v4071 = vpop.f32.mrf.mxu0
      %v4072 = vadd.f32 0.0, %v4071
      %4073 = vmatmul.f32.gmra.mxu0 %v3962
      %v4074 = vpop.f32.mrf.mxu0
      %v4075 = vadd.f32 0.0, %v4074
      %4076 = vmatmul.f32.gmra.mxu0 %v3965
      %v4077 = vpop.f32.mrf.mxu0
      %v4078 = vadd.f32 0.0, %v4077
      %4079 = vmatmul.f32.gmra.mxu0 %v3968
      %v4080 = vpop.f32.mrf.mxu0
      %v4081 = vadd.f32 0.0, %v4080
      %4082 = vmatmul.f32.gmra.mxu0 %v3971
      %v4083 = vpop.f32.mrf.mxu0
      %v4084 = vadd.f32 0.0, %v4083
      %4085 = vmatmul.f32.gmra.mxu0 %v3974
      %v4086 = vpop.f32.mrf.mxu0
      %v4087 = vadd.f32 0.0, %v4086
      %4088 = vmatmul.f32.gmra.mxu0 %v3977
      %v4089 = vpop.f32.mrf.mxu0
      %v4090 = vadd.f32 0.0, %v4089
      %4091 = vmatmul.f32.gmra.mxu0 %v3980
      %v4092 = vpop.f32.mrf.mxu0
      %v4093 = vadd.f32 0.0, %v4092
      %4094 = vmatmul.f32.gmra.mxu0 %v3983
      %v4095 = vpop.f32.mrf.mxu0
      %v4096 = vadd.f32 0.0, %v4095
      %4097 = vmatmul.f32.gmra.mxu0 %v3986
      %v4098 = vpop.f32.mrf.mxu0
      %v4099 = vadd.f32 0.0, %v4098
      %4100 = vmatmul.f32.gmra.mxu0 %v3989
      %v4101 = vpop.f32.mrf.mxu0
      %v4102 = vadd.f32 0.0, %v4101
      %4103 = vmatmul.f32.gmra.mxu0 %v3992
      %v4104 = vpop.f32.mrf.mxu0
      %v4105 = vadd.f32 0.0, %v4104
      %4106 = vmatmul.f32.gmra.mxu0 %v3995
      %v4107 = vpop.f32.mrf.mxu0
      %v4108 = vadd.f32 0.0, %v4107
      %4109 = vmatmul.f32.gmra.mxu0 %v3998
      %v4110 = vpop.f32.mrf.mxu0
      %v4111 = vadd.f32 0.0, %v4110
      %4112 = vmatmul.f32.gmra.mxu0 %v4001
      %v4113 = vpop.f32.mrf.mxu0
      %v4114 = vadd.f32 0.0, %v4113
      %4115 = vmatmul.f32.gmra.mxu0 %v4004
      %v4116 = vpop.f32.mrf.mxu0
      %v4117 = vadd.f32 0.0, %v4116
      %4118 = vmatmul.f32.gmra.mxu0 %v4007
      %v4119 = vpop.f32.mrf.mxu0
      %v4120 = vadd.f32 0.0, %v4119
      %4121 = vmatmul.f32.gmra.mxu0 %v4010
      %v4122 = vpop.f32.mrf.mxu0
      %v4123 = vadd.f32 0.0, %v4122
      %4124 = vmatmul.f32.gmra.mxu0 %v4013
      %v4125 = vpop.f32.mrf.mxu0
      %v4126 = vadd.f32 0.0, %v4125
      %4127 = vmatmul.f32.gmra.mxu0 %v4016
      %v4128 = vpop.f32.mrf.mxu0
      %v4129 = vadd.f32 0.0, %v4128
      %4130 = vmatmul.f32.gmra.mxu0 %v4019
      %v4131 = vpop.f32.mrf.mxu0
      %v4132 = vadd.f32 0.0, %v4131
      %4133 = vdwg.mxu0
      %v4134 = vadd.f32 %v3851, %v4039
      %v4135 = vadd.f32 %v3852, %v4042
      %v4136 = vadd.f32 %v3853, %v4045
      %v4137 = vadd.f32 %v3854, %v4048
      %v4138 = vadd.f32 %v3855, %v4051
      %v4139 = vadd.f32 %v3856, %v4054
      %v4140 = vadd.f32 %v3857, %v4057
      %v4141 = vadd.f32 %v3858, %v4060
      %v4142 = vadd.f32 %v3859, %v4063
      %v4143 = vadd.f32 %v3860, %v4066
      %v4144 = vadd.f32 %v3861, %v4069
      %v4145 = vadd.f32 %v3862, %v4072
      %v4146 = vadd.f32 %v3863, %v4075
      %v4147 = vadd.f32 %v3864, %v4078
      %v4148 = vadd.f32 %v3865, %v4081
      %v4149 = vadd.f32 %v3866, %v4084
      %v4150 = vadd.f32 %v3867, %v4087
      %v4151 = vadd.f32 %v3868, %v4090
      %v4152 = vadd.f32 %v3869, %v4093
      %v4153 = vadd.f32 %v3870, %v4096
      %v4154 = vadd.f32 %v3871, %v4099
      %v4155 = vadd.f32 %v3872, %v4102
      %v4156 = vadd.f32 %v3873, %v4105
      %v4157 = vadd.f32 %v3874, %v4108
      %v4158 = vadd.f32 %v3875, %v4111
      %v4159 = vadd.f32 %v3876, %v4114
      %v4160 = vadd.f32 %v3877, %v4117
      %v4161 = vadd.f32 %v3878, %v4120
      %v4162 = vadd.f32 %v3879, %v4123
      %v4163 = vadd.f32 %v3880, %v4126
      %v4164 = vadd.f32 %v3881, %v4129
      %v4165 = vadd.f32 %v3882, %v4132
      %v4166 = vld [vmem:[%s3883 + $0x1] sm:$0xff]
      %v4167 = vld [vmem:[%s3883 + $0x9] sm:$0xff]
      %v4168 = vld [vmem:[%s3883 + $0x19] sm:$0xff]
      %v4169 = vld [vmem:[%s3883 + $0x21] sm:$0xff]
      %v4170 = vld [vmem:[%s3883 + $0x31] sm:$0xff]
      %v4171 = vld [vmem:[%s3883 + $0x39] sm:$0xff]
      %v4172 = vld [vmem:[%s3883 + $0x49] sm:$0xff]
      %v4173 = vld [vmem:[%s3883 + $0x51] sm:$0xff]
      %v4174 = vld [vmem:[%s3883 + $0x61] sm:$0xff]
      %v4175 = vld [vmem:[%s3883 + $0x69] sm:$0xff]
      %v4176 = vld [vmem:[%s3883 + $0x79] sm:$0xff]
      %v4177 = vld [vmem:[%s3883 + $0x81] sm:$0xff]
      %v4178 = vld [vmem:[%s3883 + $0x91] sm:$0xff]
      %v4179 = vld [vmem:[%s3883 + $0x99] sm:$0xff]
      %v4180 = vld [vmem:[%s3883 + $0xa9] sm:$0xff]
      %v4181 = vld [vmem:[%s3883 + $0xb1] sm:$0xff]
      %v4182 = vld [vmem:[%s3883 + $0xc1] sm:$0xff]
      %v4183 = vld [vmem:[%s3883 + $0xc9] sm:$0xff]
      %v4184 = vld [vmem:[%s3883 + $0xd9] sm:$0xff]
      %v4185 = vld [vmem:[%s3883 + $0xe1] sm:$0xff]
      %v4186 = vld [vmem:[%s3883 + $0xf1] sm:$0xff]
      %v4187 = vld [vmem:[%s3883 + $0xf9] sm:$0xff]
      %v4188 = vld [vmem:[%s3883 + $0x109] sm:$0xff]
      %v4189 = vld [vmem:[%s3883 + $0x111] sm:$0xff]
      %v4190 = vld [vmem:[%s3883 + $0x121] sm:$0xff]
      %v4191 = vld [vmem:[%s3883 + $0x129] sm:$0xff]
      %v4192 = vld [vmem:[%s3883 + $0x139] sm:$0xff]
      %v4193 = vld [vmem:[%s3883 + $0x141] sm:$0xff]
      %v4194 = vld [vmem:[%s3883 + $0x151] sm:$0xff]
      %v4195 = vld [vmem:[%s3883 + $0x159] sm:$0xff]
      %v4196 = vld [vmem:[%s3883 + $0x169] sm:$0xff]
      %v4197 = vld [vmem:[%s3883 + $0x171] sm:$0xff]
      %s4198 = scalar_lea.vmem %s3, 448
      %v4199 = vld [vmem:[%s4198] sm:$0xff]
      %v4200 = vld [vmem:[%s4198 + $0x8] sm:$0xff]
      %v4201 = vld [vmem:[%s4198 + $0x10] sm:$0xff]
      %v4202 = vld [vmem:[%s4198 + $0x18] sm:$0xff]
      %v4203 = vld [vmem:[%s4198 + $0x20] sm:$0xff]
      %v4204 = vld [vmem:[%s4198 + $0x28] sm:$0xff]
      %v4205 = vld [vmem:[%s4198 + $0x30] sm:$0xff]
      %v4206 = vld [vmem:[%s4198 + $0x38] sm:$0xff]
      %v4208 = vsel %vm2167, %v4166, 0
      %v4211 = vsel %vm2167, %v4167, 0
      %v4214 = vsel %vm2167, %v4168, 0
      %v4217 = vsel %vm2167, %v4169, 0
      %v4220 = vsel %vm2167, %v4170, 0
      %v4223 = vsel %vm2167, %v4171, 0
      %v4226 = vsel %vm2167, %v4172, 0
      %v4229 = vsel %vm2167, %v4173, 0
      %v4232 = vsel %vm2167, %v4174, 0
      %v4235 = vsel %vm2167, %v4175, 0
      %v4238 = vsel %vm2167, %v4176, 0
      %v4241 = vsel %vm2167, %v4177, 0
      %v4244 = vsel %vm2167, %v4178, 0
      %v4247 = vsel %vm2167, %v4179, 0
      %v4250 = vsel %vm2167, %v4180, 0
      %v4253 = vsel %vm2167, %v4181, 0
      %v4256 = vsel %vm2167, %v4182, 0
      %v4259 = vsel %vm2167, %v4183, 0
      %v4262 = vsel %vm2167, %v4184, 0
      %v4265 = vsel %vm2167, %v4185, 0
      %v4268 = vsel %vm2167, %v4186, 0
      %v4271 = vsel %vm2167, %v4187, 0
      %v4274 = vsel %vm2167, %v4188, 0
      %v4277 = vsel %vm2167, %v4189, 0
      %v4280 = vsel %vm2167, %v4190, 0
      %v4283 = vsel %vm2167, %v4191, 0
      %v4286 = vsel %vm2167, %v4192, 0
      %v4289 = vsel %vm2167, %v4193, 0
      %v4292 = vsel %vm2167, %v4194, 0
      %v4295 = vsel %vm2167, %v4195, 0
      %v4298 = vsel %vm2167, %v4196, 0
      %v4301 = vsel %vm2167, %v4197, 0
      %4303 = vmatpush.msra.mxu0 0.0
      %4304 = vmatpush.msra.mxu0 0.0
      %4305 = vmatpush.msra.mxu0 0.0
      %4306 = vmatpush.msra.mxu0 0.0
      %4307 = vmatpush.msra.mxu0 0.0
      %4308 = vmatpush.msra.mxu0 0.0
      %4309 = vmatpush.msra.mxu0 0.0
      %4310 = vmatpush.msra.mxu0 0.0
      %4311 = vmatpush.msra.mxu0 %v4206
      %4312 = vmatpush.msra.mxu0 %v4205
      %4313 = vmatpush.msra.mxu0 %v4204
      %4314 = vmatpush.msra.mxu0 %v4203
      %4315 = vmatpush.msra.mxu0 %v4202
      %4316 = vmatpush.msra.mxu0 %v4201
      %4317 = vmatpush.msra.mxu0 %v4200
      %4318 = vmatpush.msra.mxu0 %v4199
      %4319 = vmatmul.f32.gmra.mxu0 %v4208
      %v4320 = vpop.f32.mrf.mxu0
      %v4321 = vadd.f32 0.0, %v4320
      %4322 = vmatmul.f32.gmra.mxu0 %v4211
      %v4323 = vpop.f32.mrf.mxu0
      %v4324 = vadd.f32 0.0, %v4323
      %4325 = vmatmul.f32.gmra.mxu0 %v4214
      %v4326 = vpop.f32.mrf.mxu0
      %v4327 = vadd.f32 0.0, %v4326
      %4328 = vmatmul.f32.gmra.mxu0 %v4217
      %v4329 = vpop.f32.mrf.mxu0
      %v4330 = vadd.f32 0.0, %v4329
      %4331 = vmatmul.f32.gmra.mxu0 %v4220
      %v4332 = vpop.f32.mrf.mxu0
      %v4333 = vadd.f32 0.0, %v4332
      %4334 = vmatmul.f32.gmra.mxu0 %v4223
      %v4335 = vpop.f32.mrf.mxu0
      %v4336 = vadd.f32 0.0, %v4335
      %4337 = vmatmul.f32.gmra.mxu0 %v4226
      %v4338 = vpop.f32.mrf.mxu0
      %v4339 = vadd.f32 0.0, %v4338
      %4340 = vmatmul.f32.gmra.mxu0 %v4229
      %v4341 = vpop.f32.mrf.mxu0
      %v4342 = vadd.f32 0.0, %v4341
      %4343 = vmatmul.f32.gmra.mxu0 %v4232
      %v4344 = vpop.f32.mrf.mxu0
      %v4345 = vadd.f32 0.0, %v4344
      %4346 = vmatmul.f32.gmra.mxu0 %v4235
      %v4347 = vpop.f32.mrf.mxu0
      %v4348 = vadd.f32 0.0, %v4347
      %4349 = vmatmul.f32.gmra.mxu0 %v4238
      %v4350 = vpop.f32.mrf.mxu0
      %v4351 = vadd.f32 0.0, %v4350
      %4352 = vmatmul.f32.gmra.mxu0 %v4241
      %v4353 = vpop.f32.mrf.mxu0
      %v4354 = vadd.f32 0.0, %v4353
      %4355 = vmatmul.f32.gmra.mxu0 %v4244
      %v4356 = vpop.f32.mrf.mxu0
      %v4357 = vadd.f32 0.0, %v4356
      %4358 = vmatmul.f32.gmra.mxu0 %v4247
      %v4359 = vpop.f32.mrf.mxu0
      %v4360 = vadd.f32 0.0, %v4359
      %4361 = vmatmul.f32.gmra.mxu0 %v4250
      %v4362 = vpop.f32.mrf.mxu0
      %v4363 = vadd.f32 0.0, %v4362
      %4364 = vmatmul.f32.gmra.mxu0 %v4253
      %v4365 = vpop.f32.mrf.mxu0
      %v4366 = vadd.f32 0.0, %v4365
      %4367 = vmatmul.f32.gmra.mxu0 %v4256
      %v4368 = vpop.f32.mrf.mxu0
      %v4369 = vadd.f32 0.0, %v4368
      %4370 = vmatmul.f32.gmra.mxu0 %v4259
      %v4371 = vpop.f32.mrf.mxu0
      %v4372 = vadd.f32 0.0, %v4371
      %4373 = vmatmul.f32.gmra.mxu0 %v4262
      %v4374 = vpop.f32.mrf.mxu0
      %v4375 = vadd.f32 0.0, %v4374
      %4376 = vmatmul.f32.gmra.mxu0 %v4265
      %v4377 = vpop.f32.mrf.mxu0
      %v4378 = vadd.f32 0.0, %v4377
      %4379 = vmatmul.f32.gmra.mxu0 %v4268
      %v4380 = vpop.f32.mrf.mxu0
      %v4381 = vadd.f32 0.0, %v4380
      %4382 = vmatmul.f32.gmra.mxu0 %v4271
      %v4383 = vpop.f32.mrf.mxu0
      %v4384 = vadd.f32 0.0, %v4383
      %4385 = vmatmul.f32.gmra.mxu0 %v4274
      %v4386 = vpop.f32.mrf.mxu0
      %v4387 = vadd.f32 0.0, %v4386
      %4388 = vmatmul.f32.gmra.mxu0 %v4277
      %v4389 = vpop.f32.mrf.mxu0
      %v4390 = vadd.f32 0.0, %v4389
      %4391 = vmatmul.f32.gmra.mxu0 %v4280
      %v4392 = vpop.f32.mrf.mxu0
      %v4393 = vadd.f32 0.0, %v4392
      %4394 = vmatmul.f32.gmra.mxu0 %v4283
      %v4395 = vpop.f32.mrf.mxu0
      %v4396 = vadd.f32 0.0, %v4395
      %4397 = vmatmul.f32.gmra.mxu0 %v4286
      %v4398 = vpop.f32.mrf.mxu0
      %v4399 = vadd.f32 0.0, %v4398
      %4400 = vmatmul.f32.gmra.mxu0 %v4289
      %v4401 = vpop.f32.mrf.mxu0
      %v4402 = vadd.f32 0.0, %v4401
      %4403 = vmatmul.f32.gmra.mxu0 %v4292
      %v4404 = vpop.f32.mrf.mxu0
      %v4405 = vadd.f32 0.0, %v4404
      %4406 = vmatmul.f32.gmra.mxu0 %v4295
      %v4407 = vpop.f32.mrf.mxu0
      %v4408 = vadd.f32 0.0, %v4407
      %4409 = vmatmul.f32.gmra.mxu0 %v4298
      %v4410 = vpop.f32.mrf.mxu0
      %v4411 = vadd.f32 0.0, %v4410
      %4412 = vmatmul.f32.gmra.mxu0 %v4301
      %v4413 = vpop.f32.mrf.mxu0
      %v4414 = vadd.f32 0.0, %v4413
      %4415 = vdwg.mxu0
      %v4416 = vadd.f32 %v4134, %v4321
      %v4417 = vadd.f32 %v4135, %v4324
      %v4418 = vadd.f32 %v4136, %v4327
      %v4419 = vadd.f32 %v4137, %v4330
      %v4420 = vadd.f32 %v4138, %v4333
      %v4421 = vadd.f32 %v4139, %v4336
      %v4422 = vadd.f32 %v4140, %v4339
      %v4423 = vadd.f32 %v4141, %v4342
      %v4424 = vadd.f32 %v4142, %v4345
      %v4425 = vadd.f32 %v4143, %v4348
      %v4426 = vadd.f32 %v4144, %v4351
      %v4427 = vadd.f32 %v4145, %v4354
      %v4428 = vadd.f32 %v4146, %v4357
      %v4429 = vadd.f32 %v4147, %v4360
      %v4430 = vadd.f32 %v4148, %v4363
      %v4431 = vadd.f32 %v4149, %v4366
      %v4432 = vadd.f32 %v4150, %v4369
      %v4433 = vadd.f32 %v4151, %v4372
      %v4434 = vadd.f32 %v4152, %v4375
      %v4435 = vadd.f32 %v4153, %v4378
      %v4436 = vadd.f32 %v4154, %v4381
      %v4437 = vadd.f32 %v4155, %v4384
      %v4438 = vadd.f32 %v4156, %v4387
      %v4439 = vadd.f32 %v4157, %v4390
      %v4440 = vadd.f32 %v4158, %v4393
      %v4441 = vadd.f32 %v4159, %v4396
      %v4442 = vadd.f32 %v4160, %v4399
      %v4443 = vadd.f32 %v4161, %v4402
      %v4444 = vadd.f32 %v4162, %v4405
      %v4445 = vadd.f32 %v4163, %v4408
      %v4446 = vadd.f32 %v4164, %v4411
      %v4447 = vadd.f32 %v4165, %v4414
      %v4448 = vld [vmem:[%s3883 + $0x2] sm:$0xff]
      %v4449 = vld [vmem:[%s3883 + $0xa] sm:$0xff]
      %v4450 = vld [vmem:[%s3883 + $0x1a] sm:$0xff]
      %v4451 = vld [vmem:[%s3883 + $0x22] sm:$0xff]
      %v4452 = vld [vmem:[%s3883 + $0x32] sm:$0xff]
      %v4453 = vld [vmem:[%s3883 + $0x3a] sm:$0xff]
      %v4454 = vld [vmem:[%s3883 + $0x4a] sm:$0xff]
      %v4455 = vld [vmem:[%s3883 + $0x52] sm:$0xff]
      %v4456 = vld [vmem:[%s3883 + $0x62] sm:$0xff]
      %v4457 = vld [vmem:[%s3883 + $0x6a] sm:$0xff]
      %v4458 = vld [vmem:[%s3883 + $0x7a] sm:$0xff]
      %v4459 = vld [vmem:[%s3883 + $0x82] sm:$0xff]
      %v4460 = vld [vmem:[%s3883 + $0x92] sm:$0xff]
      %v4461 = vld [vmem:[%s3883 + $0x9a] sm:$0xff]
      %v4462 = vld [vmem:[%s3883 + $0xaa] sm:$0xff]
      %v4463 = vld [vmem:[%s3883 + $0xb2] sm:$0xff]
      %v4464 = vld [vmem:[%s3883 + $0xc2] sm:$0xff]
      %v4465 = vld [vmem:[%s3883 + $0xca] sm:$0xff]
      %v4466 = vld [vmem:[%s3883 + $0xda] sm:$0xff]
      %v4467 = vld [vmem:[%s3883 + $0xe2] sm:$0xff]
      %v4468 = vld [vmem:[%s3883 + $0xf2] sm:$0xff]
      %v4469 = vld [vmem:[%s3883 + $0xfa] sm:$0xff]
      %v4470 = vld [vmem:[%s3883 + $0x10a] sm:$0xff]
      %v4471 = vld [vmem:[%s3883 + $0x112] sm:$0xff]
      %v4472 = vld [vmem:[%s3883 + $0x122] sm:$0xff]
      %v4473 = vld [vmem:[%s3883 + $0x12a] sm:$0xff]
      %v4474 = vld [vmem:[%s3883 + $0x13a] sm:$0xff]
      %v4475 = vld [vmem:[%s3883 + $0x142] sm:$0xff]
      %v4476 = vld [vmem:[%s3883 + $0x152] sm:$0xff]
      %v4477 = vld [vmem:[%s3883 + $0x15a] sm:$0xff]
      %v4478 = vld [vmem:[%s3883 + $0x16a] sm:$0xff]
      %v4479 = vld [vmem:[%s3883 + $0x172] sm:$0xff]
      %s4480 = scalar_lea.vmem %s3, 512
      %v4481 = vld [vmem:[%s4480] sm:$0xff]
      %v4482 = vld [vmem:[%s4480 + $0x8] sm:$0xff]
      %v4483 = vld [vmem:[%s4480 + $0x10] sm:$0xff]
      %v4484 = vld [vmem:[%s4480 + $0x18] sm:$0xff]
      %v4485 = vld [vmem:[%s4480 + $0x20] sm:$0xff]
      %v4486 = vld [vmem:[%s4480 + $0x28] sm:$0xff]
      %v4487 = vld [vmem:[%s4480 + $0x30] sm:$0xff]
      %v4488 = vld [vmem:[%s4480 + $0x38] sm:$0xff]
      %v4490 = vsel %vm2167, %v4448, 0
      %v4493 = vsel %vm2167, %v4449, 0
      %v4496 = vsel %vm2167, %v4450, 0
      %v4499 = vsel %vm2167, %v4451, 0
      %v4502 = vsel %vm2167, %v4452, 0
      %v4505 = vsel %vm2167, %v4453, 0
      %v4508 = vsel %vm2167, %v4454, 0
      %v4511 = vsel %vm2167, %v4455, 0
      %v4514 = vsel %vm2167, %v4456, 0
      %v4517 = vsel %vm2167, %v4457, 0
      %v4520 = vsel %vm2167, %v4458, 0
      %v4523 = vsel %vm2167, %v4459, 0
      %v4526 = vsel %vm2167, %v4460, 0
      %v4529 = vsel %vm2167, %v4461, 0
      %v4532 = vsel %vm2167, %v4462, 0
      %v4535 = vsel %vm2167, %v4463, 0
      %v4538 = vsel %vm2167, %v4464, 0
      %v4541 = vsel %vm2167, %v4465, 0
      %v4544 = vsel %vm2167, %v4466, 0
      %v4547 = vsel %vm2167, %v4467, 0
      %v4550 = vsel %vm2167, %v4468, 0
      %v4553 = vsel %vm2167, %v4469, 0
      %v4556 = vsel %vm2167, %v4470, 0
      %v4559 = vsel %vm2167, %v4471, 0
      %v4562 = vsel %vm2167, %v4472, 0
      %v4565 = vsel %vm2167, %v4473, 0
      %v4568 = vsel %vm2167, %v4474, 0
      %v4571 = vsel %vm2167, %v4475, 0
      %v4574 = vsel %vm2167, %v4476, 0
      %v4577 = vsel %vm2167, %v4477, 0
      %v4580 = vsel %vm2167, %v4478, 0
      %v4583 = vsel %vm2167, %v4479, 0
      %4585 = vmatpush.msra.mxu0 0.0
      %4586 = vmatpush.msra.mxu0 0.0
      %4587 = vmatpush.msra.mxu0 0.0
      %4588 = vmatpush.msra.mxu0 0.0
      %4589 = vmatpush.msra.mxu0 0.0
      %4590 = vmatpush.msra.mxu0 0.0
      %4591 = vmatpush.msra.mxu0 0.0
      %4592 = vmatpush.msra.mxu0 0.0
      %4593 = vmatpush.msra.mxu0 %v4488
      %4594 = vmatpush.msra.mxu0 %v4487
      %4595 = vmatpush.msra.mxu0 %v4486
      %4596 = vmatpush.msra.mxu0 %v4485
      %4597 = vmatpush.msra.mxu0 %v4484
      %4598 = vmatpush.msra.mxu0 %v4483
      %4599 = vmatpush.msra.mxu0 %v4482
      %4600 = vmatpush.msra.mxu0 %v4481
      %4601 = vmatmul.f32.gmra.mxu0 %v4490
      %v4602 = vpop.f32.mrf.mxu0
      %v4603 = vadd.f32 0.0, %v4602
      %4604 = vmatmul.f32.gmra.mxu0 %v4493
      %v4605 = vpop.f32.mrf.mxu0
      %v4606 = vadd.f32 0.0, %v4605
      %4607 = vmatmul.f32.gmra.mxu0 %v4496
      %v4608 = vpop.f32.mrf.mxu0
      %v4609 = vadd.f32 0.0, %v4608
      %4610 = vmatmul.f32.gmra.mxu0 %v4499
      %v4611 = vpop.f32.mrf.mxu0
      %v4612 = vadd.f32 0.0, %v4611
      %4613 = vmatmul.f32.gmra.mxu0 %v4502
      %v4614 = vpop.f32.mrf.mxu0
      %v4615 = vadd.f32 0.0, %v4614
      %4616 = vmatmul.f32.gmra.mxu0 %v4505
      %v4617 = vpop.f32.mrf.mxu0
      %v4618 = vadd.f32 0.0, %v4617
      %4619 = vmatmul.f32.gmra.mxu0 %v4508
      %v4620 = vpop.f32.mrf.mxu0
      %v4621 = vadd.f32 0.0, %v4620
      %4622 = vmatmul.f32.gmra.mxu0 %v4511
      %v4623 = vpop.f32.mrf.mxu0
      %v4624 = vadd.f32 0.0, %v4623
      %4625 = vmatmul.f32.gmra.mxu0 %v4514
      %v4626 = vpop.f32.mrf.mxu0
      %v4627 = vadd.f32 0.0, %v4626
      %4628 = vmatmul.f32.gmra.mxu0 %v4517
      %v4629 = vpop.f32.mrf.mxu0
      %v4630 = vadd.f32 0.0, %v4629
      %4631 = vmatmul.f32.gmra.mxu0 %v4520
      %v4632 = vpop.f32.mrf.mxu0
      %v4633 = vadd.f32 0.0, %v4632
      %4634 = vmatmul.f32.gmra.mxu0 %v4523
      %v4635 = vpop.f32.mrf.mxu0
      %v4636 = vadd.f32 0.0, %v4635
      %4637 = vmatmul.f32.gmra.mxu0 %v4526
      %v4638 = vpop.f32.mrf.mxu0
      %v4639 = vadd.f32 0.0, %v4638
      %4640 = vmatmul.f32.gmra.mxu0 %v4529
      %v4641 = vpop.f32.mrf.mxu0
      %v4642 = vadd.f32 0.0, %v4641
      %4643 = vmatmul.f32.gmra.mxu0 %v4532
      %v4644 = vpop.f32.mrf.mxu0
      %v4645 = vadd.f32 0.0, %v4644
      %4646 = vmatmul.f32.gmra.mxu0 %v4535
      %v4647 = vpop.f32.mrf.mxu0
      %v4648 = vadd.f32 0.0, %v4647
      %4649 = vmatmul.f32.gmra.mxu0 %v4538
      %v4650 = vpop.f32.mrf.mxu0
      %v4651 = vadd.f32 0.0, %v4650
      %4652 = vmatmul.f32.gmra.mxu0 %v4541
      %v4653 = vpop.f32.mrf.mxu0
      %v4654 = vadd.f32 0.0, %v4653
      %4655 = vmatmul.f32.gmra.mxu0 %v4544
      %v4656 = vpop.f32.mrf.mxu0
      %v4657 = vadd.f32 0.0, %v4656
      %4658 = vmatmul.f32.gmra.mxu0 %v4547
      %v4659 = vpop.f32.mrf.mxu0
      %v4660 = vadd.f32 0.0, %v4659
      %4661 = vmatmul.f32.gmra.mxu0 %v4550
      %v4662 = vpop.f32.mrf.mxu0
      %v4663 = vadd.f32 0.0, %v4662
      %4664 = vmatmul.f32.gmra.mxu0 %v4553
      %v4665 = vpop.f32.mrf.mxu0
      %v4666 = vadd.f32 0.0, %v4665
      %4667 = vmatmul.f32.gmra.mxu0 %v4556
      %v4668 = vpop.f32.mrf.mxu0
      %v4669 = vadd.f32 0.0, %v4668
      %4670 = vmatmul.f32.gmra.mxu0 %v4559
      %v4671 = vpop.f32.mrf.mxu0
      %v4672 = vadd.f32 0.0, %v4671
      %4673 = vmatmul.f32.gmra.mxu0 %v4562
      %v4674 = vpop.f32.mrf.mxu0
      %v4675 = vadd.f32 0.0, %v4674
      %4676 = vmatmul.f32.gmra.mxu0 %v4565
      %v4677 = vpop.f32.mrf.mxu0
      %v4678 = vadd.f32 0.0, %v4677
      %4679 = vmatmul.f32.gmra.mxu0 %v4568
      %v4680 = vpop.f32.mrf.mxu0
      %v4681 = vadd.f32 0.0, %v4680
      %4682 = vmatmul.f32.gmra.mxu0 %v4571
      %v4683 = vpop.f32.mrf.mxu0
      %v4684 = vadd.f32 0.0, %v4683
      %4685 = vmatmul.f32.gmra.mxu0 %v4574
      %v4686 = vpop.f32.mrf.mxu0
      %v4687 = vadd.f32 0.0, %v4686
      %4688 = vmatmul.f32.gmra.mxu0 %v4577
      %v4689 = vpop.f32.mrf.mxu0
      %v4690 = vadd.f32 0.0, %v4689
      %4691 = vmatmul.f32.gmra.mxu0 %v4580
      %v4692 = vpop.f32.mrf.mxu0
      %v4693 = vadd.f32 0.0, %v4692
      %4694 = vmatmul.f32.gmra.mxu0 %v4583
      %v4695 = vpop.f32.mrf.mxu0
      %v4696 = vadd.f32 0.0, %v4695
      %4697 = vdwg.mxu0
      %v4698 = vadd.f32 %v4416, %v4603
      %v4699 = vadd.f32 %v4417, %v4606
      %v4700 = vadd.f32 %v4418, %v4609
      %v4701 = vadd.f32 %v4419, %v4612
      %v4702 = vadd.f32 %v4420, %v4615
      %v4703 = vadd.f32 %v4421, %v4618
      %v4704 = vadd.f32 %v4422, %v4621
      %v4705 = vadd.f32 %v4423, %v4624
      %v4706 = vadd.f32 %v4424, %v4627
      %v4707 = vadd.f32 %v4425, %v4630
      %v4708 = vadd.f32 %v4426, %v4633
      %v4709 = vadd.f32 %v4427, %v4636
      %v4710 = vadd.f32 %v4428, %v4639
      %v4711 = vadd.f32 %v4429, %v4642
      %v4712 = vadd.f32 %v4430, %v4645
      %v4713 = vadd.f32 %v4431, %v4648
      %v4714 = vadd.f32 %v4432, %v4651
      %v4715 = vadd.f32 %v4433, %v4654
      %v4716 = vadd.f32 %v4434, %v4657
      %v4717 = vadd.f32 %v4435, %v4660
      %v4718 = vadd.f32 %v4436, %v4663
      %v4719 = vadd.f32 %v4437, %v4666
      %v4720 = vadd.f32 %v4438, %v4669
      %v4721 = vadd.f32 %v4439, %v4672
      %v4722 = vadd.f32 %v4440, %v4675
      %v4723 = vadd.f32 %v4441, %v4678
      %v4724 = vadd.f32 %v4442, %v4681
      %v4725 = vadd.f32 %v4443, %v4684
      %v4726 = vadd.f32 %v4444, %v4687
      %v4727 = vadd.f32 %v4445, %v4690
      %v4728 = vadd.f32 %v4446, %v4693
      %v4729 = vadd.f32 %v4447, %v4696
      %v4730 = vld [vmem:[%s4] sm:$0x1]
      %v4732 = vperm.slane %v4730, 0
      %v4734 = vadd.f32 %v4698, %v4732
      %v4735 = vadd.f32 %v4699, %v4732
      %v4736 = vadd.f32 %v4700, %v4732
      %v4737 = vadd.f32 %v4701, %v4732
      %v4738 = vadd.f32 %v4702, %v4732
      %v4739 = vadd.f32 %v4703, %v4732
      %v4740 = vadd.f32 %v4704, %v4732
      %v4741 = vadd.f32 %v4705, %v4732
      %v4742 = vadd.f32 %v4706, %v4732
      %v4743 = vadd.f32 %v4707, %v4732
      %v4744 = vadd.f32 %v4708, %v4732
      %v4745 = vadd.f32 %v4709, %v4732
      %v4746 = vadd.f32 %v4710, %v4732
      %v4747 = vadd.f32 %v4711, %v4732
      %v4748 = vadd.f32 %v4712, %v4732
      %v4749 = vadd.f32 %v4713, %v4732
      %v4750 = vadd.f32 %v4714, %v4732
      %v4751 = vadd.f32 %v4715, %v4732
      %v4752 = vadd.f32 %v4716, %v4732
      %v4753 = vadd.f32 %v4717, %v4732
      %v4754 = vadd.f32 %v4718, %v4732
      %v4755 = vadd.f32 %v4719, %v4732
      %v4756 = vadd.f32 %v4720, %v4732
      %v4757 = vadd.f32 %v4721, %v4732
      %v4758 = vadd.f32 %v4722, %v4732
      %v4759 = vadd.f32 %v4723, %v4732
      %v4760 = vadd.f32 %v4724, %v4732
      %v4761 = vadd.f32 %v4725, %v4732
      %v4762 = vadd.f32 %v4726, %v4732
      %v4763 = vadd.f32 %v4727, %v4732
      %v4764 = vadd.f32 %v4728, %v4732
      %v4765 = vadd.f32 %v4729, %v4732
      %v4766 = vmax.f32 %v4734, 0.0
      %v4767 = vmax.f32 %v4735, 0.0
      %v4768 = vmax.f32 %v4736, 0.0
      %v4769 = vmax.f32 %v4737, 0.0
      %v4770 = vmax.f32 %v4738, 0.0
      %v4771 = vmax.f32 %v4739, 0.0
      %v4772 = vmax.f32 %v4740, 0.0
      %v4773 = vmax.f32 %v4741, 0.0
      %v4774 = vmax.f32 %v4742, 0.0
      %v4775 = vmax.f32 %v4743, 0.0
      %v4776 = vmax.f32 %v4744, 0.0
      %v4777 = vmax.f32 %v4745, 0.0
      %v4778 = vmax.f32 %v4746, 0.0
      %v4779 = vmax.f32 %v4747, 0.0
      %v4780 = vmax.f32 %v4748, 0.0
      %v4781 = vmax.f32 %v4749, 0.0
      %v4782 = vmax.f32 %v4750, 0.0
      %v4783 = vmax.f32 %v4751, 0.0
      %v4784 = vmax.f32 %v4752, 0.0
      %v4785 = vmax.f32 %v4753, 0.0
      %v4786 = vmax.f32 %v4754, 0.0
      %v4787 = vmax.f32 %v4755, 0.0
      %v4788 = vmax.f32 %v4756, 0.0
      %v4789 = vmax.f32 %v4757, 0.0
      %v4790 = vmax.f32 %v4758, 0.0
      %v4791 = vmax.f32 %v4759, 0.0
      %v4792 = vmax.f32 %v4760, 0.0
      %v4793 = vmax.f32 %v4761, 0.0
      %v4794 = vmax.f32 %v4762, 0.0
      %v4795 = vmax.f32 %v4763, 0.0
      %v4796 = vmax.f32 %v4764, 0.0
      %v4797 = vmax.f32 %v4765, 0.0
      %vm4798 = vcmask 261120
      %4799 = vst.msk [vmem:[#allocation3] sm:$0xff] %vm4798, 0.0
      %4800 = vst.msk [vmem:[#allocation3 + $0x8] sm:$0xff] %vm4798, 0.0
      %vm4801 = vcmask 254976
      %4802 = vst.msk [vmem:[#allocation3 + $0x10] sm:$0x3] %vm4801, 0.0
      %4803 = vst.msk [vmem:[#allocation3 + $0x18] sm:$0xff] %vm4798, 0.0
      %4804 = vst.msk [vmem:[#allocation3 + $0x20] sm:$0xff] %vm4798, 0.0
      %4805 = vst.msk [vmem:[#allocation3 + $0x28] sm:$0x3] %vm4801, 0.0
      %4806 = vst.msk [vmem:[#allocation3 + $0x30] sm:$0xff] %vm4798, 0.0
      %4807 = vst.msk [vmem:[#allocation3 + $0x38] sm:$0xff] %vm4798, 0.0
      %4808 = vst.msk [vmem:[#allocation3 + $0x40] sm:$0x3] %vm4801, 0.0
      %4809 = vst.msk [vmem:[#allocation3 + $0x48] sm:$0xff] %vm4798, 0.0
      %4810 = vst.msk [vmem:[#allocation3 + $0x50] sm:$0xff] %vm4798, 0.0
      %4811 = vst.msk [vmem:[#allocation3 + $0x58] sm:$0x3] %vm4801, 0.0
      %4812 = vst.msk [vmem:[#allocation3 + $0x60] sm:$0xff] %vm4798, 0.0
      %4813 = vst.msk [vmem:[#allocation3 + $0x68] sm:$0xff] %vm4798, 0.0
      %4814 = vst.msk [vmem:[#allocation3 + $0x70] sm:$0x3] %vm4801, 0.0
      %4815 = vst.msk [vmem:[#allocation3 + $0x78] sm:$0xff] %vm4798, 0.0
      %4816 = vst.msk [vmem:[#allocation3 + $0x80] sm:$0xff] %vm4798, 0.0
      %4817 = vst.msk [vmem:[#allocation3 + $0x88] sm:$0x3] %vm4801, 0.0
      %4818 = vst.msk [vmem:[#allocation3 + $0x90] sm:$0xff] %vm4798, 0.0
      %4819 = vst.msk [vmem:[#allocation3 + $0x98] sm:$0xff] %vm4798, 0.0
      %4820 = vst.msk [vmem:[#allocation3 + $0xa0] sm:$0x3] %vm4801, 0.0
      %4821 = vst.msk [vmem:[#allocation3 + $0xa8] sm:$0xff] %vm4798, 0.0
      %4822 = vst.msk [vmem:[#allocation3 + $0xb0] sm:$0xff] %vm4798, 0.0
      %4823 = vst.msk [vmem:[#allocation3 + $0xb8] sm:$0x3] %vm4801, 0.0
      %4824 = vst.msk [vmem:[#allocation3 + $0xc0] sm:$0xff] %vm4798, 0.0
      %4825 = vst.msk [vmem:[#allocation3 + $0xc8] sm:$0xff] %vm4798, 0.0
      %4826 = vst.msk [vmem:[#allocation3 + $0xd0] sm:$0x3] %vm4801, 0.0
      %4827 = vst.msk [vmem:[#allocation3 + $0xd8] sm:$0xff] %vm4798, 0.0
      %4828 = vst.msk [vmem:[#allocation3 + $0xe0] sm:$0xff] %vm4798, 0.0
      %4829 = vst.msk [vmem:[#allocation3 + $0xe8] sm:$0x3] %vm4801, 0.0
      %4830 = vst.msk [vmem:[#allocation3 + $0xf0] sm:$0xff] %vm4798, 0.0
      %4831 = vst.msk [vmem:[#allocation3 + $0xf8] sm:$0xff] %vm4798, 0.0
      %4832 = vst.msk [vmem:[#allocation3 + $0x100] sm:$0x3] %vm4801, 0.0
      %4833 = vst.msk [vmem:[#allocation3 + $0x108] sm:$0xff] %vm4798, 0.0
      %4834 = vst.msk [vmem:[#allocation3 + $0x110] sm:$0xff] %vm4798, 0.0
      %4835 = vst.msk [vmem:[#allocation3 + $0x118] sm:$0x3] %vm4801, 0.0
      %4836 = vst.msk [vmem:[#allocation3 + $0x120] sm:$0xff] %vm4798, 0.0
      %4837 = vst.msk [vmem:[#allocation3 + $0x128] sm:$0xff] %vm4798, 0.0
      %4838 = vst.msk [vmem:[#allocation3 + $0x130] sm:$0x3] %vm4801, 0.0
      %4839 = vst.msk [vmem:[#allocation3 + $0x138] sm:$0xff] %vm4798, 0.0
      %4840 = vst.msk [vmem:[#allocation3 + $0x140] sm:$0xff] %vm4798, 0.0
      %4841 = vst.msk [vmem:[#allocation3 + $0x148] sm:$0x3] %vm4801, 0.0
      %4842 = vst.msk [vmem:[#allocation3 + $0x150] sm:$0xff] %vm4798, 0.0
      %4843 = vst.msk [vmem:[#allocation3 + $0x158] sm:$0xff] %vm4798, 0.0
      %4844 = vst.msk [vmem:[#allocation3 + $0x160] sm:$0x3] %vm4801, 0.0
      %4845 = vst.msk [vmem:[#allocation3 + $0x168] sm:$0xff] %vm4798, 0.0
      %4846 = vst.msk [vmem:[#allocation3 + $0x170] sm:$0xff] %vm4798, 0.0
      %4847 = vst.msk [vmem:[#allocation3 + $0x178] sm:$0x3] %vm4801, 0.0
      %4848 = vst.msk [vmem:[#allocation3 + $0x180] sm:$0xff] %vm4798, 0.0
      %4849 = vst.msk [vmem:[#allocation3 + $0x188] sm:$0xff] %vm4798, 0.0
      %4850 = vst.msk [vmem:[#allocation3 + $0x190] sm:$0x3] %vm4801, 0.0
      %4851 = vst.msk [vmem:[#allocation3 + $0x198] sm:$0xff] %vm4798, 0.0
      %4852 = vst.msk [vmem:[#allocation3 + $0x1a0] sm:$0xff] %vm4798, 0.0
      %4853 = vst.msk [vmem:[#allocation3 + $0x1a8] sm:$0x3] %vm4801, 0.0
      %s4854 = scalar_lea.vmem [#allocation3], 24
      %4855 = vst.msk [vmem:[%s4854 + $0x1] sm:$0xff] %vm4798, %v4766
      %4856 = vst.msk [vmem:[%s4854 + $0x9] sm:$0xff] %vm4798, %v4767
      %4857 = vst.msk [vmem:[%s4854 + $0x19] sm:$0xff] %vm4798, %v4768
      %4858 = vst.msk [vmem:[%s4854 + $0x21] sm:$0xff] %vm4798, %v4769
      %4859 = vst.msk [vmem:[%s4854 + $0x31] sm:$0xff] %vm4798, %v4770
      %4860 = vst.msk [vmem:[%s4854 + $0x39] sm:$0xff] %vm4798, %v4771
      %4861 = vst.msk [vmem:[%s4854 + $0x49] sm:$0xff] %vm4798, %v4772
      %4862 = vst.msk [vmem:[%s4854 + $0x51] sm:$0xff] %vm4798, %v4773
      %4863 = vst.msk [vmem:[%s4854 + $0x61] sm:$0xff] %vm4798, %v4774
      %4864 = vst.msk [vmem:[%s4854 + $0x69] sm:$0xff] %vm4798, %v4775
      %4865 = vst.msk [vmem:[%s4854 + $0x79] sm:$0xff] %vm4798, %v4776
      %4866 = vst.msk [vmem:[%s4854 + $0x81] sm:$0xff] %vm4798, %v4777
      %4867 = vst.msk [vmem:[%s4854 + $0x91] sm:$0xff] %vm4798, %v4778
      %4868 = vst.msk [vmem:[%s4854 + $0x99] sm:$0xff] %vm4798, %v4779
      %4869 = vst.msk [vmem:[%s4854 + $0xa9] sm:$0xff] %vm4798, %v4780
      %4870 = vst.msk [vmem:[%s4854 + $0xb1] sm:$0xff] %vm4798, %v4781
      %4871 = vst.msk [vmem:[%s4854 + $0xc1] sm:$0xff] %vm4798, %v4782
      %4872 = vst.msk [vmem:[%s4854 + $0xc9] sm:$0xff] %vm4798, %v4783
      %4873 = vst.msk [vmem:[%s4854 + $0xd9] sm:$0xff] %vm4798, %v4784
      %4874 = vst.msk [vmem:[%s4854 + $0xe1] sm:$0xff] %vm4798, %v4785
      %4875 = vst.msk [vmem:[%s4854 + $0xf1] sm:$0xff] %vm4798, %v4786
      %4876 = vst.msk [vmem:[%s4854 + $0xf9] sm:$0xff] %vm4798, %v4787
      %4877 = vst.msk [vmem:[%s4854 + $0x109] sm:$0xff] %vm4798, %v4788
      %4878 = vst.msk [vmem:[%s4854 + $0x111] sm:$0xff] %vm4798, %v4789
      %4879 = vst.msk [vmem:[%s4854 + $0x121] sm:$0xff] %vm4798, %v4790
      %4880 = vst.msk [vmem:[%s4854 + $0x129] sm:$0xff] %vm4798, %v4791
      %4881 = vst.msk [vmem:[%s4854 + $0x139] sm:$0xff] %vm4798, %v4792
      %4882 = vst.msk [vmem:[%s4854 + $0x141] sm:$0xff] %vm4798, %v4793
      %4883 = vst.msk [vmem:[%s4854 + $0x151] sm:$0xff] %vm4798, %v4794
      %4884 = vst.msk [vmem:[%s4854 + $0x159] sm:$0xff] %vm4798, %v4795
      %4885 = vst.msk [vmem:[%s4854 + $0x169] sm:$0xff] %vm4798, %v4796
      %4886 = vst.msk [vmem:[%s4854 + $0x171] sm:$0xff] %vm4798, %v4797
      %v4887 = vld [vmem:[#allocation3] sm:$0xff]
      %v4888 = vld [vmem:[#allocation3 + $0x8] sm:$0xff]
      %v4889 = vld [vmem:[#allocation3 + $0x18] sm:$0xff]
      %v4890 = vld [vmem:[#allocation3 + $0x20] sm:$0xff]
      %v4891 = vld [vmem:[#allocation3 + $0x30] sm:$0xff]
      %v4892 = vld [vmem:[#allocation3 + $0x38] sm:$0xff]
      %v4893 = vld [vmem:[#allocation3 + $0x48] sm:$0xff]
      %v4894 = vld [vmem:[#allocation3 + $0x50] sm:$0xff]
      %v4895 = vld [vmem:[#allocation3 + $0x60] sm:$0xff]
      %v4896 = vld [vmem:[#allocation3 + $0x68] sm:$0xff]
      %v4897 = vld [vmem:[#allocation3 + $0x78] sm:$0xff]
      %v4898 = vld [vmem:[#allocation3 + $0x80] sm:$0xff]
      %v4899 = vld [vmem:[#allocation3 + $0x90] sm:$0xff]
      %v4900 = vld [vmem:[#allocation3 + $0x98] sm:$0xff]
      %v4901 = vld [vmem:[#allocation3 + $0xa8] sm:$0xff]
      %v4902 = vld [vmem:[#allocation3 + $0xb0] sm:$0xff]
      %v4903 = vld [vmem:[#allocation3 + $0xc0] sm:$0xff]
      %v4904 = vld [vmem:[#allocation3 + $0xc8] sm:$0xff]
      %v4905 = vld [vmem:[#allocation3 + $0xd8] sm:$0xff]
      %v4906 = vld [vmem:[#allocation3 + $0xe0] sm:$0xff]
      %v4907 = vld [vmem:[#allocation3 + $0xf0] sm:$0xff]
      %v4908 = vld [vmem:[#allocation3 + $0xf8] sm:$0xff]
      %v4909 = vld [vmem:[#allocation3 + $0x108] sm:$0xff]
      %v4910 = vld [vmem:[#allocation3 + $0x110] sm:$0xff]
      %v4911 = vld [vmem:[#allocation3 + $0x120] sm:$0xff]
      %v4912 = vld [vmem:[#allocation3 + $0x128] sm:$0xff]
      %v4913 = vld [vmem:[#allocation3 + $0x138] sm:$0xff]
      %v4914 = vld [vmem:[#allocation3 + $0x140] sm:$0xff]
      %v4915 = vld [vmem:[#allocation3 + $0x150] sm:$0xff]
      %v4916 = vld [vmem:[#allocation3 + $0x158] sm:$0xff]
      %v4917 = vld [vmem:[#allocation3 + $0x168] sm:$0xff]
      %v4918 = vld [vmem:[#allocation3 + $0x170] sm:$0xff]
      %v4919 = vld [vmem:[%s5] sm:$0xff]
      %v4920 = vld [vmem:[%s5 + $0x8] sm:$0xff]
      %v4921 = vld [vmem:[%s5 + $0x10] sm:$0xff]
      %v4922 = vld [vmem:[%s5 + $0x18] sm:$0xff]
      %v4923 = vld [vmem:[#allocation3 + $0x1] sm:$0xff]
      %v4924 = vld [vmem:[#allocation3 + $0x9] sm:$0xff]
      %v4925 = vld [vmem:[#allocation3 + $0x19] sm:$0xff]
      %v4926 = vld [vmem:[#allocation3 + $0x21] sm:$0xff]
      %v4927 = vld [vmem:[#allocation3 + $0x31] sm:$0xff]
      %v4928 = vld [vmem:[#allocation3 + $0x39] sm:$0xff]
      %v4929 = vld [vmem:[#allocation3 + $0x49] sm:$0xff]
      %v4930 = vld [vmem:[#allocation3 + $0x51] sm:$0xff]
      %v4931 = vld [vmem:[#allocation3 + $0x61] sm:$0xff]
      %v4932 = vld [vmem:[#allocation3 + $0x69] sm:$0xff]
      %v4933 = vld [vmem:[#allocation3 + $0x79] sm:$0xff]
      %v4934 = vld [vmem:[#allocation3 + $0x81] sm:$0xff]
      %v4935 = vld [vmem:[#allocation3 + $0x91] sm:$0xff]
      %v4936 = vld [vmem:[#allocation3 + $0x99] sm:$0xff]
      %v4937 = vld [vmem:[#allocation3 + $0xa9] sm:$0xff]
      %v4938 = vld [vmem:[#allocation3 + $0xb1] sm:$0xff]
      %v4939 = vld [vmem:[#allocation3 + $0xc1] sm:$0xff]
      %v4940 = vld [vmem:[#allocation3 + $0xc9] sm:$0xff]
      %v4941 = vld [vmem:[#allocation3 + $0xd9] sm:$0xff]
      %v4942 = vld [vmem:[#allocation3 + $0xe1] sm:$0xff]
      %v4943 = vld [vmem:[#allocation3 + $0xf1] sm:$0xff]
      %v4944 = vld [vmem:[#allocation3 + $0xf9] sm:$0xff]
      %v4945 = vld [vmem:[#allocation3 + $0x109] sm:$0xff]
      %v4946 = vld [vmem:[#allocation3 + $0x111] sm:$0xff]
      %v4947 = vld [vmem:[#allocation3 + $0x121] sm:$0xff]
      %v4948 = vld [vmem:[#allocation3 + $0x129] sm:$0xff]
      %v4949 = vld [vmem:[#allocation3 + $0x139] sm:$0xff]
      %v4950 = vld [vmem:[#allocation3 + $0x141] sm:$0xff]
      %v4951 = vld [vmem:[#allocation3 + $0x151] sm:$0xff]
      %v4952 = vld [vmem:[#allocation3 + $0x159] sm:$0xff]
      %v4953 = vld [vmem:[#allocation3 + $0x169] sm:$0xff]
      %v4954 = vld [vmem:[#allocation3 + $0x171] sm:$0xff]
      %s4955 = scalar_lea.vmem %s5, 32
      %v4956 = vld [vmem:[%s4955] sm:$0xff]
      %v4957 = vld [vmem:[%s4955 + $0x8] sm:$0xff]
      %v4958 = vld [vmem:[%s4955 + $0x10] sm:$0xff]
      %v4959 = vld [vmem:[%s4955 + $0x18] sm:$0xff]
      %v4961 = vsel %vm4798, %v4923, 0
      %v4964 = vsel %vm4798, %v4924, 0
      %v4967 = vsel %vm4798, %v4925, 0
      %v4970 = vsel %vm4798, %v4926, 0
      %v4973 = vsel %vm4798, %v4927, 0
      %v4976 = vsel %vm4798, %v4928, 0
      %v4979 = vsel %vm4798, %v4929, 0
      %v4982 = vsel %vm4798, %v4930, 0
      %v4985 = vsel %vm4798, %v4931, 0
      %v4988 = vsel %vm4798, %v4932, 0
      %v4991 = vsel %vm4798, %v4933, 0
      %v4994 = vsel %vm4798, %v4934, 0
      %v4997 = vsel %vm4798, %v4935, 0
      %v5000 = vsel %vm4798, %v4936, 0
      %v5003 = vsel %vm4798, %v4937, 0
      %v5006 = vsel %vm4798, %v4938, 0
      %v5009 = vsel %vm4798, %v4939, 0
      %v5012 = vsel %vm4798, %v4940, 0
      %v5015 = vsel %vm4798, %v4941, 0
      %v5018 = vsel %vm4798, %v4942, 0
      %v5021 = vsel %vm4798, %v4943, 0
      %v5024 = vsel %vm4798, %v4944, 0
      %v5027 = vsel %vm4798, %v4945, 0
      %v5030 = vsel %vm4798, %v4946, 0
      %v5033 = vsel %vm4798, %v4947, 0
      %v5036 = vsel %vm4798, %v4948, 0
      %v5039 = vsel %vm4798, %v4949, 0
      %v5042 = vsel %vm4798, %v4950, 0
      %v5045 = vsel %vm4798, %v4951, 0
      %v5048 = vsel %vm4798, %v4952, 0
      %v5051 = vsel %vm4798, %v4953, 0
      %v5054 = vsel %vm4798, %v4954, 0
      %5056 = vmatpush.msra.mxu0 0.0
      %5057 = vmatpush.msra.mxu0 0.0
      %5058 = vmatpush.msra.mxu0 0.0
      %5059 = vmatpush.msra.mxu0 0.0
      %5060 = vmatpush.msra.mxu0 0.0
      %5061 = vmatpush.msra.mxu0 0.0
      %5062 = vmatpush.msra.mxu0 0.0
      %5063 = vmatpush.msra.mxu0 0.0
      %5064 = vmatpush.msra.mxu0 0.0
      %5065 = vmatpush.msra.mxu0 0.0
      %5066 = vmatpush.msra.mxu0 0.0
      %5067 = vmatpush.msra.mxu0 0.0
      %5068 = vmatpush.msra.mxu0 %v4959
      %5069 = vmatpush.msra.mxu0 %v4958
      %5070 = vmatpush.msra.mxu0 %v4957
      %5071 = vmatpush.msra.mxu0 %v4956
      %5072 = vmatmul.f32.gmra.mxu0 %v4961
      %v5073 = vpop.f32.mrf.mxu0
      %v5074 = vadd.f32 0.0, %v5073
      %5075 = vmatmul.f32.gmra.mxu0 %v4964
      %v5076 = vpop.f32.mrf.mxu0
      %v5077 = vadd.f32 0.0, %v5076
      %5078 = vmatmul.f32.gmra.mxu0 %v4967
      %v5079 = vpop.f32.mrf.mxu0
      %v5080 = vadd.f32 0.0, %v5079
      %5081 = vmatmul.f32.gmra.mxu0 %v4970
      %v5082 = vpop.f32.mrf.mxu0
      %v5083 = vadd.f32 0.0, %v5082
      %5084 = vmatmul.f32.gmra.mxu0 %v4973
      %v5085 = vpop.f32.mrf.mxu0
      %v5086 = vadd.f32 0.0, %v5085
      %5087 = vmatmul.f32.gmra.mxu0 %v4976
      %v5088 = vpop.f32.mrf.mxu0
      %v5089 = vadd.f32 0.0, %v5088
      %5090 = vmatmul.f32.gmra.mxu0 %v4979
      %v5091 = vpop.f32.mrf.mxu0
      %v5092 = vadd.f32 0.0, %v5091
      %5093 = vmatmul.f32.gmra.mxu0 %v4982
      %v5094 = vpop.f32.mrf.mxu0
      %v5095 = vadd.f32 0.0, %v5094
      %5096 = vmatmul.f32.gmra.mxu0 %v4985
      %v5097 = vpop.f32.mrf.mxu0
      %v5098 = vadd.f32 0.0, %v5097
      %5099 = vmatmul.f32.gmra.mxu0 %v4988
      %v5100 = vpop.f32.mrf.mxu0
      %v5101 = vadd.f32 0.0, %v5100
      %5102 = vmatmul.f32.gmra.mxu0 %v4991
      %v5103 = vpop.f32.mrf.mxu0
      %v5104 = vadd.f32 0.0, %v5103
      %5105 = vmatmul.f32.gmra.mxu0 %v4994
      %v5106 = vpop.f32.mrf.mxu0
      %v5107 = vadd.f32 0.0, %v5106
      %5108 = vmatmul.f32.gmra.mxu0 %v4997
      %v5109 = vpop.f32.mrf.mxu0
      %v5110 = vadd.f32 0.0, %v5109
      %5111 = vmatmul.f32.gmra.mxu0 %v5000
      %v5112 = vpop.f32.mrf.mxu0
      %v5113 = vadd.f32 0.0, %v5112
      %5114 = vmatmul.f32.gmra.mxu0 %v5003
      %v5115 = vpop.f32.mrf.mxu0
      %v5116 = vadd.f32 0.0, %v5115
      %5117 = vmatmul.f32.gmra.mxu0 %v5006
      %v5118 = vpop.f32.mrf.mxu0
      %v5119 = vadd.f32 0.0, %v5118
      %5120 = vmatmul.f32.gmra.mxu0 %v5009
      %v5121 = vpop.f32.mrf.mxu0
      %v5122 = vadd.f32 0.0, %v5121
      %5123 = vmatmul.f32.gmra.mxu0 %v5012
      %v5124 = vpop.f32.mrf.mxu0
      %v5125 = vadd.f32 0.0, %v5124
      %5126 = vmatmul.f32.gmra.mxu0 %v5015
      %v5127 = vpop.f32.mrf.mxu0
      %v5128 = vadd.f32 0.0, %v5127
      %5129 = vmatmul.f32.gmra.mxu0 %v5018
      %v5130 = vpop.f32.mrf.mxu0
      %v5131 = vadd.f32 0.0, %v5130
      %5132 = vmatmul.f32.gmra.mxu0 %v5021
      %v5133 = vpop.f32.mrf.mxu0
      %v5134 = vadd.f32 0.0, %v5133
      %5135 = vmatmul.f32.gmra.mxu0 %v5024
      %v5136 = vpop.f32.mrf.mxu0
      %v5137 = vadd.f32 0.0, %v5136
      %5138 = vmatmul.f32.gmra.mxu0 %v5027
      %v5139 = vpop.f32.mrf.mxu0
      %v5140 = vadd.f32 0.0, %v5139
      %5141 = vmatmul.f32.gmra.mxu0 %v5030
      %v5142 = vpop.f32.mrf.mxu0
      %v5143 = vadd.f32 0.0, %v5142
      %5144 = vmatmul.f32.gmra.mxu0 %v5033
      %v5145 = vpop.f32.mrf.mxu0
      %v5146 = vadd.f32 0.0, %v5145
      %5147 = vmatmul.f32.gmra.mxu0 %v5036
      %v5148 = vpop.f32.mrf.mxu0
      %v5149 = vadd.f32 0.0, %v5148
      %5150 = vmatmul.f32.gmra.mxu0 %v5039
      %v5151 = vpop.f32.mrf.mxu0
      %v5152 = vadd.f32 0.0, %v5151
      %5153 = vmatmul.f32.gmra.mxu0 %v5042
      %v5154 = vpop.f32.mrf.mxu0
      %v5155 = vadd.f32 0.0, %v5154
      %5156 = vmatmul.f32.gmra.mxu0 %v5045
      %v5157 = vpop.f32.mrf.mxu0
      %v5158 = vadd.f32 0.0, %v5157
      %5159 = vmatmul.f32.gmra.mxu0 %v5048
      %v5160 = vpop.f32.mrf.mxu0
      %v5161 = vadd.f32 0.0, %v5160
      %5162 = vmatmul.f32.gmra.mxu0 %v5051
      %v5163 = vpop.f32.mrf.mxu0
      %v5164 = vadd.f32 0.0, %v5163
      %5165 = vmatmul.f32.gmra.mxu0 %v5054
      %v5166 = vpop.f32.mrf.mxu0
      %v5167 = vadd.f32 0.0, %v5166
      %5168 = vdwg.mxu0
      %v5170 = vsel %vm4798, %v4887, 0
      %v5173 = vsel %vm4798, %v4888, 0
      %v5176 = vsel %vm4798, %v4889, 0
      %v5179 = vsel %vm4798, %v4890, 0
      %v5182 = vsel %vm4798, %v4891, 0
      %v5185 = vsel %vm4798, %v4892, 0
      %v5188 = vsel %vm4798, %v4893, 0
      %v5191 = vsel %vm4798, %v4894, 0
      %v5194 = vsel %vm4798, %v4895, 0
      %v5197 = vsel %vm4798, %v4896, 0
      %v5200 = vsel %vm4798, %v4897, 0
      %v5203 = vsel %vm4798, %v4898, 0
      %v5206 = vsel %vm4798, %v4899, 0
      %v5209 = vsel %vm4798, %v4900, 0
      %v5212 = vsel %vm4798, %v4901, 0
      %v5215 = vsel %vm4798, %v4902, 0
      %v5218 = vsel %vm4798, %v4903, 0
      %v5221 = vsel %vm4798, %v4904, 0
      %v5224 = vsel %vm4798, %v4905, 0
      %v5227 = vsel %vm4798, %v4906, 0
      %v5230 = vsel %vm4798, %v4907, 0
      %v5233 = vsel %vm4798, %v4908, 0
      %v5236 = vsel %vm4798, %v4909, 0
      %v5239 = vsel %vm4798, %v4910, 0
      %v5242 = vsel %vm4798, %v4911, 0
      %v5245 = vsel %vm4798, %v4912, 0
      %v5248 = vsel %vm4798, %v4913, 0
      %v5251 = vsel %vm4798, %v4914, 0
      %v5254 = vsel %vm4798, %v4915, 0
      %v5257 = vsel %vm4798, %v4916, 0
      %v5260 = vsel %vm4798, %v4917, 0
      %v5263 = vsel %vm4798, %v4918, 0
      %5265 = vmatpush.msra.mxu0 0.0
      %5266 = vmatpush.msra.mxu0 0.0
      %5267 = vmatpush.msra.mxu0 0.0
      %5268 = vmatpush.msra.mxu0 0.0
      %5269 = vmatpush.msra.mxu0 0.0
      %5270 = vmatpush.msra.mxu0 0.0
      %5271 = vmatpush.msra.mxu0 0.0
      %5272 = vmatpush.msra.mxu0 0.0
      %5273 = vmatpush.msra.mxu0 0.0
      %5274 = vmatpush.msra.mxu0 0.0
      %5275 = vmatpush.msra.mxu0 0.0
      %5276 = vmatpush.msra.mxu0 0.0
      %5277 = vmatpush.msra.mxu0 %v4922
      %5278 = vmatpush.msra.mxu0 %v4921
      %5279 = vmatpush.msra.mxu0 %v4920
      %5280 = vmatpush.msra.mxu0 %v4919
      %5281 = vmatmul.f32.gmra.mxu0 %v5170
      %v5282 = vpop.f32.mrf.mxu0
      %v5283 = vadd.f32 %v5074, %v5282
      %5284 = vmatmul.f32.gmra.mxu0 %v5173
      %v5285 = vpop.f32.mrf.mxu0
      %v5286 = vadd.f32 %v5077, %v5285
      %5287 = vmatmul.f32.gmra.mxu0 %v5176
      %v5288 = vpop.f32.mrf.mxu0
      %v5289 = vadd.f32 %v5080, %v5288
      %5290 = vmatmul.f32.gmra.mxu0 %v5179
      %v5291 = vpop.f32.mrf.mxu0
      %v5292 = vadd.f32 %v5083, %v5291
      %5293 = vmatmul.f32.gmra.mxu0 %v5182
      %v5294 = vpop.f32.mrf.mxu0
      %v5295 = vadd.f32 %v5086, %v5294
      %5296 = vmatmul.f32.gmra.mxu0 %v5185
      %v5297 = vpop.f32.mrf.mxu0
      %v5298 = vadd.f32 %v5089, %v5297
      %5299 = vmatmul.f32.gmra.mxu0 %v5188
      %v5300 = vpop.f32.mrf.mxu0
      %v5301 = vadd.f32 %v5092, %v5300
      %5302 = vmatmul.f32.gmra.mxu0 %v5191
      %v5303 = vpop.f32.mrf.mxu0
      %v5304 = vadd.f32 %v5095, %v5303
      %5305 = vmatmul.f32.gmra.mxu0 %v5194
      %v5306 = vpop.f32.mrf.mxu0
      %v5307 = vadd.f32 %v5098, %v5306
      %5308 = vmatmul.f32.gmra.mxu0 %v5197
      %v5309 = vpop.f32.mrf.mxu0
      %v5310 = vadd.f32 %v5101, %v5309
      %5311 = vmatmul.f32.gmra.mxu0 %v5200
      %v5312 = vpop.f32.mrf.mxu0
      %v5313 = vadd.f32 %v5104, %v5312
      %5314 = vmatmul.f32.gmra.mxu0 %v5203
      %v5315 = vpop.f32.mrf.mxu0
      %v5316 = vadd.f32 %v5107, %v5315
      %5317 = vmatmul.f32.gmra.mxu0 %v5206
      %v5318 = vpop.f32.mrf.mxu0
      %v5319 = vadd.f32 %v5110, %v5318
      %5320 = vmatmul.f32.gmra.mxu0 %v5209
      %v5321 = vpop.f32.mrf.mxu0
      %v5322 = vadd.f32 %v5113, %v5321
      %5323 = vmatmul.f32.gmra.mxu0 %v5212
      %v5324 = vpop.f32.mrf.mxu0
      %v5325 = vadd.f32 %v5116, %v5324
      %5326 = vmatmul.f32.gmra.mxu0 %v5215
      %v5327 = vpop.f32.mrf.mxu0
      %v5328 = vadd.f32 %v5119, %v5327
      %5329 = vmatmul.f32.gmra.mxu0 %v5218
      %v5330 = vpop.f32.mrf.mxu0
      %v5331 = vadd.f32 %v5122, %v5330
      %5332 = vmatmul.f32.gmra.mxu0 %v5221
      %v5333 = vpop.f32.mrf.mxu0
      %v5334 = vadd.f32 %v5125, %v5333
      %5335 = vmatmul.f32.gmra.mxu0 %v5224
      %v5336 = vpop.f32.mrf.mxu0
      %v5337 = vadd.f32 %v5128, %v5336
      %5338 = vmatmul.f32.gmra.mxu0 %v5227
      %v5339 = vpop.f32.mrf.mxu0
      %v5340 = vadd.f32 %v5131, %v5339
      %5341 = vmatmul.f32.gmra.mxu0 %v5230
      %v5342 = vpop.f32.mrf.mxu0
      %v5343 = vadd.f32 %v5134, %v5342
      %5344 = vmatmul.f32.gmra.mxu0 %v5233
      %v5345 = vpop.f32.mrf.mxu0
      %v5346 = vadd.f32 %v5137, %v5345
      %5347 = vmatmul.f32.gmra.mxu0 %v5236
      %v5348 = vpop.f32.mrf.mxu0
      %v5349 = vadd.f32 %v5140, %v5348
      %5350 = vmatmul.f32.gmra.mxu0 %v5239
      %v5351 = vpop.f32.mrf.mxu0
      %v5352 = vadd.f32 %v5143, %v5351
      %5353 = vmatmul.f32.gmra.mxu0 %v5242
      %v5354 = vpop.f32.mrf.mxu0
      %v5355 = vadd.f32 %v5146, %v5354
      %5356 = vmatmul.f32.gmra.mxu0 %v5245
      %v5357 = vpop.f32.mrf.mxu0
      %v5358 = vadd.f32 %v5149, %v5357
      %5359 = vmatmul.f32.gmra.mxu0 %v5248
      %v5360 = vpop.f32.mrf.mxu0
      %v5361 = vadd.f32 %v5152, %v5360
      %5362 = vmatmul.f32.gmra.mxu0 %v5251
      %v5363 = vpop.f32.mrf.mxu0
      %v5364 = vadd.f32 %v5155, %v5363
      %5365 = vmatmul.f32.gmra.mxu0 %v5254
      %v5366 = vpop.f32.mrf.mxu0
      %v5367 = vadd.f32 %v5158, %v5366
      %5368 = vmatmul.f32.gmra.mxu0 %v5257
      %v5369 = vpop.f32.mrf.mxu0
      %v5370 = vadd.f32 %v5161, %v5369
      %5371 = vmatmul.f32.gmra.mxu0 %v5260
      %v5372 = vpop.f32.mrf.mxu0
      %v5373 = vadd.f32 %v5164, %v5372
      %5374 = vmatmul.f32.gmra.mxu0 %v5263
      %v5375 = vpop.f32.mrf.mxu0
      %v5376 = vadd.f32 %v5167, %v5375
      %5377 = vdwg.mxu0
      %v5378 = vld [vmem:[#allocation3 + $0x2] sm:$0xff]
      %v5379 = vld [vmem:[#allocation3 + $0xa] sm:$0xff]
      %v5380 = vld [vmem:[#allocation3 + $0x1a] sm:$0xff]
      %v5381 = vld [vmem:[#allocation3 + $0x22] sm:$0xff]
      %v5382 = vld [vmem:[#allocation3 + $0x32] sm:$0xff]
      %v5383 = vld [vmem:[#allocation3 + $0x3a] sm:$0xff]
      %v5384 = vld [vmem:[#allocation3 + $0x4a] sm:$0xff]
      %v5385 = vld [vmem:[#allocation3 + $0x52] sm:$0xff]
      %v5386 = vld [vmem:[#allocation3 + $0x62] sm:$0xff]
      %v5387 = vld [vmem:[#allocation3 + $0x6a] sm:$0xff]
      %v5388 = vld [vmem:[#allocation3 + $0x7a] sm:$0xff]
      %v5389 = vld [vmem:[#allocation3 + $0x82] sm:$0xff]
      %v5390 = vld [vmem:[#allocation3 + $0x92] sm:$0xff]
      %v5391 = vld [vmem:[#allocation3 + $0x9a] sm:$0xff]
      %v5392 = vld [vmem:[#allocation3 + $0xaa] sm:$0xff]
      %v5393 = vld [vmem:[#allocation3 + $0xb2] sm:$0xff]
      %v5394 = vld [vmem:[#allocation3 + $0xc2] sm:$0xff]
      %v5395 = vld [vmem:[#allocation3 + $0xca] sm:$0xff]
      %v5396 = vld [vmem:[#allocation3 + $0xda] sm:$0xff]
      %v5397 = vld [vmem:[#allocation3 + $0xe2] sm:$0xff]
      %v5398 = vld [vmem:[#allocation3 + $0xf2] sm:$0xff]
      %v5399 = vld [vmem:[#allocation3 + $0xfa] sm:$0xff]
      %v5400 = vld [vmem:[#allocation3 + $0x10a] sm:$0xff]
      %v5401 = vld [vmem:[#allocation3 + $0x112] sm:$0xff]
      %v5402 = vld [vmem:[#allocation3 + $0x122] sm:$0xff]
      %v5403 = vld [vmem:[#allocation3 + $0x12a] sm:$0xff]
      %v5404 = vld [vmem:[#allocation3 + $0x13a] sm:$0xff]
      %v5405 = vld [vmem:[#allocation3 + $0x142] sm:$0xff]
      %v5406 = vld [vmem:[#allocation3 + $0x152] sm:$0xff]
      %v5407 = vld [vmem:[#allocation3 + $0x15a] sm:$0xff]
      %v5408 = vld [vmem:[#allocation3 + $0x16a] sm:$0xff]
      %v5409 = vld [vmem:[#allocation3 + $0x172] sm:$0xff]
      %s5410 = scalar_lea.vmem %s5, 64
      %v5411 = vld [vmem:[%s5410] sm:$0xff]
      %v5412 = vld [vmem:[%s5410 + $0x8] sm:$0xff]
      %v5413 = vld [vmem:[%s5410 + $0x10] sm:$0xff]
      %v5414 = vld [vmem:[%s5410 + $0x18] sm:$0xff]
      %v5416 = vsel %vm4798, %v5378, 0
      %v5419 = vsel %vm4798, %v5379, 0
      %v5422 = vsel %vm4798, %v5380, 0
      %v5425 = vsel %vm4798, %v5381, 0
      %v5428 = vsel %vm4798, %v5382, 0
      %v5431 = vsel %vm4798, %v5383, 0
      %v5434 = vsel %vm4798, %v5384, 0
      %v5437 = vsel %vm4798, %v5385, 0
      %v5440 = vsel %vm4798, %v5386, 0
      %v5443 = vsel %vm4798, %v5387, 0
      %v5446 = vsel %vm4798, %v5388, 0
      %v5449 = vsel %vm4798, %v5389, 0
      %v5452 = vsel %vm4798, %v5390, 0
      %v5455 = vsel %vm4798, %v5391, 0
      %v5458 = vsel %vm4798, %v5392, 0
      %v5461 = vsel %vm4798, %v5393, 0
      %v5464 = vsel %vm4798, %v5394, 0
      %v5467 = vsel %vm4798, %v5395, 0
      %v5470 = vsel %vm4798, %v5396, 0
      %v5473 = vsel %vm4798, %v5397, 0
      %v5476 = vsel %vm4798, %v5398, 0
      %v5479 = vsel %vm4798, %v5399, 0
      %v5482 = vsel %vm4798, %v5400, 0
      %v5485 = vsel %vm4798, %v5401, 0
      %v5488 = vsel %vm4798, %v5402, 0
      %v5491 = vsel %vm4798, %v5403, 0
      %v5494 = vsel %vm4798, %v5404, 0
      %v5497 = vsel %vm4798, %v5405, 0
      %v5500 = vsel %vm4798, %v5406, 0
      %v5503 = vsel %vm4798, %v5407, 0
      %v5506 = vsel %vm4798, %v5408, 0
      %v5509 = vsel %vm4798, %v5409, 0
      %5511 = vmatpush.msra.mxu0 0.0
      %5512 = vmatpush.msra.mxu0 0.0
      %5513 = vmatpush.msra.mxu0 0.0
      %5514 = vmatpush.msra.mxu0 0.0
      %5515 = vmatpush.msra.mxu0 0.0
      %5516 = vmatpush.msra.mxu0 0.0
      %5517 = vmatpush.msra.mxu0 0.0
      %5518 = vmatpush.msra.mxu0 0.0
      %5519 = vmatpush.msra.mxu0 0.0
      %5520 = vmatpush.msra.mxu0 0.0
      %5521 = vmatpush.msra.mxu0 0.0
      %5522 = vmatpush.msra.mxu0 0.0
      %5523 = vmatpush.msra.mxu0 %v5414
      %5524 = vmatpush.msra.mxu0 %v5413
      %5525 = vmatpush.msra.mxu0 %v5412
      %5526 = vmatpush.msra.mxu0 %v5411
      %5527 = vmatmul.f32.gmra.mxu0 %v5416
      %v5528 = vpop.f32.mrf.mxu0
      %v5529 = vadd.f32 0.0, %v5528
      %5530 = vmatmul.f32.gmra.mxu0 %v5419
      %v5531 = vpop.f32.mrf.mxu0
      %v5532 = vadd.f32 0.0, %v5531
      %5533 = vmatmul.f32.gmra.mxu0 %v5422
      %v5534 = vpop.f32.mrf.mxu0
      %v5535 = vadd.f32 0.0, %v5534
      %5536 = vmatmul.f32.gmra.mxu0 %v5425
      %v5537 = vpop.f32.mrf.mxu0
      %v5538 = vadd.f32 0.0, %v5537
      %5539 = vmatmul.f32.gmra.mxu0 %v5428
      %v5540 = vpop.f32.mrf.mxu0
      %v5541 = vadd.f32 0.0, %v5540
      %5542 = vmatmul.f32.gmra.mxu0 %v5431
      %v5543 = vpop.f32.mrf.mxu0
      %v5544 = vadd.f32 0.0, %v5543
      %5545 = vmatmul.f32.gmra.mxu0 %v5434
      %v5546 = vpop.f32.mrf.mxu0
      %v5547 = vadd.f32 0.0, %v5546
      %5548 = vmatmul.f32.gmra.mxu0 %v5437
      %v5549 = vpop.f32.mrf.mxu0
      %v5550 = vadd.f32 0.0, %v5549
      %5551 = vmatmul.f32.gmra.mxu0 %v5440
      %v5552 = vpop.f32.mrf.mxu0
      %v5553 = vadd.f32 0.0, %v5552
      %5554 = vmatmul.f32.gmra.mxu0 %v5443
      %v5555 = vpop.f32.mrf.mxu0
      %v5556 = vadd.f32 0.0, %v5555
      %5557 = vmatmul.f32.gmra.mxu0 %v5446
      %v5558 = vpop.f32.mrf.mxu0
      %v5559 = vadd.f32 0.0, %v5558
      %5560 = vmatmul.f32.gmra.mxu0 %v5449
      %v5561 = vpop.f32.mrf.mxu0
      %v5562 = vadd.f32 0.0, %v5561
      %5563 = vmatmul.f32.gmra.mxu0 %v5452
      %v5564 = vpop.f32.mrf.mxu0
      %v5565 = vadd.f32 0.0, %v5564
      %5566 = vmatmul.f32.gmra.mxu0 %v5455
      %v5567 = vpop.f32.mrf.mxu0
      %v5568 = vadd.f32 0.0, %v5567
      %5569 = vmatmul.f32.gmra.mxu0 %v5458
      %v5570 = vpop.f32.mrf.mxu0
      %v5571 = vadd.f32 0.0, %v5570
      %5572 = vmatmul.f32.gmra.mxu0 %v5461
      %v5573 = vpop.f32.mrf.mxu0
      %v5574 = vadd.f32 0.0, %v5573
      %5575 = vmatmul.f32.gmra.mxu0 %v5464
      %v5576 = vpop.f32.mrf.mxu0
      %v5577 = vadd.f32 0.0, %v5576
      %5578 = vmatmul.f32.gmra.mxu0 %v5467
      %v5579 = vpop.f32.mrf.mxu0
      %v5580 = vadd.f32 0.0, %v5579
      %5581 = vmatmul.f32.gmra.mxu0 %v5470
      %v5582 = vpop.f32.mrf.mxu0
      %v5583 = vadd.f32 0.0, %v5582
      %5584 = vmatmul.f32.gmra.mxu0 %v5473
      %v5585 = vpop.f32.mrf.mxu0
      %v5586 = vadd.f32 0.0, %v5585
      %5587 = vmatmul.f32.gmra.mxu0 %v5476
      %v5588 = vpop.f32.mrf.mxu0
      %v5589 = vadd.f32 0.0, %v5588
      %5590 = vmatmul.f32.gmra.mxu0 %v5479
      %v5591 = vpop.f32.mrf.mxu0
      %v5592 = vadd.f32 0.0, %v5591
      %5593 = vmatmul.f32.gmra.mxu0 %v5482
      %v5594 = vpop.f32.mrf.mxu0
      %v5595 = vadd.f32 0.0, %v5594
      %5596 = vmatmul.f32.gmra.mxu0 %v5485
      %v5597 = vpop.f32.mrf.mxu0
      %v5598 = vadd.f32 0.0, %v5597
      %5599 = vmatmul.f32.gmra.mxu0 %v5488
      %v5600 = vpop.f32.mrf.mxu0
      %v5601 = vadd.f32 0.0, %v5600
      %5602 = vmatmul.f32.gmra.mxu0 %v5491
      %v5603 = vpop.f32.mrf.mxu0
      %v5604 = vadd.f32 0.0, %v5603
      %5605 = vmatmul.f32.gmra.mxu0 %v5494
      %v5606 = vpop.f32.mrf.mxu0
      %v5607 = vadd.f32 0.0, %v5606
      %5608 = vmatmul.f32.gmra.mxu0 %v5497
      %v5609 = vpop.f32.mrf.mxu0
      %v5610 = vadd.f32 0.0, %v5609
      %5611 = vmatmul.f32.gmra.mxu0 %v5500
      %v5612 = vpop.f32.mrf.mxu0
      %v5613 = vadd.f32 0.0, %v5612
      %5614 = vmatmul.f32.gmra.mxu0 %v5503
      %v5615 = vpop.f32.mrf.mxu0
      %v5616 = vadd.f32 0.0, %v5615
      %5617 = vmatmul.f32.gmra.mxu0 %v5506
      %v5618 = vpop.f32.mrf.mxu0
      %v5619 = vadd.f32 0.0, %v5618
      %5620 = vmatmul.f32.gmra.mxu0 %v5509
      %v5621 = vpop.f32.mrf.mxu0
      %v5622 = vadd.f32 0.0, %v5621
      %5623 = vdwg.mxu0
      %v5624 = vadd.f32 %v5283, %v5529
      %v5625 = vadd.f32 %v5286, %v5532
      %v5626 = vadd.f32 %v5289, %v5535
      %v5627 = vadd.f32 %v5292, %v5538
      %v5628 = vadd.f32 %v5295, %v5541
      %v5629 = vadd.f32 %v5298, %v5544
      %v5630 = vadd.f32 %v5301, %v5547
      %v5631 = vadd.f32 %v5304, %v5550
      %v5632 = vadd.f32 %v5307, %v5553
      %v5633 = vadd.f32 %v5310, %v5556
      %v5634 = vadd.f32 %v5313, %v5559
      %v5635 = vadd.f32 %v5316, %v5562
      %v5636 = vadd.f32 %v5319, %v5565
      %v5637 = vadd.f32 %v5322, %v5568
      %v5638 = vadd.f32 %v5325, %v5571
      %v5639 = vadd.f32 %v5328, %v5574
      %v5640 = vadd.f32 %v5331, %v5577
      %v5641 = vadd.f32 %v5334, %v5580
      %v5642 = vadd.f32 %v5337, %v5583
      %v5643 = vadd.f32 %v5340, %v5586
      %v5644 = vadd.f32 %v5343, %v5589
      %v5645 = vadd.f32 %v5346, %v5592
      %v5646 = vadd.f32 %v5349, %v5595
      %v5647 = vadd.f32 %v5352, %v5598
      %v5648 = vadd.f32 %v5355, %v5601
      %v5649 = vadd.f32 %v5358, %v5604
      %v5650 = vadd.f32 %v5361, %v5607
      %v5651 = vadd.f32 %v5364, %v5610
      %v5652 = vadd.f32 %v5367, %v5613
      %v5653 = vadd.f32 %v5370, %v5616
      %v5654 = vadd.f32 %v5373, %v5619
      %v5655 = vadd.f32 %v5376, %v5622
      %v5656 = vld [vmem:[%s4854] sm:$0xff]
      %v5657 = vld [vmem:[%s4854 + $0x8] sm:$0xff]
      %v5658 = vld [vmem:[%s4854 + $0x18] sm:$0xff]
      %v5659 = vld [vmem:[%s4854 + $0x20] sm:$0xff]
      %v5660 = vld [vmem:[%s4854 + $0x30] sm:$0xff]
      %v5661 = vld [vmem:[%s4854 + $0x38] sm:$0xff]
      %v5662 = vld [vmem:[%s4854 + $0x48] sm:$0xff]
      %v5663 = vld [vmem:[%s4854 + $0x50] sm:$0xff]
      %v5664 = vld [vmem:[%s4854 + $0x60] sm:$0xff]
      %v5665 = vld [vmem:[%s4854 + $0x68] sm:$0xff]
      %v5666 = vld [vmem:[%s4854 + $0x78] sm:$0xff]
      %v5667 = vld [vmem:[%s4854 + $0x80] sm:$0xff]
      %v5668 = vld [vmem:[%s4854 + $0x90] sm:$0xff]
      %v5669 = vld [vmem:[%s4854 + $0x98] sm:$0xff]
      %v5670 = vld [vmem:[%s4854 + $0xa8] sm:$0xff]
      %v5671 = vld [vmem:[%s4854 + $0xb0] sm:$0xff]
      %v5672 = vld [vmem:[%s4854 + $0xc0] sm:$0xff]
      %v5673 = vld [vmem:[%s4854 + $0xc8] sm:$0xff]
      %v5674 = vld [vmem:[%s4854 + $0xd8] sm:$0xff]
      %v5675 = vld [vmem:[%s4854 + $0xe0] sm:$0xff]
      %v5676 = vld [vmem:[%s4854 + $0xf0] sm:$0xff]
      %v5677 = vld [vmem:[%s4854 + $0xf8] sm:$0xff]
      %v5678 = vld [vmem:[%s4854 + $0x108] sm:$0xff]
      %v5679 = vld [vmem:[%s4854 + $0x110] sm:$0xff]
      %v5680 = vld [vmem:[%s4854 + $0x120] sm:$0xff]
      %v5681 = vld [vmem:[%s4854 + $0x128] sm:$0xff]
      %v5682 = vld [vmem:[%s4854 + $0x138] sm:$0xff]
      %v5683 = vld [vmem:[%s4854 + $0x140] sm:$0xff]
      %v5684 = vld [vmem:[%s4854 + $0x150] sm:$0xff]
      %v5685 = vld [vmem:[%s4854 + $0x158] sm:$0xff]
      %v5686 = vld [vmem:[%s4854 + $0x168] sm:$0xff]
      %v5687 = vld [vmem:[%s4854 + $0x170] sm:$0xff]
      %s5688 = scalar_lea.vmem %s5, 96
      %v5689 = vld [vmem:[%s5688] sm:$0xff]
      %v5690 = vld [vmem:[%s5688 + $0x8] sm:$0xff]
      %v5691 = vld [vmem:[%s5688 + $0x10] sm:$0xff]
      %v5692 = vld [vmem:[%s5688 + $0x18] sm:$0xff]
      %v5694 = vsel %vm4798, %v5656, 0
      %v5697 = vsel %vm4798, %v5657, 0
      %v5700 = vsel %vm4798, %v5658, 0
      %v5703 = vsel %vm4798, %v5659, 0
      %v5706 = vsel %vm4798, %v5660, 0
      %v5709 = vsel %vm4798, %v5661, 0
      %v5712 = vsel %vm4798, %v5662, 0
      %v5715 = vsel %vm4798, %v5663, 0
      %v5718 = vsel %vm4798, %v5664, 0
      %v5721 = vsel %vm4798, %v5665, 0
      %v5724 = vsel %vm4798, %v5666, 0
      %v5727 = vsel %vm4798, %v5667, 0
      %v5730 = vsel %vm4798, %v5668, 0
      %v5733 = vsel %vm4798, %v5669, 0
      %v5736 = vsel %vm4798, %v5670, 0
      %v5739 = vsel %vm4798, %v5671, 0
      %v5742 = vsel %vm4798, %v5672, 0
      %v5745 = vsel %vm4798, %v5673, 0
      %v5748 = vsel %vm4798, %v5674, 0
      %v5751 = vsel %vm4798, %v5675, 0
      %v5754 = vsel %vm4798, %v5676, 0
      %v5757 = vsel %vm4798, %v5677, 0
      %v5760 = vsel %vm4798, %v5678, 0
      %v5763 = vsel %vm4798, %v5679, 0
      %v5766 = vsel %vm4798, %v5680, 0
      %v5769 = vsel %vm4798, %v5681, 0
      %v5772 = vsel %vm4798, %v5682, 0
      %v5775 = vsel %vm4798, %v5683, 0
      %v5778 = vsel %vm4798, %v5684, 0
      %v5781 = vsel %vm4798, %v5685, 0
      %v5784 = vsel %vm4798, %v5686, 0
      %v5787 = vsel %vm4798, %v5687, 0
      %5789 = vmatpush.msra.mxu0 0.0
      %5790 = vmatpush.msra.mxu0 0.0
      %5791 = vmatpush.msra.mxu0 0.0
      %5792 = vmatpush.msra.mxu0 0.0
      %5793 = vmatpush.msra.mxu0 0.0
      %5794 = vmatpush.msra.mxu0 0.0
      %5795 = vmatpush.msra.mxu0 0.0
      %5796 = vmatpush.msra.mxu0 0.0
      %5797 = vmatpush.msra.mxu0 0.0
      %5798 = vmatpush.msra.mxu0 0.0
      %5799 = vmatpush.msra.mxu0 0.0
      %5800 = vmatpush.msra.mxu0 0.0
      %5801 = vmatpush.msra.mxu0 %v5692
      %5802 = vmatpush.msra.mxu0 %v5691
      %5803 = vmatpush.msra.mxu0 %v5690
      %5804 = vmatpush.msra.mxu0 %v5689
      %5805 = vmatmul.f32.gmra.mxu0 %v5694
      %v5806 = vpop.f32.mrf.mxu0
      %v5807 = vadd.f32 0.0, %v5806
      %5808 = vmatmul.f32.gmra.mxu0 %v5697
      %v5809 = vpop.f32.mrf.mxu0
      %v5810 = vadd.f32 0.0, %v5809
      %5811 = vmatmul.f32.gmra.mxu0 %v5700
      %v5812 = vpop.f32.mrf.mxu0
      %v5813 = vadd.f32 0.0, %v5812
      %5814 = vmatmul.f32.gmra.mxu0 %v5703
      %v5815 = vpop.f32.mrf.mxu0
      %v5816 = vadd.f32 0.0, %v5815
      %5817 = vmatmul.f32.gmra.mxu0 %v5706
      %v5818 = vpop.f32.mrf.mxu0
      %v5819 = vadd.f32 0.0, %v5818
      %5820 = vmatmul.f32.gmra.mxu0 %v5709
      %v5821 = vpop.f32.mrf.mxu0
      %v5822 = vadd.f32 0.0, %v5821
      %5823 = vmatmul.f32.gmra.mxu0 %v5712
      %v5824 = vpop.f32.mrf.mxu0
      %v5825 = vadd.f32 0.0, %v5824
      %5826 = vmatmul.f32.gmra.mxu0 %v5715
      %v5827 = vpop.f32.mrf.mxu0
      %v5828 = vadd.f32 0.0, %v5827
      %5829 = vmatmul.f32.gmra.mxu0 %v5718
      %v5830 = vpop.f32.mrf.mxu0
      %v5831 = vadd.f32 0.0, %v5830
      %5832 = vmatmul.f32.gmra.mxu0 %v5721
      %v5833 = vpop.f32.mrf.mxu0
      %v5834 = vadd.f32 0.0, %v5833
      %5835 = vmatmul.f32.gmra.mxu0 %v5724
      %v5836 = vpop.f32.mrf.mxu0
      %v5837 = vadd.f32 0.0, %v5836
      %5838 = vmatmul.f32.gmra.mxu0 %v5727
      %v5839 = vpop.f32.mrf.mxu0
      %v5840 = vadd.f32 0.0, %v5839
      %5841 = vmatmul.f32.gmra.mxu0 %v5730
      %v5842 = vpop.f32.mrf.mxu0
      %v5843 = vadd.f32 0.0, %v5842
      %5844 = vmatmul.f32.gmra.mxu0 %v5733
      %v5845 = vpop.f32.mrf.mxu0
      %v5846 = vadd.f32 0.0, %v5845
      %5847 = vmatmul.f32.gmra.mxu0 %v5736
      %v5848 = vpop.f32.mrf.mxu0
      %v5849 = vadd.f32 0.0, %v5848
      %5850 = vmatmul.f32.gmra.mxu0 %v5739
      %v5851 = vpop.f32.mrf.mxu0
      %v5852 = vadd.f32 0.0, %v5851
      %5853 = vmatmul.f32.gmra.mxu0 %v5742
      %v5854 = vpop.f32.mrf.mxu0
      %v5855 = vadd.f32 0.0, %v5854
      %5856 = vmatmul.f32.gmra.mxu0 %v5745
      %v5857 = vpop.f32.mrf.mxu0
      %v5858 = vadd.f32 0.0, %v5857
      %5859 = vmatmul.f32.gmra.mxu0 %v5748
      %v5860 = vpop.f32.mrf.mxu0
      %v5861 = vadd.f32 0.0, %v5860
      %5862 = vmatmul.f32.gmra.mxu0 %v5751
      %v5863 = vpop.f32.mrf.mxu0
      %v5864 = vadd.f32 0.0, %v5863
      %5865 = vmatmul.f32.gmra.mxu0 %v5754
      %v5866 = vpop.f32.mrf.mxu0
      %v5867 = vadd.f32 0.0, %v5866
      %5868 = vmatmul.f32.gmra.mxu0 %v5757
      %v5869 = vpop.f32.mrf.mxu0
      %v5870 = vadd.f32 0.0, %v5869
      %5871 = vmatmul.f32.gmra.mxu0 %v5760
      %v5872 = vpop.f32.mrf.mxu0
      %v5873 = vadd.f32 0.0, %v5872
      %5874 = vmatmul.f32.gmra.mxu0 %v5763
      %v5875 = vpop.f32.mrf.mxu0
      %v5876 = vadd.f32 0.0, %v5875
      %5877 = vmatmul.f32.gmra.mxu0 %v5766
      %v5878 = vpop.f32.mrf.mxu0
      %v5879 = vadd.f32 0.0, %v5878
      %5880 = vmatmul.f32.gmra.mxu0 %v5769
      %v5881 = vpop.f32.mrf.mxu0
      %v5882 = vadd.f32 0.0, %v5881
      %5883 = vmatmul.f32.gmra.mxu0 %v5772
      %v5884 = vpop.f32.mrf.mxu0
      %v5885 = vadd.f32 0.0, %v5884
      %5886 = vmatmul.f32.gmra.mxu0 %v5775
      %v5887 = vpop.f32.mrf.mxu0
      %v5888 = vadd.f32 0.0, %v5887
      %5889 = vmatmul.f32.gmra.mxu0 %v5778
      %v5890 = vpop.f32.mrf.mxu0
      %v5891 = vadd.f32 0.0, %v5890
      %5892 = vmatmul.f32.gmra.mxu0 %v5781
      %v5893 = vpop.f32.mrf.mxu0
      %v5894 = vadd.f32 0.0, %v5893
      %5895 = vmatmul.f32.gmra.mxu0 %v5784
      %v5896 = vpop.f32.mrf.mxu0
      %v5897 = vadd.f32 0.0, %v5896
      %5898 = vmatmul.f32.gmra.mxu0 %v5787
      %v5899 = vpop.f32.mrf.mxu0
      %v5900 = vadd.f32 0.0, %v5899
      %5901 = vdwg.mxu0
      %v5902 = vadd.f32 %v5624, %v5807
      %v5903 = vadd.f32 %v5625, %v5810
      %v5904 = vadd.f32 %v5626, %v5813
      %v5905 = vadd.f32 %v5627, %v5816
      %v5906 = vadd.f32 %v5628, %v5819
      %v5907 = vadd.f32 %v5629, %v5822
      %v5908 = vadd.f32 %v5630, %v5825
      %v5909 = vadd.f32 %v5631, %v5828
      %v5910 = vadd.f32 %v5632, %v5831
      %v5911 = vadd.f32 %v5633, %v5834
      %v5912 = vadd.f32 %v5634, %v5837
      %v5913 = vadd.f32 %v5635, %v5840
      %v5914 = vadd.f32 %v5636, %v5843
      %v5915 = vadd.f32 %v5637, %v5846
      %v5916 = vadd.f32 %v5638, %v5849
      %v5917 = vadd.f32 %v5639, %v5852
      %v5918 = vadd.f32 %v5640, %v5855
      %v5919 = vadd.f32 %v5641, %v5858
      %v5920 = vadd.f32 %v5642, %v5861
      %v5921 = vadd.f32 %v5643, %v5864
      %v5922 = vadd.f32 %v5644, %v5867
      %v5923 = vadd.f32 %v5645, %v5870
      %v5924 = vadd.f32 %v5646, %v5873
      %v5925 = vadd.f32 %v5647, %v5876
      %v5926 = vadd.f32 %v5648, %v5879
      %v5927 = vadd.f32 %v5649, %v5882
      %v5928 = vadd.f32 %v5650, %v5885
      %v5929 = vadd.f32 %v5651, %v5888
      %v5930 = vadd.f32 %v5652, %v5891
      %v5931 = vadd.f32 %v5653, %v5894
      %v5932 = vadd.f32 %v5654, %v5897
      %v5933 = vadd.f32 %v5655, %v5900
      %v5934 = vld [vmem:[%s4854 + $0x1] sm:$0xff]
      %v5935 = vld [vmem:[%s4854 + $0x9] sm:$0xff]
      %v5936 = vld [vmem:[%s4854 + $0x19] sm:$0xff]
      %v5937 = vld [vmem:[%s4854 + $0x21] sm:$0xff]
      %v5938 = vld [vmem:[%s4854 + $0x31] sm:$0xff]
      %v5939 = vld [vmem:[%s4854 + $0x39] sm:$0xff]
      %v5940 = vld [vmem:[%s4854 + $0x49] sm:$0xff]
      %v5941 = vld [vmem:[%s4854 + $0x51] sm:$0xff]
      %v5942 = vld [vmem:[%s4854 + $0x61] sm:$0xff]
      %v5943 = vld [vmem:[%s4854 + $0x69] sm:$0xff]
      %v5944 = vld [vmem:[%s4854 + $0x79] sm:$0xff]
      %v5945 = vld [vmem:[%s4854 + $0x81] sm:$0xff]
      %v5946 = vld [vmem:[%s4854 + $0x91] sm:$0xff]
      %v5947 = vld [vmem:[%s4854 + $0x99] sm:$0xff]
      %v5948 = vld [vmem:[%s4854 + $0xa9] sm:$0xff]
      %v5949 = vld [vmem:[%s4854 + $0xb1] sm:$0xff]
      %v5950 = vld [vmem:[%s4854 + $0xc1] sm:$0xff]
      %v5951 = vld [vmem:[%s4854 + $0xc9] sm:$0xff]
      %v5952 = vld [vmem:[%s4854 + $0xd9] sm:$0xff]
      %v5953 = vld [vmem:[%s4854 + $0xe1] sm:$0xff]
      %v5954 = vld [vmem:[%s4854 + $0xf1] sm:$0xff]
      %v5955 = vld [vmem:[%s4854 + $0xf9] sm:$0xff]
      %v5956 = vld [vmem:[%s4854 + $0x109] sm:$0xff]
      %v5957 = vld [vmem:[%s4854 + $0x111] sm:$0xff]
      %v5958 = vld [vmem:[%s4854 + $0x121] sm:$0xff]
      %v5959 = vld [vmem:[%s4854 + $0x129] sm:$0xff]
      %v5960 = vld [vmem:[%s4854 + $0x139] sm:$0xff]
      %v5961 = vld [vmem:[%s4854 + $0x141] sm:$0xff]
      %v5962 = vld [vmem:[%s4854 + $0x151] sm:$0xff]
      %v5963 = vld [vmem:[%s4854 + $0x159] sm:$0xff]
      %v5964 = vld [vmem:[%s4854 + $0x169] sm:$0xff]
      %v5965 = vld [vmem:[%s4854 + $0x171] sm:$0xff]
      %s5966 = scalar_lea.vmem %s5, 128
      %v5967 = vld [vmem:[%s5966] sm:$0xff]
      %v5968 = vld [vmem:[%s5966 + $0x8] sm:$0xff]
      %v5969 = vld [vmem:[%s5966 + $0x10] sm:$0xff]
      %v5970 = vld [vmem:[%s5966 + $0x18] sm:$0xff]
      %v5972 = vsel %vm4798, %v5934, 0
      %v5975 = vsel %vm4798, %v5935, 0
      %v5978 = vsel %vm4798, %v5936, 0
      %v5981 = vsel %vm4798, %v5937, 0
      %v5984 = vsel %vm4798, %v5938, 0
      %v5987 = vsel %vm4798, %v5939, 0
      %v5990 = vsel %vm4798, %v5940, 0
      %v5993 = vsel %vm4798, %v5941, 0
      %v5996 = vsel %vm4798, %v5942, 0
      %v5999 = vsel %vm4798, %v5943, 0
      %v6002 = vsel %vm4798, %v5944, 0
      %v6005 = vsel %vm4798, %v5945, 0
      %v6008 = vsel %vm4798, %v5946, 0
      %v6011 = vsel %vm4798, %v5947, 0
      %v6014 = vsel %vm4798, %v5948, 0
      %v6017 = vsel %vm4798, %v5949, 0
      %v6020 = vsel %vm4798, %v5950, 0
      %v6023 = vsel %vm4798, %v5951, 0
      %v6026 = vsel %vm4798, %v5952, 0
      %v6029 = vsel %vm4798, %v5953, 0
      %v6032 = vsel %vm4798, %v5954, 0
      %v6035 = vsel %vm4798, %v5955, 0
      %v6038 = vsel %vm4798, %v5956, 0
      %v6041 = vsel %vm4798, %v5957, 0
      %v6044 = vsel %vm4798, %v5958, 0
      %v6047 = vsel %vm4798, %v5959, 0
      %v6050 = vsel %vm4798, %v5960, 0
      %v6053 = vsel %vm4798, %v5961, 0
      %v6056 = vsel %vm4798, %v5962, 0
      %v6059 = vsel %vm4798, %v5963, 0
      %v6062 = vsel %vm4798, %v5964, 0
      %v6065 = vsel %vm4798, %v5965, 0
      %6067 = vmatpush.msra.mxu0 0.0
      %6068 = vmatpush.msra.mxu0 0.0
      %6069 = vmatpush.msra.mxu0 0.0
      %6070 = vmatpush.msra.mxu0 0.0
      %6071 = vmatpush.msra.mxu0 0.0
      %6072 = vmatpush.msra.mxu0 0.0
      %6073 = vmatpush.msra.mxu0 0.0
      %6074 = vmatpush.msra.mxu0 0.0
      %6075 = vmatpush.msra.mxu0 0.0
      %6076 = vmatpush.msra.mxu0 0.0
      %6077 = vmatpush.msra.mxu0 0.0
      %6078 = vmatpush.msra.mxu0 0.0
      %6079 = vmatpush.msra.mxu0 %v5970
      %6080 = vmatpush.msra.mxu0 %v5969
      %6081 = vmatpush.msra.mxu0 %v5968
      %6082 = vmatpush.msra.mxu0 %v5967
      %6083 = vmatmul.f32.gmra.mxu0 %v5972
      %v6084 = vpop.f32.mrf.mxu0
      %v6085 = vadd.f32 0.0, %v6084
      %6086 = vmatmul.f32.gmra.mxu0 %v5975
      %v6087 = vpop.f32.mrf.mxu0
      %v6088 = vadd.f32 0.0, %v6087
      %6089 = vmatmul.f32.gmra.mxu0 %v5978
      %v6090 = vpop.f32.mrf.mxu0
      %v6091 = vadd.f32 0.0, %v6090
      %6092 = vmatmul.f32.gmra.mxu0 %v5981
      %v6093 = vpop.f32.mrf.mxu0
      %v6094 = vadd.f32 0.0, %v6093
      %6095 = vmatmul.f32.gmra.mxu0 %v5984
      %v6096 = vpop.f32.mrf.mxu0
      %v6097 = vadd.f32 0.0, %v6096
      %6098 = vmatmul.f32.gmra.mxu0 %v5987
      %v6099 = vpop.f32.mrf.mxu0
      %v6100 = vadd.f32 0.0, %v6099
      %6101 = vmatmul.f32.gmra.mxu0 %v5990
      %v6102 = vpop.f32.mrf.mxu0
      %v6103 = vadd.f32 0.0, %v6102
      %6104 = vmatmul.f32.gmra.mxu0 %v5993
      %v6105 = vpop.f32.mrf.mxu0
      %v6106 = vadd.f32 0.0, %v6105
      %6107 = vmatmul.f32.gmra.mxu0 %v5996
      %v6108 = vpop.f32.mrf.mxu0
      %v6109 = vadd.f32 0.0, %v6108
      %6110 = vmatmul.f32.gmra.mxu0 %v5999
      %v6111 = vpop.f32.mrf.mxu0
      %v6112 = vadd.f32 0.0, %v6111
      %6113 = vmatmul.f32.gmra.mxu0 %v6002
      %v6114 = vpop.f32.mrf.mxu0
      %v6115 = vadd.f32 0.0, %v6114
      %6116 = vmatmul.f32.gmra.mxu0 %v6005
      %v6117 = vpop.f32.mrf.mxu0
      %v6118 = vadd.f32 0.0, %v6117
      %6119 = vmatmul.f32.gmra.mxu0 %v6008
      %v6120 = vpop.f32.mrf.mxu0
      %v6121 = vadd.f32 0.0, %v6120
      %6122 = vmatmul.f32.gmra.mxu0 %v6011
      %v6123 = vpop.f32.mrf.mxu0
      %v6124 = vadd.f32 0.0, %v6123
      %6125 = vmatmul.f32.gmra.mxu0 %v6014
      %v6126 = vpop.f32.mrf.mxu0
      %v6127 = vadd.f32 0.0, %v6126
      %6128 = vmatmul.f32.gmra.mxu0 %v6017
      %v6129 = vpop.f32.mrf.mxu0
      %v6130 = vadd.f32 0.0, %v6129
      %6131 = vmatmul.f32.gmra.mxu0 %v6020
      %v6132 = vpop.f32.mrf.mxu0
      %v6133 = vadd.f32 0.0, %v6132
      %6134 = vmatmul.f32.gmra.mxu0 %v6023
      %v6135 = vpop.f32.mrf.mxu0
      %v6136 = vadd.f32 0.0, %v6135
      %6137 = vmatmul.f32.gmra.mxu0 %v6026
      %v6138 = vpop.f32.mrf.mxu0
      %v6139 = vadd.f32 0.0, %v6138
      %6140 = vmatmul.f32.gmra.mxu0 %v6029
      %v6141 = vpop.f32.mrf.mxu0
      %v6142 = vadd.f32 0.0, %v6141
      %6143 = vmatmul.f32.gmra.mxu0 %v6032
      %v6144 = vpop.f32.mrf.mxu0
      %v6145 = vadd.f32 0.0, %v6144
      %6146 = vmatmul.f32.gmra.mxu0 %v6035
      %v6147 = vpop.f32.mrf.mxu0
      %v6148 = vadd.f32 0.0, %v6147
      %6149 = vmatmul.f32.gmra.mxu0 %v6038
      %v6150 = vpop.f32.mrf.mxu0
      %v6151 = vadd.f32 0.0, %v6150
      %6152 = vmatmul.f32.gmra.mxu0 %v6041
      %v6153 = vpop.f32.mrf.mxu0
      %v6154 = vadd.f32 0.0, %v6153
      %6155 = vmatmul.f32.gmra.mxu0 %v6044
      %v6156 = vpop.f32.mrf.mxu0
      %v6157 = vadd.f32 0.0, %v6156
      %6158 = vmatmul.f32.gmra.mxu0 %v6047
      %v6159 = vpop.f32.mrf.mxu0
      %v6160 = vadd.f32 0.0, %v6159
      %6161 = vmatmul.f32.gmra.mxu0 %v6050
      %v6162 = vpop.f32.mrf.mxu0
      %v6163 = vadd.f32 0.0, %v6162
      %6164 = vmatmul.f32.gmra.mxu0 %v6053
      %v6165 = vpop.f32.mrf.mxu0
      %v6166 = vadd.f32 0.0, %v6165
      %6167 = vmatmul.f32.gmra.mxu0 %v6056
      %v6168 = vpop.f32.mrf.mxu0
      %v6169 = vadd.f32 0.0, %v6168
      %6170 = vmatmul.f32.gmra.mxu0 %v6059
      %v6171 = vpop.f32.mrf.mxu0
      %v6172 = vadd.f32 0.0, %v6171
      %6173 = vmatmul.f32.gmra.mxu0 %v6062
      %v6174 = vpop.f32.mrf.mxu0
      %v6175 = vadd.f32 0.0, %v6174
      %6176 = vmatmul.f32.gmra.mxu0 %v6065
      %v6177 = vpop.f32.mrf.mxu0
      %v6178 = vadd.f32 0.0, %v6177
      %6179 = vdwg.mxu0
      %v6180 = vadd.f32 %v5902, %v6085
      %v6181 = vadd.f32 %v5903, %v6088
      %v6182 = vadd.f32 %v5904, %v6091
      %v6183 = vadd.f32 %v5905, %v6094
      %v6184 = vadd.f32 %v5906, %v6097
      %v6185 = vadd.f32 %v5907, %v6100
      %v6186 = vadd.f32 %v5908, %v6103
      %v6187 = vadd.f32 %v5909, %v6106
      %v6188 = vadd.f32 %v5910, %v6109
      %v6189 = vadd.f32 %v5911, %v6112
      %v6190 = vadd.f32 %v5912, %v6115
      %v6191 = vadd.f32 %v5913, %v6118
      %v6192 = vadd.f32 %v5914, %v6121
      %v6193 = vadd.f32 %v5915, %v6124
      %v6194 = vadd.f32 %v5916, %v6127
      %v6195 = vadd.f32 %v5917, %v6130
      %v6196 = vadd.f32 %v5918, %v6133
      %v6197 = vadd.f32 %v5919, %v6136
      %v6198 = vadd.f32 %v5920, %v6139
      %v6199 = vadd.f32 %v5921, %v6142
      %v6200 = vadd.f32 %v5922, %v6145
      %v6201 = vadd.f32 %v5923, %v6148
      %v6202 = vadd.f32 %v5924, %v6151
      %v6203 = vadd.f32 %v5925, %v6154
      %v6204 = vadd.f32 %v5926, %v6157
      %v6205 = vadd.f32 %v5927, %v6160
      %v6206 = vadd.f32 %v5928, %v6163
      %v6207 = vadd.f32 %v5929, %v6166
      %v6208 = vadd.f32 %v5930, %v6169
      %v6209 = vadd.f32 %v5931, %v6172
      %v6210 = vadd.f32 %v5932, %v6175
      %v6211 = vadd.f32 %v5933, %v6178
      %v6212 = vld [vmem:[%s4854 + $0x2] sm:$0xff]
      %v6213 = vld [vmem:[%s4854 + $0xa] sm:$0xff]
      %v6214 = vld [vmem:[%s4854 + $0x1a] sm:$0xff]
      %v6215 = vld [vmem:[%s4854 + $0x22] sm:$0xff]
      %v6216 = vld [vmem:[%s4854 + $0x32] sm:$0xff]
      %v6217 = vld [vmem:[%s4854 + $0x3a] sm:$0xff]
      %v6218 = vld [vmem:[%s4854 + $0x4a] sm:$0xff]
      %v6219 = vld [vmem:[%s4854 + $0x52] sm:$0xff]
      %v6220 = vld [vmem:[%s4854 + $0x62] sm:$0xff]
      %v6221 = vld [vmem:[%s4854 + $0x6a] sm:$0xff]
      %v6222 = vld [vmem:[%s4854 + $0x7a] sm:$0xff]
      %v6223 = vld [vmem:[%s4854 + $0x82] sm:$0xff]
      %v6224 = vld [vmem:[%s4854 + $0x92] sm:$0xff]
      %v6225 = vld [vmem:[%s4854 + $0x9a] sm:$0xff]
      %v6226 = vld [vmem:[%s4854 + $0xaa] sm:$0xff]
      %v6227 = vld [vmem:[%s4854 + $0xb2] sm:$0xff]
      %v6228 = vld [vmem:[%s4854 + $0xc2] sm:$0xff]
      %v6229 = vld [vmem:[%s4854 + $0xca] sm:$0xff]
      %v6230 = vld [vmem:[%s4854 + $0xda] sm:$0xff]
      %v6231 = vld [vmem:[%s4854 + $0xe2] sm:$0xff]
      %v6232 = vld [vmem:[%s4854 + $0xf2] sm:$0xff]
      %v6233 = vld [vmem:[%s4854 + $0xfa] sm:$0xff]
      %v6234 = vld [vmem:[%s4854 + $0x10a] sm:$0xff]
      %v6235 = vld [vmem:[%s4854 + $0x112] sm:$0xff]
      %v6236 = vld [vmem:[%s4854 + $0x122] sm:$0xff]
      %v6237 = vld [vmem:[%s4854 + $0x12a] sm:$0xff]
      %v6238 = vld [vmem:[%s4854 + $0x13a] sm:$0xff]
      %v6239 = vld [vmem:[%s4854 + $0x142] sm:$0xff]
      %v6240 = vld [vmem:[%s4854 + $0x152] sm:$0xff]
      %v6241 = vld [vmem:[%s4854 + $0x15a] sm:$0xff]
      %v6242 = vld [vmem:[%s4854 + $0x16a] sm:$0xff]
      %v6243 = vld [vmem:[%s4854 + $0x172] sm:$0xff]
      %s6244 = scalar_lea.vmem %s5, 160
      %v6245 = vld [vmem:[%s6244] sm:$0xff]
      %v6246 = vld [vmem:[%s6244 + $0x8] sm:$0xff]
      %v6247 = vld [vmem:[%s6244 + $0x10] sm:$0xff]
      %v6248 = vld [vmem:[%s6244 + $0x18] sm:$0xff]
      %v6250 = vsel %vm4798, %v6212, 0
      %v6253 = vsel %vm4798, %v6213, 0
      %v6256 = vsel %vm4798, %v6214, 0
      %v6259 = vsel %vm4798, %v6215, 0
      %v6262 = vsel %vm4798, %v6216, 0
      %v6265 = vsel %vm4798, %v6217, 0
      %v6268 = vsel %vm4798, %v6218, 0
      %v6271 = vsel %vm4798, %v6219, 0
      %v6274 = vsel %vm4798, %v6220, 0
      %v6277 = vsel %vm4798, %v6221, 0
      %v6280 = vsel %vm4798, %v6222, 0
      %v6283 = vsel %vm4798, %v6223, 0
      %v6286 = vsel %vm4798, %v6224, 0
      %v6289 = vsel %vm4798, %v6225, 0
      %v6292 = vsel %vm4798, %v6226, 0
      %v6295 = vsel %vm4798, %v6227, 0
      %v6298 = vsel %vm4798, %v6228, 0
      %v6301 = vsel %vm4798, %v6229, 0
      %v6304 = vsel %vm4798, %v6230, 0
      %v6307 = vsel %vm4798, %v6231, 0
      %v6310 = vsel %vm4798, %v6232, 0
      %v6313 = vsel %vm4798, %v6233, 0
      %v6316 = vsel %vm4798, %v6234, 0
      %v6319 = vsel %vm4798, %v6235, 0
      %v6322 = vsel %vm4798, %v6236, 0
      %v6325 = vsel %vm4798, %v6237, 0
      %v6328 = vsel %vm4798, %v6238, 0
      %v6331 = vsel %vm4798, %v6239, 0
      %v6334 = vsel %vm4798, %v6240, 0
      %v6337 = vsel %vm4798, %v6241, 0
      %v6340 = vsel %vm4798, %v6242, 0
      %v6343 = vsel %vm4798, %v6243, 0
      %6345 = vmatpush.msra.mxu0 0.0
      %6346 = vmatpush.msra.mxu0 0.0
      %6347 = vmatpush.msra.mxu0 0.0
      %6348 = vmatpush.msra.mxu0 0.0
      %6349 = vmatpush.msra.mxu0 0.0
      %6350 = vmatpush.msra.mxu0 0.0
      %6351 = vmatpush.msra.mxu0 0.0
      %6352 = vmatpush.msra.mxu0 0.0
      %6353 = vmatpush.msra.mxu0 0.0
      %6354 = vmatpush.msra.mxu0 0.0
      %6355 = vmatpush.msra.mxu0 0.0
      %6356 = vmatpush.msra.mxu0 0.0
      %6357 = vmatpush.msra.mxu0 %v6248
      %6358 = vmatpush.msra.mxu0 %v6247
      %6359 = vmatpush.msra.mxu0 %v6246
      %6360 = vmatpush.msra.mxu0 %v6245
      %6361 = vmatmul.f32.gmra.mxu0 %v6250
      %v6362 = vpop.f32.mrf.mxu0
      %v6363 = vadd.f32 0.0, %v6362
      %6364 = vmatmul.f32.gmra.mxu0 %v6253
      %v6365 = vpop.f32.mrf.mxu0
      %v6366 = vadd.f32 0.0, %v6365
      %6367 = vmatmul.f32.gmra.mxu0 %v6256
      %v6368 = vpop.f32.mrf.mxu0
      %v6369 = vadd.f32 0.0, %v6368
      %6370 = vmatmul.f32.gmra.mxu0 %v6259
      %v6371 = vpop.f32.mrf.mxu0
      %v6372 = vadd.f32 0.0, %v6371
      %6373 = vmatmul.f32.gmra.mxu0 %v6262
      %v6374 = vpop.f32.mrf.mxu0
      %v6375 = vadd.f32 0.0, %v6374
      %6376 = vmatmul.f32.gmra.mxu0 %v6265
      %v6377 = vpop.f32.mrf.mxu0
      %v6378 = vadd.f32 0.0, %v6377
      %6379 = vmatmul.f32.gmra.mxu0 %v6268
      %v6380 = vpop.f32.mrf.mxu0
      %v6381 = vadd.f32 0.0, %v6380
      %6382 = vmatmul.f32.gmra.mxu0 %v6271
      %v6383 = vpop.f32.mrf.mxu0
      %v6384 = vadd.f32 0.0, %v6383
      %6385 = vmatmul.f32.gmra.mxu0 %v6274
      %v6386 = vpop.f32.mrf.mxu0
      %v6387 = vadd.f32 0.0, %v6386
      %6388 = vmatmul.f32.gmra.mxu0 %v6277
      %v6389 = vpop.f32.mrf.mxu0
      %v6390 = vadd.f32 0.0, %v6389
      %6391 = vmatmul.f32.gmra.mxu0 %v6280
      %v6392 = vpop.f32.mrf.mxu0
      %v6393 = vadd.f32 0.0, %v6392
      %6394 = vmatmul.f32.gmra.mxu0 %v6283
      %v6395 = vpop.f32.mrf.mxu0
      %v6396 = vadd.f32 0.0, %v6395
      %6397 = vmatmul.f32.gmra.mxu0 %v6286
      %v6398 = vpop.f32.mrf.mxu0
      %v6399 = vadd.f32 0.0, %v6398
      %6400 = vmatmul.f32.gmra.mxu0 %v6289
      %v6401 = vpop.f32.mrf.mxu0
      %v6402 = vadd.f32 0.0, %v6401
      %6403 = vmatmul.f32.gmra.mxu0 %v6292
      %v6404 = vpop.f32.mrf.mxu0
      %v6405 = vadd.f32 0.0, %v6404
      %6406 = vmatmul.f32.gmra.mxu0 %v6295
      %v6407 = vpop.f32.mrf.mxu0
      %v6408 = vadd.f32 0.0, %v6407
      %6409 = vmatmul.f32.gmra.mxu0 %v6298
      %v6410 = vpop.f32.mrf.mxu0
      %v6411 = vadd.f32 0.0, %v6410
      %6412 = vmatmul.f32.gmra.mxu0 %v6301
      %v6413 = vpop.f32.mrf.mxu0
      %v6414 = vadd.f32 0.0, %v6413
      %6415 = vmatmul.f32.gmra.mxu0 %v6304
      %v6416 = vpop.f32.mrf.mxu0
      %v6417 = vadd.f32 0.0, %v6416
      %6418 = vmatmul.f32.gmra.mxu0 %v6307
      %v6419 = vpop.f32.mrf.mxu0
      %v6420 = vadd.f32 0.0, %v6419
      %6421 = vmatmul.f32.gmra.mxu0 %v6310
      %v6422 = vpop.f32.mrf.mxu0
      %v6423 = vadd.f32 0.0, %v6422
      %6424 = vmatmul.f32.gmra.mxu0 %v6313
      %v6425 = vpop.f32.mrf.mxu0
      %v6426 = vadd.f32 0.0, %v6425
      %6427 = vmatmul.f32.gmra.mxu0 %v6316
      %v6428 = vpop.f32.mrf.mxu0
      %v6429 = vadd.f32 0.0, %v6428
      %6430 = vmatmul.f32.gmra.mxu0 %v6319
      %v6431 = vpop.f32.mrf.mxu0
      %v6432 = vadd.f32 0.0, %v6431
      %6433 = vmatmul.f32.gmra.mxu0 %v6322
      %v6434 = vpop.f32.mrf.mxu0
      %v6435 = vadd.f32 0.0, %v6434
      %6436 = vmatmul.f32.gmra.mxu0 %v6325
      %v6437 = vpop.f32.mrf.mxu0
      %v6438 = vadd.f32 0.0, %v6437
      %6439 = vmatmul.f32.gmra.mxu0 %v6328
      %v6440 = vpop.f32.mrf.mxu0
      %v6441 = vadd.f32 0.0, %v6440
      %6442 = vmatmul.f32.gmra.mxu0 %v6331
      %v6443 = vpop.f32.mrf.mxu0
      %v6444 = vadd.f32 0.0, %v6443
      %6445 = vmatmul.f32.gmra.mxu0 %v6334
      %v6446 = vpop.f32.mrf.mxu0
      %v6447 = vadd.f32 0.0, %v6446
      %6448 = vmatmul.f32.gmra.mxu0 %v6337
      %v6449 = vpop.f32.mrf.mxu0
      %v6450 = vadd.f32 0.0, %v6449
      %6451 = vmatmul.f32.gmra.mxu0 %v6340
      %v6452 = vpop.f32.mrf.mxu0
      %v6453 = vadd.f32 0.0, %v6452
      %6454 = vmatmul.f32.gmra.mxu0 %v6343
      %v6455 = vpop.f32.mrf.mxu0
      %v6456 = vadd.f32 0.0, %v6455
      %6457 = vdwg.mxu0
      %v6458 = vadd.f32 %v6180, %v6363
      %v6459 = vadd.f32 %v6181, %v6366
      %v6460 = vadd.f32 %v6182, %v6369
      %v6461 = vadd.f32 %v6183, %v6372
      %v6462 = vadd.f32 %v6184, %v6375
      %v6463 = vadd.f32 %v6185, %v6378
      %v6464 = vadd.f32 %v6186, %v6381
      %v6465 = vadd.f32 %v6187, %v6384
      %v6466 = vadd.f32 %v6188, %v6387
      %v6467 = vadd.f32 %v6189, %v6390
      %v6468 = vadd.f32 %v6190, %v6393
      %v6469 = vadd.f32 %v6191, %v6396
      %v6470 = vadd.f32 %v6192, %v6399
      %v6471 = vadd.f32 %v6193, %v6402
      %v6472 = vadd.f32 %v6194, %v6405
      %v6473 = vadd.f32 %v6195, %v6408
      %v6474 = vadd.f32 %v6196, %v6411
      %v6475 = vadd.f32 %v6197, %v6414
      %v6476 = vadd.f32 %v6198, %v6417
      %v6477 = vadd.f32 %v6199, %v6420
      %v6478 = vadd.f32 %v6200, %v6423
      %v6479 = vadd.f32 %v6201, %v6426
      %v6480 = vadd.f32 %v6202, %v6429
      %v6481 = vadd.f32 %v6203, %v6432
      %v6482 = vadd.f32 %v6204, %v6435
      %v6483 = vadd.f32 %v6205, %v6438
      %v6484 = vadd.f32 %v6206, %v6441
      %v6485 = vadd.f32 %v6207, %v6444
      %v6486 = vadd.f32 %v6208, %v6447
      %v6487 = vadd.f32 %v6209, %v6450
      %v6488 = vadd.f32 %v6210, %v6453
      %v6489 = vadd.f32 %v6211, %v6456
      %s6490 = scalar_lea.vmem [#allocation3], 48
      %v6491 = vld [vmem:[%s6490] sm:$0xff]
      %v6492 = vld [vmem:[%s6490 + $0x8] sm:$0xff]
      %v6493 = vld [vmem:[%s6490 + $0x18] sm:$0xff]
      %v6494 = vld [vmem:[%s6490 + $0x20] sm:$0xff]
      %v6495 = vld [vmem:[%s6490 + $0x30] sm:$0xff]
      %v6496 = vld [vmem:[%s6490 + $0x38] sm:$0xff]
      %v6497 = vld [vmem:[%s6490 + $0x48] sm:$0xff]
      %v6498 = vld [vmem:[%s6490 + $0x50] sm:$0xff]
      %v6499 = vld [vmem:[%s6490 + $0x60] sm:$0xff]
      %v6500 = vld [vmem:[%s6490 + $0x68] sm:$0xff]
      %v6501 = vld [vmem:[%s6490 + $0x78] sm:$0xff]
      %v6502 = vld [vmem:[%s6490 + $0x80] sm:$0xff]
      %v6503 = vld [vmem:[%s6490 + $0x90] sm:$0xff]
      %v6504 = vld [vmem:[%s6490 + $0x98] sm:$0xff]
      %v6505 = vld [vmem:[%s6490 + $0xa8] sm:$0xff]
      %v6506 = vld [vmem:[%s6490 + $0xb0] sm:$0xff]
      %v6507 = vld [vmem:[%s6490 + $0xc0] sm:$0xff]
      %v6508 = vld [vmem:[%s6490 + $0xc8] sm:$0xff]
      %v6509 = vld [vmem:[%s6490 + $0xd8] sm:$0xff]
      %v6510 = vld [vmem:[%s6490 + $0xe0] sm:$0xff]
      %v6511 = vld [vmem:[%s6490 + $0xf0] sm:$0xff]
      %v6512 = vld [vmem:[%s6490 + $0xf8] sm:$0xff]
      %v6513 = vld [vmem:[%s6490 + $0x108] sm:$0xff]
      %v6514 = vld [vmem:[%s6490 + $0x110] sm:$0xff]
      %v6515 = vld [vmem:[%s6490 + $0x120] sm:$0xff]
      %v6516 = vld [vmem:[%s6490 + $0x128] sm:$0xff]
      %v6517 = vld [vmem:[%s6490 + $0x138] sm:$0xff]
      %v6518 = vld [vmem:[%s6490 + $0x140] sm:$0xff]
      %v6519 = vld [vmem:[%s6490 + $0x150] sm:$0xff]
      %v6520 = vld [vmem:[%s6490 + $0x158] sm:$0xff]
      %v6521 = vld [vmem:[%s6490 + $0x168] sm:$0xff]
      %v6522 = vld [vmem:[%s6490 + $0x170] sm:$0xff]
      %s6523 = scalar_lea.vmem %s5, 192
      %v6524 = vld [vmem:[%s6523] sm:$0xff]
      %v6525 = vld [vmem:[%s6523 + $0x8] sm:$0xff]
      %v6526 = vld [vmem:[%s6523 + $0x10] sm:$0xff]
      %v6527 = vld [vmem:[%s6523 + $0x18] sm:$0xff]
      %v6529 = vsel %vm4798, %v6491, 0
      %v6532 = vsel %vm4798, %v6492, 0
      %v6535 = vsel %vm4798, %v6493, 0
      %v6538 = vsel %vm4798, %v6494, 0
      %v6541 = vsel %vm4798, %v6495, 0
      %v6544 = vsel %vm4798, %v6496, 0
      %v6547 = vsel %vm4798, %v6497, 0
      %v6550 = vsel %vm4798, %v6498, 0
      %v6553 = vsel %vm4798, %v6499, 0
      %v6556 = vsel %vm4798, %v6500, 0
      %v6559 = vsel %vm4798, %v6501, 0
      %v6562 = vsel %vm4798, %v6502, 0
      %v6565 = vsel %vm4798, %v6503, 0
      %v6568 = vsel %vm4798, %v6504, 0
      %v6571 = vsel %vm4798, %v6505, 0
      %v6574 = vsel %vm4798, %v6506, 0
      %v6577 = vsel %vm4798, %v6507, 0
      %v6580 = vsel %vm4798, %v6508, 0
      %v6583 = vsel %vm4798, %v6509, 0
      %v6586 = vsel %vm4798, %v6510, 0
      %v6589 = vsel %vm4798, %v6511, 0
      %v6592 = vsel %vm4798, %v6512, 0
      %v6595 = vsel %vm4798, %v6513, 0
      %v6598 = vsel %vm4798, %v6514, 0
      %v6601 = vsel %vm4798, %v6515, 0
      %v6604 = vsel %vm4798, %v6516, 0
      %v6607 = vsel %vm4798, %v6517, 0
      %v6610 = vsel %vm4798, %v6518, 0
      %v6613 = vsel %vm4798, %v6519, 0
      %v6616 = vsel %vm4798, %v6520, 0
      %v6619 = vsel %vm4798, %v6521, 0
      %v6622 = vsel %vm4798, %v6522, 0
      %6624 = vmatpush.msra.mxu0 0.0
      %6625 = vmatpush.msra.mxu0 0.0
      %6626 = vmatpush.msra.mxu0 0.0
      %6627 = vmatpush.msra.mxu0 0.0
      %6628 = vmatpush.msra.mxu0 0.0
      %6629 = vmatpush.msra.mxu0 0.0
      %6630 = vmatpush.msra.mxu0 0.0
      %6631 = vmatpush.msra.mxu0 0.0
      %6632 = vmatpush.msra.mxu0 0.0
      %6633 = vmatpush.msra.mxu0 0.0
      %6634 = vmatpush.msra.mxu0 0.0
      %6635 = vmatpush.msra.mxu0 0.0
      %6636 = vmatpush.msra.mxu0 %v6527
      %6637 = vmatpush.msra.mxu0 %v6526
      %6638 = vmatpush.msra.mxu0 %v6525
      %6639 = vmatpush.msra.mxu0 %v6524
      %6640 = vmatmul.f32.gmra.mxu0 %v6529
      %v6641 = vpop.f32.mrf.mxu0
      %v6642 = vadd.f32 0.0, %v6641
      %6643 = vmatmul.f32.gmra.mxu0 %v6532
      %v6644 = vpop.f32.mrf.mxu0
      %v6645 = vadd.f32 0.0, %v6644
      %6646 = vmatmul.f32.gmra.mxu0 %v6535
      %v6647 = vpop.f32.mrf.mxu0
      %v6648 = vadd.f32 0.0, %v6647
      %6649 = vmatmul.f32.gmra.mxu0 %v6538
      %v6650 = vpop.f32.mrf.mxu0
      %v6651 = vadd.f32 0.0, %v6650
      %6652 = vmatmul.f32.gmra.mxu0 %v6541
      %v6653 = vpop.f32.mrf.mxu0
      %v6654 = vadd.f32 0.0, %v6653
      %6655 = vmatmul.f32.gmra.mxu0 %v6544
      %v6656 = vpop.f32.mrf.mxu0
      %v6657 = vadd.f32 0.0, %v6656
      %6658 = vmatmul.f32.gmra.mxu0 %v6547
      %v6659 = vpop.f32.mrf.mxu0
      %v6660 = vadd.f32 0.0, %v6659
      %6661 = vmatmul.f32.gmra.mxu0 %v6550
      %v6662 = vpop.f32.mrf.mxu0
      %v6663 = vadd.f32 0.0, %v6662
      %6664 = vmatmul.f32.gmra.mxu0 %v6553
      %v6665 = vpop.f32.mrf.mxu0
      %v6666 = vadd.f32 0.0, %v6665
      %6667 = vmatmul.f32.gmra.mxu0 %v6556
      %v6668 = vpop.f32.mrf.mxu0
      %v6669 = vadd.f32 0.0, %v6668
      %6670 = vmatmul.f32.gmra.mxu0 %v6559
      %v6671 = vpop.f32.mrf.mxu0
      %v6672 = vadd.f32 0.0, %v6671
      %6673 = vmatmul.f32.gmra.mxu0 %v6562
      %v6674 = vpop.f32.mrf.mxu0
      %v6675 = vadd.f32 0.0, %v6674
      %6676 = vmatmul.f32.gmra.mxu0 %v6565
      %v6677 = vpop.f32.mrf.mxu0
      %v6678 = vadd.f32 0.0, %v6677
      %6679 = vmatmul.f32.gmra.mxu0 %v6568
      %v6680 = vpop.f32.mrf.mxu0
      %v6681 = vadd.f32 0.0, %v6680
      %6682 = vmatmul.f32.gmra.mxu0 %v6571
      %v6683 = vpop.f32.mrf.mxu0
      %v6684 = vadd.f32 0.0, %v6683
      %6685 = vmatmul.f32.gmra.mxu0 %v6574
      %v6686 = vpop.f32.mrf.mxu0
      %v6687 = vadd.f32 0.0, %v6686
      %6688 = vmatmul.f32.gmra.mxu0 %v6577
      %v6689 = vpop.f32.mrf.mxu0
      %v6690 = vadd.f32 0.0, %v6689
      %6691 = vmatmul.f32.gmra.mxu0 %v6580
      %v6692 = vpop.f32.mrf.mxu0
      %v6693 = vadd.f32 0.0, %v6692
      %6694 = vmatmul.f32.gmra.mxu0 %v6583
      %v6695 = vpop.f32.mrf.mxu0
      %v6696 = vadd.f32 0.0, %v6695
      %6697 = vmatmul.f32.gmra.mxu0 %v6586
      %v6698 = vpop.f32.mrf.mxu0
      %v6699 = vadd.f32 0.0, %v6698
      %6700 = vmatmul.f32.gmra.mxu0 %v6589
      %v6701 = vpop.f32.mrf.mxu0
      %v6702 = vadd.f32 0.0, %v6701
      %6703 = vmatmul.f32.gmra.mxu0 %v6592
      %v6704 = vpop.f32.mrf.mxu0
      %v6705 = vadd.f32 0.0, %v6704
      %6706 = vmatmul.f32.gmra.mxu0 %v6595
      %v6707 = vpop.f32.mrf.mxu0
      %v6708 = vadd.f32 0.0, %v6707
      %6709 = vmatmul.f32.gmra.mxu0 %v6598
      %v6710 = vpop.f32.mrf.mxu0
      %v6711 = vadd.f32 0.0, %v6710
      %6712 = vmatmul.f32.gmra.mxu0 %v6601
      %v6713 = vpop.f32.mrf.mxu0
      %v6714 = vadd.f32 0.0, %v6713
      %6715 = vmatmul.f32.gmra.mxu0 %v6604
      %v6716 = vpop.f32.mrf.mxu0
      %v6717 = vadd.f32 0.0, %v6716
      %6718 = vmatmul.f32.gmra.mxu0 %v6607
      %v6719 = vpop.f32.mrf.mxu0
      %v6720 = vadd.f32 0.0, %v6719
      %6721 = vmatmul.f32.gmra.mxu0 %v6610
      %v6722 = vpop.f32.mrf.mxu0
      %v6723 = vadd.f32 0.0, %v6722
      %6724 = vmatmul.f32.gmra.mxu0 %v6613
      %v6725 = vpop.f32.mrf.mxu0
      %v6726 = vadd.f32 0.0, %v6725
      %6727 = vmatmul.f32.gmra.mxu0 %v6616
      %v6728 = vpop.f32.mrf.mxu0
      %v6729 = vadd.f32 0.0, %v6728
      %6730 = vmatmul.f32.gmra.mxu0 %v6619
      %v6731 = vpop.f32.mrf.mxu0
      %v6732 = vadd.f32 0.0, %v6731
      %6733 = vmatmul.f32.gmra.mxu0 %v6622
      %v6734 = vpop.f32.mrf.mxu0
      %v6735 = vadd.f32 0.0, %v6734
      %6736 = vdwg.mxu0
      %v6737 = vadd.f32 %v6458, %v6642
      %v6738 = vadd.f32 %v6459, %v6645
      %v6739 = vadd.f32 %v6460, %v6648
      %v6740 = vadd.f32 %v6461, %v6651
      %v6741 = vadd.f32 %v6462, %v6654
      %v6742 = vadd.f32 %v6463, %v6657
      %v6743 = vadd.f32 %v6464, %v6660
      %v6744 = vadd.f32 %v6465, %v6663
      %v6745 = vadd.f32 %v6466, %v6666
      %v6746 = vadd.f32 %v6467, %v6669
      %v6747 = vadd.f32 %v6468, %v6672
      %v6748 = vadd.f32 %v6469, %v6675
      %v6749 = vadd.f32 %v6470, %v6678
      %v6750 = vadd.f32 %v6471, %v6681
      %v6751 = vadd.f32 %v6472, %v6684
      %v6752 = vadd.f32 %v6473, %v6687
      %v6753 = vadd.f32 %v6474, %v6690
      %v6754 = vadd.f32 %v6475, %v6693
      %v6755 = vadd.f32 %v6476, %v6696
      %v6756 = vadd.f32 %v6477, %v6699
      %v6757 = vadd.f32 %v6478, %v6702
      %v6758 = vadd.f32 %v6479, %v6705
      %v6759 = vadd.f32 %v6480, %v6708
      %v6760 = vadd.f32 %v6481, %v6711
      %v6761 = vadd.f32 %v6482, %v6714
      %v6762 = vadd.f32 %v6483, %v6717
      %v6763 = vadd.f32 %v6484, %v6720
      %v6764 = vadd.f32 %v6485, %v6723
      %v6765 = vadd.f32 %v6486, %v6726
      %v6766 = vadd.f32 %v6487, %v6729
      %v6767 = vadd.f32 %v6488, %v6732
      %v6768 = vadd.f32 %v6489, %v6735
      %v6769 = vld [vmem:[%s6490 + $0x1] sm:$0xff]
      %v6770 = vld [vmem:[%s6490 + $0x9] sm:$0xff]
      %v6771 = vld [vmem:[%s6490 + $0x19] sm:$0xff]
      %v6772 = vld [vmem:[%s6490 + $0x21] sm:$0xff]
      %v6773 = vld [vmem:[%s6490 + $0x31] sm:$0xff]
      %v6774 = vld [vmem:[%s6490 + $0x39] sm:$0xff]
      %v6775 = vld [vmem:[%s6490 + $0x49] sm:$0xff]
      %v6776 = vld [vmem:[%s6490 + $0x51] sm:$0xff]
      %v6777 = vld [vmem:[%s6490 + $0x61] sm:$0xff]
      %v6778 = vld [vmem:[%s6490 + $0x69] sm:$0xff]
      %v6779 = vld [vmem:[%s6490 + $0x79] sm:$0xff]
      %v6780 = vld [vmem:[%s6490 + $0x81] sm:$0xff]
      %v6781 = vld [vmem:[%s6490 + $0x91] sm:$0xff]
      %v6782 = vld [vmem:[%s6490 + $0x99] sm:$0xff]
      %v6783 = vld [vmem:[%s6490 + $0xa9] sm:$0xff]
      %v6784 = vld [vmem:[%s6490 + $0xb1] sm:$0xff]
      %v6785 = vld [vmem:[%s6490 + $0xc1] sm:$0xff]
      %v6786 = vld [vmem:[%s6490 + $0xc9] sm:$0xff]
      %v6787 = vld [vmem:[%s6490 + $0xd9] sm:$0xff]
      %v6788 = vld [vmem:[%s6490 + $0xe1] sm:$0xff]
      %v6789 = vld [vmem:[%s6490 + $0xf1] sm:$0xff]
      %v6790 = vld [vmem:[%s6490 + $0xf9] sm:$0xff]
      %v6791 = vld [vmem:[%s6490 + $0x109] sm:$0xff]
      %v6792 = vld [vmem:[%s6490 + $0x111] sm:$0xff]
      %v6793 = vld [vmem:[%s6490 + $0x121] sm:$0xff]
      %v6794 = vld [vmem:[%s6490 + $0x129] sm:$0xff]
      %v6795 = vld [vmem:[%s6490 + $0x139] sm:$0xff]
      %v6796 = vld [vmem:[%s6490 + $0x141] sm:$0xff]
      %v6797 = vld [vmem:[%s6490 + $0x151] sm:$0xff]
      %v6798 = vld [vmem:[%s6490 + $0x159] sm:$0xff]
      %v6799 = vld [vmem:[%s6490 + $0x169] sm:$0xff]
      %v6800 = vld [vmem:[%s6490 + $0x171] sm:$0xff]
      %s6801 = scalar_lea.vmem %s5, 224
      %v6802 = vld [vmem:[%s6801] sm:$0xff]
      %v6803 = vld [vmem:[%s6801 + $0x8] sm:$0xff]
      %v6804 = vld [vmem:[%s6801 + $0x10] sm:$0xff]
      %v6805 = vld [vmem:[%s6801 + $0x18] sm:$0xff]
      %v6807 = vsel %vm4798, %v6769, 0
      %v6810 = vsel %vm4798, %v6770, 0
      %v6813 = vsel %vm4798, %v6771, 0
      %v6816 = vsel %vm4798, %v6772, 0
      %v6819 = vsel %vm4798, %v6773, 0
      %v6822 = vsel %vm4798, %v6774, 0
      %v6825 = vsel %vm4798, %v6775, 0
      %v6828 = vsel %vm4798, %v6776, 0
      %v6831 = vsel %vm4798, %v6777, 0
      %v6834 = vsel %vm4798, %v6778, 0
      %v6837 = vsel %vm4798, %v6779, 0
      %v6840 = vsel %vm4798, %v6780, 0
      %v6843 = vsel %vm4798, %v6781, 0
      %v6846 = vsel %vm4798, %v6782, 0
      %v6849 = vsel %vm4798, %v6783, 0
      %v6852 = vsel %vm4798, %v6784, 0
      %v6855 = vsel %vm4798, %v6785, 0
      %v6858 = vsel %vm4798, %v6786, 0
      %v6861 = vsel %vm4798, %v6787, 0
      %v6864 = vsel %vm4798, %v6788, 0
      %v6867 = vsel %vm4798, %v6789, 0
      %v6870 = vsel %vm4798, %v6790, 0
      %v6873 = vsel %vm4798, %v6791, 0
      %v6876 = vsel %vm4798, %v6792, 0
      %v6879 = vsel %vm4798, %v6793, 0
      %v6882 = vsel %vm4798, %v6794, 0
      %v6885 = vsel %vm4798, %v6795, 0
      %v6888 = vsel %vm4798, %v6796, 0
      %v6891 = vsel %vm4798, %v6797, 0
      %v6894 = vsel %vm4798, %v6798, 0
      %v6897 = vsel %vm4798, %v6799, 0
      %v6900 = vsel %vm4798, %v6800, 0
      %6902 = vmatpush.msra.mxu0 0.0
      %6903 = vmatpush.msra.mxu0 0.0
      %6904 = vmatpush.msra.mxu0 0.0
      %6905 = vmatpush.msra.mxu0 0.0
      %6906 = vmatpush.msra.mxu0 0.0
      %6907 = vmatpush.msra.mxu0 0.0
      %6908 = vmatpush.msra.mxu0 0.0
      %6909 = vmatpush.msra.mxu0 0.0
      %6910 = vmatpush.msra.mxu0 0.0
      %6911 = vmatpush.msra.mxu0 0.0
      %6912 = vmatpush.msra.mxu0 0.0
      %6913 = vmatpush.msra.mxu0 0.0
      %6914 = vmatpush.msra.mxu0 %v6805
      %6915 = vmatpush.msra.mxu0 %v6804
      %6916 = vmatpush.msra.mxu0 %v6803
      %6917 = vmatpush.msra.mxu0 %v6802
      %6918 = vmatmul.f32.gmra.mxu0 %v6807
      %v6919 = vpop.f32.mrf.mxu0
      %v6920 = vadd.f32 0.0, %v6919
      %6921 = vmatmul.f32.gmra.mxu0 %v6810
      %v6922 = vpop.f32.mrf.mxu0
      %v6923 = vadd.f32 0.0, %v6922
      %6924 = vmatmul.f32.gmra.mxu0 %v6813
      %v6925 = vpop.f32.mrf.mxu0
      %v6926 = vadd.f32 0.0, %v6925
      %6927 = vmatmul.f32.gmra.mxu0 %v6816
      %v6928 = vpop.f32.mrf.mxu0
      %v6929 = vadd.f32 0.0, %v6928
      %6930 = vmatmul.f32.gmra.mxu0 %v6819
      %v6931 = vpop.f32.mrf.mxu0
      %v6932 = vadd.f32 0.0, %v6931
      %6933 = vmatmul.f32.gmra.mxu0 %v6822
      %v6934 = vpop.f32.mrf.mxu0
      %v6935 = vadd.f32 0.0, %v6934
      %6936 = vmatmul.f32.gmra.mxu0 %v6825
      %v6937 = vpop.f32.mrf.mxu0
      %v6938 = vadd.f32 0.0, %v6937
      %6939 = vmatmul.f32.gmra.mxu0 %v6828
      %v6940 = vpop.f32.mrf.mxu0
      %v6941 = vadd.f32 0.0, %v6940
      %6942 = vmatmul.f32.gmra.mxu0 %v6831
      %v6943 = vpop.f32.mrf.mxu0
      %v6944 = vadd.f32 0.0, %v6943
      %6945 = vmatmul.f32.gmra.mxu0 %v6834
      %v6946 = vpop.f32.mrf.mxu0
      %v6947 = vadd.f32 0.0, %v6946
      %6948 = vmatmul.f32.gmra.mxu0 %v6837
      %v6949 = vpop.f32.mrf.mxu0
      %v6950 = vadd.f32 0.0, %v6949
      %6951 = vmatmul.f32.gmra.mxu0 %v6840
      %v6952 = vpop.f32.mrf.mxu0
      %v6953 = vadd.f32 0.0, %v6952
      %6954 = vmatmul.f32.gmra.mxu0 %v6843
      %v6955 = vpop.f32.mrf.mxu0
      %v6956 = vadd.f32 0.0, %v6955
      %6957 = vmatmul.f32.gmra.mxu0 %v6846
      %v6958 = vpop.f32.mrf.mxu0
      %v6959 = vadd.f32 0.0, %v6958
      %6960 = vmatmul.f32.gmra.mxu0 %v6849
      %v6961 = vpop.f32.mrf.mxu0
      %v6962 = vadd.f32 0.0, %v6961
      %6963 = vmatmul.f32.gmra.mxu0 %v6852
      %v6964 = vpop.f32.mrf.mxu0
      %v6965 = vadd.f32 0.0, %v6964
      %6966 = vmatmul.f32.gmra.mxu0 %v6855
      %v6967 = vpop.f32.mrf.mxu0
      %v6968 = vadd.f32 0.0, %v6967
      %6969 = vmatmul.f32.gmra.mxu0 %v6858
      %v6970 = vpop.f32.mrf.mxu0
      %v6971 = vadd.f32 0.0, %v6970
      %6972 = vmatmul.f32.gmra.mxu0 %v6861
      %v6973 = vpop.f32.mrf.mxu0
      %v6974 = vadd.f32 0.0, %v6973
      %6975 = vmatmul.f32.gmra.mxu0 %v6864
      %v6976 = vpop.f32.mrf.mxu0
      %v6977 = vadd.f32 0.0, %v6976
      %6978 = vmatmul.f32.gmra.mxu0 %v6867
      %v6979 = vpop.f32.mrf.mxu0
      %v6980 = vadd.f32 0.0, %v6979
      %6981 = vmatmul.f32.gmra.mxu0 %v6870
      %v6982 = vpop.f32.mrf.mxu0
      %v6983 = vadd.f32 0.0, %v6982
      %6984 = vmatmul.f32.gmra.mxu0 %v6873
      %v6985 = vpop.f32.mrf.mxu0
      %v6986 = vadd.f32 0.0, %v6985
      %6987 = vmatmul.f32.gmra.mxu0 %v6876
      %v6988 = vpop.f32.mrf.mxu0
      %v6989 = vadd.f32 0.0, %v6988
      %6990 = vmatmul.f32.gmra.mxu0 %v6879
      %v6991 = vpop.f32.mrf.mxu0
      %v6992 = vadd.f32 0.0, %v6991
      %6993 = vmatmul.f32.gmra.mxu0 %v6882
      %v6994 = vpop.f32.mrf.mxu0
      %v6995 = vadd.f32 0.0, %v6994
      %6996 = vmatmul.f32.gmra.mxu0 %v6885
      %v6997 = vpop.f32.mrf.mxu0
      %v6998 = vadd.f32 0.0, %v6997
      %6999 = vmatmul.f32.gmra.mxu0 %v6888
      %v7000 = vpop.f32.mrf.mxu0
      %v7001 = vadd.f32 0.0, %v7000
      %7002 = vmatmul.f32.gmra.mxu0 %v6891
      %v7003 = vpop.f32.mrf.mxu0
      %v7004 = vadd.f32 0.0, %v7003
      %7005 = vmatmul.f32.gmra.mxu0 %v6894
      %v7006 = vpop.f32.mrf.mxu0
      %v7007 = vadd.f32 0.0, %v7006
      %7008 = vmatmul.f32.gmra.mxu0 %v6897
      %v7009 = vpop.f32.mrf.mxu0
      %v7010 = vadd.f32 0.0, %v7009
      %7011 = vmatmul.f32.gmra.mxu0 %v6900
      %v7012 = vpop.f32.mrf.mxu0
      %v7013 = vadd.f32 0.0, %v7012
      %7014 = vdwg.mxu0
      %v7015 = vadd.f32 %v6737, %v6920
      %v7016 = vadd.f32 %v6738, %v6923
      %v7017 = vadd.f32 %v6739, %v6926
      %v7018 = vadd.f32 %v6740, %v6929
      %v7019 = vadd.f32 %v6741, %v6932
      %v7020 = vadd.f32 %v6742, %v6935
      %v7021 = vadd.f32 %v6743, %v6938
      %v7022 = vadd.f32 %v6744, %v6941
      %v7023 = vadd.f32 %v6745, %v6944
      %v7024 = vadd.f32 %v6746, %v6947
      %v7025 = vadd.f32 %v6747, %v6950
      %v7026 = vadd.f32 %v6748, %v6953
      %v7027 = vadd.f32 %v6749, %v6956
      %v7028 = vadd.f32 %v6750, %v6959
      %v7029 = vadd.f32 %v6751, %v6962
      %v7030 = vadd.f32 %v6752, %v6965
      %v7031 = vadd.f32 %v6753, %v6968
      %v7032 = vadd.f32 %v6754, %v6971
      %v7033 = vadd.f32 %v6755, %v6974
      %v7034 = vadd.f32 %v6756, %v6977
      %v7035 = vadd.f32 %v6757, %v6980
      %v7036 = vadd.f32 %v6758, %v6983
      %v7037 = vadd.f32 %v6759, %v6986
      %v7038 = vadd.f32 %v6760, %v6989
      %v7039 = vadd.f32 %v6761, %v6992
      %v7040 = vadd.f32 %v6762, %v6995
      %v7041 = vadd.f32 %v6763, %v6998
      %v7042 = vadd.f32 %v6764, %v7001
      %v7043 = vadd.f32 %v6765, %v7004
      %v7044 = vadd.f32 %v6766, %v7007
      %v7045 = vadd.f32 %v6767, %v7010
      %v7046 = vadd.f32 %v6768, %v7013
      %v7047 = vld [vmem:[%s6490 + $0x2] sm:$0xff]
      %v7048 = vld [vmem:[%s6490 + $0xa] sm:$0xff]
      %v7049 = vld [vmem:[%s6490 + $0x1a] sm:$0xff]
      %v7050 = vld [vmem:[%s6490 + $0x22] sm:$0xff]
      %v7051 = vld [vmem:[%s6490 + $0x32] sm:$0xff]
      %v7052 = vld [vmem:[%s6490 + $0x3a] sm:$0xff]
      %v7053 = vld [vmem:[%s6490 + $0x4a] sm:$0xff]
      %v7054 = vld [vmem:[%s6490 + $0x52] sm:$0xff]
      %v7055 = vld [vmem:[%s6490 + $0x62] sm:$0xff]
      %v7056 = vld [vmem:[%s6490 + $0x6a] sm:$0xff]
      %v7057 = vld [vmem:[%s6490 + $0x7a] sm:$0xff]
      %v7058 = vld [vmem:[%s6490 + $0x82] sm:$0xff]
      %v7059 = vld [vmem:[%s6490 + $0x92] sm:$0xff]
      %v7060 = vld [vmem:[%s6490 + $0x9a] sm:$0xff]
      %v7061 = vld [vmem:[%s6490 + $0xaa] sm:$0xff]
      %v7062 = vld [vmem:[%s6490 + $0xb2] sm:$0xff]
      %v7063 = vld [vmem:[%s6490 + $0xc2] sm:$0xff]
      %v7064 = vld [vmem:[%s6490 + $0xca] sm:$0xff]
      %v7065 = vld [vmem:[%s6490 + $0xda] sm:$0xff]
      %v7066 = vld [vmem:[%s6490 + $0xe2] sm:$0xff]
      %v7067 = vld [vmem:[%s6490 + $0xf2] sm:$0xff]
      %v7068 = vld [vmem:[%s6490 + $0xfa] sm:$0xff]
      %v7069 = vld [vmem:[%s6490 + $0x10a] sm:$0xff]
      %v7070 = vld [vmem:[%s6490 + $0x112] sm:$0xff]
      %v7071 = vld [vmem:[%s6490 + $0x122] sm:$0xff]
      %v7072 = vld [vmem:[%s6490 + $0x12a] sm:$0xff]
      %v7073 = vld [vmem:[%s6490 + $0x13a] sm:$0xff]
      %v7074 = vld [vmem:[%s6490 + $0x142] sm:$0xff]
      %v7075 = vld [vmem:[%s6490 + $0x152] sm:$0xff]
      %v7076 = vld [vmem:[%s6490 + $0x15a] sm:$0xff]
      %v7077 = vld [vmem:[%s6490 + $0x16a] sm:$0xff]
      %v7078 = vld [vmem:[%s6490 + $0x172] sm:$0xff]
      %s7079 = scalar_lea.vmem %s5, 256
      %v7080 = vld [vmem:[%s7079] sm:$0xff]
      %v7081 = vld [vmem:[%s7079 + $0x8] sm:$0xff]
      %v7082 = vld [vmem:[%s7079 + $0x10] sm:$0xff]
      %v7083 = vld [vmem:[%s7079 + $0x18] sm:$0xff]
      %v7085 = vsel %vm4798, %v7047, 0
      %v7088 = vsel %vm4798, %v7048, 0
      %v7091 = vsel %vm4798, %v7049, 0
      %v7094 = vsel %vm4798, %v7050, 0
      %v7097 = vsel %vm4798, %v7051, 0
      %v7100 = vsel %vm4798, %v7052, 0
      %v7103 = vsel %vm4798, %v7053, 0
      %v7106 = vsel %vm4798, %v7054, 0
      %v7109 = vsel %vm4798, %v7055, 0
      %v7112 = vsel %vm4798, %v7056, 0
      %v7115 = vsel %vm4798, %v7057, 0
      %v7118 = vsel %vm4798, %v7058, 0
      %v7121 = vsel %vm4798, %v7059, 0
      %v7124 = vsel %vm4798, %v7060, 0
      %v7127 = vsel %vm4798, %v7061, 0
      %v7130 = vsel %vm4798, %v7062, 0
      %v7133 = vsel %vm4798, %v7063, 0
      %v7136 = vsel %vm4798, %v7064, 0
      %v7139 = vsel %vm4798, %v7065, 0
      %v7142 = vsel %vm4798, %v7066, 0
      %v7145 = vsel %vm4798, %v7067, 0
      %v7148 = vsel %vm4798, %v7068, 0
      %v7151 = vsel %vm4798, %v7069, 0
      %v7154 = vsel %vm4798, %v7070, 0
      %v7157 = vsel %vm4798, %v7071, 0
      %v7160 = vsel %vm4798, %v7072, 0
      %v7163 = vsel %vm4798, %v7073, 0
      %v7166 = vsel %vm4798, %v7074, 0
      %v7169 = vsel %vm4798, %v7075, 0
      %v7172 = vsel %vm4798, %v7076, 0
      %v7175 = vsel %vm4798, %v7077, 0
      %v7178 = vsel %vm4798, %v7078, 0
      %7180 = vmatpush.msra.mxu0 0.0
      %7181 = vmatpush.msra.mxu0 0.0
      %7182 = vmatpush.msra.mxu0 0.0
      %7183 = vmatpush.msra.mxu0 0.0
      %7184 = vmatpush.msra.mxu0 0.0
      %7185 = vmatpush.msra.mxu0 0.0
      %7186 = vmatpush.msra.mxu0 0.0
      %7187 = vmatpush.msra.mxu0 0.0
      %7188 = vmatpush.msra.mxu0 0.0
      %7189 = vmatpush.msra.mxu0 0.0
      %7190 = vmatpush.msra.mxu0 0.0
      %7191 = vmatpush.msra.mxu0 0.0
      %7192 = vmatpush.msra.mxu0 %v7083
      %7193 = vmatpush.msra.mxu0 %v7082
      %7194 = vmatpush.msra.mxu0 %v7081
      %7195 = vmatpush.msra.mxu0 %v7080
      %7196 = vmatmul.f32.gmra.mxu0 %v7085
      %v7197 = vpop.f32.mrf.mxu0
      %v7198 = vadd.f32 0.0, %v7197
      %7199 = vmatmul.f32.gmra.mxu0 %v7088
      %v7200 = vpop.f32.mrf.mxu0
      %v7201 = vadd.f32 0.0, %v7200
      %7202 = vmatmul.f32.gmra.mxu0 %v7091
      %v7203 = vpop.f32.mrf.mxu0
      %v7204 = vadd.f32 0.0, %v7203
      %7205 = vmatmul.f32.gmra.mxu0 %v7094
      %v7206 = vpop.f32.mrf.mxu0
      %v7207 = vadd.f32 0.0, %v7206
      %7208 = vmatmul.f32.gmra.mxu0 %v7097
      %v7209 = vpop.f32.mrf.mxu0
      %v7210 = vadd.f32 0.0, %v7209
      %7211 = vmatmul.f32.gmra.mxu0 %v7100
      %v7212 = vpop.f32.mrf.mxu0
      %v7213 = vadd.f32 0.0, %v7212
      %7214 = vmatmul.f32.gmra.mxu0 %v7103
      %v7215 = vpop.f32.mrf.mxu0
      %v7216 = vadd.f32 0.0, %v7215
      %7217 = vmatmul.f32.gmra.mxu0 %v7106
      %v7218 = vpop.f32.mrf.mxu0
      %v7219 = vadd.f32 0.0, %v7218
      %7220 = vmatmul.f32.gmra.mxu0 %v7109
      %v7221 = vpop.f32.mrf.mxu0
      %v7222 = vadd.f32 0.0, %v7221
      %7223 = vmatmul.f32.gmra.mxu0 %v7112
      %v7224 = vpop.f32.mrf.mxu0
      %v7225 = vadd.f32 0.0, %v7224
      %7226 = vmatmul.f32.gmra.mxu0 %v7115
      %v7227 = vpop.f32.mrf.mxu0
      %v7228 = vadd.f32 0.0, %v7227
      %7229 = vmatmul.f32.gmra.mxu0 %v7118
      %v7230 = vpop.f32.mrf.mxu0
      %v7231 = vadd.f32 0.0, %v7230
      %7232 = vmatmul.f32.gmra.mxu0 %v7121
      %v7233 = vpop.f32.mrf.mxu0
      %v7234 = vadd.f32 0.0, %v7233
      %7235 = vmatmul.f32.gmra.mxu0 %v7124
      %v7236 = vpop.f32.mrf.mxu0
      %v7237 = vadd.f32 0.0, %v7236
      %7238 = vmatmul.f32.gmra.mxu0 %v7127
      %v7239 = vpop.f32.mrf.mxu0
      %v7240 = vadd.f32 0.0, %v7239
      %7241 = vmatmul.f32.gmra.mxu0 %v7130
      %v7242 = vpop.f32.mrf.mxu0
      %v7243 = vadd.f32 0.0, %v7242
      %7244 = vmatmul.f32.gmra.mxu0 %v7133
      %v7245 = vpop.f32.mrf.mxu0
      %v7246 = vadd.f32 0.0, %v7245
      %7247 = vmatmul.f32.gmra.mxu0 %v7136
      %v7248 = vpop.f32.mrf.mxu0
      %v7249 = vadd.f32 0.0, %v7248
      %7250 = vmatmul.f32.gmra.mxu0 %v7139
      %v7251 = vpop.f32.mrf.mxu0
      %v7252 = vadd.f32 0.0, %v7251
      %7253 = vmatmul.f32.gmra.mxu0 %v7142
      %v7254 = vpop.f32.mrf.mxu0
      %v7255 = vadd.f32 0.0, %v7254
      %7256 = vmatmul.f32.gmra.mxu0 %v7145
      %v7257 = vpop.f32.mrf.mxu0
      %v7258 = vadd.f32 0.0, %v7257
      %7259 = vmatmul.f32.gmra.mxu0 %v7148
      %v7260 = vpop.f32.mrf.mxu0
      %v7261 = vadd.f32 0.0, %v7260
      %7262 = vmatmul.f32.gmra.mxu0 %v7151
      %v7263 = vpop.f32.mrf.mxu0
      %v7264 = vadd.f32 0.0, %v7263
      %7265 = vmatmul.f32.gmra.mxu0 %v7154
      %v7266 = vpop.f32.mrf.mxu0
      %v7267 = vadd.f32 0.0, %v7266
      %7268 = vmatmul.f32.gmra.mxu0 %v7157
      %v7269 = vpop.f32.mrf.mxu0
      %v7270 = vadd.f32 0.0, %v7269
      %7271 = vmatmul.f32.gmra.mxu0 %v7160
      %v7272 = vpop.f32.mrf.mxu0
      %v7273 = vadd.f32 0.0, %v7272
      %7274 = vmatmul.f32.gmra.mxu0 %v7163
      %v7275 = vpop.f32.mrf.mxu0
      %v7276 = vadd.f32 0.0, %v7275
      %7277 = vmatmul.f32.gmra.mxu0 %v7166
      %v7278 = vpop.f32.mrf.mxu0
      %v7279 = vadd.f32 0.0, %v7278
      %7280 = vmatmul.f32.gmra.mxu0 %v7169
      %v7281 = vpop.f32.mrf.mxu0
      %v7282 = vadd.f32 0.0, %v7281
      %7283 = vmatmul.f32.gmra.mxu0 %v7172
      %v7284 = vpop.f32.mrf.mxu0
      %v7285 = vadd.f32 0.0, %v7284
      %7286 = vmatmul.f32.gmra.mxu0 %v7175
      %v7287 = vpop.f32.mrf.mxu0
      %v7288 = vadd.f32 0.0, %v7287
      %7289 = vmatmul.f32.gmra.mxu0 %v7178
      %v7290 = vpop.f32.mrf.mxu0
      %v7291 = vadd.f32 0.0, %v7290
      %7292 = vdwg.mxu0
      %v7293 = vadd.f32 %v7015, %v7198
      %v7294 = vadd.f32 %v7016, %v7201
      %v7295 = vadd.f32 %v7017, %v7204
      %v7296 = vadd.f32 %v7018, %v7207
      %v7297 = vadd.f32 %v7019, %v7210
      %v7298 = vadd.f32 %v7020, %v7213
      %v7299 = vadd.f32 %v7021, %v7216
      %v7300 = vadd.f32 %v7022, %v7219
      %v7301 = vadd.f32 %v7023, %v7222
      %v7302 = vadd.f32 %v7024, %v7225
      %v7303 = vadd.f32 %v7025, %v7228
      %v7304 = vadd.f32 %v7026, %v7231
      %v7305 = vadd.f32 %v7027, %v7234
      %v7306 = vadd.f32 %v7028, %v7237
      %v7307 = vadd.f32 %v7029, %v7240
      %v7308 = vadd.f32 %v7030, %v7243
      %v7309 = vadd.f32 %v7031, %v7246
      %v7310 = vadd.f32 %v7032, %v7249
      %v7311 = vadd.f32 %v7033, %v7252
      %v7312 = vadd.f32 %v7034, %v7255
      %v7313 = vadd.f32 %v7035, %v7258
      %v7314 = vadd.f32 %v7036, %v7261
      %v7315 = vadd.f32 %v7037, %v7264
      %v7316 = vadd.f32 %v7038, %v7267
      %v7317 = vadd.f32 %v7039, %v7270
      %v7318 = vadd.f32 %v7040, %v7273
      %v7319 = vadd.f32 %v7041, %v7276
      %v7320 = vadd.f32 %v7042, %v7279
      %v7321 = vadd.f32 %v7043, %v7282
      %v7322 = vadd.f32 %v7044, %v7285
      %v7323 = vadd.f32 %v7045, %v7288
      %v7324 = vadd.f32 %v7046, %v7291
      %v7325 = vld [vmem:[%s6] sm:$0x1]
      %v7327 = vperm.slane %v7325, 0
      %v7329 = vadd.f32 %v7293, %v7327
      %v7330 = vadd.f32 %v7294, %v7327
      %v7331 = vadd.f32 %v7295, %v7327
      %v7332 = vadd.f32 %v7296, %v7327
      %v7333 = vadd.f32 %v7297, %v7327
      %v7334 = vadd.f32 %v7298, %v7327
      %v7335 = vadd.f32 %v7299, %v7327
      %v7336 = vadd.f32 %v7300, %v7327
      %v7337 = vadd.f32 %v7301, %v7327
      %v7338 = vadd.f32 %v7302, %v7327
      %v7339 = vadd.f32 %v7303, %v7327
      %v7340 = vadd.f32 %v7304, %v7327
      %v7341 = vadd.f32 %v7305, %v7327
      %v7342 = vadd.f32 %v7306, %v7327
      %v7343 = vadd.f32 %v7307, %v7327
      %v7344 = vadd.f32 %v7308, %v7327
      %v7345 = vadd.f32 %v7309, %v7327
      %v7346 = vadd.f32 %v7310, %v7327
      %v7347 = vadd.f32 %v7311, %v7327
      %v7348 = vadd.f32 %v7312, %v7327
      %v7349 = vadd.f32 %v7313, %v7327
      %v7350 = vadd.f32 %v7314, %v7327
      %v7351 = vadd.f32 %v7315, %v7327
      %v7352 = vadd.f32 %v7316, %v7327
      %v7353 = vadd.f32 %v7317, %v7327
      %v7354 = vadd.f32 %v7318, %v7327
      %v7355 = vadd.f32 %v7319, %v7327
      %v7356 = vadd.f32 %v7320, %v7327
      %v7357 = vadd.f32 %v7321, %v7327
      %v7358 = vadd.f32 %v7322, %v7327
      %v7359 = vadd.f32 %v7323, %v7327
      %v7360 = vadd.f32 %v7324, %v7327
      %v7361 = vxor.u32 %v7329, 2147483648
      %v7362 = vxor.u32 %v7330, 2147483648
      %v7363 = vxor.u32 %v7331, 2147483648
      %v7364 = vxor.u32 %v7332, 2147483648
      %v7365 = vxor.u32 %v7333, 2147483648
      %v7366 = vxor.u32 %v7334, 2147483648
      %v7367 = vxor.u32 %v7335, 2147483648
      %v7368 = vxor.u32 %v7336, 2147483648
      %v7369 = vxor.u32 %v7337, 2147483648
      %v7370 = vxor.u32 %v7338, 2147483648
      %v7371 = vxor.u32 %v7339, 2147483648
      %v7372 = vxor.u32 %v7340, 2147483648
      %v7373 = vxor.u32 %v7341, 2147483648
      %v7374 = vxor.u32 %v7342, 2147483648
      %v7375 = vxor.u32 %v7343, 2147483648
      %v7376 = vxor.u32 %v7344, 2147483648
      %v7377 = vxor.u32 %v7345, 2147483648
      %v7378 = vxor.u32 %v7346, 2147483648
      %v7379 = vxor.u32 %v7347, 2147483648
      %v7380 = vxor.u32 %v7348, 2147483648
      %v7381 = vxor.u32 %v7349, 2147483648
      %v7382 = vxor.u32 %v7350, 2147483648
      %v7383 = vxor.u32 %v7351, 2147483648
      %v7384 = vxor.u32 %v7352, 2147483648
      %v7385 = vxor.u32 %v7353, 2147483648
      %v7386 = vxor.u32 %v7354, 2147483648
      %v7387 = vxor.u32 %v7355, 2147483648
      %v7388 = vxor.u32 %v7356, 2147483648
      %v7389 = vxor.u32 %v7357, 2147483648
      %v7390 = vxor.u32 %v7358, 2147483648
      %v7391 = vxor.u32 %v7359, 2147483648
      %v7392 = vxor.u32 %v7360, 2147483648
      %v7393 = vmul.f32 %v7361, 1.442695
      %v7394 = vpow.pop %v7393
      %v7395 = vmul.f32 %v7362, 1.442695
      %v7396 = vpow.pop %v7395
      %v7397 = vmul.f32 %v7363, 1.442695
      %v7398 = vpow.pop %v7397
      %v7399 = vmul.f32 %v7364, 1.442695
      %v7400 = vpow.pop %v7399
      %v7401 = vmul.f32 %v7365, 1.442695
      %v7402 = vpow.pop %v7401
      %v7403 = vmul.f32 %v7366, 1.442695
      %v7404 = vpow.pop %v7403
      %v7405 = vmul.f32 %v7367, 1.442695
      %v7406 = vpow.pop %v7405
      %v7407 = vmul.f32 %v7368, 1.442695
      %v7408 = vpow.pop %v7407
      %v7409 = vmul.f32 %v7369, 1.442695
      %v7410 = vpow.pop %v7409
      %v7411 = vmul.f32 %v7370, 1.442695
      %v7412 = vpow.pop %v7411
      %v7413 = vmul.f32 %v7371, 1.442695
      %v7414 = vpow.pop %v7413
      %v7415 = vmul.f32 %v7372, 1.442695
      %v7416 = vpow.pop %v7415
      %v7417 = vmul.f32 %v7373, 1.442695
      %v7418 = vpow.pop %v7417
      %v7419 = vmul.f32 %v7374, 1.442695
      %v7420 = vpow.pop %v7419
      %v7421 = vmul.f32 %v7375, 1.442695
      %v7422 = vpow.pop %v7421
      %v7423 = vmul.f32 %v7376, 1.442695
      %v7424 = vpow.pop %v7423
      %v7425 = vmul.f32 %v7377, 1.442695
      %v7426 = vpow.pop %v7425
      %v7427 = vmul.f32 %v7378, 1.442695
      %v7428 = vpow.pop %v7427
      %v7429 = vmul.f32 %v7379, 1.442695
      %v7430 = vpow.pop %v7429
      %v7431 = vmul.f32 %v7380, 1.442695
      %v7432 = vpow.pop %v7431
      %v7433 = vmul.f32 %v7381, 1.442695
      %v7434 = vpow.pop %v7433
      %v7435 = vmul.f32 %v7382, 1.442695
      %v7436 = vpow.pop %v7435
      %v7437 = vmul.f32 %v7383, 1.442695
      %v7438 = vpow.pop %v7437
      %v7439 = vmul.f32 %v7384, 1.442695
      %v7440 = vpow.pop %v7439
      %v7441 = vmul.f32 %v7385, 1.442695
      %v7442 = vpow.pop %v7441
      %v7443 = vmul.f32 %v7386, 1.442695
      %v7444 = vpow.pop %v7443
      %v7445 = vmul.f32 %v7387, 1.442695
      %v7446 = vpow.pop %v7445
      %v7447 = vmul.f32 %v7388, 1.442695
      %v7448 = vpow.pop %v7447
      %v7449 = vmul.f32 %v7389, 1.442695
      %v7450 = vpow.pop %v7449
      %v7451 = vmul.f32 %v7390, 1.442695
      %v7452 = vpow.pop %v7451
      %v7453 = vmul.f32 %v7391, 1.442695
      %v7454 = vpow.pop %v7453
      %v7455 = vmul.f32 %v7392, 1.442695
      %v7456 = vpow.pop %v7455
      %v7457 = vadd.f32 %v7394, 1.0
      %v7458 = vadd.f32 %v7396, 1.0
      %v7459 = vadd.f32 %v7398, 1.0
      %v7460 = vadd.f32 %v7400, 1.0
      %v7461 = vadd.f32 %v7402, 1.0
      %v7462 = vadd.f32 %v7404, 1.0
      %v7463 = vadd.f32 %v7406, 1.0
      %v7464 = vadd.f32 %v7408, 1.0
      %v7465 = vadd.f32 %v7410, 1.0
      %v7466 = vadd.f32 %v7412, 1.0
      %v7467 = vadd.f32 %v7414, 1.0
      %v7468 = vadd.f32 %v7416, 1.0
      %v7469 = vadd.f32 %v7418, 1.0
      %v7470 = vadd.f32 %v7420, 1.0
      %v7471 = vadd.f32 %v7422, 1.0
      %v7472 = vadd.f32 %v7424, 1.0
      %v7473 = vadd.f32 %v7426, 1.0
      %v7474 = vadd.f32 %v7428, 1.0
      %v7475 = vadd.f32 %v7430, 1.0
      %v7476 = vadd.f32 %v7432, 1.0
      %v7477 = vadd.f32 %v7434, 1.0
      %v7478 = vadd.f32 %v7436, 1.0
      %v7479 = vadd.f32 %v7438, 1.0
      %v7480 = vadd.f32 %v7440, 1.0
      %v7481 = vadd.f32 %v7442, 1.0
      %v7482 = vadd.f32 %v7444, 1.0
      %v7483 = vadd.f32 %v7446, 1.0
      %v7484 = vadd.f32 %v7448, 1.0
      %v7485 = vadd.f32 %v7450, 1.0
      %v7486 = vadd.f32 %v7452, 1.0
      %v7487 = vadd.f32 %v7454, 1.0
      %v7488 = vadd.f32 %v7456, 1.0
      %v7489 = vrcp.pop %v7457
      %v7490 = vmul.f32 %v7457, %v7489
      %v7491 = vsub.f32 1.0, %v7490
      %v7492 = vmul.f32 %v7489, %v7491
      %v7493 = vadd.f32 %v7489, %v7492
      %vm7494 = vweird.f32 %v7457
      %vm7495 = vweird.f32 %v7489
      %vm7496 = vmor %vm7494, %vm7495
      %v7497 = vsel %vm7496, %v7489, %v7493
      %v7498 = vand.u32 2147483647, %v7457
      %vm7499 = vcmp.eq.f32.partialorder %v7498, 8.507059e+37
      %v7500 = vand.u32 %v7457, 2147483648
      %v7501 = vor.u32 1.1754944e-38, %v7500
      %v7502 = vsel %vm7499, %v7501, %v7497
      %v7503 = vmul.f32 1.0, %v7502
      %v7504 = vrcp.pop %v7458
      %v7505 = vmul.f32 %v7458, %v7504
      %v7506 = vsub.f32 1.0, %v7505
      %v7507 = vmul.f32 %v7504, %v7506
      %v7508 = vadd.f32 %v7504, %v7507
      %vm7509 = vweird.f32 %v7458
      %vm7510 = vweird.f32 %v7504
      %vm7511 = vmor %vm7509, %vm7510
      %v7512 = vsel %vm7511, %v7504, %v7508
      %v7513 = vand.u32 2147483647, %v7458
      %vm7514 = vcmp.eq.f32.partialorder %v7513, 8.507059e+37
      %v7515 = vand.u32 %v7458, 2147483648
      %v7516 = vor.u32 1.1754944e-38, %v7515
      %v7517 = vsel %vm7514, %v7516, %v7512
      %v7518 = vmul.f32 1.0, %v7517
      %v7519 = vrcp.pop %v7459
      %v7520 = vmul.f32 %v7459, %v7519
      %v7521 = vsub.f32 1.0, %v7520
      %v7522 = vmul.f32 %v7519, %v7521
      %v7523 = vadd.f32 %v7519, %v7522
      %vm7524 = vweird.f32 %v7459
      %vm7525 = vweird.f32 %v7519
      %vm7526 = vmor %vm7524, %vm7525
      %v7527 = vsel %vm7526, %v7519, %v7523
      %v7528 = vand.u32 2147483647, %v7459
      %vm7529 = vcmp.eq.f32.partialorder %v7528, 8.507059e+37
      %v7530 = vand.u32 %v7459, 2147483648
      %v7531 = vor.u32 1.1754944e-38, %v7530
      %v7532 = vsel %vm7529, %v7531, %v7527
      %v7533 = vmul.f32 1.0, %v7532
      %v7534 = vrcp.pop %v7460
      %v7535 = vmul.f32 %v7460, %v7534
      %v7536 = vsub.f32 1.0, %v7535
      %v7537 = vmul.f32 %v7534, %v7536
      %v7538 = vadd.f32 %v7534, %v7537
      %vm7539 = vweird.f32 %v7460
      %vm7540 = vweird.f32 %v7534
      %vm7541 = vmor %vm7539, %vm7540
      %v7542 = vsel %vm7541, %v7534, %v7538
      %v7543 = vand.u32 2147483647, %v7460
      %vm7544 = vcmp.eq.f32.partialorder %v7543, 8.507059e+37
      %v7545 = vand.u32 %v7460, 2147483648
      %v7546 = vor.u32 1.1754944e-38, %v7545
      %v7547 = vsel %vm7544, %v7546, %v7542
      %v7548 = vmul.f32 1.0, %v7547
      %v7549 = vrcp.pop %v7461
      %v7550 = vmul.f32 %v7461, %v7549
      %v7551 = vsub.f32 1.0, %v7550
      %v7552 = vmul.f32 %v7549, %v7551
      %v7553 = vadd.f32 %v7549, %v7552
      %vm7554 = vweird.f32 %v7461
      %vm7555 = vweird.f32 %v7549
      %vm7556 = vmor %vm7554, %vm7555
      %v7557 = vsel %vm7556, %v7549, %v7553
      %v7558 = vand.u32 2147483647, %v7461
      %vm7559 = vcmp.eq.f32.partialorder %v7558, 8.507059e+37
      %v7560 = vand.u32 %v7461, 2147483648
      %v7561 = vor.u32 1.1754944e-38, %v7560
      %v7562 = vsel %vm7559, %v7561, %v7557
      %v7563 = vmul.f32 1.0, %v7562
      %v7564 = vrcp.pop %v7462
      %v7565 = vmul.f32 %v7462, %v7564
      %v7566 = vsub.f32 1.0, %v7565
      %v7567 = vmul.f32 %v7564, %v7566
      %v7568 = vadd.f32 %v7564, %v7567
      %vm7569 = vweird.f32 %v7462
      %vm7570 = vweird.f32 %v7564
      %vm7571 = vmor %vm7569, %vm7570
      %v7572 = vsel %vm7571, %v7564, %v7568
      %v7573 = vand.u32 2147483647, %v7462
      %vm7574 = vcmp.eq.f32.partialorder %v7573, 8.507059e+37
      %v7575 = vand.u32 %v7462, 2147483648
      %v7576 = vor.u32 1.1754944e-38, %v7575
      %v7577 = vsel %vm7574, %v7576, %v7572
      %v7578 = vmul.f32 1.0, %v7577
      %v7579 = vrcp.pop %v7463
      %v7580 = vmul.f32 %v7463, %v7579
      %v7581 = vsub.f32 1.0, %v7580
      %v7582 = vmul.f32 %v7579, %v7581
      %v7583 = vadd.f32 %v7579, %v7582
      %vm7584 = vweird.f32 %v7463
      %vm7585 = vweird.f32 %v7579
      %vm7586 = vmor %vm7584, %vm7585
      %v7587 = vsel %vm7586, %v7579, %v7583
      %v7588 = vand.u32 2147483647, %v7463
      %vm7589 = vcmp.eq.f32.partialorder %v7588, 8.507059e+37
      %v7590 = vand.u32 %v7463, 2147483648
      %v7591 = vor.u32 1.1754944e-38, %v7590
      %v7592 = vsel %vm7589, %v7591, %v7587
      %v7593 = vmul.f32 1.0, %v7592
      %v7594 = vrcp.pop %v7464
      %v7595 = vmul.f32 %v7464, %v7594
      %v7596 = vsub.f32 1.0, %v7595
      %v7597 = vmul.f32 %v7594, %v7596
      %v7598 = vadd.f32 %v7594, %v7597
      %vm7599 = vweird.f32 %v7464
      %vm7600 = vweird.f32 %v7594
      %vm7601 = vmor %vm7599, %vm7600
      %v7602 = vsel %vm7601, %v7594, %v7598
      %v7603 = vand.u32 2147483647, %v7464
      %vm7604 = vcmp.eq.f32.partialorder %v7603, 8.507059e+37
      %v7605 = vand.u32 %v7464, 2147483648
      %v7606 = vor.u32 1.1754944e-38, %v7605
      %v7607 = vsel %vm7604, %v7606, %v7602
      %v7608 = vmul.f32 1.0, %v7607
      %v7609 = vrcp.pop %v7465
      %v7610 = vmul.f32 %v7465, %v7609
      %v7611 = vsub.f32 1.0, %v7610
      %v7612 = vmul.f32 %v7609, %v7611
      %v7613 = vadd.f32 %v7609, %v7612
      %vm7614 = vweird.f32 %v7465
      %vm7615 = vweird.f32 %v7609
      %vm7616 = vmor %vm7614, %vm7615
      %v7617 = vsel %vm7616, %v7609, %v7613
      %v7618 = vand.u32 2147483647, %v7465
      %vm7619 = vcmp.eq.f32.partialorder %v7618, 8.507059e+37
      %v7620 = vand.u32 %v7465, 2147483648
      %v7621 = vor.u32 1.1754944e-38, %v7620
      %v7622 = vsel %vm7619, %v7621, %v7617
      %v7623 = vmul.f32 1.0, %v7622
      %v7624 = vrcp.pop %v7466
      %v7625 = vmul.f32 %v7466, %v7624
      %v7626 = vsub.f32 1.0, %v7625
      %v7627 = vmul.f32 %v7624, %v7626
      %v7628 = vadd.f32 %v7624, %v7627
      %vm7629 = vweird.f32 %v7466
      %vm7630 = vweird.f32 %v7624
      %vm7631 = vmor %vm7629, %vm7630
      %v7632 = vsel %vm7631, %v7624, %v7628
      %v7633 = vand.u32 2147483647, %v7466
      %vm7634 = vcmp.eq.f32.partialorder %v7633, 8.507059e+37
      %v7635 = vand.u32 %v7466, 2147483648
      %v7636 = vor.u32 1.1754944e-38, %v7635
      %v7637 = vsel %vm7634, %v7636, %v7632
      %v7638 = vmul.f32 1.0, %v7637
      %v7639 = vrcp.pop %v7467
      %v7640 = vmul.f32 %v7467, %v7639
      %v7641 = vsub.f32 1.0, %v7640
      %v7642 = vmul.f32 %v7639, %v7641
      %v7643 = vadd.f32 %v7639, %v7642
      %vm7644 = vweird.f32 %v7467
      %vm7645 = vweird.f32 %v7639
      %vm7646 = vmor %vm7644, %vm7645
      %v7647 = vsel %vm7646, %v7639, %v7643
      %v7648 = vand.u32 2147483647, %v7467
      %vm7649 = vcmp.eq.f32.partialorder %v7648, 8.507059e+37
      %v7650 = vand.u32 %v7467, 2147483648
      %v7651 = vor.u32 1.1754944e-38, %v7650
      %v7652 = vsel %vm7649, %v7651, %v7647
      %v7653 = vmul.f32 1.0, %v7652
      %v7654 = vrcp.pop %v7468
      %v7655 = vmul.f32 %v7468, %v7654
      %v7656 = vsub.f32 1.0, %v7655
      %v7657 = vmul.f32 %v7654, %v7656
      %v7658 = vadd.f32 %v7654, %v7657
      %vm7659 = vweird.f32 %v7468
      %vm7660 = vweird.f32 %v7654
      %vm7661 = vmor %vm7659, %vm7660
      %v7662 = vsel %vm7661, %v7654, %v7658
      %v7663 = vand.u32 2147483647, %v7468
      %vm7664 = vcmp.eq.f32.partialorder %v7663, 8.507059e+37
      %v7665 = vand.u32 %v7468, 2147483648
      %v7666 = vor.u32 1.1754944e-38, %v7665
      %v7667 = vsel %vm7664, %v7666, %v7662
      %v7668 = vmul.f32 1.0, %v7667
      %v7669 = vrcp.pop %v7469
      %v7670 = vmul.f32 %v7469, %v7669
      %v7671 = vsub.f32 1.0, %v7670
      %v7672 = vmul.f32 %v7669, %v7671
      %v7673 = vadd.f32 %v7669, %v7672
      %vm7674 = vweird.f32 %v7469
      %vm7675 = vweird.f32 %v7669
      %vm7676 = vmor %vm7674, %vm7675
      %v7677 = vsel %vm7676, %v7669, %v7673
      %v7678 = vand.u32 2147483647, %v7469
      %vm7679 = vcmp.eq.f32.partialorder %v7678, 8.507059e+37
      %v7680 = vand.u32 %v7469, 2147483648
      %v7681 = vor.u32 1.1754944e-38, %v7680
      %v7682 = vsel %vm7679, %v7681, %v7677
      %v7683 = vmul.f32 1.0, %v7682
      %v7684 = vrcp.pop %v7470
      %v7685 = vmul.f32 %v7470, %v7684
      %v7686 = vsub.f32 1.0, %v7685
      %v7687 = vmul.f32 %v7684, %v7686
      %v7688 = vadd.f32 %v7684, %v7687
      %vm7689 = vweird.f32 %v7470
      %vm7690 = vweird.f32 %v7684
      %vm7691 = vmor %vm7689, %vm7690
      %v7692 = vsel %vm7691, %v7684, %v7688
      %v7693 = vand.u32 2147483647, %v7470
      %vm7694 = vcmp.eq.f32.partialorder %v7693, 8.507059e+37
      %v7695 = vand.u32 %v7470, 2147483648
      %v7696 = vor.u32 1.1754944e-38, %v7695
      %v7697 = vsel %vm7694, %v7696, %v7692
      %v7698 = vmul.f32 1.0, %v7697
      %v7699 = vrcp.pop %v7471
      %v7700 = vmul.f32 %v7471, %v7699
      %v7701 = vsub.f32 1.0, %v7700
      %v7702 = vmul.f32 %v7699, %v7701
      %v7703 = vadd.f32 %v7699, %v7702
      %vm7704 = vweird.f32 %v7471
      %vm7705 = vweird.f32 %v7699
      %vm7706 = vmor %vm7704, %vm7705
      %v7707 = vsel %vm7706, %v7699, %v7703
      %v7708 = vand.u32 2147483647, %v7471
      %vm7709 = vcmp.eq.f32.partialorder %v7708, 8.507059e+37
      %v7710 = vand.u32 %v7471, 2147483648
      %v7711 = vor.u32 1.1754944e-38, %v7710
      %v7712 = vsel %vm7709, %v7711, %v7707
      %v7713 = vmul.f32 1.0, %v7712
      %v7714 = vrcp.pop %v7472
      %v7715 = vmul.f32 %v7472, %v7714
      %v7716 = vsub.f32 1.0, %v7715
      %v7717 = vmul.f32 %v7714, %v7716
      %v7718 = vadd.f32 %v7714, %v7717
      %vm7719 = vweird.f32 %v7472
      %vm7720 = vweird.f32 %v7714
      %vm7721 = vmor %vm7719, %vm7720
      %v7722 = vsel %vm7721, %v7714, %v7718
      %v7723 = vand.u32 2147483647, %v7472
      %vm7724 = vcmp.eq.f32.partialorder %v7723, 8.507059e+37
      %v7725 = vand.u32 %v7472, 2147483648
      %v7726 = vor.u32 1.1754944e-38, %v7725
      %v7727 = vsel %vm7724, %v7726, %v7722
      %v7728 = vmul.f32 1.0, %v7727
      %v7729 = vrcp.pop %v7473
      %v7730 = vmul.f32 %v7473, %v7729
      %v7731 = vsub.f32 1.0, %v7730
      %v7732 = vmul.f32 %v7729, %v7731
      %v7733 = vadd.f32 %v7729, %v7732
      %vm7734 = vweird.f32 %v7473
      %vm7735 = vweird.f32 %v7729
      %vm7736 = vmor %vm7734, %vm7735
      %v7737 = vsel %vm7736, %v7729, %v7733
      %v7738 = vand.u32 2147483647, %v7473
      %vm7739 = vcmp.eq.f32.partialorder %v7738, 8.507059e+37
      %v7740 = vand.u32 %v7473, 2147483648
      %v7741 = vor.u32 1.1754944e-38, %v7740
      %v7742 = vsel %vm7739, %v7741, %v7737
      %v7743 = vmul.f32 1.0, %v7742
      %v7744 = vrcp.pop %v7474
      %v7745 = vmul.f32 %v7474, %v7744
      %v7746 = vsub.f32 1.0, %v7745
      %v7747 = vmul.f32 %v7744, %v7746
      %v7748 = vadd.f32 %v7744, %v7747
      %vm7749 = vweird.f32 %v7474
      %vm7750 = vweird.f32 %v7744
      %vm7751 = vmor %vm7749, %vm7750
      %v7752 = vsel %vm7751, %v7744, %v7748
      %v7753 = vand.u32 2147483647, %v7474
      %vm7754 = vcmp.eq.f32.partialorder %v7753, 8.507059e+37
      %v7755 = vand.u32 %v7474, 2147483648
      %v7756 = vor.u32 1.1754944e-38, %v7755
      %v7757 = vsel %vm7754, %v7756, %v7752
      %v7758 = vmul.f32 1.0, %v7757
      %v7759 = vrcp.pop %v7475
      %v7760 = vmul.f32 %v7475, %v7759
      %v7761 = vsub.f32 1.0, %v7760
      %v7762 = vmul.f32 %v7759, %v7761
      %v7763 = vadd.f32 %v7759, %v7762
      %vm7764 = vweird.f32 %v7475
      %vm7765 = vweird.f32 %v7759
      %vm7766 = vmor %vm7764, %vm7765
      %v7767 = vsel %vm7766, %v7759, %v7763
      %v7768 = vand.u32 2147483647, %v7475
      %vm7769 = vcmp.eq.f32.partialorder %v7768, 8.507059e+37
      %v7770 = vand.u32 %v7475, 2147483648
      %v7771 = vor.u32 1.1754944e-38, %v7770
      %v7772 = vsel %vm7769, %v7771, %v7767
      %v7773 = vmul.f32 1.0, %v7772
      %v7774 = vrcp.pop %v7476
      %v7775 = vmul.f32 %v7476, %v7774
      %v7776 = vsub.f32 1.0, %v7775
      %v7777 = vmul.f32 %v7774, %v7776
      %v7778 = vadd.f32 %v7774, %v7777
      %vm7779 = vweird.f32 %v7476
      %vm7780 = vweird.f32 %v7774
      %vm7781 = vmor %vm7779, %vm7780
      %v7782 = vsel %vm7781, %v7774, %v7778
      %v7783 = vand.u32 2147483647, %v7476
      %vm7784 = vcmp.eq.f32.partialorder %v7783, 8.507059e+37
      %v7785 = vand.u32 %v7476, 2147483648
      %v7786 = vor.u32 1.1754944e-38, %v7785
      %v7787 = vsel %vm7784, %v7786, %v7782
      %v7788 = vmul.f32 1.0, %v7787
      %v7789 = vrcp.pop %v7477
      %v7790 = vmul.f32 %v7477, %v7789
      %v7791 = vsub.f32 1.0, %v7790
      %v7792 = vmul.f32 %v7789, %v7791
      %v7793 = vadd.f32 %v7789, %v7792
      %vm7794 = vweird.f32 %v7477
      %vm7795 = vweird.f32 %v7789
      %vm7796 = vmor %vm7794, %vm7795
      %v7797 = vsel %vm7796, %v7789, %v7793
      %v7798 = vand.u32 2147483647, %v7477
      %vm7799 = vcmp.eq.f32.partialorder %v7798, 8.507059e+37
      %v7800 = vand.u32 %v7477, 2147483648
      %v7801 = vor.u32 1.1754944e-38, %v7800
      %v7802 = vsel %vm7799, %v7801, %v7797
      %v7803 = vmul.f32 1.0, %v7802
      %v7804 = vrcp.pop %v7478
      %v7805 = vmul.f32 %v7478, %v7804
      %v7806 = vsub.f32 1.0, %v7805
      %v7807 = vmul.f32 %v7804, %v7806
      %v7808 = vadd.f32 %v7804, %v7807
      %vm7809 = vweird.f32 %v7478
      %vm7810 = vweird.f32 %v7804
      %vm7811 = vmor %vm7809, %vm7810
      %v7812 = vsel %vm7811, %v7804, %v7808
      %v7813 = vand.u32 2147483647, %v7478
      %vm7814 = vcmp.eq.f32.partialorder %v7813, 8.507059e+37
      %v7815 = vand.u32 %v7478, 2147483648
      %v7816 = vor.u32 1.1754944e-38, %v7815
      %v7817 = vsel %vm7814, %v7816, %v7812
      %v7818 = vmul.f32 1.0, %v7817
      %v7819 = vrcp.pop %v7479
      %v7820 = vmul.f32 %v7479, %v7819
      %v7821 = vsub.f32 1.0, %v7820
      %v7822 = vmul.f32 %v7819, %v7821
      %v7823 = vadd.f32 %v7819, %v7822
      %vm7824 = vweird.f32 %v7479
      %vm7825 = vweird.f32 %v7819
      %vm7826 = vmor %vm7824, %vm7825
      %v7827 = vsel %vm7826, %v7819, %v7823
      %v7828 = vand.u32 2147483647, %v7479
      %vm7829 = vcmp.eq.f32.partialorder %v7828, 8.507059e+37
      %v7830 = vand.u32 %v7479, 2147483648
      %v7831 = vor.u32 1.1754944e-38, %v7830
      %v7832 = vsel %vm7829, %v7831, %v7827
      %v7833 = vmul.f32 1.0, %v7832
      %v7834 = vrcp.pop %v7480
      %v7835 = vmul.f32 %v7480, %v7834
      %v7836 = vsub.f32 1.0, %v7835
      %v7837 = vmul.f32 %v7834, %v7836
      %v7838 = vadd.f32 %v7834, %v7837
      %vm7839 = vweird.f32 %v7480
      %vm7840 = vweird.f32 %v7834
      %vm7841 = vmor %vm7839, %vm7840
      %v7842 = vsel %vm7841, %v7834, %v7838
      %v7843 = vand.u32 2147483647, %v7480
      %vm7844 = vcmp.eq.f32.partialorder %v7843, 8.507059e+37
      %v7845 = vand.u32 %v7480, 2147483648
      %v7846 = vor.u32 1.1754944e-38, %v7845
      %v7847 = vsel %vm7844, %v7846, %v7842
      %v7848 = vmul.f32 1.0, %v7847
      %v7849 = vrcp.pop %v7481
      %v7850 = vmul.f32 %v7481, %v7849
      %v7851 = vsub.f32 1.0, %v7850
      %v7852 = vmul.f32 %v7849, %v7851
      %v7853 = vadd.f32 %v7849, %v7852
      %vm7854 = vweird.f32 %v7481
      %vm7855 = vweird.f32 %v7849
      %vm7856 = vmor %vm7854, %vm7855
      %v7857 = vsel %vm7856, %v7849, %v7853
      %v7858 = vand.u32 2147483647, %v7481
      %vm7859 = vcmp.eq.f32.partialorder %v7858, 8.507059e+37
      %v7860 = vand.u32 %v7481, 2147483648
      %v7861 = vor.u32 1.1754944e-38, %v7860
      %v7862 = vsel %vm7859, %v7861, %v7857
      %v7863 = vmul.f32 1.0, %v7862
      %v7864 = vrcp.pop %v7482
      %v7865 = vmul.f32 %v7482, %v7864
      %v7866 = vsub.f32 1.0, %v7865
      %v7867 = vmul.f32 %v7864, %v7866
      %v7868 = vadd.f32 %v7864, %v7867
      %vm7869 = vweird.f32 %v7482
      %vm7870 = vweird.f32 %v7864
      %vm7871 = vmor %vm7869, %vm7870
      %v7872 = vsel %vm7871, %v7864, %v7868
      %v7873 = vand.u32 2147483647, %v7482
      %vm7874 = vcmp.eq.f32.partialorder %v7873, 8.507059e+37
      %v7875 = vand.u32 %v7482, 2147483648
      %v7876 = vor.u32 1.1754944e-38, %v7875
      %v7877 = vsel %vm7874, %v7876, %v7872
      %v7878 = vmul.f32 1.0, %v7877
      %v7879 = vrcp.pop %v7483
      %v7880 = vmul.f32 %v7483, %v7879
      %v7881 = vsub.f32 1.0, %v7880
      %v7882 = vmul.f32 %v7879, %v7881
      %v7883 = vadd.f32 %v7879, %v7882
      %vm7884 = vweird.f32 %v7483
      %vm7885 = vweird.f32 %v7879
      %vm7886 = vmor %vm7884, %vm7885
      %v7887 = vsel %vm7886, %v7879, %v7883
      %v7888 = vand.u32 2147483647, %v7483
      %vm7889 = vcmp.eq.f32.partialorder %v7888, 8.507059e+37
      %v7890 = vand.u32 %v7483, 2147483648
      %v7891 = vor.u32 1.1754944e-38, %v7890
      %v7892 = vsel %vm7889, %v7891, %v7887
      %v7893 = vmul.f32 1.0, %v7892
      %v7894 = vrcp.pop %v7484
      %v7895 = vmul.f32 %v7484, %v7894
      %v7896 = vsub.f32 1.0, %v7895
      %v7897 = vmul.f32 %v7894, %v7896
      %v7898 = vadd.f32 %v7894, %v7897
      %vm7899 = vweird.f32 %v7484
      %vm7900 = vweird.f32 %v7894
      %vm7901 = vmor %vm7899, %vm7900
      %v7902 = vsel %vm7901, %v7894, %v7898
      %v7903 = vand.u32 2147483647, %v7484
      %vm7904 = vcmp.eq.f32.partialorder %v7903, 8.507059e+37
      %v7905 = vand.u32 %v7484, 2147483648
      %v7906 = vor.u32 1.1754944e-38, %v7905
      %v7907 = vsel %vm7904, %v7906, %v7902
      %v7908 = vmul.f32 1.0, %v7907
      %v7909 = vrcp.pop %v7485
      %v7910 = vmul.f32 %v7485, %v7909
      %v7911 = vsub.f32 1.0, %v7910
      %v7912 = vmul.f32 %v7909, %v7911
      %v7913 = vadd.f32 %v7909, %v7912
      %vm7914 = vweird.f32 %v7485
      %vm7915 = vweird.f32 %v7909
      %vm7916 = vmor %vm7914, %vm7915
      %v7917 = vsel %vm7916, %v7909, %v7913
      %v7918 = vand.u32 2147483647, %v7485
      %vm7919 = vcmp.eq.f32.partialorder %v7918, 8.507059e+37
      %v7920 = vand.u32 %v7485, 2147483648
      %v7921 = vor.u32 1.1754944e-38, %v7920
      %v7922 = vsel %vm7919, %v7921, %v7917
      %v7923 = vmul.f32 1.0, %v7922
      %v7924 = vrcp.pop %v7486
      %v7925 = vmul.f32 %v7486, %v7924
      %v7926 = vsub.f32 1.0, %v7925
      %v7927 = vmul.f32 %v7924, %v7926
      %v7928 = vadd.f32 %v7924, %v7927
      %vm7929 = vweird.f32 %v7486
      %vm7930 = vweird.f32 %v7924
      %vm7931 = vmor %vm7929, %vm7930
      %v7932 = vsel %vm7931, %v7924, %v7928
      %v7933 = vand.u32 2147483647, %v7486
      %vm7934 = vcmp.eq.f32.partialorder %v7933, 8.507059e+37
      %v7935 = vand.u32 %v7486, 2147483648
      %v7936 = vor.u32 1.1754944e-38, %v7935
      %v7937 = vsel %vm7934, %v7936, %v7932
      %v7938 = vmul.f32 1.0, %v7937
      %v7939 = vrcp.pop %v7487
      %v7940 = vmul.f32 %v7487, %v7939
      %v7941 = vsub.f32 1.0, %v7940
      %v7942 = vmul.f32 %v7939, %v7941
      %v7943 = vadd.f32 %v7939, %v7942
      %vm7944 = vweird.f32 %v7487
      %vm7945 = vweird.f32 %v7939
      %vm7946 = vmor %vm7944, %vm7945
      %v7947 = vsel %vm7946, %v7939, %v7943
      %v7948 = vand.u32 2147483647, %v7487
      %vm7949 = vcmp.eq.f32.partialorder %v7948, 8.507059e+37
      %v7950 = vand.u32 %v7487, 2147483648
      %v7951 = vor.u32 1.1754944e-38, %v7950
      %v7952 = vsel %vm7949, %v7951, %v7947
      %v7953 = vmul.f32 1.0, %v7952
      %v7954 = vrcp.pop %v7488
      %v7955 = vmul.f32 %v7488, %v7954
      %v7956 = vsub.f32 1.0, %v7955
      %v7957 = vmul.f32 %v7954, %v7956
      %v7958 = vadd.f32 %v7954, %v7957
      %vm7959 = vweird.f32 %v7488
      %vm7960 = vweird.f32 %v7954
      %vm7961 = vmor %vm7959, %vm7960
      %v7962 = vsel %vm7961, %v7954, %v7958
      %v7963 = vand.u32 2147483647, %v7488
      %vm7964 = vcmp.eq.f32.partialorder %v7963, 8.507059e+37
      %v7965 = vand.u32 %v7488, 2147483648
      %v7966 = vor.u32 1.1754944e-38, %v7965
      %v7967 = vsel %vm7964, %v7966, %v7962
      %v7968 = vmul.f32 1.0, %v7967
      %v7969 = vld [vmem:[%s7] sm:$0xff]
      %v7970 = vld [vmem:[%s7 + $0x8] sm:$0xff]
      %v7971 = vld [vmem:[%s7 + $0x10] sm:$0xff]
      %v7972 = vld [vmem:[%s7 + $0x18] sm:$0xff]
      %v7973 = vld [vmem:[%s7 + $0x20] sm:$0xff]
      %v7974 = vld [vmem:[%s7 + $0x28] sm:$0xff]
      %v7975 = vld [vmem:[%s7 + $0x30] sm:$0xff]
      %v7976 = vld [vmem:[%s7 + $0x38] sm:$0xff]
      %v7977 = vld [vmem:[%s7 + $0x40] sm:$0xff]
      %v7978 = vld [vmem:[%s7 + $0x48] sm:$0xff]
      %v7979 = vld [vmem:[%s7 + $0x50] sm:$0xff]
      %v7980 = vld [vmem:[%s7 + $0x58] sm:$0xff]
      %v7981 = vld [vmem:[%s7 + $0x60] sm:$0xff]
      %v7982 = vld [vmem:[%s7 + $0x68] sm:$0xff]
      %v7983 = vld [vmem:[%s7 + $0x70] sm:$0xff]
      %v7984 = vld [vmem:[%s7 + $0x78] sm:$0xff]
      %v7985 = vld [vmem:[%s7 + $0x80] sm:$0xff]
      %v7986 = vld [vmem:[%s7 + $0x88] sm:$0xff]
      %v7987 = vld [vmem:[%s7 + $0x90] sm:$0xff]
      %v7988 = vld [vmem:[%s7 + $0x98] sm:$0xff]
      %v7989 = vld [vmem:[%s7 + $0xa0] sm:$0xff]
      %v7990 = vld [vmem:[%s7 + $0xa8] sm:$0xff]
      %v7991 = vld [vmem:[%s7 + $0xb0] sm:$0xff]
      %v7992 = vld [vmem:[%s7 + $0xb8] sm:$0xff]
      %v7993 = vld [vmem:[%s7 + $0xc0] sm:$0xff]
      %v7994 = vld [vmem:[%s7 + $0xc8] sm:$0xff]
      %v7995 = vld [vmem:[%s7 + $0xd0] sm:$0xff]
      %v7996 = vld [vmem:[%s7 + $0xd8] sm:$0xff]
      %v7997 = vld [vmem:[%s7 + $0xe0] sm:$0xff]
      %v7998 = vld [vmem:[%s7 + $0xe8] sm:$0xff]
      %v7999 = vld [vmem:[%s7 + $0xf0] sm:$0xff]
      %v8000 = vld [vmem:[%s7 + $0xf8] sm:$0xff]
      %v8001 = vld [vmem:[%s7 + $0x100] sm:$0xff]
      %v8002 = vld [vmem:[%s7 + $0x108] sm:$0xff]
      %v8003 = vld [vmem:[%s7 + $0x110] sm:$0xff]
      %v8004 = vld [vmem:[%s7 + $0x118] sm:$0xff]
      %v8005 = vld [vmem:[%s7 + $0x120] sm:$0xff]
      %v8006 = vld [vmem:[%s7 + $0x128] sm:$0xff]
      %v8007 = vld [vmem:[%s7 + $0x130] sm:$0xff]
      %v8008 = vld [vmem:[%s7 + $0x138] sm:$0xff]
      %v8009 = vld [vmem:[%s7 + $0x140] sm:$0xff]
      %v8010 = vld [vmem:[%s7 + $0x148] sm:$0xff]
      %v8011 = vld [vmem:[%s7 + $0x150] sm:$0xff]
      %v8012 = vld [vmem:[%s7 + $0x158] sm:$0xff]
      %v8013 = vld [vmem:[%s7 + $0x160] sm:$0xff]
      %v8014 = vld [vmem:[%s7 + $0x168] sm:$0xff]
      %v8015 = vld [vmem:[%s7 + $0x170] sm:$0xff]
      %v8016 = vld [vmem:[%s7 + $0x178] sm:$0xff]
      %v8017 = vld [vmem:[%s7 + $0x180] sm:$0xff]
      %v8018 = vld [vmem:[%s7 + $0x188] sm:$0xff]
      %v8019 = vld [vmem:[%s7 + $0x190] sm:$0xff]
      %v8020 = vld [vmem:[%s7 + $0x198] sm:$0xff]
      %v8021 = vld [vmem:[%s7 + $0x1a0] sm:$0xff]
      %v8022 = vld [vmem:[%s7 + $0x1a8] sm:$0xff]
      %v8023 = vld [vmem:[%s7 + $0x1b0] sm:$0xff]
      %v8024 = vld [vmem:[%s7 + $0x1b8] sm:$0xff]
      %v8025 = vld [vmem:[%s7 + $0x1c0] sm:$0xff]
      %v8026 = vld [vmem:[%s7 + $0x1c8] sm:$0xff]
      %v8027 = vld [vmem:[%s7 + $0x1d0] sm:$0xff]
      %v8028 = vld [vmem:[%s7 + $0x1d8] sm:$0xff]
      %v8029 = vld [vmem:[%s7 + $0x1e0] sm:$0xff]
      %v8030 = vld [vmem:[%s7 + $0x1e8] sm:$0xff]
      %v8031 = vld [vmem:[%s7 + $0x1f0] sm:$0xff]
      %v8032 = vld [vmem:[%s7 + $0x1f8] sm:$0xff]
      %v8033 = vld [vmem:[%s7 + $0x200] sm:$0xff]
      %v8034 = vld [vmem:[%s7 + $0x208] sm:$0xff]
      %v8035 = vld [vmem:[%s7 + $0x210] sm:$0xff]
      %v8036 = vld [vmem:[%s7 + $0x218] sm:$0xff]
      %v8037 = vld [vmem:[%s7 + $0x220] sm:$0xff]
      %v8038 = vld [vmem:[%s7 + $0x228] sm:$0xff]
      %v8039 = vld [vmem:[%s7 + $0x230] sm:$0xff]
      %v8040 = vld [vmem:[%s7 + $0x238] sm:$0xff]
      %v8041 = vld [vmem:[%s7 + $0x240] sm:$0xff]
      %v8042 = vld [vmem:[%s7 + $0x248] sm:$0xff]
      %v8043 = vld [vmem:[%s7 + $0x250] sm:$0xff]
      %v8044 = vld [vmem:[%s7 + $0x258] sm:$0xff]
      %v8045 = vld [vmem:[%s7 + $0x260] sm:$0xff]
      %v8046 = vld [vmem:[%s7 + $0x268] sm:$0xff]
      %v8047 = vld [vmem:[%s7 + $0x270] sm:$0xff]
      %v8048 = vld [vmem:[%s7 + $0x278] sm:$0xff]
      %v8049 = vld [vmem:[%s7 + $0x280] sm:$0xff]
      %v8050 = vld [vmem:[%s7 + $0x288] sm:$0xff]
      %v8051 = vld [vmem:[%s7 + $0x290] sm:$0xff]
      %v8052 = vld [vmem:[%s7 + $0x298] sm:$0xff]
      %v8053 = vld [vmem:[%s7 + $0x2a0] sm:$0xff]
      %v8054 = vld [vmem:[%s7 + $0x2a8] sm:$0xff]
      %v8055 = vld [vmem:[%s7 + $0x2b0] sm:$0xff]
      %v8056 = vld [vmem:[%s7 + $0x2b8] sm:$0xff]
      %v8057 = vld [vmem:[%s7 + $0x2c0] sm:$0xff]
      %v8058 = vld [vmem:[%s7 + $0x2c8] sm:$0xff]
      %v8059 = vld [vmem:[%s7 + $0x2d0] sm:$0xff]
      %v8060 = vld [vmem:[%s7 + $0x2d8] sm:$0xff]
      %v8061 = vld [vmem:[%s7 + $0x2e0] sm:$0xff]
      %v8062 = vld [vmem:[%s7 + $0x2e8] sm:$0xff]
      %v8063 = vld [vmem:[%s7 + $0x2f0] sm:$0xff]
      %v8064 = vld [vmem:[%s7 + $0x2f8] sm:$0xff]
      %v8065 = vld [vmem:[%s7 + $0x300] sm:$0xff]
      %v8066 = vld [vmem:[%s7 + $0x308] sm:$0xff]
      %v8067 = vld [vmem:[%s7 + $0x310] sm:$0xff]
      %v8068 = vld [vmem:[%s7 + $0x318] sm:$0xff]
      %v8069 = vld [vmem:[%s7 + $0x320] sm:$0xff]
      %v8070 = vld [vmem:[%s7 + $0x328] sm:$0xff]
      %v8071 = vld [vmem:[%s7 + $0x330] sm:$0xff]
      %v8072 = vld [vmem:[%s7 + $0x338] sm:$0xff]
      %v8073 = vld [vmem:[%s7 + $0x340] sm:$0xff]
      %v8074 = vld [vmem:[%s7 + $0x348] sm:$0xff]
      %v8075 = vld [vmem:[%s7 + $0x350] sm:$0xff]
      %v8076 = vld [vmem:[%s7 + $0x358] sm:$0xff]
      %v8077 = vld [vmem:[%s7 + $0x360] sm:$0xff]
      %v8078 = vld [vmem:[%s7 + $0x368] sm:$0xff]
      %v8079 = vld [vmem:[%s7 + $0x370] sm:$0xff]
      %v8080 = vld [vmem:[%s7 + $0x378] sm:$0xff]
      %v8081 = vld [vmem:[%s7 + $0x380] sm:$0xff]
      %v8082 = vld [vmem:[%s7 + $0x388] sm:$0xff]
      %v8083 = vld [vmem:[%s7 + $0x390] sm:$0xff]
      %v8084 = vld [vmem:[%s7 + $0x398] sm:$0xff]
      %v8085 = vld [vmem:[%s7 + $0x3a0] sm:$0xff]
      %v8086 = vld [vmem:[%s7 + $0x3a8] sm:$0xff]
      %v8087 = vld [vmem:[%s7 + $0x3b0] sm:$0xff]
      %v8088 = vld [vmem:[%s7 + $0x3b8] sm:$0xff]
      %v8089 = vld [vmem:[%s7 + $0x3c0] sm:$0xff]
      %v8090 = vld [vmem:[%s7 + $0x3c8] sm:$0xff]
      %v8091 = vld [vmem:[%s7 + $0x3d0] sm:$0xff]
      %v8092 = vld [vmem:[%s7 + $0x3d8] sm:$0xff]
      %v8093 = vld [vmem:[%s7 + $0x3e0] sm:$0xff]
      %v8094 = vld [vmem:[%s7 + $0x3e8] sm:$0xff]
      %v8095 = vld [vmem:[%s7 + $0x3f0] sm:$0xff]
      %v8096 = vld [vmem:[%s7 + $0x3f8] sm:$0xff]
      %v8097 = vld [vmem:[%s7 + $0x400] sm:$0xff]
      %v8098 = vld [vmem:[%s7 + $0x408] sm:$0xff]
      %v8099 = vld [vmem:[%s7 + $0x410] sm:$0xff]
      %v8100 = vld [vmem:[%s7 + $0x418] sm:$0xff]
      %v8101 = vld [vmem:[%s7 + $0x420] sm:$0xff]
      %v8102 = vld [vmem:[%s7 + $0x428] sm:$0xff]
      %v8103 = vld [vmem:[%s7 + $0x430] sm:$0xff]
      %v8104 = vld [vmem:[%s7 + $0x438] sm:$0xff]
      %v8105 = vld [vmem:[%s7 + $0x440] sm:$0xff]
      %v8106 = vld [vmem:[%s7 + $0x448] sm:$0xff]
      %v8107 = vld [vmem:[%s7 + $0x450] sm:$0xff]
      %v8108 = vld [vmem:[%s7 + $0x458] sm:$0xff]
      %v8109 = vld [vmem:[%s7 + $0x460] sm:$0xff]
      %v8110 = vld [vmem:[%s7 + $0x468] sm:$0xff]
      %v8111 = vld [vmem:[%s7 + $0x470] sm:$0xff]
      %v8112 = vld [vmem:[%s7 + $0x478] sm:$0xff]
      %v8113 = vld [vmem:[%s7 + $0x480] sm:$0xff]
      %v8114 = vld [vmem:[%s7 + $0x488] sm:$0xff]
      %v8115 = vld [vmem:[%s7 + $0x490] sm:$0xff]
      %v8116 = vld [vmem:[%s7 + $0x498] sm:$0xff]
      %v8117 = vld [vmem:[%s7 + $0x4a0] sm:$0xff]
      %v8118 = vld [vmem:[%s7 + $0x4a8] sm:$0xff]
      %v8119 = vld [vmem:[%s7 + $0x4b0] sm:$0xff]
      %v8120 = vld [vmem:[%s7 + $0x4b8] sm:$0xff]
      %v8121 = vld [vmem:[%s7 + $0x4c0] sm:$0xff]
      %v8122 = vld [vmem:[%s7 + $0x4c8] sm:$0xff]
      %v8123 = vld [vmem:[%s7 + $0x4d0] sm:$0xff]
      %v8124 = vld [vmem:[%s7 + $0x4d8] sm:$0xff]
      %v8125 = vld [vmem:[%s7 + $0x4e0] sm:$0xff]
      %v8126 = vld [vmem:[%s7 + $0x4e8] sm:$0xff]
      %v8127 = vld [vmem:[%s7 + $0x4f0] sm:$0xff]
      %v8128 = vld [vmem:[%s7 + $0x4f8] sm:$0xff]
      %v8129 = vld [vmem:[%s7 + $0x500] sm:$0xff]
      %v8130 = vld [vmem:[%s7 + $0x508] sm:$0xff]
      %v8131 = vld [vmem:[%s7 + $0x510] sm:$0xff]
      %v8132 = vld [vmem:[%s7 + $0x518] sm:$0xff]
      %v8133 = vld [vmem:[%s7 + $0x520] sm:$0xff]
      %v8134 = vld [vmem:[%s7 + $0x528] sm:$0xff]
      %v8135 = vld [vmem:[%s7 + $0x530] sm:$0xff]
      %v8136 = vld [vmem:[%s7 + $0x538] sm:$0xff]
      %v8137 = vld [vmem:[%s7 + $0x540] sm:$0xff]
      %v8138 = vld [vmem:[%s7 + $0x548] sm:$0xff]
      %v8139 = vld [vmem:[%s7 + $0x550] sm:$0xff]
      %v8140 = vld [vmem:[%s7 + $0x558] sm:$0xff]
      %v8141 = vld [vmem:[%s7 + $0x560] sm:$0xff]
      %v8142 = vld [vmem:[%s7 + $0x568] sm:$0xff]
      %v8143 = vld [vmem:[%s7 + $0x570] sm:$0xff]
      %v8144 = vld [vmem:[%s7 + $0x578] sm:$0xff]
      %v8145 = vld [vmem:[%s7 + $0x580] sm:$0xff]
      %v8146 = vld [vmem:[%s7 + $0x588] sm:$0xff]
      %v8147 = vld [vmem:[%s7 + $0x590] sm:$0xff]
      %v8148 = vld [vmem:[%s7 + $0x598] sm:$0xff]
      %v8149 = vld [vmem:[%s7 + $0x5a0] sm:$0xff]
      %v8150 = vld [vmem:[%s7 + $0x5a8] sm:$0xff]
      %v8151 = vld [vmem:[%s7 + $0x5b0] sm:$0xff]
      %v8152 = vld [vmem:[%s7 + $0x5b8] sm:$0xff]
      %v8153 = vld [vmem:[%s7 + $0x5c0] sm:$0xff]
      %v8154 = vld [vmem:[%s7 + $0x5c8] sm:$0xff]
      %v8155 = vld [vmem:[%s7 + $0x5d0] sm:$0xff]
      %v8156 = vld [vmem:[%s7 + $0x5d8] sm:$0xff]
      %v8157 = vld [vmem:[%s7 + $0x5e0] sm:$0xff]
      %v8158 = vld [vmem:[%s7 + $0x5e8] sm:$0xff]
      %v8159 = vld [vmem:[%s7 + $0x5f0] sm:$0xff]
      %v8160 = vld [vmem:[%s7 + $0x5f8] sm:$0xff]
      %v8161 = vld [vmem:[%s7 + $0x600] sm:$0xff]
      %v8162 = vld [vmem:[%s7 + $0x608] sm:$0xff]
      %v8163 = vld [vmem:[%s7 + $0x610] sm:$0xff]
      %v8164 = vld [vmem:[%s7 + $0x618] sm:$0xff]
      %v8165 = vld [vmem:[%s7 + $0x620] sm:$0xff]
      %v8166 = vld [vmem:[%s7 + $0x628] sm:$0xff]
      %v8167 = vld [vmem:[%s7 + $0x630] sm:$0xff]
      %v8168 = vld [vmem:[%s7 + $0x638] sm:$0xff]
      %v8169 = vld [vmem:[%s7 + $0x640] sm:$0xff]
      %v8170 = vld [vmem:[%s7 + $0x648] sm:$0xff]
      %v8171 = vld [vmem:[%s7 + $0x650] sm:$0xff]
      %v8172 = vld [vmem:[%s7 + $0x658] sm:$0xff]
      %v8173 = vld [vmem:[%s7 + $0x660] sm:$0xff]
      %v8174 = vld [vmem:[%s7 + $0x668] sm:$0xff]
      %v8175 = vld [vmem:[%s7 + $0x670] sm:$0xff]
      %v8176 = vld [vmem:[%s7 + $0x678] sm:$0xff]
      %v8177 = vld [vmem:[%s7 + $0x680] sm:$0xff]
      %v8178 = vld [vmem:[%s7 + $0x688] sm:$0xff]
      %v8179 = vld [vmem:[%s7 + $0x690] sm:$0xff]
      %v8180 = vld [vmem:[%s7 + $0x698] sm:$0xff]
      %v8181 = vld [vmem:[%s7 + $0x6a0] sm:$0xff]
      %v8182 = vld [vmem:[%s7 + $0x6a8] sm:$0xff]
      %v8183 = vld [vmem:[%s7 + $0x6b0] sm:$0xff]
      %v8184 = vld [vmem:[%s7 + $0x6b8] sm:$0xff]
      %v8185 = vld [vmem:[%s7 + $0x6c0] sm:$0xff]
      %v8186 = vld [vmem:[%s7 + $0x6c8] sm:$0xff]
      %v8187 = vld [vmem:[%s7 + $0x6d0] sm:$0xff]
      %v8188 = vld [vmem:[%s7 + $0x6d8] sm:$0xff]
      %v8189 = vld [vmem:[%s7 + $0x6e0] sm:$0xff]
      %v8190 = vld [vmem:[%s7 + $0x6e8] sm:$0xff]
      %v8191 = vld [vmem:[%s7 + $0x6f0] sm:$0xff]
      %v8192 = vld [vmem:[%s7 + $0x6f8] sm:$0xff]
      %v8193 = vld [vmem:[%s7 + $0x700] sm:$0xff]
      %v8194 = vld [vmem:[%s7 + $0x708] sm:$0xff]
      %v8195 = vld [vmem:[%s7 + $0x710] sm:$0xff]
      %v8196 = vld [vmem:[%s7 + $0x718] sm:$0xff]
      %v8197 = vld [vmem:[%s7 + $0x720] sm:$0xff]
      %v8198 = vld [vmem:[%s7 + $0x728] sm:$0xff]
      %v8199 = vld [vmem:[%s7 + $0x730] sm:$0xff]
      %v8200 = vld [vmem:[%s7 + $0x738] sm:$0xff]
      %v8201 = vld [vmem:[%s7 + $0x740] sm:$0xff]
      %v8202 = vld [vmem:[%s7 + $0x748] sm:$0xff]
      %v8203 = vld [vmem:[%s7 + $0x750] sm:$0xff]
      %v8204 = vld [vmem:[%s7 + $0x758] sm:$0xff]
      %v8205 = vld [vmem:[%s7 + $0x760] sm:$0xff]
      %v8206 = vld [vmem:[%s7 + $0x768] sm:$0xff]
      %v8207 = vld [vmem:[%s7 + $0x770] sm:$0xff]
      %v8208 = vld [vmem:[%s7 + $0x778] sm:$0xff]
      %v8209 = vld [vmem:[%s7 + $0x780] sm:$0xff]
      %v8210 = vld [vmem:[%s7 + $0x788] sm:$0xff]
      %v8211 = vld [vmem:[%s7 + $0x790] sm:$0xff]
      %v8212 = vld [vmem:[%s7 + $0x798] sm:$0xff]
      %v8213 = vld [vmem:[%s7 + $0x7a0] sm:$0xff]
      %v8214 = vld [vmem:[%s7 + $0x7a8] sm:$0xff]
      %v8215 = vld [vmem:[%s7 + $0x7b0] sm:$0xff]
      %v8216 = vld [vmem:[%s7 + $0x7b8] sm:$0xff]
      %v8217 = vld [vmem:[%s7 + $0x7c0] sm:$0xff]
      %v8218 = vld [vmem:[%s7 + $0x7c8] sm:$0xff]
      %v8219 = vld [vmem:[%s7 + $0x7d0] sm:$0xff]
      %v8220 = vld [vmem:[%s7 + $0x7d8] sm:$0xff]
      %v8221 = vld [vmem:[%s7 + $0x7e0] sm:$0xff]
      %v8222 = vld [vmem:[%s7 + $0x7e8] sm:$0xff]
      %v8223 = vld [vmem:[%s7 + $0x7f0] sm:$0xff]
      %v8224 = vld [vmem:[%s7 + $0x7f8] sm:$0xff]
      %8225 = vxpose.xlu0.b32.start [1/16] %v7503, 128
      %8226 = vxpose.xlu0.b32.cont [2/16] %v7518, 128
      %8227 = vxpose.xlu0.b32.cont [3/16] %v7533, 128
      %8228 = vxpose.xlu0.b32.cont [4/16] %v7548, 128
      %8229 = vxpose.xlu0.b32.cont [5/16] %v7563, 128
      %8230 = vxpose.xlu0.b32.cont [6/16] %v7578, 128
      %8231 = vxpose.xlu0.b32.cont [7/16] %v7593, 128
      %8232 = vxpose.xlu0.b32.cont [8/16] %v7608, 128
      %8233 = vxpose.xlu0.b32.cont [9/16] %v7623, 128
      %8234 = vxpose.xlu0.b32.cont [10/16] %v7638, 128
      %8235 = vxpose.xlu0.b32.cont [11/16] %v7653, 128
      %8236 = vxpose.xlu0.b32.cont [12/16] %v7668, 128
      %8237 = vxpose.xlu0.b32.cont [13/16] %v7683, 128
      %8238 = vxpose.xlu0.b32.cont [14/16] %v7698, 128
      %8239 = vxpose.xlu0.b32.cont [15/16] %v7713, 128
      %8240 = vxpose.xlu0.b32.end [16/16] %v7728, 128
      %v8241 = vpop.trf.xlu0
      %v8242 = vpop.trf.xlu0
      %v8243 = vpop.trf.xlu0
      %v8244 = vpop.trf.xlu0
      %v8245 = vpop.trf.xlu0
      %v8246 = vpop.trf.xlu0
      %v8247 = vpop.trf.xlu0
      %v8248 = vpop.trf.xlu0
      %v8249 = vpop.trf.xlu0
      %v8250 = vpop.trf.xlu0
      %v8251 = vpop.trf.xlu0
      %v8252 = vpop.trf.xlu0
      %v8253 = vpop.trf.xlu0
      %v8254 = vpop.trf.xlu0
      %v8255 = vpop.trf.xlu0
      %v8256 = vpop.trf.xlu0
      %8257 = vxpose.xlu0.b32.start [1/16] %v7743, 128
      %8258 = vxpose.xlu0.b32.cont [2/16] %v7758, 128
      %8259 = vxpose.xlu0.b32.cont [3/16] %v7773, 128
      %8260 = vxpose.xlu0.b32.cont [4/16] %v7788, 128
      %8261 = vxpose.xlu0.b32.cont [5/16] %v7803, 128
      %8262 = vxpose.xlu0.b32.cont [6/16] %v7818, 128
      %8263 = vxpose.xlu0.b32.cont [7/16] %v7833, 128
      %8264 = vxpose.xlu0.b32.cont [8/16] %v7848, 128
      %8265 = vxpose.xlu0.b32.cont [9/16] %v7863, 128
      %8266 = vxpose.xlu0.b32.cont [10/16] %v7878, 128
      %8267 = vxpose.xlu0.b32.cont [11/16] %v7893, 128
      %8268 = vxpose.xlu0.b32.cont [12/16] %v7908, 128
      %8269 = vxpose.xlu0.b32.cont [13/16] %v7923, 128
      %8270 = vxpose.xlu0.b32.cont [14/16] %v7938, 128
      %8271 = vxpose.xlu0.b32.cont [15/16] %v7953, 128
      %8272 = vxpose.xlu0.b32.end [16/16] %v7968, 128
      %v8273 = vpop.trf.xlu0
      %v8274 = vpop.trf.xlu0
      %v8275 = vpop.trf.xlu0
      %v8276 = vpop.trf.xlu0
      %v8277 = vpop.trf.xlu0
      %v8278 = vpop.trf.xlu0
      %v8279 = vpop.trf.xlu0
      %v8280 = vpop.trf.xlu0
      %v8281 = vpop.trf.xlu0
      %v8282 = vpop.trf.xlu0
      %v8283 = vpop.trf.xlu0
      %v8284 = vpop.trf.xlu0
      %v8285 = vpop.trf.xlu0
      %v8286 = vpop.trf.xlu0
      %v8287 = vpop.trf.xlu0
      %v8288 = vpop.trf.xlu0
      %8289 = vmatpush.msra.mxu0 %v8089
      %8290 = vmatpush.msra.mxu0 %v8081
      %8291 = vmatpush.msra.mxu0 %v8073
      %8292 = vmatpush.msra.mxu0 %v8065
      %8293 = vmatpush.msra.mxu0 %v8057
      %8294 = vmatpush.msra.mxu0 %v8049
      %8295 = vmatpush.msra.mxu0 %v8041
      %8296 = vmatpush.msra.mxu0 %v8033
      %8297 = vmatpush.msra.mxu0 %v8025
      %8298 = vmatpush.msra.mxu0 %v8017
      %8299 = vmatpush.msra.mxu0 %v8009
      %8300 = vmatpush.msra.mxu0 %v8001
      %8301 = vmatpush.msra.mxu0 %v7993
      %8302 = vmatpush.msra.mxu0 %v7985
      %8303 = vmatpush.msra.mxu0 %v7977
      %8304 = vmatpush.msra.mxu0 %v7969
      %8305 = vmatmul.f32.gmra.mxu0 %v8241
      %v8306 = vpop.f32.mrf.mxu0
      %v8307 = vadd.f32 0.0, %v8306
      %8308 = vdwg.mxu0
      %8309 = vmatpush.msra.mxu0 %v8217
      %8310 = vmatpush.msra.mxu0 %v8209
      %8311 = vmatpush.msra.mxu0 %v8201
      %8312 = vmatpush.msra.mxu0 %v8193
      %8313 = vmatpush.msra.mxu0 %v8185
      %8314 = vmatpush.msra.mxu0 %v8177
      %8315 = vmatpush.msra.mxu0 %v8169
      %8316 = vmatpush.msra.mxu0 %v8161
      %8317 = vmatpush.msra.mxu0 %v8153
      %8318 = vmatpush.msra.mxu0 %v8145
      %8319 = vmatpush.msra.mxu0 %v8137
      %8320 = vmatpush.msra.mxu0 %v8129
      %8321 = vmatpush.msra.mxu0 %v8121
      %8322 = vmatpush.msra.mxu0 %v8113
      %8323 = vmatpush.msra.mxu0 %v8105
      %8324 = vmatpush.msra.mxu0 %v8097
      %8325 = vmatmul.f32.gmra.mxu0 %v8273
      %v8326 = vpop.f32.mrf.mxu0
      %v8327 = vadd.f32 %v8307, %v8326
      %8328 = vdwg.mxu0
      %8329 = vmatpush.msra.mxu0 %v8090
      %8330 = vmatpush.msra.mxu0 %v8082
      %8331 = vmatpush.msra.mxu0 %v8074
      %8332 = vmatpush.msra.mxu0 %v8066
      %8333 = vmatpush.msra.mxu0 %v8058
      %8334 = vmatpush.msra.mxu0 %v8050
      %8335 = vmatpush.msra.mxu0 %v8042
      %8336 = vmatpush.msra.mxu0 %v8034
      %8337 = vmatpush.msra.mxu0 %v8026
      %8338 = vmatpush.msra.mxu0 %v8018
      %8339 = vmatpush.msra.mxu0 %v8010
      %8340 = vmatpush.msra.mxu0 %v8002
      %8341 = vmatpush.msra.mxu0 %v7994
      %8342 = vmatpush.msra.mxu0 %v7986
      %8343 = vmatpush.msra.mxu0 %v7978
      %8344 = vmatpush.msra.mxu0 %v7970
      %8345 = vmatmul.f32.gmra.mxu0 %v8241
      %v8346 = vpop.f32.mrf.mxu0
      %v8347 = vadd.f32 0.0, %v8346
      %8348 = vdwg.mxu0
      %8349 = vmatpush.msra.mxu0 %v8218
      %8350 = vmatpush.msra.mxu0 %v8210
      %8351 = vmatpush.msra.mxu0 %v8202
      %8352 = vmatpush.msra.mxu0 %v8194
      %8353 = vmatpush.msra.mxu0 %v8186
      %8354 = vmatpush.msra.mxu0 %v8178
      %8355 = vmatpush.msra.mxu0 %v8170
      %8356 = vmatpush.msra.mxu0 %v8162
      %8357 = vmatpush.msra.mxu0 %v8154
      %8358 = vmatpush.msra.mxu0 %v8146
      %8359 = vmatpush.msra.mxu0 %v8138
      %8360 = vmatpush.msra.mxu0 %v8130
      %8361 = vmatpush.msra.mxu0 %v8122
      %8362 = vmatpush.msra.mxu0 %v8114
      %8363 = vmatpush.msra.mxu0 %v8106
      %8364 = vmatpush.msra.mxu0 %v8098
      %8365 = vmatmul.f32.gmra.mxu0 %v8273
      %v8366 = vpop.f32.mrf.mxu0
      %v8367 = vadd.f32 %v8347, %v8366
      %8368 = vdwg.mxu0
      %8369 = vmatpush.msra.mxu0 %v8091
      %8370 = vmatpush.msra.mxu0 %v8083
      %8371 = vmatpush.msra.mxu0 %v8075
      %8372 = vmatpush.msra.mxu0 %v8067
      %8373 = vmatpush.msra.mxu0 %v8059
      %8374 = vmatpush.msra.mxu0 %v8051
      %8375 = vmatpush.msra.mxu0 %v8043
      %8376 = vmatpush.msra.mxu0 %v8035
      %8377 = vmatpush.msra.mxu0 %v8027
      %8378 = vmatpush.msra.mxu0 %v8019
      %8379 = vmatpush.msra.mxu0 %v8011
      %8380 = vmatpush.msra.mxu0 %v8003
      %8381 = vmatpush.msra.mxu0 %v7995
      %8382 = vmatpush.msra.mxu0 %v7987
      %8383 = vmatpush.msra.mxu0 %v7979
      %8384 = vmatpush.msra.mxu0 %v7971
      %8385 = vmatmul.f32.gmra.mxu0 %v8241
      %v8386 = vpop.f32.mrf.mxu0
      %v8387 = vadd.f32 0.0, %v8386
      %8388 = vdwg.mxu0
      %8389 = vmatpush.msra.mxu0 %v8219
      %8390 = vmatpush.msra.mxu0 %v8211
      %8391 = vmatpush.msra.mxu0 %v8203
      %8392 = vmatpush.msra.mxu0 %v8195
      %8393 = vmatpush.msra.mxu0 %v8187
      %8394 = vmatpush.msra.mxu0 %v8179
      %8395 = vmatpush.msra.mxu0 %v8171
      %8396 = vmatpush.msra.mxu0 %v8163
      %8397 = vmatpush.msra.mxu0 %v8155
      %8398 = vmatpush.msra.mxu0 %v8147
      %8399 = vmatpush.msra.mxu0 %v8139
      %8400 = vmatpush.msra.mxu0 %v8131
      %8401 = vmatpush.msra.mxu0 %v8123
      %8402 = vmatpush.msra.mxu0 %v8115
      %8403 = vmatpush.msra.mxu0 %v8107
      %8404 = vmatpush.msra.mxu0 %v8099
      %8405 = vmatmul.f32.gmra.mxu0 %v8273
      %v8406 = vpop.f32.mrf.mxu0
      %v8407 = vadd.f32 %v8387, %v8406
      %8408 = vdwg.mxu0
      %8409 = vmatpush.msra.mxu0 %v8092
      %8410 = vmatpush.msra.mxu0 %v8084
      %8411 = vmatpush.msra.mxu0 %v8076
      %8412 = vmatpush.msra.mxu0 %v8068
      %8413 = vmatpush.msra.mxu0 %v8060
      %8414 = vmatpush.msra.mxu0 %v8052
      %8415 = vmatpush.msra.mxu0 %v8044
      %8416 = vmatpush.msra.mxu0 %v8036
      %8417 = vmatpush.msra.mxu0 %v8028
      %8418 = vmatpush.msra.mxu0 %v8020
      %8419 = vmatpush.msra.mxu0 %v8012
      %8420 = vmatpush.msra.mxu0 %v8004
      %8421 = vmatpush.msra.mxu0 %v7996
      %8422 = vmatpush.msra.mxu0 %v7988
      %8423 = vmatpush.msra.mxu0 %v7980
      %8424 = vmatpush.msra.mxu0 %v7972
      %8425 = vmatmul.f32.gmra.mxu0 %v8241
      %v8426 = vpop.f32.mrf.mxu0
      %v8427 = vadd.f32 0.0, %v8426
      %8428 = vdwg.mxu0
      %8429 = vmatpush.msra.mxu0 %v8220
      %8430 = vmatpush.msra.mxu0 %v8212
      %8431 = vmatpush.msra.mxu0 %v8204
      %8432 = vmatpush.msra.mxu0 %v8196
      %8433 = vmatpush.msra.mxu0 %v8188
      %8434 = vmatpush.msra.mxu0 %v8180
      %8435 = vmatpush.msra.mxu0 %v8172
      %8436 = vmatpush.msra.mxu0 %v8164
      %8437 = vmatpush.msra.mxu0 %v8156
      %8438 = vmatpush.msra.mxu0 %v8148
      %8439 = vmatpush.msra.mxu0 %v8140
      %8440 = vmatpush.msra.mxu0 %v8132
      %8441 = vmatpush.msra.mxu0 %v8124
      %8442 = vmatpush.msra.mxu0 %v8116
      %8443 = vmatpush.msra.mxu0 %v8108
      %8444 = vmatpush.msra.mxu0 %v8100
      %8445 = vmatmul.f32.gmra.mxu0 %v8273
      %v8446 = vpop.f32.mrf.mxu0
      %v8447 = vadd.f32 %v8427, %v8446
      %8448 = vdwg.mxu0
      %8449 = vmatpush.msra.mxu0 %v8093
      %8450 = vmatpush.msra.mxu0 %v8085
      %8451 = vmatpush.msra.mxu0 %v8077
      %8452 = vmatpush.msra.mxu0 %v8069
      %8453 = vmatpush.msra.mxu0 %v8061
      %8454 = vmatpush.msra.mxu0 %v8053
      %8455 = vmatpush.msra.mxu0 %v8045
      %8456 = vmatpush.msra.mxu0 %v8037
      %8457 = vmatpush.msra.mxu0 %v8029
      %8458 = vmatpush.msra.mxu0 %v8021
      %8459 = vmatpush.msra.mxu0 %v8013
      %8460 = vmatpush.msra.mxu0 %v8005
      %8461 = vmatpush.msra.mxu0 %v7997
      %8462 = vmatpush.msra.mxu0 %v7989
      %8463 = vmatpush.msra.mxu0 %v7981
      %8464 = vmatpush.msra.mxu0 %v7973
      %8465 = vmatmul.f32.gmra.mxu0 %v8241
      %v8466 = vpop.f32.mrf.mxu0
      %v8467 = vadd.f32 0.0, %v8466
      %8468 = vdwg.mxu0
      %8469 = vmatpush.msra.mxu0 %v8221
      %8470 = vmatpush.msra.mxu0 %v8213
      %8471 = vmatpush.msra.mxu0 %v8205
      %8472 = vmatpush.msra.mxu0 %v8197
      %8473 = vmatpush.msra.mxu0 %v8189
      %8474 = vmatpush.msra.mxu0 %v8181
      %8475 = vmatpush.msra.mxu0 %v8173
      %8476 = vmatpush.msra.mxu0 %v8165
      %8477 = vmatpush.msra.mxu0 %v8157
      %8478 = vmatpush.msra.mxu0 %v8149
      %8479 = vmatpush.msra.mxu0 %v8141
      %8480 = vmatpush.msra.mxu0 %v8133
      %8481 = vmatpush.msra.mxu0 %v8125
      %8482 = vmatpush.msra.mxu0 %v8117
      %8483 = vmatpush.msra.mxu0 %v8109
      %8484 = vmatpush.msra.mxu0 %v8101
      %8485 = vmatmul.f32.gmra.mxu0 %v8273
      %v8486 = vpop.f32.mrf.mxu0
      %v8487 = vadd.f32 %v8467, %v8486
      %8488 = vdwg.mxu0
      %8489 = vmatpush.msra.mxu0 %v8094
      %8490 = vmatpush.msra.mxu0 %v8086
      %8491 = vmatpush.msra.mxu0 %v8078
      %8492 = vmatpush.msra.mxu0 %v8070
      %8493 = vmatpush.msra.mxu0 %v8062
      %8494 = vmatpush.msra.mxu0 %v8054
      %8495 = vmatpush.msra.mxu0 %v8046
      %8496 = vmatpush.msra.mxu0 %v8038
      %8497 = vmatpush.msra.mxu0 %v8030
      %8498 = vmatpush.msra.mxu0 %v8022
      %8499 = vmatpush.msra.mxu0 %v8014
      %8500 = vmatpush.msra.mxu0 %v8006
      %8501 = vmatpush.msra.mxu0 %v7998
      %8502 = vmatpush.msra.mxu0 %v7990
      %8503 = vmatpush.msra.mxu0 %v7982
      %8504 = vmatpush.msra.mxu0 %v7974
      %8505 = vmatmul.f32.gmra.mxu0 %v8241
      %v8506 = vpop.f32.mrf.mxu0
      %v8507 = vadd.f32 0.0, %v8506
      %8508 = vdwg.mxu0
      %8509 = vmatpush.msra.mxu0 %v8222
      %8510 = vmatpush.msra.mxu0 %v8214
      %8511 = vmatpush.msra.mxu0 %v8206
      %8512 = vmatpush.msra.mxu0 %v8198
      %8513 = vmatpush.msra.mxu0 %v8190
      %8514 = vmatpush.msra.mxu0 %v8182
      %8515 = vmatpush.msra.mxu0 %v8174
      %8516 = vmatpush.msra.mxu0 %v8166
      %8517 = vmatpush.msra.mxu0 %v8158
      %8518 = vmatpush.msra.mxu0 %v8150
      %8519 = vmatpush.msra.mxu0 %v8142
      %8520 = vmatpush.msra.mxu0 %v8134
      %8521 = vmatpush.msra.mxu0 %v8126
      %8522 = vmatpush.msra.mxu0 %v8118
      %8523 = vmatpush.msra.mxu0 %v8110
      %8524 = vmatpush.msra.mxu0 %v8102
      %8525 = vmatmul.f32.gmra.mxu0 %v8273
      %v8526 = vpop.f32.mrf.mxu0
      %v8527 = vadd.f32 %v8507, %v8526
      %8528 = vdwg.mxu0
      %8529 = vmatpush.msra.mxu0 %v8095
      %8530 = vmatpush.msra.mxu0 %v8087
      %8531 = vmatpush.msra.mxu0 %v8079
      %8532 = vmatpush.msra.mxu0 %v8071
      %8533 = vmatpush.msra.mxu0 %v8063
      %8534 = vmatpush.msra.mxu0 %v8055
      %8535 = vmatpush.msra.mxu0 %v8047
      %8536 = vmatpush.msra.mxu0 %v8039
      %8537 = vmatpush.msra.mxu0 %v8031
      %8538 = vmatpush.msra.mxu0 %v8023
      %8539 = vmatpush.msra.mxu0 %v8015
      %8540 = vmatpush.msra.mxu0 %v8007
      %8541 = vmatpush.msra.mxu0 %v7999
      %8542 = vmatpush.msra.mxu0 %v7991
      %8543 = vmatpush.msra.mxu0 %v7983
      %8544 = vmatpush.msra.mxu0 %v7975
      %8545 = vmatmul.f32.gmra.mxu0 %v8241
      %v8546 = vpop.f32.mrf.mxu0
      %v8547 = vadd.f32 0.0, %v8546
      %8548 = vdwg.mxu0
      %8549 = vmatpush.msra.mxu0 %v8223
      %8550 = vmatpush.msra.mxu0 %v8215
      %8551 = vmatpush.msra.mxu0 %v8207
      %8552 = vmatpush.msra.mxu0 %v8199
      %8553 = vmatpush.msra.mxu0 %v8191
      %8554 = vmatpush.msra.mxu0 %v8183
      %8555 = vmatpush.msra.mxu0 %v8175
      %8556 = vmatpush.msra.mxu0 %v8167
      %8557 = vmatpush.msra.mxu0 %v8159
      %8558 = vmatpush.msra.mxu0 %v8151
      %8559 = vmatpush.msra.mxu0 %v8143
      %8560 = vmatpush.msra.mxu0 %v8135
      %8561 = vmatpush.msra.mxu0 %v8127
      %8562 = vmatpush.msra.mxu0 %v8119
      %8563 = vmatpush.msra.mxu0 %v8111
      %8564 = vmatpush.msra.mxu0 %v8103
      %8565 = vmatmul.f32.gmra.mxu0 %v8273
      %v8566 = vpop.f32.mrf.mxu0
      %v8567 = vadd.f32 %v8547, %v8566
      %8568 = vdwg.mxu0
      %8569 = vmatpush.msra.mxu0 %v8096
      %8570 = vmatpush.msra.mxu0 %v8088
      %8571 = vmatpush.msra.mxu0 %v8080
      %8572 = vmatpush.msra.mxu0 %v8072
      %8573 = vmatpush.msra.mxu0 %v8064
      %8574 = vmatpush.msra.mxu0 %v8056
      %8575 = vmatpush.msra.mxu0 %v8048
      %8576 = vmatpush.msra.mxu0 %v8040
      %8577 = vmatpush.msra.mxu0 %v8032
      %8578 = vmatpush.msra.mxu0 %v8024
      %8579 = vmatpush.msra.mxu0 %v8016
      %8580 = vmatpush.msra.mxu0 %v8008
      %8581 = vmatpush.msra.mxu0 %v8000
      %8582 = vmatpush.msra.mxu0 %v7992
      %8583 = vmatpush.msra.mxu0 %v7984
      %8584 = vmatpush.msra.mxu0 %v7976
      %8585 = vmatmul.f32.gmra.mxu0 %v8241
      %v8586 = vpop.f32.mrf.mxu0
      %v8587 = vadd.f32 0.0, %v8586
      %8588 = vdwg.mxu0
      %8589 = vmatpush.msra.mxu0 %v8224
      %8590 = vmatpush.msra.mxu0 %v8216
      %8591 = vmatpush.msra.mxu0 %v8208
      %8592 = vmatpush.msra.mxu0 %v8200
      %8593 = vmatpush.msra.mxu0 %v8192
      %8594 = vmatpush.msra.mxu0 %v8184
      %8595 = vmatpush.msra.mxu0 %v8176
      %8596 = vmatpush.msra.mxu0 %v8168
      %8597 = vmatpush.msra.mxu0 %v8160
      %8598 = vmatpush.msra.mxu0 %v8152
      %8599 = vmatpush.msra.mxu0 %v8144
      %8600 = vmatpush.msra.mxu0 %v8136
      %8601 = vmatpush.msra.mxu0 %v8128
      %8602 = vmatpush.msra.mxu0 %v8120
      %8603 = vmatpush.msra.mxu0 %v8112
      %8604 = vmatpush.msra.mxu0 %v8104
      %8605 = vmatmul.f32.gmra.mxu0 %v8273
      %v8606 = vpop.f32.mrf.mxu0
      %v8607 = vadd.f32 %v8587, %v8606
      %8608 = vdwg.mxu0
      %v8617 = vrot.slane %v8367, 4
      %v8618 = vrot.slane %v8447, 4
      %v8619 = vrot.slane %v8527, 4
      %v8620 = vrot.slane %v8607, 4
      %v8621 = vsel %vm557, %v8327, %v8617
      %v8622 = vsel %vm557, %v8407, %v8618
      %v8623 = vsel %vm557, %v8487, %v8619
      %v8624 = vsel %vm557, %v8567, %v8620
      %8629 = vst [vmem:[%s305] sm:$0x77] %v8621
      %8630 = vst [vmem:[%s305 + $0x8] sm:$0x77] %v8622
      %8631 = vst [vmem:[%s305 + $0x10] sm:$0x77] %v8623
      %8632 = vst [vmem:[%s305 + $0x18] sm:$0x77] %v8624
      %p8633 = scmp.lt.s32.totalorder %s19, 1
      %s8634 = scalar_select %p8633, %s19, 1
      %s8635 = smul.addr %s8634, 8
      %s8636 = smul.addr %s8635, 4
      %s8637 = scalar_lea.vmem %s8, %s8636
      // Predicated region
      $region53: #{tpu_custom_call.1} parent=51 // pred_check
        %p8638 = pneg %p210
      $region54: #{tpu_custom_call.1} parent=51 // pred_check_branch
        %8640 = sbr.rel (%p8638) target = $region56
      $region55: #{tpu_custom_call.1} parent=51 // pred_region
        _
      $region56: #{tpu_custom_call.1} parent=51 // pred_fallthru
        _
    $region52: #{tpu_custom_call.1} parent=5 // pred_fallthru
      _
    %p8641 = scmp.le.s32.totalorder 2, %s14
    // Predicated region
    $region57: #{tpu_custom_call.1} parent=5 // pred_check
      %p8642 = pneg %p8641
    $region58: #{tpu_custom_call.1} parent=5 // pred_check_branch
      %8644 = sbr.rel (%p8642) target = $region60
    $region59: #{tpu_custom_call.1} parent=5 // pred_region
      %s8645 = ssub.s32 %s14, 2
      // Predicated region
      $region61: #{tpu_custom_call.1} parent=59 // pred_check
        %p8646 = pneg %p216
      $region62: #{tpu_custom_call.1} parent=59 // pred_check_branch
        %8648 = sbr.rel (%p8646) target = $region64
      $region63: #{tpu_custom_call.1} parent=59 // pred_region
        %p8649 = scmp.lt.s32.totalorder %s20, 1
        %s8650 = scalar_select %p8649, %s20, 1
        %s8651 = smul.addr %s8650, 8
        %s8652 = smul.addr %s8651, 4
        %s8653 = scalar_lea.vmem %s8, %s8652
      $region64: #{tpu_custom_call.1} parent=59 // pred_fallthru
        _
    $region60: #{tpu_custom_call.1} parent=5 // pred_fallthru
      _
  $region6: #{tpu_custom_call.1} parent=0 // loop_footer
    %s18 = sadd.s32 1, %s14
  $region7: #{tpu_custom_call.1} parent=0 // loop_footer_branch
    %13 = sbr.rel target = $region3
  $region8: #{tpu_custom_call.1} parent=0 // loop_exit
    _

</llo_original>
